<compile_context>
chip_gen: v6e
topology: v6e:2x2x1
jax: 0.10.0
libtpu: 0.0.40
codegen_flags: <defaults>
</compile_context>

<pallas_src>
import functools
import math

import numpy as np
import jax
import jax.numpy as jnp
from jax.experimental import pallas as pl
from jax.experimental.pallas import tpu as pltpu

# ----------------------- small, module-consistent hyperparameters -----------------------
B = 2            # batch
L = 12           # source length
EMB = 32         # embedding_size
HID = 32         # hidden_size
NUM_LAYERS = 2   # num_layers
NUM_HEADS = 4    # num_heads
KEY_DEPTH = 32   # total_key_depth
VAL_DEPTH = 32   # total_value_depth
FILTER = 64      # filter_size
MAX_LEN = 64     # max_length (timing signal)
EPS = 1e-6       # repo LayerNorm eps

HEAD_DK = KEY_DEPTH // NUM_HEADS
HEAD_DV = VAL_DEPTH // NUM_HEADS
Q_SCALE = HEAD_DK ** -0.5
LANES = 128

# ---- weight slab layout: [W_ROWS, 128], every sub-block starts at an 8-aligned row ----
WQKV_OFF = 0
WO_OFF = HID                                   # 32
C1W_OFF = WO_OFF + VAL_DEPTH                   # 64
C2W_OFF = C1W_OFF + 3 * HID                    # 160
LAYER_ROWS = C2W_OFF + 3 * FILTER              # 352
W_ROWS = EMB + NUM_LAYERS * LAYER_ROWS         # 736

# ---- const slab layout: [CONST_ROWS, 128] ----
#  rows [0, B*L)            : timing signal tiled over the batch, lanes [0, HID)
#  rows per layer (6 each)  : ln1_g, ln1_b, ln2_g, ln2_b, c1b(lanes[0,FILTER)), c2b
#  final 2 rows             : lnf_g, lnf_b
N_TOK = B * L
CONST_LAYER_R0 = N_TOK
CONST_LAYER_STRIDE = 6
CONST_FINAL_R0 = CONST_LAYER_R0 + NUM_LAYERS * CONST_LAYER_STRIDE
CONST_ROWS = ((CONST_FINAL_R0 + 2 + 7) // 8) * 8


# ------------------------------ shared math (kernel & reference) ------------------------------
def layer_norm(x, g, b):
    # Repo's custom LayerNorm: unbiased std (divide by N-1), eps added to std (not var).
    mean = jnp.mean(x, axis=-1, keepdims=True)
    d = x - mean
    var = jnp.sum(d * d, axis=-1, keepdims=True) / (x.shape[-1] - 1)
    return g * d / (jnp.sqrt(var) + EPS) + b


# --------------------- one-time probe of pltpu.roll sublane support / direction ---------------------
@functools.lru_cache(maxsize=None)
def _roll_dir():
    """Determine pltpu.roll's axis-0 (sublane) convention on this backend.

    Returns +1 if pltpu.roll(x, 1, axis=0)[t] == x[t-1] (jnp.roll convention),
    -1 for the opposite convention, 0 if the sublane roll fails to lower
    (in which case the kernel falls back to the concat-based shift).
    """
    rows, cols = B * L, FILTER
    try:
        def _probe(x_ref, a_ref, b_ref):
            a_ref[...] = pltpu.roll(x_ref[...], 1, axis=0)
            b_ref[...] = pltpu.roll(x_ref[...], rows - 1, axis=0)

        x = jnp.arange(rows * cols, dtype=jnp.float32).reshape(rows, cols)
        y1, y2 = pl.pallas_call(
            _probe,
            out_shape=(jax.ShapeDtypeStruct((rows, cols), jnp.float32),
                       jax.ShapeDtypeStruct((rows, cols), jnp.float32)),
        )(x)
        y1 = np.asarray(jax.block_until_ready(y1))
        y2 = np.asarray(jax.block_until_ready(y2))
        xn = np.asarray(x)
        if np.array_equal(y1, np.roll(xn, 1, 0)) and np.array_equal(y2, np.roll(xn, -1, 0)):
            return 1
        if np.array_equal(y1, np.roll(xn, -1, 0)) and np.array_equal(y2, np.roll(xn, 1, 0)):
            return -1
    except Exception:
        pass
    return 0


# --------------------------------------- Pallas kernel ---------------------------------------
def encoder_kernel(x_ref, bias_ref, w_ref, const_ref, y_ref, *, nb, roll_dir):
    n = nb * L

    # conv boundary masks: zero rows that would be shifted in across batch-element
    # boundaries (and across the wrap-around of the roll).  Built once per grid step.
    row = jax.lax.broadcasted_iota(jnp.int32, (n, 1), 0)
    is_first = row == 0
    is_last = row == (L - 1)
    for b in range(1, nb):
        is_first = is_first | (row == b * L)
        is_last = is_last | (row == (b * L + L - 1))
    not_first = jnp.where(is_first, 0.0, 1.0)
    not_last = jnp.where(is_last, 0.0, 1.0)

    def shift_rows(v, delta):
        # out[t] = v[t + delta]; rows wrapped in across boundaries are zeroed by the caller.
        if roll_dir == 0:
            # fallback: concat with a zero row (always lowers)
            z = jnp.zeros((1, v.shape[1]), v.dtype)
            return (jnp.concatenate([z, v[:-1]], axis=0) if delta == -1
                    else jnp.concatenate([v[1:], z], axis=0))
        s = (-delta * roll_dir) % v.shape[0]          # positive static shift
        return pltpu.roll(v, s, axis=0)

    def get_row(r, width):
        return const_ref[r:r + 1, 0:width]            # [1, width]

    # ---------- embedding_proj (Linear, no bias) + timing signal ----------
    x_in = x_ref[...]                                 # [n, EMB]
    timing = const_ref[0:n, 0:HID]                    # [n, HID] (pre-tiled over the batch)
    emb_w = w_ref[0:EMB, 0:HID]
    x = jnp.dot(x_in, emb_w, preferred_element_type=jnp.float32) + timing

    def attention(x_norm, base):
        # fused Q/K/V projection: one [n, HID] @ [HID, 3*KD] matmul
        wqkv = w_ref[base + WQKV_OFF: base + WQKV_OFF + HID, 0:3 * KEY_DEPTH]
        qkv = jnp.dot(x_norm, wqkv, preferred_element_type=jnp.float32)
        q = qkv[:, 0:KEY_DEPTH] * Q_SCALE
        k = qkv[:, KEY_DEPTH:2 * KEY_DEPTH]
        v = qkv[:, 2 * KEY_DEPTH:2 * KEY_DEPTH + VAL_DEPTH]
        kT = k.T                                      # one transpose per layer (whole block)

        wo_base = base + WO_OFF
        outs = []
        for b in range(nb):
            bias_b = bias_ref[b:b + 1, :]             # [1, L] additive mask bias (broadcasts)
            out_b = None
            for h in range(NUM_HEADS):
                qh = q[b * L:(b + 1) * L, h * HEAD_DK:(h + 1) * HEAD_DK]        # [L, dk]
                khT = kT[h * HEAD_DK:(h + 1) * HEAD_DK, b * L:(b + 1) * L]      # [dk, L]
                logits = jnp.dot(qh, khT, preferred_element_type=jnp.float32) + bias_b
                p = jax.nn.softmax(logits, axis=-1)   # masked_fill(-1e18) equivalent
                vh = v[b * L:(b + 1) * L, h * HEAD_DV:(h + 1) * HEAD_DV]        # [L, dv]
                ctx = jnp.dot(p, vh, preferred_element_type=jnp.float32)        # [L, dv]
                # fold merge_heads + output projection: ctx_h @ Wo[h*dv:(h+1)*dv, :]
                wo_h = w_ref[wo_base + h * HEAD_DV: wo_base + (h + 1) * HEAD_DV, 0:HID]
                o = jnp.dot(ctx, wo_h, preferred_element_type=jnp.float32)      # [L, HID]
                out_b = o if out_b is None else out_b + o
            outs.append(out_b)
        return outs[0] if nb == 1 else jnp.concatenate(outs, axis=0)            # [n, HID]

    def conv3(x_l, w_r0, cin, cout, bias_row):
        # Conv1d(kernel=3, padding='both') as three tap matmuls summed
        # (no [n, 3*cin] lane-concatenated operand; weight taps are 8-aligned row blocks).
        w0 = w_ref[w_r0: w_r0 + cin, 0:cout]
        w1 = w_ref[w_r0 + cin: w_r0 + 2 * cin, 0:cout]
        w2 = w_ref[w_r0 + 2 * cin: w_r0 + 3 * cin, 0:cout]
        x_m1 = shift_rows(x_l, -1) * not_first
        x_p1 = shift_rows(x_l, +1) * not_last
        return (jnp.dot(x_m1, w0, preferred_element_type=jnp.float32)
                + jnp.dot(x_l, w1, preferred_element_type=jnp.float32)
                + jnp.dot(x_p1, w2, preferred_element_type=jnp.float32)
                + bias_row)

    for l in range(NUM_LAYERS):                       # static unroll
        base = EMB + l * LAYER_ROWS
        r = CONST_LAYER_R0 + l * CONST_LAYER_STRIDE
        ln1_g, ln1_b = get_row(r + 0, HID), get_row(r + 1, HID)
        ln2_g, ln2_b = get_row(r + 2, HID), get_row(r + 3, HID)
        c1b, c2b = get_row(r + 4, FILTER), get_row(r + 5, HID)

        # --- multi-head self-attention sublayer (pre-LN, residual; dropouts identity) ---
        x = x + attention(layer_norm(x, ln1_g, ln1_b), base)

        # --- positionwise feed-forward ('cc', padding='both') ---
        x_norm = layer_norm(x, ln2_g, ln2_b)
        h1 = jax.nn.relu(conv3(x_norm, base + C1W_OFF, HID, FILTER, c1b))
        # NOTE: source PositionwiseFeedForward uses `if i < len(self.layers)` (no -1),
        # so ReLU is applied after *every* conv, including the last one — kept verbatim.
        h2 = jax.nn.relu(conv3(h1, base + C2W_OFF, FILTER, HID, c2b))
        x = x + h2

    lnf_g = get_row(CONST_FINAL_R0, HID)
    lnf_b = get_row(CONST_FINAL_R0 + 1, HID)
    y_ref[...] = layer_norm(x, lnf_g, lnf_b).astype(y_ref.dtype)


# ------------------------------------- wrapper -------------------------------------
def _batch_block(batch):
    """Batch elements handled per grid step.

    Fold the whole batch into a single grid step on every generation:
      * v5e/v6e have one TensorCore, so a batch grid axis is a serial loop with
        ~0.35us/step overhead and half-empty sublanes.
      * v7x has two TensorCores, but at B=2/L=12/HID=32 the kernel is fixed-overhead
        bound: a per-core split (nb=1) duplicates all weight DMAs and the pipeline
        prologue to save only a few thousand MXU cycles, so folding wins there too.
    """
    return batch


def encoder_forward(inputs, mask, params):
    batch, length, _ = inputs.shape
    assert batch == B and length == L
    # additive mask bias (== masked_fill(mask, -1e18)), computed once here
    bias = mask.reshape(batch, L).astype(jnp.float32) * (-1e18)
    x_flat = inputs.reshape(batch * L, EMB)           # HBM-side reshape is effectively free

    nb = _batch_block(batch)
    grid = (batch // nb,)
    n = nb * L

    in_specs = [
        pl.BlockSpec((n, EMB), lambda g: (g, 0)),            # flattened activations
        pl.BlockSpec((nb, L), lambda g: (g, 0)),             # additive mask bias
        pl.BlockSpec((W_ROWS, LANES), lambda g: (0, 0)),     # packed fp32 weight slab
        pl.BlockSpec((CONST_ROWS, LANES), lambda g: (0, 0)),  # timing + small per-layer rows
    ]
    out_spec = pl.BlockSpec((n, HID), lambda g: (g, 0))

    y = pl.pallas_call(
        functools.partial(encoder_kernel, nb=nb, roll_dir=_roll_dir()),
        out_shape=jax.ShapeDtypeStruct((batch * L, HID), jnp.float32),
        grid=grid,
        in_specs=in_specs,
        out_specs=out_spec,
        compiler_params=pltpu.CompilerParams(dimension_semantics=("parallel",)),
    )(x_flat, bias, params["w_slab"], params["const_slab"])
    return y.reshape(batch, L, HID)


# -------------------------------- params / constants (deterministic) --------------------------------
def gen_timing_signal(length, channels, min_timescale=1.0, max_timescale=1.0e4):
    position = np.arange(length, dtype=np.float64)
    num_timescales = channels // 2
    log_inc = math.log(float(max_timescale) / float(min_timescale)) / max(num_timescales - 1, 1)
    inv_timescales = min_timescale * np.exp(np.arange(num_timescales, dtype=np.float64) * -log_inc)
    scaled_time = position[:, None] * inv_timescales[None, :]
    signal = np.concatenate([np.sin(scaled_time), np.cos(scaled_time)], axis=1)
    signal = np.pad(signal, [[0, 0], [0, channels % 2]], mode="constant")
    return jnp.asarray(signal.astype(np.float32))     # [length, channels]


def init_params(key):
    keys = iter(jax.random.split(key, 16))

    def nrm(shape, fan_in):
        return jax.random.normal(next(keys), shape, jnp.float32) / np.sqrt(fan_in)

    p = {}
    # nn.Linear weights stored pre-transposed as [in, out]; conv taps pre-flattened:
    # a PyTorch Conv1d weight W[Cout,Cin,3] maps to rows [W[:,:,0].T; W[:,:,1].T; W[:,:,2].T].
    p["emb_w"] = nrm((EMB, HID), EMB)
    p["wqkv"] = nrm((NUM_LAYERS, HID, 3 * KEY_DEPTH), HID)
    p["wo"] = nrm((NUM_LAYERS, VAL_DEPTH, HID), VAL_DEPTH)
    p["c1w"] = nrm((NUM_LAYERS, 3 * HID, FILTER), 3 * HID)
    p["c2w"] = nrm((NUM_LAYERS, 3 * FILTER, HID), 3 * FILTER)
    p["c1b"] = 0.01 * jax.random.normal(next(keys), (NUM_LAYERS, FILTER), jnp.float32)
    p["c2b"] = 0.01 * jax.random.normal(next(keys), (NUM_LAYERS, HID), jnp.float32)
    p["ln1_g"] = 1.0 + 0.1 * jax.random.normal(next(keys), (NUM_LAYERS, HID), jnp.float32)
    p["ln1_b"] = 0.1 * jax.random.normal(next(keys), (NUM_LAYERS, HID), jnp.float32)
    p["ln2_g"] = 1.0 + 0.1 * jax.random.normal(next(keys), (NUM_LAYERS, HID), jnp.float32)
    p["ln2_b"] = 0.1 * jax.random.normal(next(keys), (NUM_LAYERS, HID), jnp.float32)
    p["lnf_g"] = 1.0 + 0.1 * jax.random.normal(next(keys), (HID,), jnp.float32)
    p["lnf_b"] = 0.1 * jax.random.normal(next(keys), (HID,), jnp.float32)
    p["timing"] = gen_timing_signal(MAX_LEN, HID)[:L]

    # ---- packed fp32 weight slab [W_ROWS, 128] ----
    w_slab = np.zeros((W_ROWS, LANES), np.float32)
    w_slab[0:EMB, 0:HID] = np.asarray(p["emb_w"])
    for l in range(NUM_LAYERS):
        base = EMB + l * LAYER_ROWS
        w_slab[base + WQKV_OFF: base + WQKV_OFF + HID, 0:3 * KEY_DEPTH] = np.asarray(p["wqkv"][l])
        w_slab[base + WO_OFF: base + WO_OFF + VAL_DEPTH, 0:HID] = np.asarray(p["wo"][l])
        w_slab[base + C1W_OFF: base + C1W_OFF + 3 * HID, 0:FILTER] = np.asarray(p["c1w"][l])
        w_slab[base + C2W_OFF: base + C2W_OFF + 3 * FILTER, 0:HID] = np.asarray(p["c2w"][l])
    p["w_slab"] = jnp.asarray(w_slab)

    # ---- const slab [CONST_ROWS, 128]: batch-tiled timing + one row per small vector ----
    const = np.zeros((CONST_ROWS, LANES), np.float32)
    const[0:B * L, 0:HID] = np.tile(np.asarray(p["timing"]), (B, 1))
    for l in range(NUM_LAYERS):
        r = CONST_LAYER_R0 + l * CONST_LAYER_STRIDE
        const[r + 0, 0:HID] = np.asarray(p["ln1_g"][l])
        const[r + 1, 0:HID] = np.asarray(p["ln1_b"][l])
        const[r + 2, 0:HID] = np.asarray(p["ln2_g"][l])
        const[r + 3, 0:HID] = np.asarray(p["ln2_b"][l])
        const[r + 4, 0:FILTER] = np.asarray(p["c1b"][l])
        const[r + 5, 0:HID] = np.asarray(p["c2b"][l])
    const[CONST_FINAL_R0, 0:HID] = np.asarray(p["lnf_g"])
    const[CONST_FINAL_R0 + 1, 0:HID] = np.asarray(p["lnf_b"])
    p["const_slab"] = jnp.asarray(const)
    return p


# ------------------------------------ pure-JAX reference ------------------------------------
def _conv3_ref(x, w_flat, b):
    cin = x.shape[1]
    xp = jnp.pad(x, ((1, 1), (0, 0)))
    return (jnp.dot(xp[:-2], w_flat[:cin]) + jnp.dot(xp[1:-1], w_flat[cin:2 * cin])
            + jnp.dot(xp[2:], w_flat[2 * cin:]) + b)


def encoder_ref(inputs, mask, params):
    timing = params["timing"]
    masked = mask > 0                                  # [B, 1, L], True == padded
    ys = []
    for b in range(inputs.shape[0]):
        x = jnp.dot(inputs[b], params["emb_w"]) + timing
        for l in range(NUM_LAYERS):
            wqkv = params["wqkv"][l]
            wo = params["wo"][l]

            # multi-head self-attention (masked_fill form, per-head softmax)
            x_norm = layer_norm(x, params["ln1_g"][l][None], params["ln1_b"][l][None])
            q = jnp.dot(x_norm, wqkv[:, :KEY_DEPTH])
            k = jnp.dot(x_norm, wqkv[:, KEY_DEPTH:2 * KEY_DEPTH])
            v = jnp.dot(x_norm, wqkv[:, 2 * KEY_DEPTH:])
            heads = []
            for h in range(NUM_HEADS):
                qh = q[:, h * HEAD_DK:(h + 1) * HEAD_DK] * Q_SCALE
                kh = k[:, h * HEAD_DK:(h + 1) * HEAD_DK]
                vh = v[:, h * HEAD_DV:(h + 1) * HEAD_DV]
                logits = jnp.dot(qh, kh.T)
                logits = jnp.where(masked[b], -1e18, logits)
                heads.append(jnp.dot(jax.nn.softmax(logits, axis=-1), vh))
            x = x + jnp.dot(jnp.concatenate(heads, axis=-1), wo)

            # positionwise feed-forward (Conv1d k=3, padding='both'), relu-after-last bug kept
            x_norm = layer_norm(x, params["ln2_g"][l][None], params["ln2_b"][l][None])
            h1 = jax.nn.relu(_conv3_ref(x_norm, params["c1w"][l], params["c1b"][l][None]))
            h2 = jax.nn.relu(_conv3_ref(h1, params["c2w"][l], params["c2b"][l][None]))
            x = x + h2
        ys.append(layer_norm(x, params["lnf_g"][None], params["lnf_b"][None]))
    return jnp.stack(ys)


# ----------------------------------------- main -----------------------------------------
if __name__ == "__main__":
    key = jax.random.PRNGKey(0)
    k_in, k_par = jax.random.split(key, 2)
    params = init_params(k_par)

    inputs = jax.random.normal(k_in, (B, L, EMB), jnp.float32)
    mask_np = np.zeros((B, 1, L), np.int32)            # 1 == padded source position
    mask_np[1, 0, L - 3:] = 1
    mask = jnp.asarray(mask_np)

    y = encoder_forward(inputs, mask, params)
    y = jax.block_until_ready(y)

    y_ref = encoder_ref(inputs, mask, params)
    assert np.allclose(np.asarray(y), np.asarray(y_ref), rtol=1e-3, atol=1e-3), "y mismatch"

    print("KERNEL_OK")
</pallas_src>

<mosaic_0001>
module attributes {stable_mosaic.version = 11 : i64} {
  func.func @_probe(%arg0: memref<24x64xf32, #tpu.memory_space<vmem>>, %arg1: memref<24x64xf32, #tpu.memory_space<vmem>>, %arg2: memref<24x64xf32, #tpu.memory_space<vmem>>) attributes {dimension_semantics = [], scalar_prefetch = 0 : i64, scratch_operands = 0 : i64, tpu.core_type = #tpu.core_type<tc>} {
    %c0 = arith.constant 0 : index
    %c0_0 = arith.constant 0 : index
    %0 = vector.load %arg0[%c0, %c0_0] : memref<24x64xf32, #tpu.memory_space<vmem>>, vector<24x64xf32>
    %c1_i32 = arith.constant 1 : i32
    %1 = tpu.dynamic_rotate %0 by %c1_i32 dim 0 : vector<24x64xf32>, i32 -> vector<24x64xf32>
    %c0_1 = arith.constant 0 : index
    %c0_2 = arith.constant 0 : index
    %2 = vector.load %arg1[%c0_1, %c0_2] : memref<24x64xf32, #tpu.memory_space<vmem>>, vector<24x64xf32>
    tpu.vector_store %arg1[%c0_1, %c0_2], %1 {strides = array<i32>} : memref<24x64xf32, #tpu.memory_space<vmem>>, vector<24x64xf32>,
    %c0_3 = arith.constant 0 : index
    %c0_4 = arith.constant 0 : index
    %3 = vector.load %arg0[%c0_3, %c0_4] : memref<24x64xf32, #tpu.memory_space<vmem>>, vector<24x64xf32>
    %c23_i32 = arith.constant 23 : i32
    %4 = tpu.dynamic_rotate %3 by %c23_i32 dim 0 : vector<24x64xf32>, i32 -> vector<24x64xf32>
    %c0_5 = arith.constant 0 : index
    %c0_6 = arith.constant 0 : index
    %5 = vector.load %arg2[%c0_5, %c0_6] : memref<24x64xf32, #tpu.memory_space<vmem>>, vector<24x64xf32>
    tpu.vector_store %arg2[%c0_5, %c0_6], %4 {strides = array<i32>} : memref<24x64xf32, #tpu.memory_space<vmem>>, vector<24x64xf32>,
    return
  }
}

module attributes {stable_mosaic.version = 11 : i64} {
  func.func @encoder_kernel(%arg0: i32, %arg1: memref<24x32xf32, #tpu.memory_space<vmem>>, %arg2: memref<2x12xf32, #tpu.memory_space<vmem>>, %arg3: memref<736x128xf32, #tpu.memory_space<vmem>>, %arg4: memref<40x128xf32, #tpu.memory_space<vmem>>, %arg5: memref<24x32xf32, #tpu.memory_space<vmem>>) attributes {dimension_semantics = [#tpu.dimension_semantics<parallel>], iteration_bounds = array<i64: 1>, scalar_prefetch = 0 : i64, scratch_operands = 0 : i64, tpu.core_type = #tpu.core_type<tc>, window_params = [{transform_indices = @transform_0, window_bounds = array<i64: 24, 32>}, {transform_indices = @transform_1, window_bounds = array<i64: 2, 12>}, {pipeline_mode = #tpu.pipeline_mode<synchronous>, transform_indices = @transform_2, window_bounds = array<i64: 736, 128>}, {pipeline_mode = #tpu.pipeline_mode<synchronous>, transform_indices = @transform_3, window_bounds = array<i64: 40, 128>}, {transform_indices = @transform_4, window_bounds = array<i64: 24, 32>}]} {
    %0 = tpu.iota {dimensions = array<i32: 0>} : vector<24x1xi32>
    %c0_i32 = arith.constant 0 : i32
    %1 = vector.broadcast %c0_i32 : i32 to vector<24x1xi32>
    %2 = arith.cmpi eq, %0, %1 : vector<24x1xi32>
    %c11_i32 = arith.constant 11 : i32
    %3 = vector.broadcast %c11_i32 : i32 to vector<24x1xi32>
    %4 = arith.cmpi eq, %0, %3 : vector<24x1xi32>
    %c12_i32 = arith.constant 12 : i32
    %5 = vector.broadcast %c12_i32 : i32 to vector<24x1xi32>
    %6 = arith.cmpi eq, %0, %5 : vector<24x1xi32>
    %7 = arith.ori %2, %6 : vector<24x1xi1>
    %c23_i32 = arith.constant 23 : i32
    %8 = vector.broadcast %c23_i32 : i32 to vector<24x1xi32>
    %9 = arith.cmpi eq, %0, %8 : vector<24x1xi32>
    %10 = arith.ori %4, %9 : vector<24x1xi1>
    %cst = arith.constant 0.000000e+00 : f32
    %cst_0 = arith.constant 1.000000e+00 : f32
    %11 = vector.broadcast %cst : f32 to vector<24x1xf32>
    %12 = vector.broadcast %cst_0 : f32 to vector<24x1xf32>
    %13 = arith.select %7, %11, %12 : vector<24x1xi1>, vector<24x1xf32>
    %cst_1 = arith.constant 0.000000e+00 : f32
    %cst_2 = arith.constant 1.000000e+00 : f32
    %14 = vector.broadcast %cst_1 : f32 to vector<24x1xf32>
    %15 = vector.broadcast %cst_2 : f32 to vector<24x1xf32>
    %16 = arith.select %10, %14, %15 : vector<24x1xi1>, vector<24x1xf32>
    %c0 = arith.constant 0 : index
    %c0_3 = arith.constant 0 : index
    %17 = vector.load %arg1[%c0, %c0_3] : memref<24x32xf32, #tpu.memory_space<vmem>>, vector<24x32xf32>
    %c0_4 = arith.constant 0 : index
    %c0_5 = arith.constant 0 : index
    %18 = vector.load %arg4[%c0_4, %c0_5] : memref<40x128xf32, #tpu.memory_space<vmem>>, vector<24x32xf32>
    %c0_6 = arith.constant 0 : index
    %c0_7 = arith.constant 0 : index
    %19 = vector.load %arg3[%c0_6, %c0_7] : memref<736x128xf32, #tpu.memory_space<vmem>>, vector<32x32xf32>
    %cst_8 = arith.constant dense<0.000000e+00> : vector<24x32xf32>
    %20 = tpu.matmul %17, %19, %cst_8 {dimension_numbers = #tpu.dot_dimension_numbers<[1], [0], [0], [1], [0, 0, 1, 1], [], []>} : vector<24x32xf32>, vector<32x32xf32>, vector<24x32xf32> -> vector<24x32xf32>
    %21 = arith.addf %20, %18 : vector<24x32xf32>
    %c24 = arith.constant 24 : index
    %c0_9 = arith.constant 0 : index
    %22 = vector.load %arg4[%c24, %c0_9] : memref<40x128xf32, #tpu.memory_space<vmem>>, vector<1x32xf32>
    %c25 = arith.constant 25 : index
    %c0_10 = arith.constant 0 : index
    %23 = vector.load %arg4[%c25, %c0_10] : memref<40x128xf32, #tpu.memory_space<vmem>>, vector<1x32xf32>
    %c26 = arith.constant 26 : index
    %c0_11 = arith.constant 0 : index
    %24 = vector.load %arg4[%c26, %c0_11] : memref<40x128xf32, #tpu.memory_space<vmem>>, vector<1x32xf32>
    %c27 = arith.constant 27 : index
    %c0_12 = arith.constant 0 : index
    %25 = vector.load %arg4[%c27, %c0_12] : memref<40x128xf32, #tpu.memory_space<vmem>>, vector<1x32xf32>
    %c28 = arith.constant 28 : index
    %c0_13 = arith.constant 0 : index
    %26 = vector.load %arg4[%c28, %c0_13] : memref<40x128xf32, #tpu.memory_space<vmem>>, vector<1x64xf32>
    %c29 = arith.constant 29 : index
    %c0_14 = arith.constant 0 : index
    %27 = vector.load %arg4[%c29, %c0_14] : memref<40x128xf32, #tpu.memory_space<vmem>>, vector<1x32xf32>
    %cst_15 = arith.constant dense<0.000000e+00> : vector<24xf32>
    %28 = vector.multi_reduction <add>, %21, %cst_15 [1] : vector<24x32xf32> to vector<24xf32>
    %29 = vector.shape_cast %28 : vector<24xf32> to vector<24x1xf32>
    %cst_16 = arith.constant 3.200000e+01 : f32
    %30 = vector.broadcast %cst_16 : f32 to vector<24x1xf32>
    %31 = arith.divf %29, %30 : vector<24x1xf32>
    %32 = vector.broadcast %31 : vector<24x1xf32> to vector<24x32xf32>
    %33 = arith.subf %21, %32 : vector<24x32xf32>
    %34 = arith.mulf %33, %33 : vector<24x32xf32>
    %cst_17 = arith.constant dense<0.000000e+00> : vector<24xf32>
    %35 = vector.multi_reduction <add>, %34, %cst_17 [1] : vector<24x32xf32> to vector<24xf32>
    %36 = vector.shape_cast %35 : vector<24xf32> to vector<24x1xf32>
    %cst_18 = arith.constant 3.100000e+01 : f32
    %37 = vector.broadcast %cst_18 : f32 to vector<24x1xf32>
    %38 = arith.divf %36, %37 : vector<24x1xf32>
    %39 = vector.broadcast %22 : vector<1x32xf32> to vector<24x32xf32>
    %40 = arith.mulf %39, %33 : vector<24x32xf32>
    %41 = math.sqrt %38 : vector<24x1xf32>
    %cst_19 = arith.constant 9.99999997E-7 : f32
    %42 = vector.broadcast %cst_19 : f32 to vector<24x1xf32>
    %43 = arith.addf %41, %42 : vector<24x1xf32>
    %44 = vector.broadcast %43 : vector<24x1xf32> to vector<24x32xf32>
    %45 = arith.divf %40, %44 : vector<24x32xf32>
    %46 = vector.broadcast %23 : vector<1x32xf32> to vector<24x32xf32>
    %47 = arith.addf %45, %46 : vector<24x32xf32>
    %c32 = arith.constant 32 : index
    %c0_20 = arith.constant 0 : index
    %48 = vector.load %arg3[%c32, %c0_20] : memref<736x128xf32, #tpu.memory_space<vmem>>, vector<32x96xf32>
    %cst_21 = arith.constant dense<0.000000e+00> : vector<24x96xf32>
    %49 = tpu.matmul %47, %48, %cst_21 {dimension_numbers = #tpu.dot_dimension_numbers<[1], [0], [0], [1], [0, 0, 1, 1], [], []>} : vector<24x32xf32>, vector<32x96xf32>, vector<24x96xf32> -> vector<24x96xf32>
    %50 = vector.extract_strided_slice %49 {offsets = [0, 0], sizes = [24, 32], strides = [1, 1]} : vector<24x96xf32> to vector<24x32xf32>
    %cst_22 = arith.constant 0.353553385 : f32
    %51 = vector.broadcast %cst_22 : f32 to vector<24x32xf32>
    %52 = arith.mulf %50, %51 : vector<24x32xf32>
    %53 = vector.extract_strided_slice %49 {offsets = [0, 32], sizes = [24, 32], strides = [1, 1]} : vector<24x96xf32> to vector<24x32xf32>
    %54 = vector.extract_strided_slice %49 {offsets = [0, 64], sizes = [24, 32], strides = [1, 1]} : vector<24x96xf32> to vector<24x32xf32>
    %55 = tpu.transpose %53, [1, 0] : vector<24x32xf32> -> vector<32x24xf32>
    %c0_23 = arith.constant 0 : index
    %c0_24 = arith.constant 0 : index
    %56 = vector.load %arg2[%c0_23, %c0_24] : memref<2x12xf32, #tpu.memory_space<vmem>>, vector<1x12xf32>
    %57 = vector.extract_strided_slice %52 {offsets = [0, 0], sizes = [12, 8], strides = [1, 1]} : vector<24x32xf32> to vector<12x8xf32>
    %58 = vector.extract_strided_slice %55 {offsets = [0, 0], sizes = [8, 12], strides = [1, 1]} : vector<32x24xf32> to vector<8x12xf32>
    %cst_25 = arith.constant dense<0.000000e+00> : vector<12x12xf32>
    %59 = tpu.matmul %57, %58, %cst_25 {dimension_numbers = #tpu.dot_dimension_numbers<[1], [0], [0], [1], [0, 0, 1, 1], [], []>} : vector<12x8xf32>, vector<8x12xf32>, vector<12x12xf32> -> vector<12x12xf32>
    %60 = vector.broadcast %56 : vector<1x12xf32> to vector<12x12xf32>
    %61 = arith.addf %59, %60 : vector<12x12xf32>
    %cst_26 = arith.constant dense<0xFF800000> : vector<12xf32>
    %62 = vector.multi_reduction <maximumf>, %61, %cst_26 [1] : vector<12x12xf32> to vector<12xf32>
    %cst_27 = arith.constant 0xFF800000 : f32
    %63 = vector.broadcast %cst_27 : f32 to vector<12xf32>
    %64 = arith.maximumf %63, %62 : vector<12xf32>
    %65 = vector.shape_cast %64 : vector<12xf32> to vector<12x1xf32>
    %66 = vector.broadcast %65 : vector<12x1xf32> to vector<12x12xf32>
    %67 = arith.subf %61, %66 : vector<12x12xf32>
    %68 = math.exp %67 : vector<12x12xf32>
    %cst_28 = arith.constant dense<0.000000e+00> : vector<12xf32>
    %69 = vector.multi_reduction <add>, %68, %cst_28 [1] : vector<12x12xf32> to vector<12xf32>
    %70 = vector.shape_cast %69 : vector<12xf32> to vector<12x1xf32>
    %71 = vector.broadcast %70 : vector<12x1xf32> to vector<12x12xf32>
    %72 = arith.divf %68, %71 : vector<12x12xf32>
    %73 = vector.extract_strided_slice %54 {offsets = [0, 0], sizes = [12, 8], strides = [1, 1]} : vector<24x32xf32> to vector<12x8xf32>
    %cst_29 = arith.constant dense<0.000000e+00> : vector<12x8xf32>
    %74 = tpu.matmul %72, %73, %cst_29 {dimension_numbers = #tpu.dot_dimension_numbers<[1], [0], [0], [1], [0, 0, 1, 1], [], []>} : vector<12x12xf32>, vector<12x8xf32>, vector<12x8xf32> -> vector<12x8xf32>
    %c64 = arith.constant 64 : index
    %c0_30 = arith.constant 0 : index
    %75 = vector.load %arg3[%c64, %c0_30] : memref<736x128xf32, #tpu.memory_space<vmem>>, vector<8x32xf32>
    %cst_31 = arith.constant dense<0.000000e+00> : vector<12x32xf32>
    %76 = tpu.matmul %74, %75, %cst_31 {dimension_numbers = #tpu.dot_dimension_numbers<[1], [0], [0], [1], [0, 0, 1, 1], [], []>} : vector<12x8xf32>, vector<8x32xf32>, vector<12x32xf32> -> vector<12x32xf32>
    %77 = vector.extract_strided_slice %52 {offsets = [0, 8], sizes = [12, 8], strides = [1, 1]} : vector<24x32xf32> to vector<12x8xf32>
    %78 = vector.extract_strided_slice %55 {offsets = [8, 0], sizes = [8, 12], strides = [1, 1]} : vector<32x24xf32> to vector<8x12xf32>
    %cst_32 = arith.constant dense<0.000000e+00> : vector<12x12xf32>
    %79 = tpu.matmul %77, %78, %cst_32 {dimension_numbers = #tpu.dot_dimension_numbers<[1], [0], [0], [1], [0, 0, 1, 1], [], []>} : vector<12x8xf32>, vector<8x12xf32>, vector<12x12xf32> -> vector<12x12xf32>
    %80 = vector.broadcast %56 : vector<1x12xf32> to vector<12x12xf32>
    %81 = arith.addf %79, %80 : vector<12x12xf32>
    %cst_33 = arith.constant dense<0xFF800000> : vector<12xf32>
    %82 = vector.multi_reduction <maximumf>, %81, %cst_33 [1] : vector<12x12xf32> to vector<12xf32>
    %cst_34 = arith.constant 0xFF800000 : f32
    %83 = vector.broadcast %cst_34 : f32 to vector<12xf32>
    %84 = arith.maximumf %83, %82 : vector<12xf32>
    %85 = vector.shape_cast %84 : vector<12xf32> to vector<12x1xf32>
    %86 = vector.broadcast %85 : vector<12x1xf32> to vector<12x12xf32>
    %87 = arith.subf %81, %86 : vector<12x12xf32>
    %88 = math.exp %87 : vector<12x12xf32>
    %cst_35 = arith.constant dense<0.000000e+00> : vector<12xf32>
    %89 = vector.multi_reduction <add>, %88, %cst_35 [1] : vector<12x12xf32> to vector<12xf32>
    %90 = vector.shape_cast %89 : vector<12xf32> to vector<12x1xf32>
    %91 = vector.broadcast %90 : vector<12x1xf32> to vector<12x12xf32>
    %92 = arith.divf %88, %91 : vector<12x12xf32>
    %93 = vector.extract_strided_slice %54 {offsets = [0, 8], sizes = [12, 8], strides = [1, 1]} : vector<24x32xf32> to vector<12x8xf32>
    %cst_36 = arith.constant dense<0.000000e+00> : vector<12x8xf32>
    %94 = tpu.matmul %92, %93, %cst_36 {dimension_numbers = #tpu.dot_dimension_numbers<[1], [0], [0], [1], [0, 0, 1, 1], [], []>} : vector<12x12xf32>, vector<12x8xf32>, vector<12x8xf32> -> vector<12x8xf32>
    %c72 = arith.constant 72 : index
    %c0_37 = arith.constant 0 : index
    %95 = vector.load %arg3[%c72, %c0_37] : memref<736x128xf32, #tpu.memory_space<vmem>>, vector<8x32xf32>
    %cst_38 = arith.constant dense<0.000000e+00> : vector<12x32xf32>
    %96 = tpu.matmul %94, %95, %cst_38 {dimension_numbers = #tpu.dot_dimension_numbers<[1], [0], [0], [1], [0, 0, 1, 1], [], []>} : vector<12x8xf32>, vector<8x32xf32>, vector<12x32xf32> -> vector<12x32xf32>
    %97 = arith.addf %76, %96 : vector<12x32xf32>
    %98 = vector.extract_strided_slice %52 {offsets = [0, 16], sizes = [12, 8], strides = [1, 1]} : vector<24x32xf32> to vector<12x8xf32>
    %99 = vector.extract_strided_slice %55 {offsets = [16, 0], sizes = [8, 12], strides = [1, 1]} : vector<32x24xf32> to vector<8x12xf32>
    %cst_39 = arith.constant dense<0.000000e+00> : vector<12x12xf32>
    %100 = tpu.matmul %98, %99, %cst_39 {dimension_numbers = #tpu.dot_dimension_numbers<[1], [0], [0], [1], [0, 0, 1, 1], [], []>} : vector<12x8xf32>, vector<8x12xf32>, vector<12x12xf32> -> vector<12x12xf32>
    %101 = vector.broadcast %56 : vector<1x12xf32> to vector<12x12xf32>
    %102 = arith.addf %100, %101 : vector<12x12xf32>
    %cst_40 = arith.constant dense<0xFF800000> : vector<12xf32>
    %103 = vector.multi_reduction <maximumf>, %102, %cst_40 [1] : vector<12x12xf32> to vector<12xf32>
    %cst_41 = arith.constant 0xFF800000 : f32
    %104 = vector.broadcast %cst_41 : f32 to vector<12xf32>
    %105 = arith.maximumf %104, %103 : vector<12xf32>
    %106 = vector.shape_cast %105 : vector<12xf32> to vector<12x1xf32>
    %107 = vector.broadcast %106 : vector<12x1xf32> to vector<12x12xf32>
    %108 = arith.subf %102, %107 : vector<12x12xf32>
    %109 = math.exp %108 : vector<12x12xf32>
    %cst_42 = arith.constant dense<0.000000e+00> : vector<12xf32>
    %110 = vector.multi_reduction <add>, %109, %cst_42 [1] : vector<12x12xf32> to vector<12xf32>
    %111 = vector.shape_cast %110 : vector<12xf32> to vector<12x1xf32>
    %112 = vector.broadcast %111 : vector<12x1xf32> to vector<12x12xf32>
    %113 = arith.divf %109, %112 : vector<12x12xf32>
    %114 = vector.extract_strided_slice %54 {offsets = [0, 16], sizes = [12, 8], strides = [1, 1]} : vector<24x32xf32> to vector<12x8xf32>
    %cst_43 = arith.constant dense<0.000000e+00> : vector<12x8xf32>
    %115 = tpu.matmul %113, %114, %cst_43 {dimension_numbers = #tpu.dot_dimension_numbers<[1], [0], [0], [1], [0, 0, 1, 1], [], []>} : vector<12x12xf32>, vector<12x8xf32>, vector<12x8xf32> -> vector<12x8xf32>
    %c80 = arith.constant 80 : index
    %c0_44 = arith.constant 0 : index
    %116 = vector.load %arg3[%c80, %c0_44] : memref<736x128xf32, #tpu.memory_space<vmem>>, vector<8x32xf32>
    %cst_45 = arith.constant dense<0.000000e+00> : vector<12x32xf32>
    %117 = tpu.matmul %115, %116, %cst_45 {dimension_numbers = #tpu.dot_dimension_numbers<[1], [0], [0], [1], [0, 0, 1, 1], [], []>} : vector<12x8xf32>, vector<8x32xf32>, vector<12x32xf32> -> vector<12x32xf32>
    %118 = arith.addf %97, %117 : vector<12x32xf32>
    %119 = vector.extract_strided_slice %52 {offsets = [0, 24], sizes = [12, 8], strides = [1, 1]} : vector<24x32xf32> to vector<12x8xf32>
    %120 = vector.extract_strided_slice %55 {offsets = [24, 0], sizes = [8, 12], strides = [1, 1]} : vector<32x24xf32> to vector<8x12xf32>
    %cst_46 = arith.constant dense<0.000000e+00> : vector<12x12xf32>
    %121 = tpu.matmul %119, %120, %cst_46 {dimension_numbers = #tpu.dot_dimension_numbers<[1], [0], [0], [1], [0, 0, 1, 1], [], []>} : vector<12x8xf32>, vector<8x12xf32>, vector<12x12xf32> -> vector<12x12xf32>
    %122 = vector.broadcast %56 : vector<1x12xf32> to vector<12x12xf32>
    %123 = arith.addf %121, %122 : vector<12x12xf32>
    %cst_47 = arith.constant dense<0xFF800000> : vector<12xf32>
    %124 = vector.multi_reduction <maximumf>, %123, %cst_47 [1] : vector<12x12xf32> to vector<12xf32>
    %cst_48 = arith.constant 0xFF800000 : f32
    %125 = vector.broadcast %cst_48 : f32 to vector<12xf32>
    %126 = arith.maximumf %125, %124 : vector<12xf32>
    %127 = vector.shape_cast %126 : vector<12xf32> to vector<12x1xf32>
    %128 = vector.broadcast %127 : vector<12x1xf32> to vector<12x12xf32>
    %129 = arith.subf %123, %128 : vector<12x12xf32>
    %130 = math.exp %129 : vector<12x12xf32>
    %cst_49 = arith.constant dense<0.000000e+00> : vector<12xf32>
    %131 = vector.multi_reduction <add>, %130, %cst_49 [1] : vector<12x12xf32> to vector<12xf32>
    %132 = vector.shape_cast %131 : vector<12xf32> to vector<12x1xf32>
    %133 = vector.broadcast %132 : vector<12x1xf32> to vector<12x12xf32>
    %134 = arith.divf %130, %133 : vector<12x12xf32>
    %135 = vector.extract_strided_slice %54 {offsets = [0, 24], sizes = [12, 8], strides = [1, 1]} : vector<24x32xf32> to vector<12x8xf32>
    %cst_50 = arith.constant dense<0.000000e+00> : vector<12x8xf32>
    %136 = tpu.matmul %134, %135, %cst_50 {dimension_numbers = #tpu.dot_dimension_numbers<[1], [0], [0], [1], [0, 0, 1, 1], [], []>} : vector<12x12xf32>, vector<12x8xf32>, vector<12x8xf32> -> vector<12x8xf32>
    %c88 = arith.constant 88 : index
    %c0_51 = arith.constant 0 : index
    %137 = vector.load %arg3[%c88, %c0_51] : memref<736x128xf32, #tpu.memory_space<vmem>>, vector<8x32xf32>
    %cst_52 = arith.constant dense<0.000000e+00> : vector<12x32xf32>
    %138 = tpu.matmul %136, %137, %cst_52 {dimension_numbers = #tpu.dot_dimension_numbers<[1], [0], [0], [1], [0, 0, 1, 1], [], []>} : vector<12x8xf32>, vector<8x32xf32>, vector<12x32xf32> -> vector<12x32xf32>
    %139 = arith.addf %118, %138 : vector<12x32xf32>
    %c1 = arith.constant 1 : index
    %c0_53 = arith.constant 0 : index
    %140 = vector.load %arg2[%c1, %c0_53] : memref<2x12xf32, #tpu.memory_space<vmem>>, vector<1x12xf32>
    %141 = vector.extract_strided_slice %52 {offsets = [12, 0], sizes = [12, 8], strides = [1, 1]} : vector<24x32xf32> to vector<12x8xf32>
    %142 = vector.extract_strided_slice %55 {offsets = [0, 12], sizes = [8, 12], strides = [1, 1]} : vector<32x24xf32> to vector<8x12xf32>
    %cst_54 = arith.constant dense<0.000000e+00> : vector<12x12xf32>
    %143 = tpu.matmul %141, %142, %cst_54 {dimension_numbers = #tpu.dot_dimension_numbers<[1], [0], [0], [1], [0, 0, 1, 1], [], []>} : vector<12x8xf32>, vector<8x12xf32>, vector<12x12xf32> -> vector<12x12xf32>
    %144 = vector.broadcast %140 : vector<1x12xf32> to vector<12x12xf32>
    %145 = arith.addf %143, %144 : vector<12x12xf32>
    %cst_55 = arith.constant dense<0xFF800000> : vector<12xf32>
    %146 = vector.multi_reduction <maximumf>, %145, %cst_55 [1] : vector<12x12xf32> to vector<12xf32>
    %cst_56 = arith.constant 0xFF800000 : f32
    %147 = vector.broadcast %cst_56 : f32 to vector<12xf32>
    %148 = arith.maximumf %147, %146 : vector<12xf32>
    %149 = vector.shape_cast %148 : vector<12xf32> to vector<12x1xf32>
    %150 = vector.broadcast %149 : vector<12x1xf32> to vector<12x12xf32>
    %151 = arith.subf %145, %150 : vector<12x12xf32>
    %152 = math.exp %151 : vector<12x12xf32>
    %cst_57 = arith.constant dense<0.000000e+00> : vector<12xf32>
    %153 = vector.multi_reduction <add>, %152, %cst_57 [1] : vector<12x12xf32> to vector<12xf32>
    %154 = vector.shape_cast %153 : vector<12xf32> to vector<12x1xf32>
    %155 = vector.broadcast %154 : vector<12x1xf32> to vector<12x12xf32>
    %156 = arith.divf %152, %155 : vector<12x12xf32>
    %157 = vector.extract_strided_slice %54 {offsets = [12, 0], sizes = [12, 8], strides = [1, 1]} : vector<24x32xf32> to vector<12x8xf32>
    %cst_58 = arith.constant dense<0.000000e+00> : vector<12x8xf32>
    %158 = tpu.matmul %156, %157, %cst_58 {dimension_numbers = #tpu.dot_dimension_numbers<[1], [0], [0], [1], [0, 0, 1, 1], [], []>} : vector<12x12xf32>, vector<12x8xf32>, vector<12x8xf32> -> vector<12x8xf32>
    %c64_59 = arith.constant 64 : index
    %c0_60 = arith.constant 0 : index
    %159 = vector.load %arg3[%c64_59, %c0_60] : memref<736x128xf32, #tpu.memory_space<vmem>>, vector<8x32xf32>
    %cst_61 = arith.constant dense<0.000000e+00> : vector<12x32xf32>
    %160 = tpu.matmul %158, %159, %cst_61 {dimension_numbers = #tpu.dot_dimension_numbers<[1], [0], [0], [1], [0, 0, 1, 1], [], []>} : vector<12x8xf32>, vector<8x32xf32>, vector<12x32xf32> -> vector<12x32xf32>
    %161 = vector.extract_strided_slice %52 {offsets = [12, 8], sizes = [12, 8], strides = [1, 1]} : vector<24x32xf32> to vector<12x8xf32>
    %162 = vector.extract_strided_slice %55 {offsets = [8, 12], sizes = [8, 12], strides = [1, 1]} : vector<32x24xf32> to vector<8x12xf32>
    %cst_62 = arith.constant dense<0.000000e+00> : vector<12x12xf32>
    %163 = tpu.matmul %161, %162, %cst_62 {dimension_numbers = #tpu.dot_dimension_numbers<[1], [0], [0], [1], [0, 0, 1, 1], [], []>} : vector<12x8xf32>, vector<8x12xf32>, vector<12x12xf32> -> vector<12x12xf32>
    %164 = vector.broadcast %140 : vector<1x12xf32> to vector<12x12xf32>
    %165 = arith.addf %163, %164 : vector<12x12xf32>
    %cst_63 = arith.constant dense<0xFF800000> : vector<12xf32>
    %166 = vector.multi_reduction <maximumf>, %165, %cst_63 [1] : vector<12x12xf32> to vector<12xf32>
    %cst_64 = arith.constant 0xFF800000 : f32
    %167 = vector.broadcast %cst_64 : f32 to vector<12xf32>
    %168 = arith.maximumf %167, %166 : vector<12xf32>
    %169 = vector.shape_cast %168 : vector<12xf32> to vector<12x1xf32>
    %170 = vector.broadcast %169 : vector<12x1xf32> to vector<12x12xf32>
    %171 = arith.subf %165, %170 : vector<12x12xf32>
    %172 = math.exp %171 : vector<12x12xf32>
    %cst_65 = arith.constant dense<0.000000e+00> : vector<12xf32>
    %173 = vector.multi_reduction <add>, %172, %cst_65 [1] : vector<12x12xf32> to vector<12xf32>
    %174 = vector.shape_cast %173 : vector<12xf32> to vector<12x1xf32>
    %175 = vector.broadcast %174 : vector<12x1xf32> to vector<12x12xf32>
    %176 = arith.divf %172, %175 : vector<12x12xf32>
    %177 = vector.extract_strided_slice %54 {offsets = [12, 8], sizes = [12, 8], strides = [1, 1]} : vector<24x32xf32> to vector<12x8xf32>
    %cst_66 = arith.constant dense<0.000000e+00> : vector<12x8xf32>
    %178 = tpu.matmul %176, %177, %cst_66 {dimension_numbers = #tpu.dot_dimension_numbers<[1], [0], [0], [1], [0, 0, 1, 1], [], []>} : vector<12x12xf32>, vector<12x8xf32>, vector<12x8xf32> -> vector<12x8xf32>
    %c72_67 = arith.constant 72 : index
    %c0_68 = arith.constant 0 : index
    %179 = vector.load %arg3[%c72_67, %c0_68] : memref<736x128xf32, #tpu.memory_space<vmem>>, vector<8x32xf32>
    %cst_69 = arith.constant dense<0.000000e+00> : vector<12x32xf32>
    %180 = tpu.matmul %178, %179, %cst_69 {dimension_numbers = #tpu.dot_dimension_numbers<[1], [0], [0], [1], [0, 0, 1, 1], [], []>} : vector<12x8xf32>, vector<8x32xf32>, vector<12x32xf32> -> vector<12x32xf32>
    %181 = arith.addf %160, %180 : vector<12x32xf32>
    %182 = vector.extract_strided_slice %52 {offsets = [12, 16], sizes = [12, 8], strides = [1, 1]} : vector<24x32xf32> to vector<12x8xf32>
    %183 = vector.extract_strided_slice %55 {offsets = [16, 12], sizes = [8, 12], strides = [1, 1]} : vector<32x24xf32> to vector<8x12xf32>
    %cst_70 = arith.constant dense<0.000000e+00> : vector<12x12xf32>
    %184 = tpu.matmul %182, %183, %cst_70 {dimension_numbers = #tpu.dot_dimension_numbers<[1], [0], [0], [1], [0, 0, 1, 1], [], []>} : vector<12x8xf32>, vector<8x12xf32>, vector<12x12xf32> -> vector<12x12xf32>
    %185 = vector.broadcast %140 : vector<1x12xf32> to vector<12x12xf32>
    %186 = arith.addf %184, %185 : vector<12x12xf32>
    %cst_71 = arith.constant dense<0xFF800000> : vector<12xf32>
    %187 = vector.multi_reduction <maximumf>, %186, %cst_71 [1] : vector<12x12xf32> to vector<12xf32>
    %cst_72 = arith.constant 0xFF800000 : f32
    %188 = vector.broadcast %cst_72 : f32 to vector<12xf32>
    %189 = arith.maximumf %188, %187 : vector<12xf32>
    %190 = vector.shape_cast %189 : vector<12xf32> to vector<12x1xf32>
    %191 = vector.broadcast %190 : vector<12x1xf32> to vector<12x12xf32>
    %192 = arith.subf %186, %191 : vector<12x12xf32>
    %193 = math.exp %192 : vector<12x12xf32>
    %cst_73 = arith.constant dense<0.000000e+00> : vector<12xf32>
    %194 = vector.multi_reduction <add>, %193, %cst_73 [1] : vector<12x12xf32> to vector<12xf32>
    %195 = vector.shape_cast %194 : vector<12xf32> to vector<12x1xf32>
    %196 = vector.broadcast %195 : vector<12x1xf32> to vector<12x12xf32>
    %197 = arith.divf %193, %196 : vector<12x12xf32>
    %198 = vector.extract_strided_slice %54 {offsets = [12, 16], sizes = [12, 8], strides = [1, 1]} : vector<24x32xf32> to vector<12x8xf32>
    %cst_74 = arith.constant dense<0.000000e+00> : vector<12x8xf32>
    %199 = tpu.matmul %197, %198, %cst_74 {dimension_numbers = #tpu.dot_dimension_numbers<[1], [0], [0], [1], [0, 0, 1, 1], [], []>} : vector<12x12xf32>, vector<12x8xf32>, vector<12x8xf32> -> vector<12x8xf32>
    %c80_75 = arith.constant 80 : index
    %c0_76 = arith.constant 0 : index
    %200 = vector.load %arg3[%c80_75, %c0_76] : memref<736x128xf32, #tpu.memory_space<vmem>>, vector<8x32xf32>
    %cst_77 = arith.constant dense<0.000000e+00> : vector<12x32xf32>
    %201 = tpu.matmul %199, %200, %cst_77 {dimension_numbers = #tpu.dot_dimension_numbers<[1], [0], [0], [1], [0, 0, 1, 1], [], []>} : vector<12x8xf32>, vector<8x32xf32>, vector<12x32xf32> -> vector<12x32xf32>
    %202 = arith.addf %181, %201 : vector<12x32xf32>
    %203 = vector.extract_strided_slice %52 {offsets = [12, 24], sizes = [12, 8], strides = [1, 1]} : vector<24x32xf32> to vector<12x8xf32>
    %204 = vector.extract_strided_slice %55 {offsets = [24, 12], sizes = [8, 12], strides = [1, 1]} : vector<32x24xf32> to vector<8x12xf32>
    %cst_78 = arith.constant dense<0.000000e+00> : vector<12x12xf32>
    %205 = tpu.matmul %203, %204, %cst_78 {dimension_numbers = #tpu.dot_dimension_numbers<[1], [0], [0], [1], [0, 0, 1, 1], [], []>} : vector<12x8xf32>, vector<8x12xf32>, vector<12x12xf32> -> vector<12x12xf32>
    %206 = vector.broadcast %140 : vector<1x12xf32> to vector<12x12xf32>
    %207 = arith.addf %205, %206 : vector<12x12xf32>
    %cst_79 = arith.constant dense<0xFF800000> : vector<12xf32>
    %208 = vector.multi_reduction <maximumf>, %207, %cst_79 [1] : vector<12x12xf32> to vector<12xf32>
    %cst_80 = arith.constant 0xFF800000 : f32
    %209 = vector.broadcast %cst_80 : f32 to vector<12xf32>
    %210 = arith.maximumf %209, %208 : vector<12xf32>
    %211 = vector.shape_cast %210 : vector<12xf32> to vector<12x1xf32>
    %212 = vector.broadcast %211 : vector<12x1xf32> to vector<12x12xf32>
    %213 = arith.subf %207, %212 : vector<12x12xf32>
    %214 = math.exp %213 : vector<12x12xf32>
    %cst_81 = arith.constant dense<0.000000e+00> : vector<12xf32>
    %215 = vector.multi_reduction <add>, %214, %cst_81 [1] : vector<12x12xf32> to vector<12xf32>
    %216 = vector.shape_cast %215 : vector<12xf32> to vector<12x1xf32>
    %217 = vector.broadcast %216 : vector<12x1xf32> to vector<12x12xf32>
    %218 = arith.divf %214, %217 : vector<12x12xf32>
    %219 = vector.extract_strided_slice %54 {offsets = [12, 24], sizes = [12, 8], strides = [1, 1]} : vector<24x32xf32> to vector<12x8xf32>
    %cst_82 = arith.constant dense<0.000000e+00> : vector<12x8xf32>
    %220 = tpu.matmul %218, %219, %cst_82 {dimension_numbers = #tpu.dot_dimension_numbers<[1], [0], [0], [1], [0, 0, 1, 1], [], []>} : vector<12x12xf32>, vector<12x8xf32>, vector<12x8xf32> -> vector<12x8xf32>
    %c88_83 = arith.constant 88 : index
    %c0_84 = arith.constant 0 : index
    %221 = vector.load %arg3[%c88_83, %c0_84] : memref<736x128xf32, #tpu.memory_space<vmem>>, vector<8x32xf32>
    %cst_85 = arith.constant dense<0.000000e+00> : vector<12x32xf32>
    %222 = tpu.matmul %220, %221, %cst_85 {dimension_numbers = #tpu.dot_dimension_numbers<[1], [0], [0], [1], [0, 0, 1, 1], [], []>} : vector<12x8xf32>, vector<8x32xf32>, vector<12x32xf32> -> vector<12x32xf32>
    %223 = arith.addf %202, %222 : vector<12x32xf32>
    %224 = tpu.concatenate %139, %223 in 0 : vector<12x32xf32>, vector<12x32xf32> -> vector<24x32xf32>
    %225 = arith.addf %21, %224 : vector<24x32xf32>
    %cst_86 = arith.constant dense<0.000000e+00> : vector<24xf32>
    %226 = vector.multi_reduction <add>, %225, %cst_86 [1] : vector<24x32xf32> to vector<24xf32>
    %227 = vector.shape_cast %226 : vector<24xf32> to vector<24x1xf32>
    %cst_87 = arith.constant 3.200000e+01 : f32
    %228 = vector.broadcast %cst_87 : f32 to vector<24x1xf32>
    %229 = arith.divf %227, %228 : vector<24x1xf32>
    %230 = vector.broadcast %229 : vector<24x1xf32> to vector<24x32xf32>
    %231 = arith.subf %225, %230 : vector<24x32xf32>
    %232 = arith.mulf %231, %231 : vector<24x32xf32>
    %cst_88 = arith.constant dense<0.000000e+00> : vector<24xf32>
    %233 = vector.multi_reduction <add>, %232, %cst_88 [1] : vector<24x32xf32> to vector<24xf32>
    %234 = vector.shape_cast %233 : vector<24xf32> to vector<24x1xf32>
    %cst_89 = arith.constant 3.100000e+01 : f32
    %235 = vector.broadcast %cst_89 : f32 to vector<24x1xf32>
    %236 = arith.divf %234, %235 : vector<24x1xf32>
    %237 = vector.broadcast %24 : vector<1x32xf32> to vector<24x32xf32>
    %238 = arith.mulf %237, %231 : vector<24x32xf32>
    %239 = math.sqrt %236 : vector<24x1xf32>
    %cst_90 = arith.constant 9.99999997E-7 : f32
    %240 = vector.broadcast %cst_90 : f32 to vector<24x1xf32>
    %241 = arith.addf %239, %240 : vector<24x1xf32>
    %242 = vector.broadcast %241 : vector<24x1xf32> to vector<24x32xf32>
    %243 = arith.divf %238, %242 : vector<24x32xf32>
    %244 = vector.broadcast %25 : vector<1x32xf32> to vector<24x32xf32>
    %245 = arith.addf %243, %244 : vector<24x32xf32>
    %c96 = arith.constant 96 : index
    %c0_91 = arith.constant 0 : index
    %246 = vector.load %arg3[%c96, %c0_91] : memref<736x128xf32, #tpu.memory_space<vmem>>, vector<32x64xf32>
    %c128 = arith.constant 128 : index
    %c0_92 = arith.constant 0 : index
    %247 = vector.load %arg3[%c128, %c0_92] : memref<736x128xf32, #tpu.memory_space<vmem>>, vector<32x64xf32>
    %c160 = arith.constant 160 : index
    %c0_93 = arith.constant 0 : index
    %248 = vector.load %arg3[%c160, %c0_93] : memref<736x128xf32, #tpu.memory_space<vmem>>, vector<32x64xf32>
    %cst_94 = arith.constant 0.000000e+00 : f32
    %249 = vector.broadcast %cst_94 : f32 to vector<1x32xf32>
    %250 = vector.extract_strided_slice %245 {offsets = [0, 0], sizes = [23, 32], strides = [1, 1]} : vector<24x32xf32> to vector<23x32xf32>
    %251 = tpu.concatenate %249, %250 in 0 : vector<1x32xf32>, vector<23x32xf32> -> vector<24x32xf32>
    %252 = vector.broadcast %13 : vector<24x1xf32> to vector<24x32xf32>
    %253 = arith.mulf %251, %252 : vector<24x32xf32>
    %cst_95 = arith.constant 0.000000e+00 : f32
    %254 = vector.broadcast %cst_95 : f32 to vector<1x32xf32>
    %255 = vector.extract_strided_slice %245 {offsets = [1, 0], sizes = [23, 32], strides = [1, 1]} : vector<24x32xf32> to vector<23x32xf32>
    %256 = tpu.concatenate %255, %254 in 0 : vector<23x32xf32>, vector<1x32xf32> -> vector<24x32xf32>
    %257 = vector.broadcast %16 : vector<24x1xf32> to vector<24x32xf32>
    %258 = arith.mulf %256, %257 : vector<24x32xf32>
    %cst_96 = arith.constant dense<0.000000e+00> : vector<24x64xf32>
    %259 = tpu.matmul %253, %246, %cst_96 {dimension_numbers = #tpu.dot_dimension_numbers<[1], [0], [0], [1], [0, 0, 1, 1], [], []>} : vector<24x32xf32>, vector<32x64xf32>, vector<24x64xf32> -> vector<24x64xf32>
    %cst_97 = arith.constant dense<0.000000e+00> : vector<24x64xf32>
    %260 = tpu.matmul %245, %247, %cst_97 {dimension_numbers = #tpu.dot_dimension_numbers<[1], [0], [0], [1], [0, 0, 1, 1], [], []>} : vector<24x32xf32>, vector<32x64xf32>, vector<24x64xf32> -> vector<24x64xf32>
    %261 = arith.addf %259, %260 : vector<24x64xf32>
    %cst_98 = arith.constant dense<0.000000e+00> : vector<24x64xf32>
    %262 = tpu.matmul %258, %248, %cst_98 {dimension_numbers = #tpu.dot_dimension_numbers<[1], [0], [0], [1], [0, 0, 1, 1], [], []>} : vector<24x32xf32>, vector<32x64xf32>, vector<24x64xf32> -> vector<24x64xf32>
    %263 = arith.addf %261, %262 : vector<24x64xf32>
    %264 = vector.broadcast %26 : vector<1x64xf32> to vector<24x64xf32>
    %265 = arith.addf %263, %264 : vector<24x64xf32>
    %cst_99 = arith.constant 0.000000e+00 : f32
    %266 = vector.broadcast %cst_99 : f32 to vector<24x64xf32>
    %267 = arith.maximumf %265, %266 : vector<24x64xf32>
    %c192 = arith.constant 192 : index
    %c0_100 = arith.constant 0 : index
    %268 = vector.load %arg3[%c192, %c0_100] : memref<736x128xf32, #tpu.memory_space<vmem>>, vector<64x32xf32>
    %c256 = arith.constant 256 : index
    %c0_101 = arith.constant 0 : index
    %269 = vector.load %arg3[%c256, %c0_101] : memref<736x128xf32, #tpu.memory_space<vmem>>, vector<64x32xf32>
    %c320 = arith.constant 320 : index
    %c0_102 = arith.constant 0 : index
    %270 = vector.load %arg3[%c320, %c0_102] : memref<736x128xf32, #tpu.memory_space<vmem>>, vector<64x32xf32>
    %cst_103 = arith.constant 0.000000e+00 : f32
    %271 = vector.broadcast %cst_103 : f32 to vector<1x64xf32>
    %272 = vector.extract_strided_slice %267 {offsets = [0, 0], sizes = [23, 64], strides = [1, 1]} : vector<24x64xf32> to vector<23x64xf32>
    %273 = tpu.concatenate %271, %272 in 0 : vector<1x64xf32>, vector<23x64xf32> -> vector<24x64xf32>
    %274 = vector.broadcast %13 : vector<24x1xf32> to vector<24x64xf32>
    %275 = arith.mulf %273, %274 : vector<24x64xf32>
    %cst_104 = arith.constant 0.000000e+00 : f32
    %276 = vector.broadcast %cst_104 : f32 to vector<1x64xf32>
    %277 = vector.extract_strided_slice %267 {offsets = [1, 0], sizes = [23, 64], strides = [1, 1]} : vector<24x64xf32> to vector<23x64xf32>
    %278 = tpu.concatenate %277, %276 in 0 : vector<23x64xf32>, vector<1x64xf32> -> vector<24x64xf32>
    %279 = vector.broadcast %16 : vector<24x1xf32> to vector<24x64xf32>
    %280 = arith.mulf %278, %279 : vector<24x64xf32>
    %cst_105 = arith.constant dense<0.000000e+00> : vector<24x32xf32>
    %281 = tpu.matmul %275, %268, %cst_105 {dimension_numbers = #tpu.dot_dimension_numbers<[1], [0], [0], [1], [0, 0, 1, 1], [], []>} : vector<24x64xf32>, vector<64x32xf32>, vector<24x32xf32> -> vector<24x32xf32>
    %cst_106 = arith.constant dense<0.000000e+00> : vector<24x32xf32>
    %282 = tpu.matmul %267, %269, %cst_106 {dimension_numbers = #tpu.dot_dimension_numbers<[1], [0], [0], [1], [0, 0, 1, 1], [], []>} : vector<24x64xf32>, vector<64x32xf32>, vector<24x32xf32> -> vector<24x32xf32>
    %283 = arith.addf %281, %282 : vector<24x32xf32>
    %cst_107 = arith.constant dense<0.000000e+00> : vector<24x32xf32>
    %284 = tpu.matmul %280, %270, %cst_107 {dimension_numbers = #tpu.dot_dimension_numbers<[1], [0], [0], [1], [0, 0, 1, 1], [], []>} : vector<24x64xf32>, vector<64x32xf32>, vector<24x32xf32> -> vector<24x32xf32>
    %285 = arith.addf %283, %284 : vector<24x32xf32>
    %286 = vector.broadcast %27 : vector<1x32xf32> to vector<24x32xf32>
    %287 = arith.addf %285, %286 : vector<24x32xf32>
    %cst_108 = arith.constant 0.000000e+00 : f32
    %288 = vector.broadcast %cst_108 : f32 to vector<24x32xf32>
    %289 = arith.maximumf %287, %288 : vector<24x32xf32>
    %290 = arith.addf %225, %289 : vector<24x32xf32>
    %c30 = arith.constant 30 : index
    %c0_109 = arith.constant 0 : index
    %291 = vector.load %arg4[%c30, %c0_109] : memref<40x128xf32, #tpu.memory_space<vmem>>, vector<1x32xf32>
    %c31 = arith.constant 31 : index
    %c0_110 = arith.constant 0 : index
    %292 = vector.load %arg4[%c31, %c0_110] : memref<40x128xf32, #tpu.memory_space<vmem>>, vector<1x32xf32>
    %c32_111 = arith.constant 32 : index
    %c0_112 = arith.constant 0 : index
    %293 = vector.load %arg4[%c32_111, %c0_112] : memref<40x128xf32, #tpu.memory_space<vmem>>, vector<1x32xf32>
    %c33 = arith.constant 33 : index
    %c0_113 = arith.constant 0 : index
    %294 = vector.load %arg4[%c33, %c0_113] : memref<40x128xf32, #tpu.memory_space<vmem>>, vector<1x32xf32>
    %c34 = arith.constant 34 : index
    %c0_114 = arith.constant 0 : index
    %295 = vector.load %arg4[%c34, %c0_114] : memref<40x128xf32, #tpu.memory_space<vmem>>, vector<1x64xf32>
    %c35 = arith.constant 35 : index
    %c0_115 = arith.constant 0 : index
    %296 = vector.load %arg4[%c35, %c0_115] : memref<40x128xf32, #tpu.memory_space<vmem>>, vector<1x32xf32>
    %cst_116 = arith.constant dense<0.000000e+00> : vector<24xf32>
    %297 = vector.multi_reduction <add>, %290, %cst_116 [1] : vector<24x32xf32> to vector<24xf32>
    %298 = vector.shape_cast %297 : vector<24xf32> to vector<24x1xf32>
    %cst_117 = arith.constant 3.200000e+01 : f32
    %299 = vector.broadcast %cst_117 : f32 to vector<24x1xf32>
    %300 = arith.divf %298, %299 : vector<24x1xf32>
    %301 = vector.broadcast %300 : vector<24x1xf32> to vector<24x32xf32>
    %302 = arith.subf %290, %301 : vector<24x32xf32>
    %303 = arith.mulf %302, %302 : vector<24x32xf32>
    %cst_118 = arith.constant dense<0.000000e+00> : vector<24xf32>
    %304 = vector.multi_reduction <add>, %303, %cst_118 [1] : vector<24x32xf32> to vector<24xf32>
    %305 = vector.shape_cast %304 : vector<24xf32> to vector<24x1xf32>
    %cst_119 = arith.constant 3.100000e+01 : f32
    %306 = vector.broadcast %cst_119 : f32 to vector<24x1xf32>
    %307 = arith.divf %305, %306 : vector<24x1xf32>
    %308 = vector.broadcast %291 : vector<1x32xf32> to vector<24x32xf32>
    %309 = arith.mulf %308, %302 : vector<24x32xf32>
    %310 = math.sqrt %307 : vector<24x1xf32>
    %cst_120 = arith.constant 9.99999997E-7 : f32
    %311 = vector.broadcast %cst_120 : f32 to vector<24x1xf32>
    %312 = arith.addf %310, %311 : vector<24x1xf32>
    %313 = vector.broadcast %312 : vector<24x1xf32> to vector<24x32xf32>
    %314 = arith.divf %309, %313 : vector<24x32xf32>
    %315 = vector.broadcast %292 : vector<1x32xf32> to vector<24x32xf32>
    %316 = arith.addf %314, %315 : vector<24x32xf32>
    %c384 = arith.constant 384 : index
    %c0_121 = arith.constant 0 : index
    %317 = vector.load %arg3[%c384, %c0_121] : memref<736x128xf32, #tpu.memory_space<vmem>>, vector<32x96xf32>
    %cst_122 = arith.constant dense<0.000000e+00> : vector<24x96xf32>
    %318 = tpu.matmul %316, %317, %cst_122 {dimension_numbers = #tpu.dot_dimension_numbers<[1], [0], [0], [1], [0, 0, 1, 1], [], []>} : vector<24x32xf32>, vector<32x96xf32>, vector<24x96xf32> -> vector<24x96xf32>
    %319 = vector.extract_strided_slice %318 {offsets = [0, 0], sizes = [24, 32], strides = [1, 1]} : vector<24x96xf32> to vector<24x32xf32>
    %cst_123 = arith.constant 0.353553385 : f32
    %320 = vector.broadcast %cst_123 : f32 to vector<24x32xf32>
    %321 = arith.mulf %319, %320 : vector<24x32xf32>
    %322 = vector.extract_strided_slice %318 {offsets = [0, 32], sizes = [24, 32], strides = [1, 1]} : vector<24x96xf32> to vector<24x32xf32>
    %323 = vector.extract_strided_slice %318 {offsets = [0, 64], sizes = [24, 32], strides = [1, 1]} : vector<24x96xf32> to vector<24x32xf32>
    %324 = tpu.transpose %322, [1, 0] : vector<24x32xf32> -> vector<32x24xf32>
    %c0_124 = arith.constant 0 : index
    %c0_125 = arith.constant 0 : index
    %325 = vector.load %arg2[%c0_124, %c0_125] : memref<2x12xf32, #tpu.memory_space<vmem>>, vector<1x12xf32>
    %326 = vector.extract_strided_slice %321 {offsets = [0, 0], sizes = [12, 8], strides = [1, 1]} : vector<24x32xf32> to vector<12x8xf32>
    %327 = vector.extract_strided_slice %324 {offsets = [0, 0], sizes = [8, 12], strides = [1, 1]} : vector<32x24xf32> to vector<8x12xf32>
    %cst_126 = arith.constant dense<0.000000e+00> : vector<12x12xf32>
    %328 = tpu.matmul %326, %327, %cst_126 {dimension_numbers = #tpu.dot_dimension_numbers<[1], [0], [0], [1], [0, 0, 1, 1], [], []>} : vector<12x8xf32>, vector<8x12xf32>, vector<12x12xf32> -> vector<12x12xf32>
    %329 = vector.broadcast %325 : vector<1x12xf32> to vector<12x12xf32>
    %330 = arith.addf %328, %329 : vector<12x12xf32>
    %cst_127 = arith.constant dense<0xFF800000> : vector<12xf32>
    %331 = vector.multi_reduction <maximumf>, %330, %cst_127 [1] : vector<12x12xf32> to vector<12xf32>
    %cst_128 = arith.constant 0xFF800000 : f32
    %332 = vector.broadcast %cst_128 : f32 to vector<12xf32>
    %333 = arith.maximumf %332, %331 : vector<12xf32>
    %334 = vector.shape_cast %333 : vector<12xf32> to vector<12x1xf32>
    %335 = vector.broadcast %334 : vector<12x1xf32> to vector<12x12xf32>
    %336 = arith.subf %330, %335 : vector<12x12xf32>
    %337 = math.exp %336 : vector<12x12xf32>
    %cst_129 = arith.constant dense<0.000000e+00> : vector<12xf32>
    %338 = vector.multi_reduction <add>, %337, %cst_129 [1] : vector<12x12xf32> to vector<12xf32>
    %339 = vector.shape_cast %338 : vector<12xf32> to vector<12x1xf32>
    %340 = vector.broadcast %339 : vector<12x1xf32> to vector<12x12xf32>
    %341 = arith.divf %337, %340 : vector<12x12xf32>
    %342 = vector.extract_strided_slice %323 {offsets = [0, 0], sizes = [12, 8], strides = [1, 1]} : vector<24x32xf32> to vector<12x8xf32>
    %cst_130 = arith.constant dense<0.000000e+00> : vector<12x8xf32>
    %343 = tpu.matmul %341, %342, %cst_130 {dimension_numbers = #tpu.dot_dimension_numbers<[1], [0], [0], [1], [0, 0, 1, 1], [], []>} : vector<12x12xf32>, vector<12x8xf32>, vector<12x8xf32> -> vector<12x8xf32>
    %c416 = arith.constant 416 : index
    %c0_131 = arith.constant 0 : index
    %344 = vector.load %arg3[%c416, %c0_131] : memref<736x128xf32, #tpu.memory_space<vmem>>, vector<8x32xf32>
    %cst_132 = arith.constant dense<0.000000e+00> : vector<12x32xf32>
    %345 = tpu.matmul %343, %344, %cst_132 {dimension_numbers = #tpu.dot_dimension_numbers<[1], [0], [0], [1], [0, 0, 1, 1], [], []>} : vector<12x8xf32>, vector<8x32xf32>, vector<12x32xf32> -> vector<12x32xf32>
    %346 = vector.extract_strided_slice %321 {offsets = [0, 8], sizes = [12, 8], strides = [1, 1]} : vector<24x32xf32> to vector<12x8xf32>
    %347 = vector.extract_strided_slice %324 {offsets = [8, 0], sizes = [8, 12], strides = [1, 1]} : vector<32x24xf32> to vector<8x12xf32>
    %cst_133 = arith.constant dense<0.000000e+00> : vector<12x12xf32>
    %348 = tpu.matmul %346, %347, %cst_133 {dimension_numbers = #tpu.dot_dimension_numbers<[1], [0], [0], [1], [0, 0, 1, 1], [], []>} : vector<12x8xf32>, vector<8x12xf32>, vector<12x12xf32> -> vector<12x12xf32>
    %349 = vector.broadcast %325 : vector<1x12xf32> to vector<12x12xf32>
    %350 = arith.addf %348, %349 : vector<12x12xf32>
    %cst_134 = arith.constant dense<0xFF800000> : vector<12xf32>
    %351 = vector.multi_reduction <maximumf>, %350, %cst_134 [1] : vector<12x12xf32> to vector<12xf32>
    %cst_135 = arith.constant 0xFF800000 : f32
    %352 = vector.broadcast %cst_135 : f32 to vector<12xf32>
    %353 = arith.maximumf %352, %351 : vector<12xf32>
    %354 = vector.shape_cast %353 : vector<12xf32> to vector<12x1xf32>
    %355 = vector.broadcast %354 : vector<12x1xf32> to vector<12x12xf32>
    %356 = arith.subf %350, %355 : vector<12x12xf32>
    %357 = math.exp %356 : vector<12x12xf32>
    %cst_136 = arith.constant dense<0.000000e+00> : vector<12xf32>
    %358 = vector.multi_reduction <add>, %357, %cst_136 [1] : vector<12x12xf32> to vector<12xf32>
    %359 = vector.shape_cast %358 : vector<12xf32> to vector<12x1xf32>
    %360 = vector.broadcast %359 : vector<12x1xf32> to vector<12x12xf32>
    %361 = arith.divf %357, %360 : vector<12x12xf32>
    %362 = vector.extract_strided_slice %323 {offsets = [0, 8], sizes = [12, 8], strides = [1, 1]} : vector<24x32xf32> to vector<12x8xf32>
    %cst_137 = arith.constant dense<0.000000e+00> : vector<12x8xf32>
    %363 = tpu.matmul %361, %362, %cst_137 {dimension_numbers = #tpu.dot_dimension_numbers<[1], [0], [0], [1], [0, 0, 1, 1], [], []>} : vector<12x12xf32>, vector<12x8xf32>, vector<12x8xf32> -> vector<12x8xf32>
    %c424 = arith.constant 424 : index
    %c0_138 = arith.constant 0 : index
    %364 = vector.load %arg3[%c424, %c0_138] : memref<736x128xf32, #tpu.memory_space<vmem>>, vector<8x32xf32>
    %cst_139 = arith.constant dense<0.000000e+00> : vector<12x32xf32>
    %365 = tpu.matmul %363, %364, %cst_139 {dimension_numbers = #tpu.dot_dimension_numbers<[1], [0], [0], [1], [0, 0, 1, 1], [], []>} : vector<12x8xf32>, vector<8x32xf32>, vector<12x32xf32> -> vector<12x32xf32>
    %366 = arith.addf %345, %365 : vector<12x32xf32>
    %367 = vector.extract_strided_slice %321 {offsets = [0, 16], sizes = [12, 8], strides = [1, 1]} : vector<24x32xf32> to vector<12x8xf32>
    %368 = vector.extract_strided_slice %324 {offsets = [16, 0], sizes = [8, 12], strides = [1, 1]} : vector<32x24xf32> to vector<8x12xf32>
    %cst_140 = arith.constant dense<0.000000e+00> : vector<12x12xf32>
    %369 = tpu.matmul %367, %368, %cst_140 {dimension_numbers = #tpu.dot_dimension_numbers<[1], [0], [0], [1], [0, 0, 1, 1], [], []>} : vector<12x8xf32>, vector<8x12xf32>, vector<12x12xf32> -> vector<12x12xf32>
    %370 = vector.broadcast %325 : vector<1x12xf32> to vector<12x12xf32>
    %371 = arith.addf %369, %370 : vector<12x12xf32>
    %cst_141 = arith.constant dense<0xFF800000> : vector<12xf32>
    %372 = vector.multi_reduction <maximumf>, %371, %cst_141 [1] : vector<12x12xf32> to vector<12xf32>
    %cst_142 = arith.constant 0xFF800000 : f32
    %373 = vector.broadcast %cst_142 : f32 to vector<12xf32>
    %374 = arith.maximumf %373, %372 : vector<12xf32>
    %375 = vector.shape_cast %374 : vector<12xf32> to vector<12x1xf32>
    %376 = vector.broadcast %375 : vector<12x1xf32> to vector<12x12xf32>
    %377 = arith.subf %371, %376 : vector<12x12xf32>
    %378 = math.exp %377 : vector<12x12xf32>
    %cst_143 = arith.constant dense<0.000000e+00> : vector<12xf32>
    %379 = vector.multi_reduction <add>, %378, %cst_143 [1] : vector<12x12xf32> to vector<12xf32>
    %380 = vector.shape_cast %379 : vector<12xf32> to vector<12x1xf32>
    %381 = vector.broadcast %380 : vector<12x1xf32> to vector<12x12xf32>
    %382 = arith.divf %378, %381 : vector<12x12xf32>
    %383 = vector.extract_strided_slice %323 {offsets = [0, 16], sizes = [12, 8], strides = [1, 1]} : vector<24x32xf32> to vector<12x8xf32>
    %cst_144 = arith.constant dense<0.000000e+00> : vector<12x8xf32>
    %384 = tpu.matmul %382, %383, %cst_144 {dimension_numbers = #tpu.dot_dimension_numbers<[1], [0], [0], [1], [0, 0, 1, 1], [], []>} : vector<12x12xf32>, vector<12x8xf32>, vector<12x8xf32> -> vector<12x8xf32>
    %c432 = arith.constant 432 : index
    %c0_145 = arith.constant 0 : index
    %385 = vector.load %arg3[%c432, %c0_145] : memref<736x128xf32, #tpu.memory_space<vmem>>, vector<8x32xf32>
    %cst_146 = arith.constant dense<0.000000e+00> : vector<12x32xf32>
    %386 = tpu.matmul %384, %385, %cst_146 {dimension_numbers = #tpu.dot_dimension_numbers<[1], [0], [0], [1], [0, 0, 1, 1], [], []>} : vector<12x8xf32>, vector<8x32xf32>, vector<12x32xf32> -> vector<12x32xf32>
    %387 = arith.addf %366, %386 : vector<12x32xf32>
    %388 = vector.extract_strided_slice %321 {offsets = [0, 24], sizes = [12, 8], strides = [1, 1]} : vector<24x32xf32> to vector<12x8xf32>
    %389 = vector.extract_strided_slice %324 {offsets = [24, 0], sizes = [8, 12], strides = [1, 1]} : vector<32x24xf32> to vector<8x12xf32>
    %cst_147 = arith.constant dense<0.000000e+00> : vector<12x12xf32>
    %390 = tpu.matmul %388, %389, %cst_147 {dimension_numbers = #tpu.dot_dimension_numbers<[1], [0], [0], [1], [0, 0, 1, 1], [], []>} : vector<12x8xf32>, vector<8x12xf32>, vector<12x12xf32> -> vector<12x12xf32>
    %391 = vector.broadcast %325 : vector<1x12xf32> to vector<12x12xf32>
    %392 = arith.addf %390, %391 : vector<12x12xf32>
    %cst_148 = arith.constant dense<0xFF800000> : vector<12xf32>
    %393 = vector.multi_reduction <maximumf>, %392, %cst_148 [1] : vector<12x12xf32> to vector<12xf32>
    %cst_149 = arith.constant 0xFF800000 : f32
    %394 = vector.broadcast %cst_149 : f32 to vector<12xf32>
    %395 = arith.maximumf %394, %393 : vector<12xf32>
    %396 = vector.shape_cast %395 : vector<12xf32> to vector<12x1xf32>
    %397 = vector.broadcast %396 : vector<12x1xf32> to vector<12x12xf32>
    %398 = arith.subf %392, %397 : vector<12x12xf32>
    %399 = math.exp %398 : vector<12x12xf32>
    %cst_150 = arith.constant dense<0.000000e+00> : vector<12xf32>
    %400 = vector.multi_reduction <add>, %399, %cst_150 [1] : vector<12x12xf32> to vector<12xf32>
    %401 = vector.shape_cast %400 : vector<12xf32> to vector<12x1xf32>
    %402 = vector.broadcast %401 : vector<12x1xf32> to vector<12x12xf32>
    %403 = arith.divf %399, %402 : vector<12x12xf32>
    %404 = vector.extract_strided_slice %323 {offsets = [0, 24], sizes = [12, 8], strides = [1, 1]} : vector<24x32xf32> to vector<12x8xf32>
    %cst_151 = arith.constant dense<0.000000e+00> : vector<12x8xf32>
    %405 = tpu.matmul %403, %404, %cst_151 {dimension_numbers = #tpu.dot_dimension_numbers<[1], [0], [0], [1], [0, 0, 1, 1], [], []>} : vector<12x12xf32>, vector<12x8xf32>, vector<12x8xf32> -> vector<12x8xf32>
    %c440 = arith.constant 440 : index
    %c0_152 = arith.constant 0 : index
    %406 = vector.load %arg3[%c440, %c0_152] : memref<736x128xf32, #tpu.memory_space<vmem>>, vector<8x32xf32>
    %cst_153 = arith.constant dense<0.000000e+00> : vector<12x32xf32>
    %407 = tpu.matmul %405, %406, %cst_153 {dimension_numbers = #tpu.dot_dimension_numbers<[1], [0], [0], [1], [0, 0, 1, 1], [], []>} : vector<12x8xf32>, vector<8x32xf32>, vector<12x32xf32> -> vector<12x32xf32>
    %408 = arith.addf %387, %407 : vector<12x32xf32>
    %c1_154 = arith.constant 1 : index
    %c0_155 = arith.constant 0 : index
    %409 = vector.load %arg2[%c1_154, %c0_155] : memref<2x12xf32, #tpu.memory_space<vmem>>, vector<1x12xf32>
    %410 = vector.extract_strided_slice %321 {offsets = [12, 0], sizes = [12, 8], strides = [1, 1]} : vector<24x32xf32> to vector<12x8xf32>
    %411 = vector.extract_strided_slice %324 {offsets = [0, 12], sizes = [8, 12], strides = [1, 1]} : vector<32x24xf32> to vector<8x12xf32>
    %cst_156 = arith.constant dense<0.000000e+00> : vector<12x12xf32>
    %412 = tpu.matmul %410, %411, %cst_156 {dimension_numbers = #tpu.dot_dimension_numbers<[1], [0], [0], [1], [0, 0, 1, 1], [], []>} : vector<12x8xf32>, vector<8x12xf32>, vector<12x12xf32> -> vector<12x12xf32>
    %413 = vector.broadcast %409 : vector<1x12xf32> to vector<12x12xf32>
    %414 = arith.addf %412, %413 : vector<12x12xf32>
    %cst_157 = arith.constant dense<0xFF800000> : vector<12xf32>
    %415 = vector.multi_reduction <maximumf>, %414, %cst_157 [1] : vector<12x12xf32> to vector<12xf32>
    %cst_158 = arith.constant 0xFF800000 : f32
    %416 = vector.broadcast %cst_158 : f32 to vector<12xf32>
    %417 = arith.maximumf %416, %415 : vector<12xf32>
    %418 = vector.shape_cast %417 : vector<12xf32> to vector<12x1xf32>
    %419 = vector.broadcast %418 : vector<12x1xf32> to vector<12x12xf32>
    %420 = arith.subf %414, %419 : vector<12x12xf32>
    %421 = math.exp %420 : vector<12x12xf32>
    %cst_159 = arith.constant dense<0.000000e+00> : vector<12xf32>
    %422 = vector.multi_reduction <add>, %421, %cst_159 [1] : vector<12x12xf32> to vector<12xf32>
    %423 = vector.shape_cast %422 : vector<12xf32> to vector<12x1xf32>
    %424 = vector.broadcast %423 : vector<12x1xf32> to vector<12x12xf32>
    %425 = arith.divf %421, %424 : vector<12x12xf32>
    %426 = vector.extract_strided_slice %323 {offsets = [12, 0], sizes = [12, 8], strides = [1, 1]} : vector<24x32xf32> to vector<12x8xf32>
    %cst_160 = arith.constant dense<0.000000e+00> : vector<12x8xf32>
    %427 = tpu.matmul %425, %426, %cst_160 {dimension_numbers = #tpu.dot_dimension_numbers<[1], [0], [0], [1], [0, 0, 1, 1], [], []>} : vector<12x12xf32>, vector<12x8xf32>, vector<12x8xf32> -> vector<12x8xf32>
    %c416_161 = arith.constant 416 : index
    %c0_162 = arith.constant 0 : index
    %428 = vector.load %arg3[%c416_161, %c0_162] : memref<736x128xf32, #tpu.memory_space<vmem>>, vector<8x32xf32>
    %cst_163 = arith.constant dense<0.000000e+00> : vector<12x32xf32>
    %429 = tpu.matmul %427, %428, %cst_163 {dimension_numbers = #tpu.dot_dimension_numbers<[1], [0], [0], [1], [0, 0, 1, 1], [], []>} : vector<12x8xf32>, vector<8x32xf32>, vector<12x32xf32> -> vector<12x32xf32>
    %430 = vector.extract_strided_slice %321 {offsets = [12, 8], sizes = [12, 8], strides = [1, 1]} : vector<24x32xf32> to vector<12x8xf32>
    %431 = vector.extract_strided_slice %324 {offsets = [8, 12], sizes = [8, 12], strides = [1, 1]} : vector<32x24xf32> to vector<8x12xf32>
    %cst_164 = arith.constant dense<0.000000e+00> : vector<12x12xf32>
    %432 = tpu.matmul %430, %431, %cst_164 {dimension_numbers = #tpu.dot_dimension_numbers<[1], [0], [0], [1], [0, 0, 1, 1], [], []>} : vector<12x8xf32>, vector<8x12xf32>, vector<12x12xf32> -> vector<12x12xf32>
    %433 = vector.broadcast %409 : vector<1x12xf32> to vector<12x12xf32>
    %434 = arith.addf %432, %433 : vector<12x12xf32>
    %cst_165 = arith.constant dense<0xFF800000> : vector<12xf32>
    %435 = vector.multi_reduction <maximumf>, %434, %cst_165 [1] : vector<12x12xf32> to vector<12xf32>
    %cst_166 = arith.constant 0xFF800000 : f32
    %436 = vector.broadcast %cst_166 : f32 to vector<12xf32>
    %437 = arith.maximumf %436, %435 : vector<12xf32>
    %438 = vector.shape_cast %437 : vector<12xf32> to vector<12x1xf32>
    %439 = vector.broadcast %438 : vector<12x1xf32> to vector<12x12xf32>
    %440 = arith.subf %434, %439 : vector<12x12xf32>
    %441 = math.exp %440 : vector<12x12xf32>
    %cst_167 = arith.constant dense<0.000000e+00> : vector<12xf32>
    %442 = vector.multi_reduction <add>, %441, %cst_167 [1] : vector<12x12xf32> to vector<12xf32>
    %443 = vector.shape_cast %442 : vector<12xf32> to vector<12x1xf32>
    %444 = vector.broadcast %443 : vector<12x1xf32> to vector<12x12xf32>
    %445 = arith.divf %441, %444 : vector<12x12xf32>
    %446 = vector.extract_strided_slice %323 {offsets = [12, 8], sizes = [12, 8], strides = [1, 1]} : vector<24x32xf32> to vector<12x8xf32>
    %cst_168 = arith.constant dense<0.000000e+00> : vector<12x8xf32>
    %447 = tpu.matmul %445, %446, %cst_168 {dimension_numbers = #tpu.dot_dimension_numbers<[1], [0], [0], [1], [0, 0, 1, 1], [], []>} : vector<12x12xf32>, vector<12x8xf32>, vector<12x8xf32> -> vector<12x8xf32>
    %c424_169 = arith.constant 424 : index
    %c0_170 = arith.constant 0 : index
    %448 = vector.load %arg3[%c424_169, %c0_170] : memref<736x128xf32, #tpu.memory_space<vmem>>, vector<8x32xf32>
    %cst_171 = arith.constant dense<0.000000e+00> : vector<12x32xf32>
    %449 = tpu.matmul %447, %448, %cst_171 {dimension_numbers = #tpu.dot_dimension_numbers<[1], [0], [0], [1], [0, 0, 1, 1], [], []>} : vector<12x8xf32>, vector<8x32xf32>, vector<12x32xf32> -> vector<12x32xf32>
    %450 = arith.addf %429, %449 : vector<12x32xf32>
    %451 = vector.extract_strided_slice %321 {offsets = [12, 16], sizes = [12, 8], strides = [1, 1]} : vector<24x32xf32> to vector<12x8xf32>
    %452 = vector.extract_strided_slice %324 {offsets = [16, 12], sizes = [8, 12], strides = [1, 1]} : vector<32x24xf32> to vector<8x12xf32>
    %cst_172 = arith.constant dense<0.000000e+00> : vector<12x12xf32>
    %453 = tpu.matmul %451, %452, %cst_172 {dimension_numbers = #tpu.dot_dimension_numbers<[1], [0], [0], [1], [0, 0, 1, 1], [], []>} : vector<12x8xf32>, vector<8x12xf32>, vector<12x12xf32> -> vector<12x12xf32>
    %454 = vector.broadcast %409 : vector<1x12xf32> to vector<12x12xf32>
    %455 = arith.addf %453, %454 : vector<12x12xf32>
    %cst_173 = arith.constant dense<0xFF800000> : vector<12xf32>
    %456 = vector.multi_reduction <maximumf>, %455, %cst_173 [1] : vector<12x12xf32> to vector<12xf32>
    %cst_174 = arith.constant 0xFF800000 : f32
    %457 = vector.broadcast %cst_174 : f32 to vector<12xf32>
    %458 = arith.maximumf %457, %456 : vector<12xf32>
    %459 = vector.shape_cast %458 : vector<12xf32> to vector<12x1xf32>
    %460 = vector.broadcast %459 : vector<12x1xf32> to vector<12x12xf32>
    %461 = arith.subf %455, %460 : vector<12x12xf32>
    %462 = math.exp %461 : vector<12x12xf32>
    %cst_175 = arith.constant dense<0.000000e+00> : vector<12xf32>
    %463 = vector.multi_reduction <add>, %462, %cst_175 [1] : vector<12x12xf32> to vector<12xf32>
    %464 = vector.shape_cast %463 : vector<12xf32> to vector<12x1xf32>
    %465 = vector.broadcast %464 : vector<12x1xf32> to vector<12x12xf32>
    %466 = arith.divf %462, %465 : vector<12x12xf32>
    %467 = vector.extract_strided_slice %323 {offsets = [12, 16], sizes = [12, 8], strides = [1, 1]} : vector<24x32xf32> to vector<12x8xf32>
    %cst_176 = arith.constant dense<0.000000e+00> : vector<12x8xf32>
    %468 = tpu.matmul %466, %467, %cst_176 {dimension_numbers = #tpu.dot_dimension_numbers<[1], [0], [0], [1], [0, 0, 1, 1], [], []>} : vector<12x12xf32>, vector<12x8xf32>, vector<12x8xf32> -> vector<12x8xf32>
    %c432_177 = arith.constant 432 : index
    %c0_178 = arith.constant 0 : index
    %469 = vector.load %arg3[%c432_177, %c0_178] : memref<736x128xf32, #tpu.memory_space<vmem>>, vector<8x32xf32>
    %cst_179 = arith.constant dense<0.000000e+00> : vector<12x32xf32>
    %470 = tpu.matmul %468, %469, %cst_179 {dimension_numbers = #tpu.dot_dimension_numbers<[1], [0], [0], [1], [0, 0, 1, 1], [], []>} : vector<12x8xf32>, vector<8x32xf32>, vector<12x32xf32> -> vector<12x32xf32>
    %471 = arith.addf %450, %470 : vector<12x32xf32>
    %472 = vector.extract_strided_slice %321 {offsets = [12, 24], sizes = [12, 8], strides = [1, 1]} : vector<24x32xf32> to vector<12x8xf32>
    %473 = vector.extract_strided_slice %324 {offsets = [24, 12], sizes = [8, 12], strides = [1, 1]} : vector<32x24xf32> to vector<8x12xf32>
    %cst_180 = arith.constant dense<0.000000e+00> : vector<12x12xf32>
    %474 = tpu.matmul %472, %473, %cst_180 {dimension_numbers = #tpu.dot_dimension_numbers<[1], [0], [0], [1], [0, 0, 1, 1], [], []>} : vector<12x8xf32>, vector<8x12xf32>, vector<12x12xf32> -> vector<12x12xf32>
    %475 = vector.broadcast %409 : vector<1x12xf32> to vector<12x12xf32>
    %476 = arith.addf %474, %475 : vector<12x12xf32>
    %cst_181 = arith.constant dense<0xFF800000> : vector<12xf32>
    %477 = vector.multi_reduction <maximumf>, %476, %cst_181 [1] : vector<12x12xf32> to vector<12xf32>
    %cst_182 = arith.constant 0xFF800000 : f32
    %478 = vector.broadcast %cst_182 : f32 to vector<12xf32>
    %479 = arith.maximumf %478, %477 : vector<12xf32>
    %480 = vector.shape_cast %479 : vector<12xf32> to vector<12x1xf32>
    %481 = vector.broadcast %480 : vector<12x1xf32> to vector<12x12xf32>
    %482 = arith.subf %476, %481 : vector<12x12xf32>
    %483 = math.exp %482 : vector<12x12xf32>
    %cst_183 = arith.constant dense<0.000000e+00> : vector<12xf32>
    %484 = vector.multi_reduction <add>, %483, %cst_183 [1] : vector<12x12xf32> to vector<12xf32>
    %485 = vector.shape_cast %484 : vector<12xf32> to vector<12x1xf32>
    %486 = vector.broadcast %485 : vector<12x1xf32> to vector<12x12xf32>
    %487 = arith.divf %483, %486 : vector<12x12xf32>
    %488 = vector.extract_strided_slice %323 {offsets = [12, 24], sizes = [12, 8], strides = [1, 1]} : vector<24x32xf32> to vector<12x8xf32>
    %cst_184 = arith.constant dense<0.000000e+00> : vector<12x8xf32>
    %489 = tpu.matmul %487, %488, %cst_184 {dimension_numbers = #tpu.dot_dimension_numbers<[1], [0], [0], [1], [0, 0, 1, 1], [], []>} : vector<12x12xf32>, vector<12x8xf32>, vector<12x8xf32> -> vector<12x8xf32>
    %c440_185 = arith.constant 440 : index
    %c0_186 = arith.constant 0 : index
    %490 = vector.load %arg3[%c440_185, %c0_186] : memref<736x128xf32, #tpu.memory_space<vmem>>, vector<8x32xf32>
    %cst_187 = arith.constant dense<0.000000e+00> : vector<12x32xf32>
    %491 = tpu.matmul %489, %490, %cst_187 {dimension_numbers = #tpu.dot_dimension_numbers<[1], [0], [0], [1], [0, 0, 1, 1], [], []>} : vector<12x8xf32>, vector<8x32xf32>, vector<12x32xf32> -> vector<12x32xf32>
    %492 = arith.addf %471, %491 : vector<12x32xf32>
    %493 = tpu.concatenate %408, %492 in 0 : vector<12x32xf32>, vector<12x32xf32> -> vector<24x32xf32>
    %494 = arith.addf %290, %493 : vector<24x32xf32>
    %cst_188 = arith.constant dense<0.000000e+00> : vector<24xf32>
    %495 = vector.multi_reduction <add>, %494, %cst_188 [1] : vector<24x32xf32> to vector<24xf32>
    %496 = vector.shape_cast %495 : vector<24xf32> to vector<24x1xf32>
    %cst_189 = arith.constant 3.200000e+01 : f32
    %497 = vector.broadcast %cst_189 : f32 to vector<24x1xf32>
    %498 = arith.divf %496, %497 : vector<24x1xf32>
    %499 = vector.broadcast %498 : vector<24x1xf32> to vector<24x32xf32>
    %500 = arith.subf %494, %499 : vector<24x32xf32>
    %501 = arith.mulf %500, %500 : vector<24x32xf32>
    %cst_190 = arith.constant dense<0.000000e+00> : vector<24xf32>
    %502 = vector.multi_reduction <add>, %501, %cst_190 [1] : vector<24x32xf32> to vector<24xf32>
    %503 = vector.shape_cast %502 : vector<24xf32> to vector<24x1xf32>
    %cst_191 = arith.constant 3.100000e+01 : f32
    %504 = vector.broadcast %cst_191 : f32 to vector<24x1xf32>
    %505 = arith.divf %503, %504 : vector<24x1xf32>
    %506 = vector.broadcast %293 : vector<1x32xf32> to vector<24x32xf32>
    %507 = arith.mulf %506, %500 : vector<24x32xf32>
    %508 = math.sqrt %505 : vector<24x1xf32>
    %cst_192 = arith.constant 9.99999997E-7 : f32
    %509 = vector.broadcast %cst_192 : f32 to vector<24x1xf32>
    %510 = arith.addf %508, %509 : vector<24x1xf32>
    %511 = vector.broadcast %510 : vector<24x1xf32> to vector<24x32xf32>
    %512 = arith.divf %507, %511 : vector<24x32xf32>
    %513 = vector.broadcast %294 : vector<1x32xf32> to vector<24x32xf32>
    %514 = arith.addf %512, %513 : vector<24x32xf32>
    %c448 = arith.constant 448 : index
    %c0_193 = arith.constant 0 : index
    %515 = vector.load %arg3[%c448, %c0_193] : memref<736x128xf32, #tpu.memory_space<vmem>>, vector<32x64xf32>
    %c480 = arith.constant 480 : index
    %c0_194 = arith.constant 0 : index
    %516 = vector.load %arg3[%c480, %c0_194] : memref<736x128xf32, #tpu.memory_space<vmem>>, vector<32x64xf32>
    %c512 = arith.constant 512 : index
    %c0_195 = arith.constant 0 : index
    %517 = vector.load %arg3[%c512, %c0_195] : memref<736x128xf32, #tpu.memory_space<vmem>>, vector<32x64xf32>
    %cst_196 = arith.constant 0.000000e+00 : f32
    %518 = vector.broadcast %cst_196 : f32 to vector<1x32xf32>
    %519 = vector.extract_strided_slice %514 {offsets = [0, 0], sizes = [23, 32], strides = [1, 1]} : vector<24x32xf32> to vector<23x32xf32>
    %520 = tpu.concatenate %518, %519 in 0 : vector<1x32xf32>, vector<23x32xf32> -> vector<24x32xf32>
    %521 = vector.broadcast %13 : vector<24x1xf32> to vector<24x32xf32>
    %522 = arith.mulf %520, %521 : vector<24x32xf32>
    %cst_197 = arith.constant 0.000000e+00 : f32
    %523 = vector.broadcast %cst_197 : f32 to vector<1x32xf32>
    %524 = vector.extract_strided_slice %514 {offsets = [1, 0], sizes = [23, 32], strides = [1, 1]} : vector<24x32xf32> to vector<23x32xf32>
    %525 = tpu.concatenate %524, %523 in 0 : vector<23x32xf32>, vector<1x32xf32> -> vector<24x32xf32>
    %526 = vector.broadcast %16 : vector<24x1xf32> to vector<24x32xf32>
    %527 = arith.mulf %525, %526 : vector<24x32xf32>
    %cst_198 = arith.constant dense<0.000000e+00> : vector<24x64xf32>
    %528 = tpu.matmul %522, %515, %cst_198 {dimension_numbers = #tpu.dot_dimension_numbers<[1], [0], [0], [1], [0, 0, 1, 1], [], []>} : vector<24x32xf32>, vector<32x64xf32>, vector<24x64xf32> -> vector<24x64xf32>
    %cst_199 = arith.constant dense<0.000000e+00> : vector<24x64xf32>
    %529 = tpu.matmul %514, %516, %cst_199 {dimension_numbers = #tpu.dot_dimension_numbers<[1], [0], [0], [1], [0, 0, 1, 1], [], []>} : vector<24x32xf32>, vector<32x64xf32>, vector<24x64xf32> -> vector<24x64xf32>
    %530 = arith.addf %528, %529 : vector<24x64xf32>
    %cst_200 = arith.constant dense<0.000000e+00> : vector<24x64xf32>
    %531 = tpu.matmul %527, %517, %cst_200 {dimension_numbers = #tpu.dot_dimension_numbers<[1], [0], [0], [1], [0, 0, 1, 1], [], []>} : vector<24x32xf32>, vector<32x64xf32>, vector<24x64xf32> -> vector<24x64xf32>
    %532 = arith.addf %530, %531 : vector<24x64xf32>
    %533 = vector.broadcast %295 : vector<1x64xf32> to vector<24x64xf32>
    %534 = arith.addf %532, %533 : vector<24x64xf32>
    %cst_201 = arith.constant 0.000000e+00 : f32
    %535 = vector.broadcast %cst_201 : f32 to vector<24x64xf32>
    %536 = arith.maximumf %534, %535 : vector<24x64xf32>
    %c544 = arith.constant 544 : index
    %c0_202 = arith.constant 0 : index
    %537 = vector.load %arg3[%c544, %c0_202] : memref<736x128xf32, #tpu.memory_space<vmem>>, vector<64x32xf32>
    %c608 = arith.constant 608 : index
    %c0_203 = arith.constant 0 : index
    %538 = vector.load %arg3[%c608, %c0_203] : memref<736x128xf32, #tpu.memory_space<vmem>>, vector<64x32xf32>
    %c672 = arith.constant 672 : index
    %c0_204 = arith.constant 0 : index
    %539 = vector.load %arg3[%c672, %c0_204] : memref<736x128xf32, #tpu.memory_space<vmem>>, vector<64x32xf32>
    %cst_205 = arith.constant 0.000000e+00 : f32
    %540 = vector.broadcast %cst_205 : f32 to vector<1x64xf32>
    %541 = vector.extract_strided_slice %536 {offsets = [0, 0], sizes = [23, 64], strides = [1, 1]} : vector<24x64xf32> to vector<23x64xf32>
    %542 = tpu.concatenate %540, %541 in 0 : vector<1x64xf32>, vector<23x64xf32> -> vector<24x64xf32>
    %543 = vector.broadcast %13 : vector<24x1xf32> to vector<24x64xf32>
    %544 = arith.mulf %542, %543 : vector<24x64xf32>
    %cst_206 = arith.constant 0.000000e+00 : f32
    %545 = vector.broadcast %cst_206 : f32 to vector<1x64xf32>
    %546 = vector.extract_strided_slice %536 {offsets = [1, 0], sizes = [23, 64], strides = [1, 1]} : vector<24x64xf32> to vector<23x64xf32>
    %547 = tpu.concatenate %546, %545 in 0 : vector<23x64xf32>, vector<1x64xf32> -> vector<24x64xf32>
    %548 = vector.broadcast %16 : vector<24x1xf32> to vector<24x64xf32>
    %549 = arith.mulf %547, %548 : vector<24x64xf32>
    %cst_207 = arith.constant dense<0.000000e+00> : vector<24x32xf32>
    %550 = tpu.matmul %544, %537, %cst_207 {dimension_numbers = #tpu.dot_dimension_numbers<[1], [0], [0], [1], [0, 0, 1, 1], [], []>} : vector<24x64xf32>, vector<64x32xf32>, vector<24x32xf32> -> vector<24x32xf32>
    %cst_208 = arith.constant dense<0.000000e+00> : vector<24x32xf32>
    %551 = tpu.matmul %536, %538, %cst_208 {dimension_numbers = #tpu.dot_dimension_numbers<[1], [0], [0], [1], [0, 0, 1, 1], [], []>} : vector<24x64xf32>, vector<64x32xf32>, vector<24x32xf32> -> vector<24x32xf32>
    %552 = arith.addf %550, %551 : vector<24x32xf32>
    %cst_209 = arith.constant dense<0.000000e+00> : vector<24x32xf32>
    %553 = tpu.matmul %549, %539, %cst_209 {dimension_numbers = #tpu.dot_dimension_numbers<[1], [0], [0], [1], [0, 0, 1, 1], [], []>} : vector<24x64xf32>, vector<64x32xf32>, vector<24x32xf32> -> vector<24x32xf32>
    %554 = arith.addf %552, %553 : vector<24x32xf32>
    %555 = vector.broadcast %296 : vector<1x32xf32> to vector<24x32xf32>
    %556 = arith.addf %554, %555 : vector<24x32xf32>
    %cst_210 = arith.constant 0.000000e+00 : f32
    %557 = vector.broadcast %cst_210 : f32 to vector<24x32xf32>
    %558 = arith.maximumf %556, %557 : vector<24x32xf32>
    %559 = arith.addf %494, %558 : vector<24x32xf32>
    %c36 = arith.constant 36 : index
    %c0_211 = arith.constant 0 : index
    %560 = vector.load %arg4[%c36, %c0_211] : memref<40x128xf32, #tpu.memory_space<vmem>>, vector<1x32xf32>
    %c37 = arith.constant 37 : index
    %c0_212 = arith.constant 0 : index
    %561 = vector.load %arg4[%c37, %c0_212] : memref<40x128xf32, #tpu.memory_space<vmem>>, vector<1x32xf32>
    %cst_213 = arith.constant dense<0.000000e+00> : vector<24xf32>
    %562 = vector.multi_reduction <add>, %559, %cst_213 [1] : vector<24x32xf32> to vector<24xf32>
    %563 = vector.shape_cast %562 : vector<24xf32> to vector<24x1xf32>
    %cst_214 = arith.constant 3.200000e+01 : f32
    %564 = vector.broadcast %cst_214 : f32 to vector<24x1xf32>
    %565 = arith.divf %563, %564 : vector<24x1xf32>
    %566 = vector.broadcast %565 : vector<24x1xf32> to vector<24x32xf32>
    %567 = arith.subf %559, %566 : vector<24x32xf32>
    %568 = arith.mulf %567, %567 : vector<24x32xf32>
    %cst_215 = arith.constant dense<0.000000e+00> : vector<24xf32>
    %569 = vector.multi_reduction <add>, %568, %cst_215 [1] : vector<24x32xf32> to vector<24xf32>
    %570 = vector.shape_cast %569 : vector<24xf32> to vector<24x1xf32>
    %cst_216 = arith.constant 3.100000e+01 : f32
    %571 = vector.broadcast %cst_216 : f32 to vector<24x1xf32>
    %572 = arith.divf %570, %571 : vector<24x1xf32>
    %573 = vector.broadcast %560 : vector<1x32xf32> to vector<24x32xf32>
    %574 = arith.mulf %573, %567 : vector<24x32xf32>
    %575 = math.sqrt %572 : vector<24x1xf32>
    %cst_217 = arith.constant 9.99999997E-7 : f32
    %576 = vector.broadcast %cst_217 : f32 to vector<24x1xf32>
    %577 = arith.addf %575, %576 : vector<24x1xf32>
    %578 = vector.broadcast %577 : vector<24x1xf32> to vector<24x32xf32>
    %579 = arith.divf %574, %578 : vector<24x32xf32>
    %580 = vector.broadcast %561 : vector<1x32xf32> to vector<24x32xf32>
    %581 = arith.addf %579, %580 : vector<24x32xf32>
    %c0_218 = arith.constant 0 : index
    %c0_219 = arith.constant 0 : index
    %582 = vector.load %arg5[%c0_218, %c0_219] : memref<24x32xf32, #tpu.memory_space<vmem>>, vector<24x32xf32>
    tpu.vector_store %arg5[%c0_218, %c0_219], %581 {strides = array<i32>} : memref<24x32xf32, #tpu.memory_space<vmem>>, vector<24x32xf32>,
    return
  }
  func.func @transform_0(%arg0: i32) -> (i32, i32) {
    %c0_i32 = arith.constant 0 : i32
    %c0_i32_0 = arith.constant 0 : i32
    return %arg0, %c0_i32 : i32, i32
  }
  func.func @transform_1(%arg0: i32) -> (i32, i32) {
    %c0_i32 = arith.constant 0 : i32
    %c0_i32_0 = arith.constant 0 : i32
    return %arg0, %c0_i32 : i32, i32
  }
  func.func @transform_2(%arg0: i32) -> (i32, i32) {
    %c0_i32 = arith.constant 0 : i32
    %c0_i32_0 = arith.constant 0 : i32
    %c0_i32_1 = arith.constant 0 : i32
    return %c0_i32, %c0_i32_0 : i32, i32
  }
  func.func @transform_3(%arg0: i32) -> (i32, i32) {
    %c0_i32 = arith.constant 0 : i32
    %c0_i32_0 = arith.constant 0 : i32
    %c0_i32_1 = arith.constant 0 : i32
    return %c0_i32, %c0_i32_0 : i32, i32
  }
  func.func @transform_4(%arg0: i32) -> (i32, i32) {
    %c0_i32 = arith.constant 0 : i32
    %c0_i32_0 = arith.constant 0 : i32
    return %arg0, %c0_i32 : i32, i32
  }
}

</mosaic_0001>

<llo_original>
// kernel: tpu_custom_call.1
$region0: #{tpu_custom_call.1}
  #allocation0 [shape = 'u32[]', space=smem, size = 0x4, offset = 0x4, fixed_abs, tag = 'smem constant byte address 0x4 - core index']
  #allocation1 [shape = 'u32[144,128]{1,0:T(1,128)}', space=vmem, size = 0x12000, scoped, tag = 'internal scratch']
  %s0 = inlined_call_operand.hbm [shape: f32[24,64], index: 0, kind: input, shape index: {}]
  %s1 = inlined_call_operand.hbm [shape: f32[24,64], index: 1, kind: output, shape index: {0}]
  %s2 = inlined_call_operand.hbm [shape: f32[24,64], index: 2, kind: output, shape index: {1}]
  %3 = xla_tuple %s1, %s2
  %s4 = sld [smem:[#allocation0]]
  $region26: #{tpu_custom_call.1} parent=0
    _
  %s6 = ssub.s32 1, %s4
  %s7 = scalar_select 0, %s6, %s4
  $region1: #{tpu_custom_call.1} parent=0
    #allocation2 [shape = 'u8[12288]{0}', space=vmem, size = 0x3000, scoped, tag = 'input window, operand 0, single buffered']
    #allocation3 [shape = 's32[1]{0}', space=sflag, size = 0x4, scoped, tag = 'scoped memory for tpu_custom_call.1']
    #allocation4 [shape = 's32[1]{0}', space=sflag, size = 0x4, scoped, tag = 'scoped memory for tpu_custom_call.1']
    #allocation5 [shape = 'u8[12288]{0}', space=vmem, size = 0x3000, scoped, tag = 'output window, operand 0, single buffered']
    #allocation6 [shape = 'u8[12288]{0}', space=vmem, size = 0x3000, scoped, tag = 'output window, operand 1, single buffered']
    #allocation7 [shape = 's32[1]{0}', space=sflag, size = 0x4, scoped, tag = 'scoped memory for tpu_custom_call.1']
    %8 = vsyncpa [#allocation3], 0
    %9 = vsyncpa [#allocation4], 0
    %10 = vsyncpa [#allocation7], 0
    // Predicated region
    $region2: #{tpu_custom_call.1} parent=1 // pred_check
      _
    $region3: #{tpu_custom_call.1} parent=1 // pred_check_branch
      %12 = sbr.rel (0) target = $region5
    $region4: #{tpu_custom_call.1} parent=1 // pred_region
      %s14 = ssub.s32 384, 384
      %15 = vsyncadd [#allocation3], %s14
      %s16 = sshll.u32 [#allocation2], 4
      %s17 = int_to_ptr.vmem [resolvable:$true] %s16
      %22 = dma.hbm_to_vmem [thread:$0]  %s0, 384, %s17, [#allocation3], 128, 128, 8
    $region5: #{tpu_custom_call.1} parent=1 // pred_fallthru
      _
    // Predicated region
    $region6: #{tpu_custom_call.1} parent=1 // pred_check
      _
    $region7: #{tpu_custom_call.1} parent=1 // pred_check_branch
      %24 = sbr.rel (0) target = $region9
    $region8: #{tpu_custom_call.1} parent=1 // pred_region
      %25 = dma.done [#allocation3], 384
    $region9: #{tpu_custom_call.1} parent=1 // pred_fallthru
      _
    %v26 = vld [vmem:[#allocation2] sm:$0xff]
    %v27 = vld [vmem:[#allocation2 + $0x8] sm:$0xff]
    %v28 = vld [vmem:[#allocation2 + $0x10] sm:$0xff]
    %v29 = vrot.slane %v26, 7
    %v30 = vrot.slane %v27, 7
    %v31 = vrot.slane %v28, 7
    %v32 = vlaneseq
    %v33 = vshrl.u32 %v32, 7
    %vm34 = vcmp.lt.s32.totalorder %v33, 1
    %v35 = vsel %vm34, %v30, %v31
    %v36 = vsel %vm34, %v29, %v30
    %v37 = vsel %vm34, %v31, %v29
    %vm38 = vcmask 523264
    %39 = vst.msk [vmem:[#allocation5] sm:$0xff] %vm38, %v37
    %40 = vst.msk [vmem:[#allocation5 + $0x8] sm:$0xff] %vm38, %v36
    %41 = vst.msk [vmem:[#allocation5 + $0x10] sm:$0xff] %vm38, %v35
    %v42 = vld [vmem:[#allocation2] sm:$0xff]
    %v43 = vld [vmem:[#allocation2 + $0x8] sm:$0xff]
    %v44 = vld [vmem:[#allocation2 + $0x10] sm:$0xff]
    %v45 = vrot.slane %v42, 1
    %v46 = vrot.slane %v43, 1
    %v47 = vrot.slane %v44, 1
    %vm48 = vcmp.lt.s32.totalorder %v33, 7
    %v49 = vsel %vm48, %v46, %v47
    %v50 = vsel %vm48, %v45, %v46
    %v51 = vsel %vm48, %v47, %v45
    %52 = vst.msk [vmem:[#allocation6] sm:$0xff] %vm38, %v50
    %53 = vst.msk [vmem:[#allocation6 + $0x8] sm:$0xff] %vm38, %v49
    %54 = vst.msk [vmem:[#allocation6 + $0x10] sm:$0xff] %vm38, %v51
    // Predicated region
    $region10: #{tpu_custom_call.1} parent=1 // pred_check
      _
    $region11: #{tpu_custom_call.1} parent=1 // pred_check_branch
      %56 = sbr.rel (0) target = $region13
    $region12: #{tpu_custom_call.1} parent=1 // pred_region
      %s58 = ssub.s32 384, 384
      %59 = vsyncadd [#allocation4], %s58
      %s60 = sshll.u32 [#allocation5], 4
      %s61 = int_to_ptr.vmem [resolvable:$true] %s60
      %66 = dma.vmem_to_hbm [thread:$0]  %s61, 384, %s1, [#allocation4], 128, 128, 8
    $region13: #{tpu_custom_call.1} parent=1 // pred_fallthru
      _
    // Predicated region
    $region14: #{tpu_custom_call.1} parent=1 // pred_check
      _
    $region15: #{tpu_custom_call.1} parent=1 // pred_check_branch
      %68 = sbr.rel (0) target = $region17
    $region16: #{tpu_custom_call.1} parent=1 // pred_region
      %s70 = ssub.s32 384, 384
      %71 = vsyncadd [#allocation7], %s70
      %s72 = sshll.u32 [#allocation6], 4
      %s73 = int_to_ptr.vmem [resolvable:$true] %s72
      %78 = dma.vmem_to_hbm [thread:$0]  %s73, 384, %s2, [#allocation7], 128, 128, 8
    $region17: #{tpu_custom_call.1} parent=1 // pred_fallthru
      _
    // Predicated region
    $region18: #{tpu_custom_call.1} parent=1 // pred_check
      _
    $region19: #{tpu_custom_call.1} parent=1 // pred_check_branch
      %80 = sbr.rel (0) target = $region21
    $region20: #{tpu_custom_call.1} parent=1 // pred_region
      %81 = dma.done [#allocation4], 384
    $region21: #{tpu_custom_call.1} parent=1 // pred_fallthru
      _
    // Predicated region
    $region22: #{tpu_custom_call.1} parent=1 // pred_check
      _
    $region23: #{tpu_custom_call.1} parent=1 // pred_check_branch
      %83 = sbr.rel (0) target = $region25
    $region24: #{tpu_custom_call.1} parent=1 // pred_region
      %84 = dma.done [#allocation7], 384
    $region25: #{tpu_custom_call.1} parent=1 // pred_fallthru
      _
    %85 = vsyncpa [#allocation3], 1
    %86 = vsyncpa [#allocation4], 1
    %87 = vsyncpa [#allocation7], 1

// kernel: tpu_custom_call.1
$region0: #{tpu_custom_call.1}
  #allocation0 [shape = 'u32[]', space=smem, size = 0x4, offset = 0x4, fixed_abs, tag = 'smem constant byte address 0x4 - core index']
  #allocation1 [shape = 'u32[144,128]{1,0:T(1,128)}', space=vmem, size = 0x12000, scoped, tag = 'internal scratch']
  %s0 = inlined_call_operand.hbm [shape: f32[24,32], index: 0, kind: input, shape index: {}]
  %s1 = inlined_call_operand.hbm [shape: f32[2,12], index: 1, kind: input, shape index: {}]
  %s2 = inlined_call_operand.hbm [shape: f32[736,128], index: 2, kind: input, shape index: {}]
  %s3 = inlined_call_operand.hbm [shape: f32[40,128], index: 3, kind: input, shape index: {}]
  %s4 = inlined_call_operand.hbm [shape: f32[24,32], index: 4, kind: output, shape index: {}]
  %s5 = sld [smem:[#allocation0]]
  $region42: #{tpu_custom_call.1} parent=0
    _
  %s7 = ssub.s32 1, %s5
  %s8 = scalar_select 0, %s7, %s5
  $region1: #{tpu_custom_call.1} parent=0
    #allocation2 [shape = 'u8[12288]{0}', space=vmem, size = 0x3000, scoped, tag = 'input window, operand 0, single buffered']
    #allocation3 [shape = 's32[1]{0}', space=sflag, size = 0x4, scoped, tag = 'scoped memory for tpu_custom_call.1']
    #allocation4 [shape = 's32[1]{0}', space=sflag, size = 0x4, scoped, tag = 'scoped memory for tpu_custom_call.1']
    #allocation5 [shape = 'u8[1024]{0}', space=vmem, size = 0x400, scoped, tag = 'input window, operand 1, single buffered']
    #allocation6 [shape = 's32[1]{0}', space=sflag, size = 0x4, scoped, tag = 'scoped memory for tpu_custom_call.1']
    #allocation7 [shape = 'u8[376832]{0}', space=vmem, size = 0x5c000, scoped, tag = 'input window, operand 2, single buffered']
    #allocation8 [shape = 'u8[20480]{0}', space=vmem, size = 0x5000, scoped, tag = 'input window, operand 3, single buffered']
    #allocation9 [shape = 's32[1]{0}', space=sflag, size = 0x4, scoped, tag = 'scoped memory for tpu_custom_call.1']
    #allocation10 [shape = 'u8[12288]{0}', space=vmem, size = 0x3000, scoped, tag = 'output window, operand 0, single buffered']
    %9 = vsyncpa [#allocation3], 0
    %10 = vsyncpa [#allocation6], 0
    %11 = vsyncpa [#allocation9], 0
    %12 = vsyncpa [#allocation4], 0
    // Predicated region
    $region2: #{tpu_custom_call.1} parent=1 // pred_check
      _
    $region3: #{tpu_custom_call.1} parent=1 // pred_check_branch
      %14 = sbr.rel (0) target = $region5
    $region4: #{tpu_custom_call.1} parent=1 // pred_region
      %s16 = ssub.s32 384, 384
      %17 = vsyncadd [#allocation3], %s16
      %s18 = sshll.u32 [#allocation2], 4
      %s19 = int_to_ptr.vmem [resolvable:$true] %s18
      %24 = dma.hbm_to_vmem [thread:$0]  %s0, 384, %s19, [#allocation3], 128, 128, 8
    $region5: #{tpu_custom_call.1} parent=1 // pred_fallthru
      _
    // Predicated region
    $region6: #{tpu_custom_call.1} parent=1 // pred_check
      _
    $region7: #{tpu_custom_call.1} parent=1 // pred_check_branch
      %26 = sbr.rel (0) target = $region9
    $region8: #{tpu_custom_call.1} parent=1 // pred_region
      %s28 = ssub.s32 32, 32
      %29 = vsyncadd [#allocation6], %s28
      %s31 = sshll.u32 [#allocation5], 4
      %s32 = int_to_ptr.vmem [resolvable:$true] %s31
      %34 = dma.hbm_to_vmem [thread:$0]  %s1, 32, %s32, [#allocation6]
    $region9: #{tpu_custom_call.1} parent=1 // pred_fallthru
      _
    // Predicated region
    $region10: #{tpu_custom_call.1} parent=1 // pred_check
      _
    $region11: #{tpu_custom_call.1} parent=1 // pred_check_branch
      %36 = sbr.rel (0) target = $region13
    $region12: #{tpu_custom_call.1} parent=1 // pred_region
      %s38 = ssub.s32 11776, 11776
      %39 = vsyncadd [#allocation6], %s38
      %s40 = sshll.u32 [#allocation7], 4
      %s41 = int_to_ptr.vmem [resolvable:$true] %s40
      %46 = dma.hbm_to_vmem [thread:$0]  %s2, 11776, %s41, [#allocation6], 128, 128, 8
    $region13: #{tpu_custom_call.1} parent=1 // pred_fallthru
      _
    // Predicated region
    $region14: #{tpu_custom_call.1} parent=1 // pred_check
      _
    $region15: #{tpu_custom_call.1} parent=1 // pred_check_branch
      %48 = sbr.rel (0) target = $region17
    $region16: #{tpu_custom_call.1} parent=1 // pred_region
      %s50 = ssub.s32 640, 640
      %51 = vsyncadd [#allocation9], %s50
      %s52 = sshll.u32 [#allocation8], 4
      %s53 = int_to_ptr.vmem [resolvable:$true] %s52
      %58 = dma.hbm_to_vmem [thread:$0]  %s3, 640, %s53, [#allocation9], 128, 128, 8
    $region17: #{tpu_custom_call.1} parent=1 // pred_fallthru
      _
    // Predicated region
    $region18: #{tpu_custom_call.1} parent=1 // pred_check
      _
    $region19: #{tpu_custom_call.1} parent=1 // pred_check_branch
      %60 = sbr.rel (0) target = $region21
    $region20: #{tpu_custom_call.1} parent=1 // pred_region
      %61 = dma.done [#allocation3], 384
    $region21: #{tpu_custom_call.1} parent=1 // pred_fallthru
      _
    // Predicated region
    $region22: #{tpu_custom_call.1} parent=1 // pred_check
      _
    $region23: #{tpu_custom_call.1} parent=1 // pred_check_branch
      %63 = sbr.rel (0) target = $region25
    $region24: #{tpu_custom_call.1} parent=1 // pred_region
      %64 = dma.done [#allocation6], 32
    $region25: #{tpu_custom_call.1} parent=1 // pred_fallthru
      _
    // Predicated region
    $region26: #{tpu_custom_call.1} parent=1 // pred_check
      _
    $region27: #{tpu_custom_call.1} parent=1 // pred_check_branch
      %66 = sbr.rel (0) target = $region29
    $region28: #{tpu_custom_call.1} parent=1 // pred_region
      %67 = dma.done [#allocation6], 11776
    $region29: #{tpu_custom_call.1} parent=1 // pred_fallthru
      _
    // Predicated region
    $region30: #{tpu_custom_call.1} parent=1 // pred_check
      _
    $region31: #{tpu_custom_call.1} parent=1 // pred_check_branch
      %69 = sbr.rel (0) target = $region33
    $region32: #{tpu_custom_call.1} parent=1 // pred_region
      %70 = dma.done [#allocation9], 640
    $region33: #{tpu_custom_call.1} parent=1 // pred_fallthru
      _
    %v71 = vlaneseq
    %v72 = vshrl.u32 %v71, 7
    %v73 = vadd.s32 %v72, 8
    %v74 = vadd.s32 %v72, 16
    %vm75 = vcmp.eq.s32.totalorder %v72, 0
    %vm76 = vcmp.eq.s32.totalorder %v73, 0
    %vm77 = vcmp.eq.s32.totalorder %v74, 0
    %vm78 = vcmp.eq.s32.totalorder %v72, 11
    %vm79 = vcmp.eq.s32.totalorder %v73, 11
    %vm80 = vcmp.eq.s32.totalorder %v74, 11
    %vm81 = vcmp.eq.s32.totalorder %v72, 12
    %vm82 = vcmp.eq.s32.totalorder %v73, 12
    %vm83 = vcmp.eq.s32.totalorder %v74, 12
    %vm84 = vmor %vm75, %vm81
    %vm85 = vmor %vm76, %vm82
    %vm86 = vmor %vm77, %vm83
    %vm87 = vcmp.eq.s32.totalorder %v72, 23
    %vm88 = vcmp.eq.s32.totalorder %v73, 23
    %vm89 = vcmp.eq.s32.totalorder %v74, 23
    %vm90 = vmor %vm78, %vm87
    %vm91 = vmor %vm79, %vm88
    %vm92 = vmor %vm80, %vm89
    %v93 = vsel %vm84, 0.0, 1.0
    %v94 = vsel %vm85, 0.0, 1.0
    %v95 = vsel %vm86, 0.0, 1.0
    %v96 = vsel %vm90, 0.0, 1.0
    %v97 = vsel %vm91, 0.0, 1.0
    %v98 = vsel %vm92, 0.0, 1.0
    %v99 = vld [vmem:[#allocation2] sm:$0xff]
    %v100 = vld [vmem:[#allocation2 + $0x8] sm:$0xff]
    %v101 = vld [vmem:[#allocation2 + $0x10] sm:$0xff]
    %v102 = vld [vmem:[#allocation8] sm:$0xff]
    %v103 = vld [vmem:[#allocation8 + $0x8] sm:$0xff]
    %v104 = vld [vmem:[#allocation8 + $0x10] sm:$0xff]
    %v105 = vld [vmem:[#allocation7] sm:$0xff]
    %v106 = vld [vmem:[#allocation7 + $0x8] sm:$0xff]
    %v107 = vld [vmem:[#allocation7 + $0x10] sm:$0xff]
    %v108 = vld [vmem:[#allocation7 + $0x18] sm:$0xff]
    %vm109 = vcmask 261120
    %v111 = vsel %vm109, %v99, 0
    %v114 = vsel %vm109, %v100, 0
    %v117 = vsel %vm109, %v101, 0
    %119 = vmatprep.subr.mxu0 0.0
    %120 = vmatpush1.msra.mxu0 0.0
    %121 = vmatprep.subr.mxu0 0.0
    %122 = vmatpush1.msra.mxu0 0.0
    %123 = vmatprep.subr.mxu0 0.0
    %124 = vmatpush1.msra.mxu0 0.0
    %125 = vmatprep.subr.mxu0 0.0
    %126 = vmatpush1.msra.mxu0 0.0
    %127 = vmatprep.subr.mxu0 0.0
    %128 = vmatpush1.msra.mxu0 0.0
    %129 = vmatprep.subr.mxu0 0.0
    %130 = vmatpush1.msra.mxu0 0.0
    %131 = vmatprep.subr.mxu0 0.0
    %132 = vmatpush1.msra.mxu0 0.0
    %133 = vmatprep.subr.mxu0 0.0
    %134 = vmatpush1.msra.mxu0 0.0
    %135 = vmatprep.subr.mxu0 0.0
    %136 = vmatpush1.msra.mxu0 0.0
    %137 = vmatprep.subr.mxu0 0.0
    %138 = vmatpush1.msra.mxu0 0.0
    %139 = vmatprep.subr.mxu0 0.0
    %140 = vmatpush1.msra.mxu0 0.0
    %141 = vmatprep.subr.mxu0 0.0
    %142 = vmatpush1.msra.mxu0 0.0
    %143 = vmatprep.subr.mxu0 0.0
    %144 = vmatpush1.msra.mxu0 %v108
    %145 = vmatprep.subr.mxu0 0.0
    %146 = vmatpush1.msra.mxu0 %v107
    %147 = vmatprep.subr.mxu0 0.0
    %148 = vmatpush1.msra.mxu0 %v106
    %149 = vmatprep.subr.mxu0 0.0
    %150 = vmatpush1.msra.mxu0 %v105
    %151 = vmatprep.subr.mxu0 0.0
    %152 = vmatpush2.msra.mxu0 0.0
    %153 = vmatprep.subr.mxu0 0.0
    %154 = vmatpush2.msra.mxu0 0.0
    %155 = vmatprep.subr.mxu0 0.0
    %156 = vmatpush2.msra.mxu0 0.0
    %157 = vmatprep.subr.mxu0 0.0
    %158 = vmatpush2.msra.mxu0 0.0
    %159 = vmatprep.subr.mxu0 0.0
    %160 = vmatpush2.msra.mxu0 0.0
    %161 = vmatprep.subr.mxu0 0.0
    %162 = vmatpush2.msra.mxu0 0.0
    %163 = vmatprep.subr.mxu0 0.0
    %164 = vmatpush2.msra.mxu0 0.0
    %165 = vmatprep.subr.mxu0 0.0
    %166 = vmatpush2.msra.mxu0 0.0
    %167 = vmatprep.subr.mxu0 0.0
    %168 = vmatpush2.msra.mxu0 0.0
    %169 = vmatprep.subr.mxu0 0.0
    %170 = vmatpush2.msra.mxu0 0.0
    %171 = vmatprep.subr.mxu0 0.0
    %172 = vmatpush2.msra.mxu0 0.0
    %173 = vmatprep.subr.mxu0 0.0
    %174 = vmatpush2.msra.mxu0 0.0
    %175 = vmatprep.subr.mxu0 0.0
    %176 = vmatpush2.msra.mxu0 0.0
    %177 = vmatprep.subr.mxu0 0.0
    %178 = vmatpush2.msra.mxu0 0.0
    %179 = vmatprep.subr.mxu0 0.0
    %180 = vmatpush2.msra.mxu0 0.0
    %181 = vmatprep.subr.mxu0 0.0
    %182 = vmatpush2.msra.mxu0 0.0
    %183 = vmatprep.mubr.f32.mxu0 0.0
    %184 = vmatmul.mubr.f32.gmra.mxu0 %v111
    %v185 = vpop.f32.mrf.mxu0
    %v186 = vadd.f32 %v102, %v185
    %v187 = vpop.f32.mrf.mxu0
    %188 = vmatprep.mubr.f32.mxu0 0.0
    %189 = vmatmul.mubr.f32.gmra.mxu0 %v114
    %v190 = vpop.f32.mrf.mxu0
    %v191 = vadd.f32 %v103, %v190
    %v192 = vpop.f32.mrf.mxu0
    %193 = vmatprep.mubr.f32.mxu0 0.0
    %194 = vmatmul.mubr.f32.gmra.mxu0 %v117
    %v195 = vpop.f32.mrf.mxu0
    %v196 = vadd.f32 %v104, %v195
    %v197 = vpop.f32.mrf.mxu0
    %198 = vdwg.mxu0
    %v199 = vld [vmem:[#allocation8 + $0x18] sm:$0x1]
    %v200 = vld [vmem:[#allocation8 + $0x19] sm:$0x1]
    %v201 = vld [vmem:[#allocation8 + $0x1a] sm:$0x1]
    %v202 = vld [vmem:[#allocation8 + $0x1b] sm:$0x1]
    %v203 = vld [vmem:[#allocation8 + $0x1c] sm:$0x1]
    %v204 = vld [vmem:[#allocation8 + $0x1d] sm:$0x1]
    %v205 = vsel %vm109, %v186, 0.0
    %206 = vadd.xlane.f32.xlu0 %v205
    %v207 = vpop.xlane.xlu0 %206
    %v208 = vsel %vm109, %v191, 0.0
    %209 = vadd.xlane.f32.xlu0 %v208
    %v210 = vpop.xlane.xlu0 %209
    %v211 = vsel %vm109, %v196, 0.0
    %212 = vadd.xlane.f32.xlu0 %v211
    %v213 = vpop.xlane.xlu0 %212
    %v214 = vrcp.pop 32.0
    %v215 = vmul.f32 %v207, %v214
    %v216 = vmul.f32 %v210, %v214
    %v217 = vmul.f32 %v213, %v214
    %v218 = vsub.f32 %v186, %v215
    %v219 = vsub.f32 %v191, %v216
    %v220 = vsub.f32 %v196, %v217
    %v221 = vmul.f32 %v218, %v218
    %v222 = vmul.f32 %v219, %v219
    %v223 = vmul.f32 %v220, %v220
    %v224 = vsel %vm109, %v221, 0.0
    %225 = vadd.xlane.f32.xlu0 %v224
    %v226 = vpop.xlane.xlu0 %225
    %v227 = vsel %vm109, %v222, 0.0
    %228 = vadd.xlane.f32.xlu0 %v227
    %v229 = vpop.xlane.xlu0 %228
    %v230 = vsel %vm109, %v223, 0.0
    %231 = vadd.xlane.f32.xlu0 %v230
    %v232 = vpop.xlane.xlu0 %231
    %v233 = vrcp.pop 31.0
    %v234 = vmul.f32 %v226, %v233
    %v235 = vmul.f32 %v229, %v233
    %v236 = vmul.f32 %v232, %v233
    %v237 = vlaneseq
    %v238 = vshrl.u32 %v237, 7
    %v239 = vsub.s32 0, %v238
    %v240 = vrot.slane %v199, %v239
    %v241 = vmul.f32 %v240, %v218
    %v242 = vmul.f32 %v240, %v219
    %v243 = vmul.f32 %v240, %v220
    %v244 = vrsqrt.pop %v234
    %v245 = vmul.f32 %v234, %v244
    %vm246 = vcmp.eq.f32.partialorder %v234, inf
    %v247 = vsel %vm246, %v234, %v245
    %vm248 = vcmp.eq.f32.partialorder %v234, 0.0
    %v249 = vand.u32 %v234, 2147483648
    %v250 = vsel %vm248, %v249, %v247
    %v251 = vrsqrt.pop %v235
    %v252 = vmul.f32 %v235, %v251
    %vm253 = vcmp.eq.f32.partialorder %v235, inf
    %v254 = vsel %vm253, %v235, %v252
    %vm255 = vcmp.eq.f32.partialorder %v235, 0.0
    %v256 = vand.u32 %v235, 2147483648
    %v257 = vsel %vm255, %v256, %v254
    %v258 = vrsqrt.pop %v236
    %v259 = vmul.f32 %v236, %v258
    %vm260 = vcmp.eq.f32.partialorder %v236, inf
    %v261 = vsel %vm260, %v236, %v259
    %vm262 = vcmp.eq.f32.partialorder %v236, 0.0
    %v263 = vand.u32 %v236, 2147483648
    %v264 = vsel %vm262, %v263, %v261
    %v265 = vadd.f32 %v250, 1e-06
    %v266 = vadd.f32 %v257, 1e-06
    %v267 = vadd.f32 %v264, 1e-06
    %v268 = vrcp.pop %v265
    %v269 = vmul.f32 %v241, %v268
    %v270 = vrcp.pop %v266
    %v271 = vmul.f32 %v242, %v270
    %v272 = vrcp.pop %v267
    %v273 = vmul.f32 %v243, %v272
    %v274 = vlaneseq
    %v275 = vshrl.u32 %v274, 7
    %v276 = vsub.s32 0, %v275
    %v277 = vrot.slane %v200, %v276
    %v278 = vadd.f32 %v269, %v277
    %v279 = vadd.f32 %v271, %v277
    %v280 = vadd.f32 %v273, %v277
    %v281 = vld [vmem:[#allocation7 + $0x20] sm:$0xff]
    %v282 = vld [vmem:[#allocation7 + $0x28] sm:$0xff]
    %v283 = vld [vmem:[#allocation7 + $0x30] sm:$0xff]
    %v284 = vld [vmem:[#allocation7 + $0x38] sm:$0xff]
    %v286 = vsel %vm109, %v278, 0
    %v289 = vsel %vm109, %v279, 0
    %v292 = vsel %vm109, %v280, 0
    %294 = vmatprep.subr.mxu0 0.0
    %295 = vmatpush1.msra.mxu0 0.0
    %296 = vmatprep.subr.mxu0 0.0
    %297 = vmatpush1.msra.mxu0 0.0
    %298 = vmatprep.subr.mxu0 0.0
    %299 = vmatpush1.msra.mxu0 0.0
    %300 = vmatprep.subr.mxu0 0.0
    %301 = vmatpush1.msra.mxu0 0.0
    %302 = vmatprep.subr.mxu0 0.0
    %303 = vmatpush1.msra.mxu0 0.0
    %304 = vmatprep.subr.mxu0 0.0
    %305 = vmatpush1.msra.mxu0 0.0
    %306 = vmatprep.subr.mxu0 0.0
    %307 = vmatpush1.msra.mxu0 0.0
    %308 = vmatprep.subr.mxu0 0.0
    %309 = vmatpush1.msra.mxu0 0.0
    %310 = vmatprep.subr.mxu0 0.0
    %311 = vmatpush1.msra.mxu0 0.0
    %312 = vmatprep.subr.mxu0 0.0
    %313 = vmatpush1.msra.mxu0 0.0
    %314 = vmatprep.subr.mxu0 0.0
    %315 = vmatpush1.msra.mxu0 0.0
    %316 = vmatprep.subr.mxu0 0.0
    %317 = vmatpush1.msra.mxu0 0.0
    %318 = vmatprep.subr.mxu0 0.0
    %319 = vmatpush1.msra.mxu0 %v284
    %320 = vmatprep.subr.mxu0 0.0
    %321 = vmatpush1.msra.mxu0 %v283
    %322 = vmatprep.subr.mxu0 0.0
    %323 = vmatpush1.msra.mxu0 %v282
    %324 = vmatprep.subr.mxu0 0.0
    %325 = vmatpush1.msra.mxu0 %v281
    %326 = vmatprep.subr.mxu0 0.0
    %327 = vmatpush2.msra.mxu0 0.0
    %328 = vmatprep.subr.mxu0 0.0
    %329 = vmatpush2.msra.mxu0 0.0
    %330 = vmatprep.subr.mxu0 0.0
    %331 = vmatpush2.msra.mxu0 0.0
    %332 = vmatprep.subr.mxu0 0.0
    %333 = vmatpush2.msra.mxu0 0.0
    %334 = vmatprep.subr.mxu0 0.0
    %335 = vmatpush2.msra.mxu0 0.0
    %336 = vmatprep.subr.mxu0 0.0
    %337 = vmatpush2.msra.mxu0 0.0
    %338 = vmatprep.subr.mxu0 0.0
    %339 = vmatpush2.msra.mxu0 0.0
    %340 = vmatprep.subr.mxu0 0.0
    %341 = vmatpush2.msra.mxu0 0.0
    %342 = vmatprep.subr.mxu0 0.0
    %343 = vmatpush2.msra.mxu0 0.0
    %344 = vmatprep.subr.mxu0 0.0
    %345 = vmatpush2.msra.mxu0 0.0
    %346 = vmatprep.subr.mxu0 0.0
    %347 = vmatpush2.msra.mxu0 0.0
    %348 = vmatprep.subr.mxu0 0.0
    %349 = vmatpush2.msra.mxu0 0.0
    %350 = vmatprep.subr.mxu0 0.0
    %351 = vmatpush2.msra.mxu0 0.0
    %352 = vmatprep.subr.mxu0 0.0
    %353 = vmatpush2.msra.mxu0 0.0
    %354 = vmatprep.subr.mxu0 0.0
    %355 = vmatpush2.msra.mxu0 0.0
    %356 = vmatprep.subr.mxu0 0.0
    %357 = vmatpush2.msra.mxu0 0.0
    %358 = vmatprep.mubr.f32.mxu0 0.0
    %359 = vmatmul.mubr.f32.gmra.mxu0 %v286
    %v360 = vpop.f32.mrf.mxu0
    %v361 = vadd.f32 0.0, %v360
    %v362 = vpop.f32.mrf.mxu0
    %363 = vmatprep.mubr.f32.mxu0 0.0
    %364 = vmatmul.mubr.f32.gmra.mxu0 %v289
    %v365 = vpop.f32.mrf.mxu0
    %v366 = vadd.f32 0.0, %v365
    %v367 = vpop.f32.mrf.mxu0
    %368 = vmatprep.mubr.f32.mxu0 0.0
    %369 = vmatmul.mubr.f32.gmra.mxu0 %v292
    %v370 = vpop.f32.mrf.mxu0
    %v371 = vadd.f32 0.0, %v370
    %v372 = vpop.f32.mrf.mxu0
    %373 = vdwg.mxu0
    %v374 = vmul.f32 %v361, 0.35355338
    %v375 = vmul.f32 %v366, 0.35355338
    %v376 = vmul.f32 %v371, 0.35355338
    %v377 = vld [vmem:[#allocation5] sm:$0x1]
    %v378 = vlaneseq
    %v379 = vshrl.u32 %v378, 7
    %v380 = vsub.s32 0, %v379
    %v381 = vrot.slane %v377, %v380
    %384 = vrot.lane.b32.xlu0 %v361, 96
    %v385 = vpop.permute.xlu0 %384
    %386 = vrot.lane.b32.xlu0 %v366, 96
    %v387 = vpop.permute.xlu0 %386
    %vm388 = vcmask 64512
    %v390 = vsel %vm388, %v374, 0
    %v393 = vsel %vm388, %v375, 0
    %v395 = vsel %vm388, %v385, 0
    %v397 = vsel %vm388, %v387, 0
    %399 = vmatprep.subr.mxu0 0.0
    %400 = vmatpush1.xpose.msra.mxu0 0.0
    %401 = vmatprep.subr.mxu0 0.0
    %402 = vmatpush1.xpose.msra.mxu0 0.0
    %403 = vmatprep.subr.mxu0 0.0
    %404 = vmatpush1.xpose.msra.mxu0 0.0
    %405 = vmatprep.subr.mxu0 0.0
    %406 = vmatpush1.xpose.msra.mxu0 0.0
    %407 = vmatprep.subr.mxu0 0.0
    %408 = vmatpush1.xpose.msra.mxu0 0.0
    %409 = vmatprep.subr.mxu0 0.0
    %410 = vmatpush1.xpose.msra.mxu0 0.0
    %411 = vmatprep.subr.mxu0 0.0
    %412 = vmatpush1.xpose.msra.mxu0 0.0
    %413 = vmatprep.subr.mxu0 0.0
    %414 = vmatpush1.xpose.msra.mxu0 0.0
    %415 = vmatprep.subr.mxu0 0.0
    %416 = vmatpush1.xpose.msra.mxu0 0.0
    %417 = vmatprep.subr.mxu0 0.0
    %418 = vmatpush1.xpose.msra.mxu0 0.0
    %419 = vmatprep.subr.mxu0 0.0
    %420 = vmatpush1.xpose.msra.mxu0 0.0
    %421 = vmatprep.subr.mxu0 0.0
    %422 = vmatpush1.xpose.msra.mxu0 0.0
    %423 = vmatprep.subr.mxu0 0.0
    %424 = vmatpush1.xpose.msra.mxu0 0.0
    %425 = vmatprep.subr.mxu0 0.0
    %426 = vmatpush1.xpose.msra.mxu0 0.0
    %427 = vmatprep.subr.mxu0 0.0
    %428 = vmatpush1.xpose.msra.mxu0 %v397
    %429 = vmatprep.subr.mxu0 0.0
    %430 = vmatpush1.xpose.msra.mxu0 %v395
    %431 = vmatprep.subr.mxu0 0.0
    %432 = vmatpush2.xpose.msra.mxu0 0.0
    %433 = vmatprep.subr.mxu0 0.0
    %434 = vmatpush2.xpose.msra.mxu0 0.0
    %435 = vmatprep.subr.mxu0 0.0
    %436 = vmatpush2.xpose.msra.mxu0 0.0
    %437 = vmatprep.subr.mxu0 0.0
    %438 = vmatpush2.xpose.msra.mxu0 0.0
    %439 = vmatprep.subr.mxu0 0.0
    %440 = vmatpush2.xpose.msra.mxu0 0.0
    %441 = vmatprep.subr.mxu0 0.0
    %442 = vmatpush2.xpose.msra.mxu0 0.0
    %443 = vmatprep.subr.mxu0 0.0
    %444 = vmatpush2.xpose.msra.mxu0 0.0
    %445 = vmatprep.subr.mxu0 0.0
    %446 = vmatpush2.xpose.msra.mxu0 0.0
    %447 = vmatprep.subr.mxu0 0.0
    %448 = vmatpush2.xpose.msra.mxu0 0.0
    %449 = vmatprep.subr.mxu0 0.0
    %450 = vmatpush2.xpose.msra.mxu0 0.0
    %451 = vmatprep.subr.mxu0 0.0
    %452 = vmatpush2.xpose.msra.mxu0 0.0
    %453 = vmatprep.subr.mxu0 0.0
    %454 = vmatpush2.xpose.msra.mxu0 0.0
    %455 = vmatprep.subr.mxu0 0.0
    %456 = vmatpush2.xpose.msra.mxu0 0.0
    %457 = vmatprep.subr.mxu0 0.0
    %458 = vmatpush2.xpose.msra.mxu0 0.0
    %459 = vmatprep.subr.mxu0 0.0
    %460 = vmatpush2.xpose.msra.mxu0 0.0
    %461 = vmatprep.subr.mxu0 0.0
    %462 = vmatpush2.xpose.msra.mxu0 0.0
    %463 = vmatprep.mubr.f32.mxu0 0.0
    %464 = vmatmul.mubr.f32.gmra.mxu0 %v390
    %v465 = vpop.f32.mrf.mxu0
    %v466 = vadd.f32 %v381, %v465
    %v467 = vpop.f32.mrf.mxu0
    %468 = vmatprep.mubr.f32.mxu0 0.0
    %469 = vmatmul.mubr.f32.gmra.mxu0 %v393
    %v470 = vpop.f32.mrf.mxu0
    %v471 = vadd.f32 %v381, %v470
    %v472 = vpop.f32.mrf.mxu0
    %473 = vdwg.mxu0
    %vm474 = vcmask 97280
    %v475 = vsel %vm474, %v466, -inf
    %476 = vmax.xlane.f32.xlu0 %v475
    %v477 = vpop.xlane.xlu0 %476
    %vm478 = vcmask 93184
    %v479 = vsel %vm478, %v471, -inf
    %480 = vmax.xlane.f32.xlu0 %v479
    %v481 = vpop.xlane.xlu0 %480
    %v482 = vsub.f32 %v466, %v477
    %v483 = vsub.f32 %v471, %v481
    %v484 = vmul.f32 %v482, 1.442695
    %v485 = vpow.pop %v484
    %v486 = vmul.f32 %v483, 1.442695
    %v487 = vpow.pop %v486
    %v488 = vsel %vm474, %v485, 0.0
    %489 = vadd.xlane.f32.xlu0 %v488
    %v490 = vpop.xlane.xlu0 %489
    %v491 = vsel %vm478, %v487, 0.0
    %492 = vadd.xlane.f32.xlu0 %v491
    %v493 = vpop.xlane.xlu0 %492
    %v494 = vrcp.pop %v490
    %v495 = vmul.f32 %v485, %v494
    %v496 = vrcp.pop %v493
    %v497 = vmul.f32 %v487, %v496
    %498 = vrot.lane.b32.xlu0 %v361, 64
    %v499 = vpop.permute.xlu0 %498
    %500 = vrot.lane.b32.xlu0 %v366, 64
    %v501 = vpop.permute.xlu0 %500
    %v504 = vsel %vm474, %v495, 0
    %v507 = vsel %vm474, %v497, 0
    %vm509 = vcmask 1043456
    %v510 = vsel %vm509, %v501, 0
    %512 = vmatprep.subr.mxu0 0.0
    %513 = vmatpush1.msra.mxu0 0.0
    %514 = vmatprep.subr.mxu0 0.0
    %515 = vmatpush1.msra.mxu0 0.0
    %516 = vmatprep.subr.mxu0 0.0
    %517 = vmatpush1.msra.mxu0 0.0
    %518 = vmatprep.subr.mxu0 0.0
    %519 = vmatpush1.msra.mxu0 0.0
    %520 = vmatprep.subr.mxu0 0.0
    %521 = vmatpush1.msra.mxu0 0.0
    %522 = vmatprep.subr.mxu0 0.0
    %523 = vmatpush1.msra.mxu0 0.0
    %524 = vmatprep.subr.mxu0 0.0
    %525 = vmatpush1.msra.mxu0 0.0
    %526 = vmatprep.subr.mxu0 0.0
    %527 = vmatpush1.msra.mxu0 0.0
    %528 = vmatprep.subr.mxu0 0.0
    %529 = vmatpush1.msra.mxu0 0.0
    %530 = vmatprep.subr.mxu0 0.0
    %531 = vmatpush1.msra.mxu0 0.0
    %532 = vmatprep.subr.mxu0 0.0
    %533 = vmatpush1.msra.mxu0 0.0
    %534 = vmatprep.subr.mxu0 0.0
    %535 = vmatpush1.msra.mxu0 0.0
    %536 = vmatprep.subr.mxu0 0.0
    %537 = vmatpush1.msra.mxu0 0.0
    %538 = vmatprep.subr.mxu0 0.0
    %539 = vmatpush1.msra.mxu0 0.0
    %540 = vmatprep.subr.mxu0 0.0
    %541 = vmatpush1.msra.mxu0 %v510
    %542 = vmatprep.subr.mxu0 0.0
    %543 = vmatpush1.msra.mxu0 %v499
    %544 = vmatprep.subr.mxu0 0.0
    %545 = vmatpush2.msra.mxu0 0.0
    %546 = vmatprep.subr.mxu0 0.0
    %547 = vmatpush2.msra.mxu0 0.0
    %548 = vmatprep.subr.mxu0 0.0
    %549 = vmatpush2.msra.mxu0 0.0
    %550 = vmatprep.subr.mxu0 0.0
    %551 = vmatpush2.msra.mxu0 0.0
    %552 = vmatprep.subr.mxu0 0.0
    %553 = vmatpush2.msra.mxu0 0.0
    %554 = vmatprep.subr.mxu0 0.0
    %555 = vmatpush2.msra.mxu0 0.0
    %556 = vmatprep.subr.mxu0 0.0
    %557 = vmatpush2.msra.mxu0 0.0
    %558 = vmatprep.subr.mxu0 0.0
    %559 = vmatpush2.msra.mxu0 0.0
    %560 = vmatprep.subr.mxu0 0.0
    %561 = vmatpush2.msra.mxu0 0.0
    %562 = vmatprep.subr.mxu0 0.0
    %563 = vmatpush2.msra.mxu0 0.0
    %564 = vmatprep.subr.mxu0 0.0
    %565 = vmatpush2.msra.mxu0 0.0
    %566 = vmatprep.subr.mxu0 0.0
    %567 = vmatpush2.msra.mxu0 0.0
    %568 = vmatprep.subr.mxu0 0.0
    %569 = vmatpush2.msra.mxu0 0.0
    %570 = vmatprep.subr.mxu0 0.0
    %571 = vmatpush2.msra.mxu0 0.0
    %572 = vmatprep.subr.mxu0 0.0
    %573 = vmatpush2.msra.mxu0 0.0
    %574 = vmatprep.subr.mxu0 0.0
    %575 = vmatpush2.msra.mxu0 0.0
    %576 = vmatprep.mubr.f32.mxu0 0.0
    %577 = vmatmul.mubr.f32.gmra.mxu0 %v504
    %v578 = vpop.f32.mrf.mxu0
    %v579 = vadd.f32 0.0, %v578
    %v580 = vpop.f32.mrf.mxu0
    %581 = vmatprep.mubr.f32.mxu0 0.0
    %582 = vmatmul.mubr.f32.gmra.mxu0 %v507
    %v583 = vpop.f32.mrf.mxu0
    %v584 = vadd.f32 0.0, %v583
    %v585 = vpop.f32.mrf.mxu0
    %586 = vdwg.mxu0
    %v587 = vld [vmem:[#allocation7 + $0x40] sm:$0xff]
    %588 = vrot.lane.b32.xlu0 %v374, 120
    %v589 = vpop.permute.xlu0 %588
    %590 = vrot.lane.b32.xlu0 %v375, 120
    %v591 = vpop.permute.xlu0 %590
    %592 = vrot.lane.b32.xlu0 %v361, 88
    %v593 = vpop.permute.xlu0 %592
    %594 = vrot.lane.b32.xlu0 %v366, 88
    %v595 = vpop.permute.xlu0 %594
    %v596 = vsel %vm388, %v589, 0
    %v598 = vsel %vm388, %v591, 0
    %v600 = vsel %vm388, %v593, 0
    %v602 = vsel %vm388, %v595, 0
    %604 = vmatprep.subr.mxu0 0.0
    %605 = vmatpush1.xpose.msra.mxu0 0.0
    %606 = vmatprep.subr.mxu0 0.0
    %607 = vmatpush1.xpose.msra.mxu0 0.0
    %608 = vmatprep.subr.mxu0 0.0
    %609 = vmatpush1.xpose.msra.mxu0 0.0
    %610 = vmatprep.subr.mxu0 0.0
    %611 = vmatpush1.xpose.msra.mxu0 0.0
    %612 = vmatprep.subr.mxu0 0.0
    %613 = vmatpush1.xpose.msra.mxu0 0.0
    %614 = vmatprep.subr.mxu0 0.0
    %615 = vmatpush1.xpose.msra.mxu0 0.0
    %616 = vmatprep.subr.mxu0 0.0
    %617 = vmatpush1.xpose.msra.mxu0 0.0
    %618 = vmatprep.subr.mxu0 0.0
    %619 = vmatpush1.xpose.msra.mxu0 0.0
    %620 = vmatprep.subr.mxu0 0.0
    %621 = vmatpush1.xpose.msra.mxu0 0.0
    %622 = vmatprep.subr.mxu0 0.0
    %623 = vmatpush1.xpose.msra.mxu0 0.0
    %624 = vmatprep.subr.mxu0 0.0
    %625 = vmatpush1.xpose.msra.mxu0 0.0
    %626 = vmatprep.subr.mxu0 0.0
    %627 = vmatpush1.xpose.msra.mxu0 0.0
    %628 = vmatprep.subr.mxu0 0.0
    %629 = vmatpush1.xpose.msra.mxu0 0.0
    %630 = vmatprep.subr.mxu0 0.0
    %631 = vmatpush1.xpose.msra.mxu0 0.0
    %632 = vmatprep.subr.mxu0 0.0
    %633 = vmatpush1.xpose.msra.mxu0 %v602
    %634 = vmatprep.subr.mxu0 0.0
    %635 = vmatpush1.xpose.msra.mxu0 %v600
    %636 = vmatprep.subr.mxu0 0.0
    %637 = vmatpush2.xpose.msra.mxu0 0.0
    %638 = vmatprep.subr.mxu0 0.0
    %639 = vmatpush2.xpose.msra.mxu0 0.0
    %640 = vmatprep.subr.mxu0 0.0
    %641 = vmatpush2.xpose.msra.mxu0 0.0
    %642 = vmatprep.subr.mxu0 0.0
    %643 = vmatpush2.xpose.msra.mxu0 0.0
    %644 = vmatprep.subr.mxu0 0.0
    %645 = vmatpush2.xpose.msra.mxu0 0.0
    %646 = vmatprep.subr.mxu0 0.0
    %647 = vmatpush2.xpose.msra.mxu0 0.0
    %648 = vmatprep.subr.mxu0 0.0
    %649 = vmatpush2.xpose.msra.mxu0 0.0
    %650 = vmatprep.subr.mxu0 0.0
    %651 = vmatpush2.xpose.msra.mxu0 0.0
    %652 = vmatprep.subr.mxu0 0.0
    %653 = vmatpush2.xpose.msra.mxu0 0.0
    %654 = vmatprep.subr.mxu0 0.0
    %655 = vmatpush2.xpose.msra.mxu0 0.0
    %656 = vmatprep.subr.mxu0 0.0
    %657 = vmatpush2.xpose.msra.mxu0 0.0
    %658 = vmatprep.subr.mxu0 0.0
    %659 = vmatpush2.xpose.msra.mxu0 0.0
    %660 = vmatprep.subr.mxu0 0.0
    %661 = vmatpush2.xpose.msra.mxu0 0.0
    %662 = vmatprep.subr.mxu0 0.0
    %663 = vmatpush2.xpose.msra.mxu0 0.0
    %664 = vmatprep.subr.mxu0 0.0
    %665 = vmatpush2.xpose.msra.mxu0 0.0
    %666 = vmatprep.subr.mxu0 0.0
    %667 = vmatpush2.xpose.msra.mxu0 0.0
    %668 = vmatprep.mubr.f32.mxu0 0.0
    %669 = vmatmul.mubr.f32.gmra.mxu0 %v596
    %v670 = vpop.f32.mrf.mxu0
    %v671 = vadd.f32 %v381, %v670
    %v672 = vpop.f32.mrf.mxu0
    %673 = vmatprep.mubr.f32.mxu0 0.0
    %674 = vmatmul.mubr.f32.gmra.mxu0 %v598
    %v675 = vpop.f32.mrf.mxu0
    %v676 = vadd.f32 %v381, %v675
    %v677 = vpop.f32.mrf.mxu0
    %678 = vdwg.mxu0
    %v679 = vsel %vm474, %v671, -inf
    %680 = vmax.xlane.f32.xlu0 %v679
    %v681 = vpop.xlane.xlu0 %680
    %v682 = vsel %vm478, %v676, -inf
    %683 = vmax.xlane.f32.xlu0 %v682
    %v684 = vpop.xlane.xlu0 %683
    %v685 = vsub.f32 %v671, %v681
    %v686 = vsub.f32 %v676, %v684
    %v687 = vmul.f32 %v685, 1.442695
    %v688 = vpow.pop %v687
    %v689 = vmul.f32 %v686, 1.442695
    %v690 = vpow.pop %v689
    %v691 = vsel %vm474, %v688, 0.0
    %692 = vadd.xlane.f32.xlu0 %v691
    %v693 = vpop.xlane.xlu0 %692
    %v694 = vsel %vm478, %v690, 0.0
    %695 = vadd.xlane.f32.xlu0 %v694
    %v696 = vpop.xlane.xlu0 %695
    %v697 = vrcp.pop %v693
    %v698 = vmul.f32 %v688, %v697
    %v699 = vrcp.pop %v696
    %v700 = vmul.f32 %v690, %v699
    %701 = vrot.lane.b32.xlu0 %v361, 56
    %v702 = vpop.permute.xlu0 %701
    %703 = vrot.lane.b32.xlu0 %v366, 56
    %v704 = vpop.permute.xlu0 %703
    %v707 = vsel %vm474, %v698, 0
    %v710 = vsel %vm474, %v700, 0
    %v712 = vsel %vm509, %v704, 0
    %714 = vmatprep.subr.mxu0 0.0
    %715 = vmatpush1.msra.mxu0 0.0
    %716 = vmatprep.subr.mxu0 0.0
    %717 = vmatpush1.msra.mxu0 0.0
    %718 = vmatprep.subr.mxu0 0.0
    %719 = vmatpush1.msra.mxu0 0.0
    %720 = vmatprep.subr.mxu0 0.0
    %721 = vmatpush1.msra.mxu0 0.0
    %722 = vmatprep.subr.mxu0 0.0
    %723 = vmatpush1.msra.mxu0 0.0
    %724 = vmatprep.subr.mxu0 0.0
    %725 = vmatpush1.msra.mxu0 0.0
    %726 = vmatprep.subr.mxu0 0.0
    %727 = vmatpush1.msra.mxu0 0.0
    %728 = vmatprep.subr.mxu0 0.0
    %729 = vmatpush1.msra.mxu0 0.0
    %730 = vmatprep.subr.mxu0 0.0
    %731 = vmatpush1.msra.mxu0 0.0
    %732 = vmatprep.subr.mxu0 0.0
    %733 = vmatpush1.msra.mxu0 0.0
    %734 = vmatprep.subr.mxu0 0.0
    %735 = vmatpush1.msra.mxu0 0.0
    %736 = vmatprep.subr.mxu0 0.0
    %737 = vmatpush1.msra.mxu0 0.0
    %738 = vmatprep.subr.mxu0 0.0
    %739 = vmatpush1.msra.mxu0 0.0
    %740 = vmatprep.subr.mxu0 0.0
    %741 = vmatpush1.msra.mxu0 0.0
    %742 = vmatprep.subr.mxu0 0.0
    %743 = vmatpush1.msra.mxu0 %v712
    %744 = vmatprep.subr.mxu0 0.0
    %745 = vmatpush1.msra.mxu0 %v702
    %746 = vmatprep.subr.mxu0 0.0
    %747 = vmatpush2.msra.mxu0 0.0
    %748 = vmatprep.subr.mxu0 0.0
    %749 = vmatpush2.msra.mxu0 0.0
    %750 = vmatprep.subr.mxu0 0.0
    %751 = vmatpush2.msra.mxu0 0.0
    %752 = vmatprep.subr.mxu0 0.0
    %753 = vmatpush2.msra.mxu0 0.0
    %754 = vmatprep.subr.mxu0 0.0
    %755 = vmatpush2.msra.mxu0 0.0
    %756 = vmatprep.subr.mxu0 0.0
    %757 = vmatpush2.msra.mxu0 0.0
    %758 = vmatprep.subr.mxu0 0.0
    %759 = vmatpush2.msra.mxu0 0.0
    %760 = vmatprep.subr.mxu0 0.0
    %761 = vmatpush2.msra.mxu0 0.0
    %762 = vmatprep.subr.mxu0 0.0
    %763 = vmatpush2.msra.mxu0 0.0
    %764 = vmatprep.subr.mxu0 0.0
    %765 = vmatpush2.msra.mxu0 0.0
    %766 = vmatprep.subr.mxu0 0.0
    %767 = vmatpush2.msra.mxu0 0.0
    %768 = vmatprep.subr.mxu0 0.0
    %769 = vmatpush2.msra.mxu0 0.0
    %770 = vmatprep.subr.mxu0 0.0
    %771 = vmatpush2.msra.mxu0 0.0
    %772 = vmatprep.subr.mxu0 0.0
    %773 = vmatpush2.msra.mxu0 0.0
    %774 = vmatprep.subr.mxu0 0.0
    %775 = vmatpush2.msra.mxu0 0.0
    %776 = vmatprep.subr.mxu0 0.0
    %777 = vmatpush2.msra.mxu0 0.0
    %778 = vmatprep.mubr.f32.mxu0 0.0
    %779 = vmatmul.mubr.f32.gmra.mxu0 %v707
    %v780 = vpop.f32.mrf.mxu0
    %v781 = vadd.f32 0.0, %v780
    %v782 = vpop.f32.mrf.mxu0
    %783 = vmatprep.mubr.f32.mxu0 0.0
    %784 = vmatmul.mubr.f32.gmra.mxu0 %v710
    %v785 = vpop.f32.mrf.mxu0
    %v786 = vadd.f32 0.0, %v785
    %v787 = vpop.f32.mrf.mxu0
    %788 = vdwg.mxu0
    %v789 = vld [vmem:[#allocation7 + $0x48] sm:$0xff]
    %v791 = vsel %vm388, %v781, 0
    %v794 = vsel %vm388, %v786, 0
    %796 = vmatprep.subr.mxu0 0.0
    %797 = vmatpush1.msra.mxu0 0.0
    %798 = vmatprep.subr.mxu0 0.0
    %799 = vmatpush1.msra.mxu0 0.0
    %800 = vmatprep.subr.mxu0 0.0
    %801 = vmatpush1.msra.mxu0 0.0
    %802 = vmatprep.subr.mxu0 0.0
    %803 = vmatpush1.msra.mxu0 0.0
    %804 = vmatprep.subr.mxu0 0.0
    %805 = vmatpush1.msra.mxu0 0.0
    %806 = vmatprep.subr.mxu0 0.0
    %807 = vmatpush1.msra.mxu0 0.0
    %808 = vmatprep.subr.mxu0 0.0
    %809 = vmatpush1.msra.mxu0 0.0
    %810 = vmatprep.subr.mxu0 0.0
    %811 = vmatpush1.msra.mxu0 0.0
    %812 = vmatprep.subr.mxu0 0.0
    %813 = vmatpush1.msra.mxu0 0.0
    %814 = vmatprep.subr.mxu0 0.0
    %815 = vmatpush1.msra.mxu0 0.0
    %816 = vmatprep.subr.mxu0 0.0
    %817 = vmatpush1.msra.mxu0 0.0
    %818 = vmatprep.subr.mxu0 0.0
    %819 = vmatpush1.msra.mxu0 0.0
    %820 = vmatprep.subr.mxu0 0.0
    %821 = vmatpush1.msra.mxu0 0.0
    %822 = vmatprep.subr.mxu0 0.0
    %823 = vmatpush1.msra.mxu0 0.0
    %824 = vmatprep.subr.mxu0 0.0
    %825 = vmatpush1.msra.mxu0 0.0
    %826 = vmatprep.subr.mxu0 0.0
    %827 = vmatpush1.msra.mxu0 %v789
    %828 = vmatprep.subr.mxu0 0.0
    %829 = vmatpush2.msra.mxu0 0.0
    %830 = vmatprep.subr.mxu0 0.0
    %831 = vmatpush2.msra.mxu0 0.0
    %832 = vmatprep.subr.mxu0 0.0
    %833 = vmatpush2.msra.mxu0 0.0
    %834 = vmatprep.subr.mxu0 0.0
    %835 = vmatpush2.msra.mxu0 0.0
    %836 = vmatprep.subr.mxu0 0.0
    %837 = vmatpush2.msra.mxu0 0.0
    %838 = vmatprep.subr.mxu0 0.0
    %839 = vmatpush2.msra.mxu0 0.0
    %840 = vmatprep.subr.mxu0 0.0
    %841 = vmatpush2.msra.mxu0 0.0
    %842 = vmatprep.subr.mxu0 0.0
    %843 = vmatpush2.msra.mxu0 0.0
    %844 = vmatprep.subr.mxu0 0.0
    %845 = vmatpush2.msra.mxu0 0.0
    %846 = vmatprep.subr.mxu0 0.0
    %847 = vmatpush2.msra.mxu0 0.0
    %848 = vmatprep.subr.mxu0 0.0
    %849 = vmatpush2.msra.mxu0 0.0
    %850 = vmatprep.subr.mxu0 0.0
    %851 = vmatpush2.msra.mxu0 0.0
    %852 = vmatprep.subr.mxu0 0.0
    %853 = vmatpush2.msra.mxu0 0.0
    %854 = vmatprep.subr.mxu0 0.0
    %855 = vmatpush2.msra.mxu0 0.0
    %856 = vmatprep.subr.mxu0 0.0
    %857 = vmatpush2.msra.mxu0 0.0
    %858 = vmatprep.subr.mxu0 0.0
    %859 = vmatpush2.msra.mxu0 0.0
    %860 = vmatprep.mubr.f32.mxu0 0.0
    %861 = vmatmul.mubr.f32.gmra.mxu0 %v791
    %v862 = vpop.f32.mrf.mxu0
    %v863 = vadd.f32 0.0, %v862
    %v864 = vpop.f32.mrf.mxu0
    %865 = vmatprep.mubr.f32.mxu0 0.0
    %866 = vmatmul.mubr.f32.gmra.mxu0 %v794
    %v867 = vpop.f32.mrf.mxu0
    %v868 = vadd.f32 0.0, %v867
    %v869 = vpop.f32.mrf.mxu0
    %870 = vdwg.mxu0
    %v872 = vsel %vm388, %v579, 0
    %v875 = vsel %vm388, %v584, 0
    %877 = vmatprep.subr.mxu0 0.0
    %878 = vmatpush1.msra.mxu0 0.0
    %879 = vmatprep.subr.mxu0 0.0
    %880 = vmatpush1.msra.mxu0 0.0
    %881 = vmatprep.subr.mxu0 0.0
    %882 = vmatpush1.msra.mxu0 0.0
    %883 = vmatprep.subr.mxu0 0.0
    %884 = vmatpush1.msra.mxu0 0.0
    %885 = vmatprep.subr.mxu0 0.0
    %886 = vmatpush1.msra.mxu0 0.0
    %887 = vmatprep.subr.mxu0 0.0
    %888 = vmatpush1.msra.mxu0 0.0
    %889 = vmatprep.subr.mxu0 0.0
    %890 = vmatpush1.msra.mxu0 0.0
    %891 = vmatprep.subr.mxu0 0.0
    %892 = vmatpush1.msra.mxu0 0.0
    %893 = vmatprep.subr.mxu0 0.0
    %894 = vmatpush1.msra.mxu0 0.0
    %895 = vmatprep.subr.mxu0 0.0
    %896 = vmatpush1.msra.mxu0 0.0
    %897 = vmatprep.subr.mxu0 0.0
    %898 = vmatpush1.msra.mxu0 0.0
    %899 = vmatprep.subr.mxu0 0.0
    %900 = vmatpush1.msra.mxu0 0.0
    %901 = vmatprep.subr.mxu0 0.0
    %902 = vmatpush1.msra.mxu0 0.0
    %903 = vmatprep.subr.mxu0 0.0
    %904 = vmatpush1.msra.mxu0 0.0
    %905 = vmatprep.subr.mxu0 0.0
    %906 = vmatpush1.msra.mxu0 0.0
    %907 = vmatprep.subr.mxu0 0.0
    %908 = vmatpush1.msra.mxu0 %v587
    %909 = vmatprep.subr.mxu0 0.0
    %910 = vmatpush2.msra.mxu0 0.0
    %911 = vmatprep.subr.mxu0 0.0
    %912 = vmatpush2.msra.mxu0 0.0
    %913 = vmatprep.subr.mxu0 0.0
    %914 = vmatpush2.msra.mxu0 0.0
    %915 = vmatprep.subr.mxu0 0.0
    %916 = vmatpush2.msra.mxu0 0.0
    %917 = vmatprep.subr.mxu0 0.0
    %918 = vmatpush2.msra.mxu0 0.0
    %919 = vmatprep.subr.mxu0 0.0
    %920 = vmatpush2.msra.mxu0 0.0
    %921 = vmatprep.subr.mxu0 0.0
    %922 = vmatpush2.msra.mxu0 0.0
    %923 = vmatprep.subr.mxu0 0.0
    %924 = vmatpush2.msra.mxu0 0.0
    %925 = vmatprep.subr.mxu0 0.0
    %926 = vmatpush2.msra.mxu0 0.0
    %927 = vmatprep.subr.mxu0 0.0
    %928 = vmatpush2.msra.mxu0 0.0
    %929 = vmatprep.subr.mxu0 0.0
    %930 = vmatpush2.msra.mxu0 0.0
    %931 = vmatprep.subr.mxu0 0.0
    %932 = vmatpush2.msra.mxu0 0.0
    %933 = vmatprep.subr.mxu0 0.0
    %934 = vmatpush2.msra.mxu0 0.0
    %935 = vmatprep.subr.mxu0 0.0
    %936 = vmatpush2.msra.mxu0 0.0
    %937 = vmatprep.subr.mxu0 0.0
    %938 = vmatpush2.msra.mxu0 0.0
    %939 = vmatprep.subr.mxu0 0.0
    %940 = vmatpush2.msra.mxu0 0.0
    %941 = vmatprep.mubr.f32.mxu0 0.0
    %942 = vmatmul.mubr.f32.gmra.mxu0 %v872
    %v943 = vpop.f32.mrf.mxu0
    %v944 = vadd.f32 %v863, %v943
    %v945 = vpop.f32.mrf.mxu0
    %946 = vmatprep.mubr.f32.mxu0 0.0
    %947 = vmatmul.mubr.f32.gmra.mxu0 %v875
    %v948 = vpop.f32.mrf.mxu0
    %v949 = vadd.f32 %v868, %v948
    %v950 = vpop.f32.mrf.mxu0
    %951 = vdwg.mxu0
    %952 = vrot.lane.b32.xlu0 %v374, 112
    %v953 = vpop.permute.xlu0 %952
    %954 = vrot.lane.b32.xlu0 %v375, 112
    %v955 = vpop.permute.xlu0 %954
    %956 = vrot.lane.b32.xlu0 %v361, 80
    %v957 = vpop.permute.xlu0 %956
    %958 = vrot.lane.b32.xlu0 %v366, 80
    %v959 = vpop.permute.xlu0 %958
    %v960 = vsel %vm388, %v953, 0
    %v962 = vsel %vm388, %v955, 0
    %v964 = vsel %vm388, %v957, 0
    %v966 = vsel %vm388, %v959, 0
    %968 = vmatprep.subr.mxu0 0.0
    %969 = vmatpush1.xpose.msra.mxu0 0.0
    %970 = vmatprep.subr.mxu0 0.0
    %971 = vmatpush1.xpose.msra.mxu0 0.0
    %972 = vmatprep.subr.mxu0 0.0
    %973 = vmatpush1.xpose.msra.mxu0 0.0
    %974 = vmatprep.subr.mxu0 0.0
    %975 = vmatpush1.xpose.msra.mxu0 0.0
    %976 = vmatprep.subr.mxu0 0.0
    %977 = vmatpush1.xpose.msra.mxu0 0.0
    %978 = vmatprep.subr.mxu0 0.0
    %979 = vmatpush1.xpose.msra.mxu0 0.0
    %980 = vmatprep.subr.mxu0 0.0
    %981 = vmatpush1.xpose.msra.mxu0 0.0
    %982 = vmatprep.subr.mxu0 0.0
    %983 = vmatpush1.xpose.msra.mxu0 0.0
    %984 = vmatprep.subr.mxu0 0.0
    %985 = vmatpush1.xpose.msra.mxu0 0.0
    %986 = vmatprep.subr.mxu0 0.0
    %987 = vmatpush1.xpose.msra.mxu0 0.0
    %988 = vmatprep.subr.mxu0 0.0
    %989 = vmatpush1.xpose.msra.mxu0 0.0
    %990 = vmatprep.subr.mxu0 0.0
    %991 = vmatpush1.xpose.msra.mxu0 0.0
    %992 = vmatprep.subr.mxu0 0.0
    %993 = vmatpush1.xpose.msra.mxu0 0.0
    %994 = vmatprep.subr.mxu0 0.0
    %995 = vmatpush1.xpose.msra.mxu0 0.0
    %996 = vmatprep.subr.mxu0 0.0
    %997 = vmatpush1.xpose.msra.mxu0 %v966
    %998 = vmatprep.subr.mxu0 0.0
    %999 = vmatpush1.xpose.msra.mxu0 %v964
    %1000 = vmatprep.subr.mxu0 0.0
    %1001 = vmatpush2.xpose.msra.mxu0 0.0
    %1002 = vmatprep.subr.mxu0 0.0
    %1003 = vmatpush2.xpose.msra.mxu0 0.0
    %1004 = vmatprep.subr.mxu0 0.0
    %1005 = vmatpush2.xpose.msra.mxu0 0.0
    %1006 = vmatprep.subr.mxu0 0.0
    %1007 = vmatpush2.xpose.msra.mxu0 0.0
    %1008 = vmatprep.subr.mxu0 0.0
    %1009 = vmatpush2.xpose.msra.mxu0 0.0
    %1010 = vmatprep.subr.mxu0 0.0
    %1011 = vmatpush2.xpose.msra.mxu0 0.0
    %1012 = vmatprep.subr.mxu0 0.0
    %1013 = vmatpush2.xpose.msra.mxu0 0.0
    %1014 = vmatprep.subr.mxu0 0.0
    %1015 = vmatpush2.xpose.msra.mxu0 0.0
    %1016 = vmatprep.subr.mxu0 0.0
    %1017 = vmatpush2.xpose.msra.mxu0 0.0
    %1018 = vmatprep.subr.mxu0 0.0
    %1019 = vmatpush2.xpose.msra.mxu0 0.0
    %1020 = vmatprep.subr.mxu0 0.0
    %1021 = vmatpush2.xpose.msra.mxu0 0.0
    %1022 = vmatprep.subr.mxu0 0.0
    %1023 = vmatpush2.xpose.msra.mxu0 0.0
    %1024 = vmatprep.subr.mxu0 0.0
    %1025 = vmatpush2.xpose.msra.mxu0 0.0
    %1026 = vmatprep.subr.mxu0 0.0
    %1027 = vmatpush2.xpose.msra.mxu0 0.0
    %1028 = vmatprep.subr.mxu0 0.0
    %1029 = vmatpush2.xpose.msra.mxu0 0.0
    %1030 = vmatprep.subr.mxu0 0.0
    %1031 = vmatpush2.xpose.msra.mxu0 0.0
    %1032 = vmatprep.mubr.f32.mxu0 0.0
    %1033 = vmatmul.mubr.f32.gmra.mxu0 %v960
    %v1034 = vpop.f32.mrf.mxu0
    %v1035 = vadd.f32 %v381, %v1034
    %v1036 = vpop.f32.mrf.mxu0
    %1037 = vmatprep.mubr.f32.mxu0 0.0
    %1038 = vmatmul.mubr.f32.gmra.mxu0 %v962
    %v1039 = vpop.f32.mrf.mxu0
    %v1040 = vadd.f32 %v381, %v1039
    %v1041 = vpop.f32.mrf.mxu0
    %1042 = vdwg.mxu0
    %v1043 = vsel %vm474, %v1035, -inf
    %1044 = vmax.xlane.f32.xlu0 %v1043
    %v1045 = vpop.xlane.xlu0 %1044
    %v1046 = vsel %vm478, %v1040, -inf
    %1047 = vmax.xlane.f32.xlu0 %v1046
    %v1048 = vpop.xlane.xlu0 %1047
    %v1049 = vsub.f32 %v1035, %v1045
    %v1050 = vsub.f32 %v1040, %v1048
    %v1051 = vmul.f32 %v1049, 1.442695
    %v1052 = vpow.pop %v1051
    %v1053 = vmul.f32 %v1050, 1.442695
    %v1054 = vpow.pop %v1053
    %v1055 = vsel %vm474, %v1052, 0.0
    %1056 = vadd.xlane.f32.xlu0 %v1055
    %v1057 = vpop.xlane.xlu0 %1056
    %v1058 = vsel %vm478, %v1054, 0.0
    %1059 = vadd.xlane.f32.xlu0 %v1058
    %v1060 = vpop.xlane.xlu0 %1059
    %v1061 = vrcp.pop %v1057
    %v1062 = vmul.f32 %v1052, %v1061
    %v1063 = vrcp.pop %v1060
    %v1064 = vmul.f32 %v1054, %v1063
    %1065 = vrot.lane.b32.xlu0 %v361, 48
    %v1066 = vpop.permute.xlu0 %1065
    %1067 = vrot.lane.b32.xlu0 %v366, 48
    %v1068 = vpop.permute.xlu0 %1067
    %v1071 = vsel %vm474, %v1062, 0
    %v1074 = vsel %vm474, %v1064, 0
    %v1076 = vsel %vm509, %v1068, 0
    %1078 = vmatprep.subr.mxu0 0.0
    %1079 = vmatpush1.msra.mxu0 0.0
    %1080 = vmatprep.subr.mxu0 0.0
    %1081 = vmatpush1.msra.mxu0 0.0
    %1082 = vmatprep.subr.mxu0 0.0
    %1083 = vmatpush1.msra.mxu0 0.0
    %1084 = vmatprep.subr.mxu0 0.0
    %1085 = vmatpush1.msra.mxu0 0.0
    %1086 = vmatprep.subr.mxu0 0.0
    %1087 = vmatpush1.msra.mxu0 0.0
    %1088 = vmatprep.subr.mxu0 0.0
    %1089 = vmatpush1.msra.mxu0 0.0
    %1090 = vmatprep.subr.mxu0 0.0
    %1091 = vmatpush1.msra.mxu0 0.0
    %1092 = vmatprep.subr.mxu0 0.0
    %1093 = vmatpush1.msra.mxu0 0.0
    %1094 = vmatprep.subr.mxu0 0.0
    %1095 = vmatpush1.msra.mxu0 0.0
    %1096 = vmatprep.subr.mxu0 0.0
    %1097 = vmatpush1.msra.mxu0 0.0
    %1098 = vmatprep.subr.mxu0 0.0
    %1099 = vmatpush1.msra.mxu0 0.0
    %1100 = vmatprep.subr.mxu0 0.0
    %1101 = vmatpush1.msra.mxu0 0.0
    %1102 = vmatprep.subr.mxu0 0.0
    %1103 = vmatpush1.msra.mxu0 0.0
    %1104 = vmatprep.subr.mxu0 0.0
    %1105 = vmatpush1.msra.mxu0 0.0
    %1106 = vmatprep.subr.mxu0 0.0
    %1107 = vmatpush1.msra.mxu0 %v1076
    %1108 = vmatprep.subr.mxu0 0.0
    %1109 = vmatpush1.msra.mxu0 %v1066
    %1110 = vmatprep.subr.mxu0 0.0
    %1111 = vmatpush2.msra.mxu0 0.0
    %1112 = vmatprep.subr.mxu0 0.0
    %1113 = vmatpush2.msra.mxu0 0.0
    %1114 = vmatprep.subr.mxu0 0.0
    %1115 = vmatpush2.msra.mxu0 0.0
    %1116 = vmatprep.subr.mxu0 0.0
    %1117 = vmatpush2.msra.mxu0 0.0
    %1118 = vmatprep.subr.mxu0 0.0
    %1119 = vmatpush2.msra.mxu0 0.0
    %1120 = vmatprep.subr.mxu0 0.0
    %1121 = vmatpush2.msra.mxu0 0.0
    %1122 = vmatprep.subr.mxu0 0.0
    %1123 = vmatpush2.msra.mxu0 0.0
    %1124 = vmatprep.subr.mxu0 0.0
    %1125 = vmatpush2.msra.mxu0 0.0
    %1126 = vmatprep.subr.mxu0 0.0
    %1127 = vmatpush2.msra.mxu0 0.0
    %1128 = vmatprep.subr.mxu0 0.0
    %1129 = vmatpush2.msra.mxu0 0.0
    %1130 = vmatprep.subr.mxu0 0.0
    %1131 = vmatpush2.msra.mxu0 0.0
    %1132 = vmatprep.subr.mxu0 0.0
    %1133 = vmatpush2.msra.mxu0 0.0
    %1134 = vmatprep.subr.mxu0 0.0
    %1135 = vmatpush2.msra.mxu0 0.0
    %1136 = vmatprep.subr.mxu0 0.0
    %1137 = vmatpush2.msra.mxu0 0.0
    %1138 = vmatprep.subr.mxu0 0.0
    %1139 = vmatpush2.msra.mxu0 0.0
    %1140 = vmatprep.subr.mxu0 0.0
    %1141 = vmatpush2.msra.mxu0 0.0
    %1142 = vmatprep.mubr.f32.mxu0 0.0
    %1143 = vmatmul.mubr.f32.gmra.mxu0 %v1071
    %v1144 = vpop.f32.mrf.mxu0
    %v1145 = vadd.f32 0.0, %v1144
    %v1146 = vpop.f32.mrf.mxu0
    %1147 = vmatprep.mubr.f32.mxu0 0.0
    %1148 = vmatmul.mubr.f32.gmra.mxu0 %v1074
    %v1149 = vpop.f32.mrf.mxu0
    %v1150 = vadd.f32 0.0, %v1149
    %v1151 = vpop.f32.mrf.mxu0
    %1152 = vdwg.mxu0
    %v1153 = vld [vmem:[#allocation7 + $0x50] sm:$0xff]
    %v1155 = vsel %vm388, %v1145, 0
    %v1158 = vsel %vm388, %v1150, 0
    %1160 = vmatprep.subr.mxu0 0.0
    %1161 = vmatpush1.msra.mxu0 0.0
    %1162 = vmatprep.subr.mxu0 0.0
    %1163 = vmatpush1.msra.mxu0 0.0
    %1164 = vmatprep.subr.mxu0 0.0
    %1165 = vmatpush1.msra.mxu0 0.0
    %1166 = vmatprep.subr.mxu0 0.0
    %1167 = vmatpush1.msra.mxu0 0.0
    %1168 = vmatprep.subr.mxu0 0.0
    %1169 = vmatpush1.msra.mxu0 0.0
    %1170 = vmatprep.subr.mxu0 0.0
    %1171 = vmatpush1.msra.mxu0 0.0
    %1172 = vmatprep.subr.mxu0 0.0
    %1173 = vmatpush1.msra.mxu0 0.0
    %1174 = vmatprep.subr.mxu0 0.0
    %1175 = vmatpush1.msra.mxu0 0.0
    %1176 = vmatprep.subr.mxu0 0.0
    %1177 = vmatpush1.msra.mxu0 0.0
    %1178 = vmatprep.subr.mxu0 0.0
    %1179 = vmatpush1.msra.mxu0 0.0
    %1180 = vmatprep.subr.mxu0 0.0
    %1181 = vmatpush1.msra.mxu0 0.0
    %1182 = vmatprep.subr.mxu0 0.0
    %1183 = vmatpush1.msra.mxu0 0.0
    %1184 = vmatprep.subr.mxu0 0.0
    %1185 = vmatpush1.msra.mxu0 0.0
    %1186 = vmatprep.subr.mxu0 0.0
    %1187 = vmatpush1.msra.mxu0 0.0
    %1188 = vmatprep.subr.mxu0 0.0
    %1189 = vmatpush1.msra.mxu0 0.0
    %1190 = vmatprep.subr.mxu0 0.0
    %1191 = vmatpush1.msra.mxu0 %v1153
    %1192 = vmatprep.subr.mxu0 0.0
    %1193 = vmatpush2.msra.mxu0 0.0
    %1194 = vmatprep.subr.mxu0 0.0
    %1195 = vmatpush2.msra.mxu0 0.0
    %1196 = vmatprep.subr.mxu0 0.0
    %1197 = vmatpush2.msra.mxu0 0.0
    %1198 = vmatprep.subr.mxu0 0.0
    %1199 = vmatpush2.msra.mxu0 0.0
    %1200 = vmatprep.subr.mxu0 0.0
    %1201 = vmatpush2.msra.mxu0 0.0
    %1202 = vmatprep.subr.mxu0 0.0
    %1203 = vmatpush2.msra.mxu0 0.0
    %1204 = vmatprep.subr.mxu0 0.0
    %1205 = vmatpush2.msra.mxu0 0.0
    %1206 = vmatprep.subr.mxu0 0.0
    %1207 = vmatpush2.msra.mxu0 0.0
    %1208 = vmatprep.subr.mxu0 0.0
    %1209 = vmatpush2.msra.mxu0 0.0
    %1210 = vmatprep.subr.mxu0 0.0
    %1211 = vmatpush2.msra.mxu0 0.0
    %1212 = vmatprep.subr.mxu0 0.0
    %1213 = vmatpush2.msra.mxu0 0.0
    %1214 = vmatprep.subr.mxu0 0.0
    %1215 = vmatpush2.msra.mxu0 0.0
    %1216 = vmatprep.subr.mxu0 0.0
    %1217 = vmatpush2.msra.mxu0 0.0
    %1218 = vmatprep.subr.mxu0 0.0
    %1219 = vmatpush2.msra.mxu0 0.0
    %1220 = vmatprep.subr.mxu0 0.0
    %1221 = vmatpush2.msra.mxu0 0.0
    %1222 = vmatprep.subr.mxu0 0.0
    %1223 = vmatpush2.msra.mxu0 0.0
    %1224 = vmatprep.mubr.f32.mxu0 0.0
    %1225 = vmatmul.mubr.f32.gmra.mxu0 %v1155
    %v1226 = vpop.f32.mrf.mxu0
    %v1227 = vadd.f32 0.0, %v1226
    %v1228 = vpop.f32.mrf.mxu0
    %1229 = vmatprep.mubr.f32.mxu0 0.0
    %1230 = vmatmul.mubr.f32.gmra.mxu0 %v1158
    %v1231 = vpop.f32.mrf.mxu0
    %v1232 = vadd.f32 0.0, %v1231
    %v1233 = vpop.f32.mrf.mxu0
    %1234 = vdwg.mxu0
    %v1235 = vadd.f32 %v944, %v1227
    %v1236 = vadd.f32 %v949, %v1232
    %1237 = vrot.lane.b32.xlu0 %v374, 104
    %v1238 = vpop.permute.xlu0 %1237
    %1239 = vrot.lane.b32.xlu0 %v375, 104
    %v1240 = vpop.permute.xlu0 %1239
    %1241 = vrot.lane.b32.xlu0 %v361, 72
    %v1242 = vpop.permute.xlu0 %1241
    %1243 = vrot.lane.b32.xlu0 %v366, 72
    %v1244 = vpop.permute.xlu0 %1243
    %v1245 = vsel %vm388, %v1238, 0
    %v1247 = vsel %vm388, %v1240, 0
    %v1249 = vsel %vm388, %v1242, 0
    %v1251 = vsel %vm388, %v1244, 0
    %1253 = vmatprep.subr.mxu0 0.0
    %1254 = vmatpush1.xpose.msra.mxu0 0.0
    %1255 = vmatprep.subr.mxu0 0.0
    %1256 = vmatpush1.xpose.msra.mxu0 0.0
    %1257 = vmatprep.subr.mxu0 0.0
    %1258 = vmatpush1.xpose.msra.mxu0 0.0
    %1259 = vmatprep.subr.mxu0 0.0
    %1260 = vmatpush1.xpose.msra.mxu0 0.0
    %1261 = vmatprep.subr.mxu0 0.0
    %1262 = vmatpush1.xpose.msra.mxu0 0.0
    %1263 = vmatprep.subr.mxu0 0.0
    %1264 = vmatpush1.xpose.msra.mxu0 0.0
    %1265 = vmatprep.subr.mxu0 0.0
    %1266 = vmatpush1.xpose.msra.mxu0 0.0
    %1267 = vmatprep.subr.mxu0 0.0
    %1268 = vmatpush1.xpose.msra.mxu0 0.0
    %1269 = vmatprep.subr.mxu0 0.0
    %1270 = vmatpush1.xpose.msra.mxu0 0.0
    %1271 = vmatprep.subr.mxu0 0.0
    %1272 = vmatpush1.xpose.msra.mxu0 0.0
    %1273 = vmatprep.subr.mxu0 0.0
    %1274 = vmatpush1.xpose.msra.mxu0 0.0
    %1275 = vmatprep.subr.mxu0 0.0
    %1276 = vmatpush1.xpose.msra.mxu0 0.0
    %1277 = vmatprep.subr.mxu0 0.0
    %1278 = vmatpush1.xpose.msra.mxu0 0.0
    %1279 = vmatprep.subr.mxu0 0.0
    %1280 = vmatpush1.xpose.msra.mxu0 0.0
    %1281 = vmatprep.subr.mxu0 0.0
    %1282 = vmatpush1.xpose.msra.mxu0 %v1251
    %1283 = vmatprep.subr.mxu0 0.0
    %1284 = vmatpush1.xpose.msra.mxu0 %v1249
    %1285 = vmatprep.subr.mxu0 0.0
    %1286 = vmatpush2.xpose.msra.mxu0 0.0
    %1287 = vmatprep.subr.mxu0 0.0
    %1288 = vmatpush2.xpose.msra.mxu0 0.0
    %1289 = vmatprep.subr.mxu0 0.0
    %1290 = vmatpush2.xpose.msra.mxu0 0.0
    %1291 = vmatprep.subr.mxu0 0.0
    %1292 = vmatpush2.xpose.msra.mxu0 0.0
    %1293 = vmatprep.subr.mxu0 0.0
    %1294 = vmatpush2.xpose.msra.mxu0 0.0
    %1295 = vmatprep.subr.mxu0 0.0
    %1296 = vmatpush2.xpose.msra.mxu0 0.0
    %1297 = vmatprep.subr.mxu0 0.0
    %1298 = vmatpush2.xpose.msra.mxu0 0.0
    %1299 = vmatprep.subr.mxu0 0.0
    %1300 = vmatpush2.xpose.msra.mxu0 0.0
    %1301 = vmatprep.subr.mxu0 0.0
    %1302 = vmatpush2.xpose.msra.mxu0 0.0
    %1303 = vmatprep.subr.mxu0 0.0
    %1304 = vmatpush2.xpose.msra.mxu0 0.0
    %1305 = vmatprep.subr.mxu0 0.0
    %1306 = vmatpush2.xpose.msra.mxu0 0.0
    %1307 = vmatprep.subr.mxu0 0.0
    %1308 = vmatpush2.xpose.msra.mxu0 0.0
    %1309 = vmatprep.subr.mxu0 0.0
    %1310 = vmatpush2.xpose.msra.mxu0 0.0
    %1311 = vmatprep.subr.mxu0 0.0
    %1312 = vmatpush2.xpose.msra.mxu0 0.0
    %1313 = vmatprep.subr.mxu0 0.0
    %1314 = vmatpush2.xpose.msra.mxu0 0.0
    %1315 = vmatprep.subr.mxu0 0.0
    %1316 = vmatpush2.xpose.msra.mxu0 0.0
    %1317 = vmatprep.mubr.f32.mxu0 0.0
    %1318 = vmatmul.mubr.f32.gmra.mxu0 %v1245
    %v1319 = vpop.f32.mrf.mxu0
    %v1320 = vadd.f32 %v381, %v1319
    %v1321 = vpop.f32.mrf.mxu0
    %1322 = vmatprep.mubr.f32.mxu0 0.0
    %1323 = vmatmul.mubr.f32.gmra.mxu0 %v1247
    %v1324 = vpop.f32.mrf.mxu0
    %v1325 = vadd.f32 %v381, %v1324
    %v1326 = vpop.f32.mrf.mxu0
    %1327 = vdwg.mxu0
    %v1328 = vsel %vm474, %v1320, -inf
    %1329 = vmax.xlane.f32.xlu0 %v1328
    %v1330 = vpop.xlane.xlu0 %1329
    %v1331 = vsel %vm478, %v1325, -inf
    %1332 = vmax.xlane.f32.xlu0 %v1331
    %v1333 = vpop.xlane.xlu0 %1332
    %v1334 = vsub.f32 %v1320, %v1330
    %v1335 = vsub.f32 %v1325, %v1333
    %v1336 = vmul.f32 %v1334, 1.442695
    %v1337 = vpow.pop %v1336
    %v1338 = vmul.f32 %v1335, 1.442695
    %v1339 = vpow.pop %v1338
    %v1340 = vsel %vm474, %v1337, 0.0
    %1341 = vadd.xlane.f32.xlu0 %v1340
    %v1342 = vpop.xlane.xlu0 %1341
    %v1343 = vsel %vm478, %v1339, 0.0
    %1344 = vadd.xlane.f32.xlu0 %v1343
    %v1345 = vpop.xlane.xlu0 %1344
    %v1346 = vrcp.pop %v1342
    %v1347 = vmul.f32 %v1337, %v1346
    %v1348 = vrcp.pop %v1345
    %v1349 = vmul.f32 %v1339, %v1348
    %1350 = vrot.lane.b32.xlu0 %v361, 40
    %v1351 = vpop.permute.xlu0 %1350
    %1352 = vrot.lane.b32.xlu0 %v366, 40
    %v1353 = vpop.permute.xlu0 %1352
    %v1356 = vsel %vm474, %v1347, 0
    %v1359 = vsel %vm474, %v1349, 0
    %v1361 = vsel %vm509, %v1353, 0
    %1363 = vmatprep.subr.mxu0 0.0
    %1364 = vmatpush1.msra.mxu0 0.0
    %1365 = vmatprep.subr.mxu0 0.0
    %1366 = vmatpush1.msra.mxu0 0.0
    %1367 = vmatprep.subr.mxu0 0.0
    %1368 = vmatpush1.msra.mxu0 0.0
    %1369 = vmatprep.subr.mxu0 0.0
    %1370 = vmatpush1.msra.mxu0 0.0
    %1371 = vmatprep.subr.mxu0 0.0
    %1372 = vmatpush1.msra.mxu0 0.0
    %1373 = vmatprep.subr.mxu0 0.0
    %1374 = vmatpush1.msra.mxu0 0.0
    %1375 = vmatprep.subr.mxu0 0.0
    %1376 = vmatpush1.msra.mxu0 0.0
    %1377 = vmatprep.subr.mxu0 0.0
    %1378 = vmatpush1.msra.mxu0 0.0
    %1379 = vmatprep.subr.mxu0 0.0
    %1380 = vmatpush1.msra.mxu0 0.0
    %1381 = vmatprep.subr.mxu0 0.0
    %1382 = vmatpush1.msra.mxu0 0.0
    %1383 = vmatprep.subr.mxu0 0.0
    %1384 = vmatpush1.msra.mxu0 0.0
    %1385 = vmatprep.subr.mxu0 0.0
    %1386 = vmatpush1.msra.mxu0 0.0
    %1387 = vmatprep.subr.mxu0 0.0
    %1388 = vmatpush1.msra.mxu0 0.0
    %1389 = vmatprep.subr.mxu0 0.0
    %1390 = vmatpush1.msra.mxu0 0.0
    %1391 = vmatprep.subr.mxu0 0.0
    %1392 = vmatpush1.msra.mxu0 %v1361
    %1393 = vmatprep.subr.mxu0 0.0
    %1394 = vmatpush1.msra.mxu0 %v1351
    %1395 = vmatprep.subr.mxu0 0.0
    %1396 = vmatpush2.msra.mxu0 0.0
    %1397 = vmatprep.subr.mxu0 0.0
    %1398 = vmatpush2.msra.mxu0 0.0
    %1399 = vmatprep.subr.mxu0 0.0
    %1400 = vmatpush2.msra.mxu0 0.0
    %1401 = vmatprep.subr.mxu0 0.0
    %1402 = vmatpush2.msra.mxu0 0.0
    %1403 = vmatprep.subr.mxu0 0.0
    %1404 = vmatpush2.msra.mxu0 0.0
    %1405 = vmatprep.subr.mxu0 0.0
    %1406 = vmatpush2.msra.mxu0 0.0
    %1407 = vmatprep.subr.mxu0 0.0
    %1408 = vmatpush2.msra.mxu0 0.0
    %1409 = vmatprep.subr.mxu0 0.0
    %1410 = vmatpush2.msra.mxu0 0.0
    %1411 = vmatprep.subr.mxu0 0.0
    %1412 = vmatpush2.msra.mxu0 0.0
    %1413 = vmatprep.subr.mxu0 0.0
    %1414 = vmatpush2.msra.mxu0 0.0
    %1415 = vmatprep.subr.mxu0 0.0
    %1416 = vmatpush2.msra.mxu0 0.0
    %1417 = vmatprep.subr.mxu0 0.0
    %1418 = vmatpush2.msra.mxu0 0.0
    %1419 = vmatprep.subr.mxu0 0.0
    %1420 = vmatpush2.msra.mxu0 0.0
    %1421 = vmatprep.subr.mxu0 0.0
    %1422 = vmatpush2.msra.mxu0 0.0
    %1423 = vmatprep.subr.mxu0 0.0
    %1424 = vmatpush2.msra.mxu0 0.0
    %1425 = vmatprep.subr.mxu0 0.0
    %1426 = vmatpush2.msra.mxu0 0.0
    %1427 = vmatprep.mubr.f32.mxu0 0.0
    %1428 = vmatmul.mubr.f32.gmra.mxu0 %v1356
    %v1429 = vpop.f32.mrf.mxu0
    %v1430 = vadd.f32 0.0, %v1429
    %v1431 = vpop.f32.mrf.mxu0
    %1432 = vmatprep.mubr.f32.mxu0 0.0
    %1433 = vmatmul.mubr.f32.gmra.mxu0 %v1359
    %v1434 = vpop.f32.mrf.mxu0
    %v1435 = vadd.f32 0.0, %v1434
    %v1436 = vpop.f32.mrf.mxu0
    %1437 = vdwg.mxu0
    %v1438 = vld [vmem:[#allocation7 + $0x58] sm:$0xff]
    %v1440 = vsel %vm388, %v1430, 0
    %v1443 = vsel %vm388, %v1435, 0
    %1445 = vmatprep.subr.mxu0 0.0
    %1446 = vmatpush1.msra.mxu0 0.0
    %1447 = vmatprep.subr.mxu0 0.0
    %1448 = vmatpush1.msra.mxu0 0.0
    %1449 = vmatprep.subr.mxu0 0.0
    %1450 = vmatpush1.msra.mxu0 0.0
    %1451 = vmatprep.subr.mxu0 0.0
    %1452 = vmatpush1.msra.mxu0 0.0
    %1453 = vmatprep.subr.mxu0 0.0
    %1454 = vmatpush1.msra.mxu0 0.0
    %1455 = vmatprep.subr.mxu0 0.0
    %1456 = vmatpush1.msra.mxu0 0.0
    %1457 = vmatprep.subr.mxu0 0.0
    %1458 = vmatpush1.msra.mxu0 0.0
    %1459 = vmatprep.subr.mxu0 0.0
    %1460 = vmatpush1.msra.mxu0 0.0
    %1461 = vmatprep.subr.mxu0 0.0
    %1462 = vmatpush1.msra.mxu0 0.0
    %1463 = vmatprep.subr.mxu0 0.0
    %1464 = vmatpush1.msra.mxu0 0.0
    %1465 = vmatprep.subr.mxu0 0.0
    %1466 = vmatpush1.msra.mxu0 0.0
    %1467 = vmatprep.subr.mxu0 0.0
    %1468 = vmatpush1.msra.mxu0 0.0
    %1469 = vmatprep.subr.mxu0 0.0
    %1470 = vmatpush1.msra.mxu0 0.0
    %1471 = vmatprep.subr.mxu0 0.0
    %1472 = vmatpush1.msra.mxu0 0.0
    %1473 = vmatprep.subr.mxu0 0.0
    %1474 = vmatpush1.msra.mxu0 0.0
    %1475 = vmatprep.subr.mxu0 0.0
    %1476 = vmatpush1.msra.mxu0 %v1438
    %1477 = vmatprep.subr.mxu0 0.0
    %1478 = vmatpush2.msra.mxu0 0.0
    %1479 = vmatprep.subr.mxu0 0.0
    %1480 = vmatpush2.msra.mxu0 0.0
    %1481 = vmatprep.subr.mxu0 0.0
    %1482 = vmatpush2.msra.mxu0 0.0
    %1483 = vmatprep.subr.mxu0 0.0
    %1484 = vmatpush2.msra.mxu0 0.0
    %1485 = vmatprep.subr.mxu0 0.0
    %1486 = vmatpush2.msra.mxu0 0.0
    %1487 = vmatprep.subr.mxu0 0.0
    %1488 = vmatpush2.msra.mxu0 0.0
    %1489 = vmatprep.subr.mxu0 0.0
    %1490 = vmatpush2.msra.mxu0 0.0
    %1491 = vmatprep.subr.mxu0 0.0
    %1492 = vmatpush2.msra.mxu0 0.0
    %1493 = vmatprep.subr.mxu0 0.0
    %1494 = vmatpush2.msra.mxu0 0.0
    %1495 = vmatprep.subr.mxu0 0.0
    %1496 = vmatpush2.msra.mxu0 0.0
    %1497 = vmatprep.subr.mxu0 0.0
    %1498 = vmatpush2.msra.mxu0 0.0
    %1499 = vmatprep.subr.mxu0 0.0
    %1500 = vmatpush2.msra.mxu0 0.0
    %1501 = vmatprep.subr.mxu0 0.0
    %1502 = vmatpush2.msra.mxu0 0.0
    %1503 = vmatprep.subr.mxu0 0.0
    %1504 = vmatpush2.msra.mxu0 0.0
    %1505 = vmatprep.subr.mxu0 0.0
    %1506 = vmatpush2.msra.mxu0 0.0
    %1507 = vmatprep.subr.mxu0 0.0
    %1508 = vmatpush2.msra.mxu0 0.0
    %1509 = vmatprep.mubr.f32.mxu0 0.0
    %1510 = vmatmul.mubr.f32.gmra.mxu0 %v1440
    %v1511 = vpop.f32.mrf.mxu0
    %v1512 = vadd.f32 0.0, %v1511
    %v1513 = vpop.f32.mrf.mxu0
    %1514 = vmatprep.mubr.f32.mxu0 0.0
    %1515 = vmatmul.mubr.f32.gmra.mxu0 %v1443
    %v1516 = vpop.f32.mrf.mxu0
    %v1517 = vadd.f32 0.0, %v1516
    %v1518 = vpop.f32.mrf.mxu0
    %1519 = vdwg.mxu0
    %v1520 = vadd.f32 %v1235, %v1512
    %v1521 = vadd.f32 %v1236, %v1517
    %v1522 = vld [vmem:[#allocation5 + $0x1] sm:$0x1]
    %v1523 = vlaneseq
    %v1524 = vshrl.u32 %v1523, 7
    %v1525 = vsub.s32 0, %v1524
    %v1526 = vrot.slane %v1522, %v1525
    %v1528 = vrot.slane %v375, 4
    %v1529 = vrot.slane %v376, 4
    %v1530 = vsel %vm509, %v1528, %v1529
    %v1532 = vrot.slane %v366, 4
    %v1533 = vrot.slane %v371, 4
    %v1534 = vsel %vm509, %v1532, %v1533
    %1535 = vrot.lane.b32.xlu0 %v1534, 96
    %v1536 = vpop.permute.xlu0 %1535
    %1537 = vrot.lane.b32.xlu0 %v1533, 96
    %v1538 = vpop.permute.xlu0 %1537
    %v1539 = vsel %vm388, %v1530, 0
    %v1541 = vsel %vm388, %v1529, 0
    %v1543 = vsel %vm388, %v1536, 0
    %v1545 = vsel %vm388, %v1538, 0
    %1547 = vmatprep.subr.mxu0 0.0
    %1548 = vmatpush1.xpose.msra.mxu0 0.0
    %1549 = vmatprep.subr.mxu0 0.0
    %1550 = vmatpush1.xpose.msra.mxu0 0.0
    %1551 = vmatprep.subr.mxu0 0.0
    %1552 = vmatpush1.xpose.msra.mxu0 0.0
    %1553 = vmatprep.subr.mxu0 0.0
    %1554 = vmatpush1.xpose.msra.mxu0 0.0
    %1555 = vmatprep.subr.mxu0 0.0
    %1556 = vmatpush1.xpose.msra.mxu0 0.0
    %1557 = vmatprep.subr.mxu0 0.0
    %1558 = vmatpush1.xpose.msra.mxu0 0.0
    %1559 = vmatprep.subr.mxu0 0.0
    %1560 = vmatpush1.xpose.msra.mxu0 0.0
    %1561 = vmatprep.subr.mxu0 0.0
    %1562 = vmatpush1.xpose.msra.mxu0 0.0
    %1563 = vmatprep.subr.mxu0 0.0
    %1564 = vmatpush1.xpose.msra.mxu0 0.0
    %1565 = vmatprep.subr.mxu0 0.0
    %1566 = vmatpush1.xpose.msra.mxu0 0.0
    %1567 = vmatprep.subr.mxu0 0.0
    %1568 = vmatpush1.xpose.msra.mxu0 0.0
    %1569 = vmatprep.subr.mxu0 0.0
    %1570 = vmatpush1.xpose.msra.mxu0 0.0
    %1571 = vmatprep.subr.mxu0 0.0
    %1572 = vmatpush1.xpose.msra.mxu0 0.0
    %1573 = vmatprep.subr.mxu0 0.0
    %1574 = vmatpush1.xpose.msra.mxu0 0.0
    %1575 = vmatprep.subr.mxu0 0.0
    %1576 = vmatpush1.xpose.msra.mxu0 %v1545
    %1577 = vmatprep.subr.mxu0 0.0
    %1578 = vmatpush1.xpose.msra.mxu0 %v1543
    %1579 = vmatprep.subr.mxu0 0.0
    %1580 = vmatpush2.xpose.msra.mxu0 0.0
    %1581 = vmatprep.subr.mxu0 0.0
    %1582 = vmatpush2.xpose.msra.mxu0 0.0
    %1583 = vmatprep.subr.mxu0 0.0
    %1584 = vmatpush2.xpose.msra.mxu0 0.0
    %1585 = vmatprep.subr.mxu0 0.0
    %1586 = vmatpush2.xpose.msra.mxu0 0.0
    %1587 = vmatprep.subr.mxu0 0.0
    %1588 = vmatpush2.xpose.msra.mxu0 0.0
    %1589 = vmatprep.subr.mxu0 0.0
    %1590 = vmatpush2.xpose.msra.mxu0 0.0
    %1591 = vmatprep.subr.mxu0 0.0
    %1592 = vmatpush2.xpose.msra.mxu0 0.0
    %1593 = vmatprep.subr.mxu0 0.0
    %1594 = vmatpush2.xpose.msra.mxu0 0.0
    %1595 = vmatprep.subr.mxu0 0.0
    %1596 = vmatpush2.xpose.msra.mxu0 0.0
    %1597 = vmatprep.subr.mxu0 0.0
    %1598 = vmatpush2.xpose.msra.mxu0 0.0
    %1599 = vmatprep.subr.mxu0 0.0
    %1600 = vmatpush2.xpose.msra.mxu0 0.0
    %1601 = vmatprep.subr.mxu0 0.0
    %1602 = vmatpush2.xpose.msra.mxu0 0.0
    %1603 = vmatprep.subr.mxu0 0.0
    %1604 = vmatpush2.xpose.msra.mxu0 0.0
    %1605 = vmatprep.subr.mxu0 0.0
    %1606 = vmatpush2.xpose.msra.mxu0 0.0
    %1607 = vmatprep.subr.mxu0 0.0
    %1608 = vmatpush2.xpose.msra.mxu0 0.0
    %1609 = vmatprep.subr.mxu0 0.0
    %1610 = vmatpush2.xpose.msra.mxu0 0.0
    %1611 = vmatprep.mubr.f32.mxu0 0.0
    %1612 = vmatmul.mubr.f32.gmra.mxu0 %v1539
    %v1613 = vpop.f32.mrf.mxu0
    %v1614 = vadd.f32 %v1526, %v1613
    %v1615 = vpop.f32.mrf.mxu0
    %1616 = vmatprep.mubr.f32.mxu0 0.0
    %1617 = vmatmul.mubr.f32.gmra.mxu0 %v1541
    %v1618 = vpop.f32.mrf.mxu0
    %v1619 = vadd.f32 %v1526, %v1618
    %v1620 = vpop.f32.mrf.mxu0
    %1621 = vdwg.mxu0
    %v1622 = vsel %vm474, %v1614, -inf
    %1623 = vmax.xlane.f32.xlu0 %v1622
    %v1624 = vpop.xlane.xlu0 %1623
    %v1625 = vsel %vm478, %v1619, -inf
    %1626 = vmax.xlane.f32.xlu0 %v1625
    %v1627 = vpop.xlane.xlu0 %1626
    %v1628 = vsub.f32 %v1614, %v1624
    %v1629 = vsub.f32 %v1619, %v1627
    %v1630 = vmul.f32 %v1628, 1.442695
    %v1631 = vpow.pop %v1630
    %v1632 = vmul.f32 %v1629, 1.442695
    %v1633 = vpow.pop %v1632
    %v1634 = vsel %vm474, %v1631, 0.0
    %1635 = vadd.xlane.f32.xlu0 %v1634
    %v1636 = vpop.xlane.xlu0 %1635
    %v1637 = vsel %vm478, %v1633, 0.0
    %1638 = vadd.xlane.f32.xlu0 %v1637
    %v1639 = vpop.xlane.xlu0 %1638
    %v1640 = vrcp.pop %v1636
    %v1641 = vmul.f32 %v1631, %v1640
    %v1642 = vrcp.pop %v1639
    %v1643 = vmul.f32 %v1633, %v1642
    %1644 = vrot.lane.b32.xlu0 %v1534, 64
    %v1645 = vpop.permute.xlu0 %1644
    %1646 = vrot.lane.b32.xlu0 %v1533, 64
    %v1647 = vpop.permute.xlu0 %1646
    %v1650 = vsel %vm474, %v1641, 0
    %v1653 = vsel %vm474, %v1643, 0
    %v1655 = vsel %vm509, %v1647, 0
    %1657 = vmatprep.subr.mxu0 0.0
    %1658 = vmatpush1.msra.mxu0 0.0
    %1659 = vmatprep.subr.mxu0 0.0
    %1660 = vmatpush1.msra.mxu0 0.0
    %1661 = vmatprep.subr.mxu0 0.0
    %1662 = vmatpush1.msra.mxu0 0.0
    %1663 = vmatprep.subr.mxu0 0.0
    %1664 = vmatpush1.msra.mxu0 0.0
    %1665 = vmatprep.subr.mxu0 0.0
    %1666 = vmatpush1.msra.mxu0 0.0
    %1667 = vmatprep.subr.mxu0 0.0
    %1668 = vmatpush1.msra.mxu0 0.0
    %1669 = vmatprep.subr.mxu0 0.0
    %1670 = vmatpush1.msra.mxu0 0.0
    %1671 = vmatprep.subr.mxu0 0.0
    %1672 = vmatpush1.msra.mxu0 0.0
    %1673 = vmatprep.subr.mxu0 0.0
    %1674 = vmatpush1.msra.mxu0 0.0
    %1675 = vmatprep.subr.mxu0 0.0
    %1676 = vmatpush1.msra.mxu0 0.0
    %1677 = vmatprep.subr.mxu0 0.0
    %1678 = vmatpush1.msra.mxu0 0.0
    %1679 = vmatprep.subr.mxu0 0.0
    %1680 = vmatpush1.msra.mxu0 0.0
    %1681 = vmatprep.subr.mxu0 0.0
    %1682 = vmatpush1.msra.mxu0 0.0
    %1683 = vmatprep.subr.mxu0 0.0
    %1684 = vmatpush1.msra.mxu0 0.0
    %1685 = vmatprep.subr.mxu0 0.0
    %1686 = vmatpush1.msra.mxu0 %v1655
    %1687 = vmatprep.subr.mxu0 0.0
    %1688 = vmatpush1.msra.mxu0 %v1645
    %1689 = vmatprep.subr.mxu0 0.0
    %1690 = vmatpush2.msra.mxu0 0.0
    %1691 = vmatprep.subr.mxu0 0.0
    %1692 = vmatpush2.msra.mxu0 0.0
    %1693 = vmatprep.subr.mxu0 0.0
    %1694 = vmatpush2.msra.mxu0 0.0
    %1695 = vmatprep.subr.mxu0 0.0
    %1696 = vmatpush2.msra.mxu0 0.0
    %1697 = vmatprep.subr.mxu0 0.0
    %1698 = vmatpush2.msra.mxu0 0.0
    %1699 = vmatprep.subr.mxu0 0.0
    %1700 = vmatpush2.msra.mxu0 0.0
    %1701 = vmatprep.subr.mxu0 0.0
    %1702 = vmatpush2.msra.mxu0 0.0
    %1703 = vmatprep.subr.mxu0 0.0
    %1704 = vmatpush2.msra.mxu0 0.0
    %1705 = vmatprep.subr.mxu0 0.0
    %1706 = vmatpush2.msra.mxu0 0.0
    %1707 = vmatprep.subr.mxu0 0.0
    %1708 = vmatpush2.msra.mxu0 0.0
    %1709 = vmatprep.subr.mxu0 0.0
    %1710 = vmatpush2.msra.mxu0 0.0
    %1711 = vmatprep.subr.mxu0 0.0
    %1712 = vmatpush2.msra.mxu0 0.0
    %1713 = vmatprep.subr.mxu0 0.0
    %1714 = vmatpush2.msra.mxu0 0.0
    %1715 = vmatprep.subr.mxu0 0.0
    %1716 = vmatpush2.msra.mxu0 0.0
    %1717 = vmatprep.subr.mxu0 0.0
    %1718 = vmatpush2.msra.mxu0 0.0
    %1719 = vmatprep.subr.mxu0 0.0
    %1720 = vmatpush2.msra.mxu0 0.0
    %1721 = vmatprep.mubr.f32.mxu0 0.0
    %1722 = vmatmul.mubr.f32.gmra.mxu0 %v1650
    %v1723 = vpop.f32.mrf.mxu0
    %v1724 = vadd.f32 0.0, %v1723
    %v1725 = vpop.f32.mrf.mxu0
    %1726 = vmatprep.mubr.f32.mxu0 0.0
    %1727 = vmatmul.mubr.f32.gmra.mxu0 %v1653
    %v1728 = vpop.f32.mrf.mxu0
    %v1729 = vadd.f32 0.0, %v1728
    %v1730 = vpop.f32.mrf.mxu0
    %1731 = vdwg.mxu0
    %1732 = vrot.lane.b32.xlu0 %v1530, 120
    %v1733 = vpop.permute.xlu0 %1732
    %1734 = vrot.lane.b32.xlu0 %v1529, 120
    %v1735 = vpop.permute.xlu0 %1734
    %1736 = vrot.lane.b32.xlu0 %v1534, 88
    %v1737 = vpop.permute.xlu0 %1736
    %1738 = vrot.lane.b32.xlu0 %v1533, 88
    %v1739 = vpop.permute.xlu0 %1738
    %v1740 = vsel %vm388, %v1733, 0
    %v1742 = vsel %vm388, %v1735, 0
    %v1744 = vsel %vm388, %v1737, 0
    %v1746 = vsel %vm388, %v1739, 0
    %1748 = vmatprep.subr.mxu0 0.0
    %1749 = vmatpush1.xpose.msra.mxu0 0.0
    %1750 = vmatprep.subr.mxu0 0.0
    %1751 = vmatpush1.xpose.msra.mxu0 0.0
    %1752 = vmatprep.subr.mxu0 0.0
    %1753 = vmatpush1.xpose.msra.mxu0 0.0
    %1754 = vmatprep.subr.mxu0 0.0
    %1755 = vmatpush1.xpose.msra.mxu0 0.0
    %1756 = vmatprep.subr.mxu0 0.0
    %1757 = vmatpush1.xpose.msra.mxu0 0.0
    %1758 = vmatprep.subr.mxu0 0.0
    %1759 = vmatpush1.xpose.msra.mxu0 0.0
    %1760 = vmatprep.subr.mxu0 0.0
    %1761 = vmatpush1.xpose.msra.mxu0 0.0
    %1762 = vmatprep.subr.mxu0 0.0
    %1763 = vmatpush1.xpose.msra.mxu0 0.0
    %1764 = vmatprep.subr.mxu0 0.0
    %1765 = vmatpush1.xpose.msra.mxu0 0.0
    %1766 = vmatprep.subr.mxu0 0.0
    %1767 = vmatpush1.xpose.msra.mxu0 0.0
    %1768 = vmatprep.subr.mxu0 0.0
    %1769 = vmatpush1.xpose.msra.mxu0 0.0
    %1770 = vmatprep.subr.mxu0 0.0
    %1771 = vmatpush1.xpose.msra.mxu0 0.0
    %1772 = vmatprep.subr.mxu0 0.0
    %1773 = vmatpush1.xpose.msra.mxu0 0.0
    %1774 = vmatprep.subr.mxu0 0.0
    %1775 = vmatpush1.xpose.msra.mxu0 0.0
    %1776 = vmatprep.subr.mxu0 0.0
    %1777 = vmatpush1.xpose.msra.mxu0 %v1746
    %1778 = vmatprep.subr.mxu0 0.0
    %1779 = vmatpush1.xpose.msra.mxu0 %v1744
    %1780 = vmatprep.subr.mxu0 0.0
    %1781 = vmatpush2.xpose.msra.mxu0 0.0
    %1782 = vmatprep.subr.mxu0 0.0
    %1783 = vmatpush2.xpose.msra.mxu0 0.0
    %1784 = vmatprep.subr.mxu0 0.0
    %1785 = vmatpush2.xpose.msra.mxu0 0.0
    %1786 = vmatprep.subr.mxu0 0.0
    %1787 = vmatpush2.xpose.msra.mxu0 0.0
    %1788 = vmatprep.subr.mxu0 0.0
    %1789 = vmatpush2.xpose.msra.mxu0 0.0
    %1790 = vmatprep.subr.mxu0 0.0
    %1791 = vmatpush2.xpose.msra.mxu0 0.0
    %1792 = vmatprep.subr.mxu0 0.0
    %1793 = vmatpush2.xpose.msra.mxu0 0.0
    %1794 = vmatprep.subr.mxu0 0.0
    %1795 = vmatpush2.xpose.msra.mxu0 0.0
    %1796 = vmatprep.subr.mxu0 0.0
    %1797 = vmatpush2.xpose.msra.mxu0 0.0
    %1798 = vmatprep.subr.mxu0 0.0
    %1799 = vmatpush2.xpose.msra.mxu0 0.0
    %1800 = vmatprep.subr.mxu0 0.0
    %1801 = vmatpush2.xpose.msra.mxu0 0.0
    %1802 = vmatprep.subr.mxu0 0.0
    %1803 = vmatpush2.xpose.msra.mxu0 0.0
    %1804 = vmatprep.subr.mxu0 0.0
    %1805 = vmatpush2.xpose.msra.mxu0 0.0
    %1806 = vmatprep.subr.mxu0 0.0
    %1807 = vmatpush2.xpose.msra.mxu0 0.0
    %1808 = vmatprep.subr.mxu0 0.0
    %1809 = vmatpush2.xpose.msra.mxu0 0.0
    %1810 = vmatprep.subr.mxu0 0.0
    %1811 = vmatpush2.xpose.msra.mxu0 0.0
    %1812 = vmatprep.mubr.f32.mxu0 0.0
    %1813 = vmatmul.mubr.f32.gmra.mxu0 %v1740
    %v1814 = vpop.f32.mrf.mxu0
    %v1815 = vadd.f32 %v1526, %v1814
    %v1816 = vpop.f32.mrf.mxu0
    %1817 = vmatprep.mubr.f32.mxu0 0.0
    %1818 = vmatmul.mubr.f32.gmra.mxu0 %v1742
    %v1819 = vpop.f32.mrf.mxu0
    %v1820 = vadd.f32 %v1526, %v1819
    %v1821 = vpop.f32.mrf.mxu0
    %1822 = vdwg.mxu0
    %v1823 = vsel %vm474, %v1815, -inf
    %1824 = vmax.xlane.f32.xlu0 %v1823
    %v1825 = vpop.xlane.xlu0 %1824
    %v1826 = vsel %vm478, %v1820, -inf
    %1827 = vmax.xlane.f32.xlu0 %v1826
    %v1828 = vpop.xlane.xlu0 %1827
    %v1829 = vsub.f32 %v1815, %v1825
    %v1830 = vsub.f32 %v1820, %v1828
    %v1831 = vmul.f32 %v1829, 1.442695
    %v1832 = vpow.pop %v1831
    %v1833 = vmul.f32 %v1830, 1.442695
    %v1834 = vpow.pop %v1833
    %v1835 = vsel %vm474, %v1832, 0.0
    %1836 = vadd.xlane.f32.xlu0 %v1835
    %v1837 = vpop.xlane.xlu0 %1836
    %v1838 = vsel %vm478, %v1834, 0.0
    %1839 = vadd.xlane.f32.xlu0 %v1838
    %v1840 = vpop.xlane.xlu0 %1839
    %v1841 = vrcp.pop %v1837
    %v1842 = vmul.f32 %v1832, %v1841
    %v1843 = vrcp.pop %v1840
    %v1844 = vmul.f32 %v1834, %v1843
    %1845 = vrot.lane.b32.xlu0 %v1534, 56
    %v1846 = vpop.permute.xlu0 %1845
    %1847 = vrot.lane.b32.xlu0 %v1533, 56
    %v1848 = vpop.permute.xlu0 %1847
    %v1851 = vsel %vm474, %v1842, 0
    %v1854 = vsel %vm474, %v1844, 0
    %v1856 = vsel %vm509, %v1848, 0
    %1858 = vmatprep.subr.mxu0 0.0
    %1859 = vmatpush1.msra.mxu0 0.0
    %1860 = vmatprep.subr.mxu0 0.0
    %1861 = vmatpush1.msra.mxu0 0.0
    %1862 = vmatprep.subr.mxu0 0.0
    %1863 = vmatpush1.msra.mxu0 0.0
    %1864 = vmatprep.subr.mxu0 0.0
    %1865 = vmatpush1.msra.mxu0 0.0
    %1866 = vmatprep.subr.mxu0 0.0
    %1867 = vmatpush1.msra.mxu0 0.0
    %1868 = vmatprep.subr.mxu0 0.0
    %1869 = vmatpush1.msra.mxu0 0.0
    %1870 = vmatprep.subr.mxu0 0.0
    %1871 = vmatpush1.msra.mxu0 0.0
    %1872 = vmatprep.subr.mxu0 0.0
    %1873 = vmatpush1.msra.mxu0 0.0
    %1874 = vmatprep.subr.mxu0 0.0
    %1875 = vmatpush1.msra.mxu0 0.0
    %1876 = vmatprep.subr.mxu0 0.0
    %1877 = vmatpush1.msra.mxu0 0.0
    %1878 = vmatprep.subr.mxu0 0.0
    %1879 = vmatpush1.msra.mxu0 0.0
    %1880 = vmatprep.subr.mxu0 0.0
    %1881 = vmatpush1.msra.mxu0 0.0
    %1882 = vmatprep.subr.mxu0 0.0
    %1883 = vmatpush1.msra.mxu0 0.0
    %1884 = vmatprep.subr.mxu0 0.0
    %1885 = vmatpush1.msra.mxu0 0.0
    %1886 = vmatprep.subr.mxu0 0.0
    %1887 = vmatpush1.msra.mxu0 %v1856
    %1888 = vmatprep.subr.mxu0 0.0
    %1889 = vmatpush1.msra.mxu0 %v1846
    %1890 = vmatprep.subr.mxu0 0.0
    %1891 = vmatpush2.msra.mxu0 0.0
    %1892 = vmatprep.subr.mxu0 0.0
    %1893 = vmatpush2.msra.mxu0 0.0
    %1894 = vmatprep.subr.mxu0 0.0
    %1895 = vmatpush2.msra.mxu0 0.0
    %1896 = vmatprep.subr.mxu0 0.0
    %1897 = vmatpush2.msra.mxu0 0.0
    %1898 = vmatprep.subr.mxu0 0.0
    %1899 = vmatpush2.msra.mxu0 0.0
    %1900 = vmatprep.subr.mxu0 0.0
    %1901 = vmatpush2.msra.mxu0 0.0
    %1902 = vmatprep.subr.mxu0 0.0
    %1903 = vmatpush2.msra.mxu0 0.0
    %1904 = vmatprep.subr.mxu0 0.0
    %1905 = vmatpush2.msra.mxu0 0.0
    %1906 = vmatprep.subr.mxu0 0.0
    %1907 = vmatpush2.msra.mxu0 0.0
    %1908 = vmatprep.subr.mxu0 0.0
    %1909 = vmatpush2.msra.mxu0 0.0
    %1910 = vmatprep.subr.mxu0 0.0
    %1911 = vmatpush2.msra.mxu0 0.0
    %1912 = vmatprep.subr.mxu0 0.0
    %1913 = vmatpush2.msra.mxu0 0.0
    %1914 = vmatprep.subr.mxu0 0.0
    %1915 = vmatpush2.msra.mxu0 0.0
    %1916 = vmatprep.subr.mxu0 0.0
    %1917 = vmatpush2.msra.mxu0 0.0
    %1918 = vmatprep.subr.mxu0 0.0
    %1919 = vmatpush2.msra.mxu0 0.0
    %1920 = vmatprep.subr.mxu0 0.0
    %1921 = vmatpush2.msra.mxu0 0.0
    %1922 = vmatprep.mubr.f32.mxu0 0.0
    %1923 = vmatmul.mubr.f32.gmra.mxu0 %v1851
    %v1924 = vpop.f32.mrf.mxu0
    %v1925 = vadd.f32 0.0, %v1924
    %v1926 = vpop.f32.mrf.mxu0
    %1927 = vmatprep.mubr.f32.mxu0 0.0
    %1928 = vmatmul.mubr.f32.gmra.mxu0 %v1854
    %v1929 = vpop.f32.mrf.mxu0
    %v1930 = vadd.f32 0.0, %v1929
    %v1931 = vpop.f32.mrf.mxu0
    %1932 = vdwg.mxu0
    %v1934 = vsel %vm388, %v1925, 0
    %v1937 = vsel %vm388, %v1930, 0
    %1939 = vmatprep.subr.mxu0 0.0
    %1940 = vmatpush1.msra.mxu0 0.0
    %1941 = vmatprep.subr.mxu0 0.0
    %1942 = vmatpush1.msra.mxu0 0.0
    %1943 = vmatprep.subr.mxu0 0.0
    %1944 = vmatpush1.msra.mxu0 0.0
    %1945 = vmatprep.subr.mxu0 0.0
    %1946 = vmatpush1.msra.mxu0 0.0
    %1947 = vmatprep.subr.mxu0 0.0
    %1948 = vmatpush1.msra.mxu0 0.0
    %1949 = vmatprep.subr.mxu0 0.0
    %1950 = vmatpush1.msra.mxu0 0.0
    %1951 = vmatprep.subr.mxu0 0.0
    %1952 = vmatpush1.msra.mxu0 0.0
    %1953 = vmatprep.subr.mxu0 0.0
    %1954 = vmatpush1.msra.mxu0 0.0
    %1955 = vmatprep.subr.mxu0 0.0
    %1956 = vmatpush1.msra.mxu0 0.0
    %1957 = vmatprep.subr.mxu0 0.0
    %1958 = vmatpush1.msra.mxu0 0.0
    %1959 = vmatprep.subr.mxu0 0.0
    %1960 = vmatpush1.msra.mxu0 0.0
    %1961 = vmatprep.subr.mxu0 0.0
    %1962 = vmatpush1.msra.mxu0 0.0
    %1963 = vmatprep.subr.mxu0 0.0
    %1964 = vmatpush1.msra.mxu0 0.0
    %1965 = vmatprep.subr.mxu0 0.0
    %1966 = vmatpush1.msra.mxu0 0.0
    %1967 = vmatprep.subr.mxu0 0.0
    %1968 = vmatpush1.msra.mxu0 0.0
    %1969 = vmatprep.subr.mxu0 0.0
    %1970 = vmatpush1.msra.mxu0 %v789
    %1971 = vmatprep.subr.mxu0 0.0
    %1972 = vmatpush2.msra.mxu0 0.0
    %1973 = vmatprep.subr.mxu0 0.0
    %1974 = vmatpush2.msra.mxu0 0.0
    %1975 = vmatprep.subr.mxu0 0.0
    %1976 = vmatpush2.msra.mxu0 0.0
    %1977 = vmatprep.subr.mxu0 0.0
    %1978 = vmatpush2.msra.mxu0 0.0
    %1979 = vmatprep.subr.mxu0 0.0
    %1980 = vmatpush2.msra.mxu0 0.0
    %1981 = vmatprep.subr.mxu0 0.0
    %1982 = vmatpush2.msra.mxu0 0.0
    %1983 = vmatprep.subr.mxu0 0.0
    %1984 = vmatpush2.msra.mxu0 0.0
    %1985 = vmatprep.subr.mxu0 0.0
    %1986 = vmatpush2.msra.mxu0 0.0
    %1987 = vmatprep.subr.mxu0 0.0
    %1988 = vmatpush2.msra.mxu0 0.0
    %1989 = vmatprep.subr.mxu0 0.0
    %1990 = vmatpush2.msra.mxu0 0.0
    %1991 = vmatprep.subr.mxu0 0.0
    %1992 = vmatpush2.msra.mxu0 0.0
    %1993 = vmatprep.subr.mxu0 0.0
    %1994 = vmatpush2.msra.mxu0 0.0
    %1995 = vmatprep.subr.mxu0 0.0
    %1996 = vmatpush2.msra.mxu0 0.0
    %1997 = vmatprep.subr.mxu0 0.0
    %1998 = vmatpush2.msra.mxu0 0.0
    %1999 = vmatprep.subr.mxu0 0.0
    %2000 = vmatpush2.msra.mxu0 0.0
    %2001 = vmatprep.subr.mxu0 0.0
    %2002 = vmatpush2.msra.mxu0 0.0
    %2003 = vmatprep.mubr.f32.mxu0 0.0
    %2004 = vmatmul.mubr.f32.gmra.mxu0 %v1934
    %v2005 = vpop.f32.mrf.mxu0
    %v2006 = vadd.f32 0.0, %v2005
    %v2007 = vpop.f32.mrf.mxu0
    %2008 = vmatprep.mubr.f32.mxu0 0.0
    %2009 = vmatmul.mubr.f32.gmra.mxu0 %v1937
    %v2010 = vpop.f32.mrf.mxu0
    %v2011 = vadd.f32 0.0, %v2010
    %v2012 = vpop.f32.mrf.mxu0
    %2013 = vdwg.mxu0
    %v2015 = vsel %vm388, %v1724, 0
    %v2018 = vsel %vm388, %v1729, 0
    %2020 = vmatprep.subr.mxu0 0.0
    %2021 = vmatpush1.msra.mxu0 0.0
    %2022 = vmatprep.subr.mxu0 0.0
    %2023 = vmatpush1.msra.mxu0 0.0
    %2024 = vmatprep.subr.mxu0 0.0
    %2025 = vmatpush1.msra.mxu0 0.0
    %2026 = vmatprep.subr.mxu0 0.0
    %2027 = vmatpush1.msra.mxu0 0.0
    %2028 = vmatprep.subr.mxu0 0.0
    %2029 = vmatpush1.msra.mxu0 0.0
    %2030 = vmatprep.subr.mxu0 0.0
    %2031 = vmatpush1.msra.mxu0 0.0
    %2032 = vmatprep.subr.mxu0 0.0
    %2033 = vmatpush1.msra.mxu0 0.0
    %2034 = vmatprep.subr.mxu0 0.0
    %2035 = vmatpush1.msra.mxu0 0.0
    %2036 = vmatprep.subr.mxu0 0.0
    %2037 = vmatpush1.msra.mxu0 0.0
    %2038 = vmatprep.subr.mxu0 0.0
    %2039 = vmatpush1.msra.mxu0 0.0
    %2040 = vmatprep.subr.mxu0 0.0
    %2041 = vmatpush1.msra.mxu0 0.0
    %2042 = vmatprep.subr.mxu0 0.0
    %2043 = vmatpush1.msra.mxu0 0.0
    %2044 = vmatprep.subr.mxu0 0.0
    %2045 = vmatpush1.msra.mxu0 0.0
    %2046 = vmatprep.subr.mxu0 0.0
    %2047 = vmatpush1.msra.mxu0 0.0
    %2048 = vmatprep.subr.mxu0 0.0
    %2049 = vmatpush1.msra.mxu0 0.0
    %2050 = vmatprep.subr.mxu0 0.0
    %2051 = vmatpush1.msra.mxu0 %v587
    %2052 = vmatprep.subr.mxu0 0.0
    %2053 = vmatpush2.msra.mxu0 0.0
    %2054 = vmatprep.subr.mxu0 0.0
    %2055 = vmatpush2.msra.mxu0 0.0
    %2056 = vmatprep.subr.mxu0 0.0
    %2057 = vmatpush2.msra.mxu0 0.0
    %2058 = vmatprep.subr.mxu0 0.0
    %2059 = vmatpush2.msra.mxu0 0.0
    %2060 = vmatprep.subr.mxu0 0.0
    %2061 = vmatpush2.msra.mxu0 0.0
    %2062 = vmatprep.subr.mxu0 0.0
    %2063 = vmatpush2.msra.mxu0 0.0
    %2064 = vmatprep.subr.mxu0 0.0
    %2065 = vmatpush2.msra.mxu0 0.0
    %2066 = vmatprep.subr.mxu0 0.0
    %2067 = vmatpush2.msra.mxu0 0.0
    %2068 = vmatprep.subr.mxu0 0.0
    %2069 = vmatpush2.msra.mxu0 0.0
    %2070 = vmatprep.subr.mxu0 0.0
    %2071 = vmatpush2.msra.mxu0 0.0
    %2072 = vmatprep.subr.mxu0 0.0
    %2073 = vmatpush2.msra.mxu0 0.0
    %2074 = vmatprep.subr.mxu0 0.0
    %2075 = vmatpush2.msra.mxu0 0.0
    %2076 = vmatprep.subr.mxu0 0.0
    %2077 = vmatpush2.msra.mxu0 0.0
    %2078 = vmatprep.subr.mxu0 0.0
    %2079 = vmatpush2.msra.mxu0 0.0
    %2080 = vmatprep.subr.mxu0 0.0
    %2081 = vmatpush2.msra.mxu0 0.0
    %2082 = vmatprep.subr.mxu0 0.0
    %2083 = vmatpush2.msra.mxu0 0.0
    %2084 = vmatprep.mubr.f32.mxu0 0.0
    %2085 = vmatmul.mubr.f32.gmra.mxu0 %v2015
    %v2086 = vpop.f32.mrf.mxu0
    %v2087 = vadd.f32 %v2006, %v2086
    %v2088 = vpop.f32.mrf.mxu0
    %2089 = vmatprep.mubr.f32.mxu0 0.0
    %2090 = vmatmul.mubr.f32.gmra.mxu0 %v2018
    %v2091 = vpop.f32.mrf.mxu0
    %v2092 = vadd.f32 %v2011, %v2091
    %v2093 = vpop.f32.mrf.mxu0
    %2094 = vdwg.mxu0
    %2095 = vrot.lane.b32.xlu0 %v1530, 112
    %v2096 = vpop.permute.xlu0 %2095
    %2097 = vrot.lane.b32.xlu0 %v1529, 112
    %v2098 = vpop.permute.xlu0 %2097
    %2099 = vrot.lane.b32.xlu0 %v1534, 80
    %v2100 = vpop.permute.xlu0 %2099
    %2101 = vrot.lane.b32.xlu0 %v1533, 80
    %v2102 = vpop.permute.xlu0 %2101
    %v2103 = vsel %vm388, %v2096, 0
    %v2105 = vsel %vm388, %v2098, 0
    %v2107 = vsel %vm388, %v2100, 0
    %v2109 = vsel %vm388, %v2102, 0
    %2111 = vmatprep.subr.mxu0 0.0
    %2112 = vmatpush1.xpose.msra.mxu0 0.0
    %2113 = vmatprep.subr.mxu0 0.0
    %2114 = vmatpush1.xpose.msra.mxu0 0.0
    %2115 = vmatprep.subr.mxu0 0.0
    %2116 = vmatpush1.xpose.msra.mxu0 0.0
    %2117 = vmatprep.subr.mxu0 0.0
    %2118 = vmatpush1.xpose.msra.mxu0 0.0
    %2119 = vmatprep.subr.mxu0 0.0
    %2120 = vmatpush1.xpose.msra.mxu0 0.0
    %2121 = vmatprep.subr.mxu0 0.0
    %2122 = vmatpush1.xpose.msra.mxu0 0.0
    %2123 = vmatprep.subr.mxu0 0.0
    %2124 = vmatpush1.xpose.msra.mxu0 0.0
    %2125 = vmatprep.subr.mxu0 0.0
    %2126 = vmatpush1.xpose.msra.mxu0 0.0
    %2127 = vmatprep.subr.mxu0 0.0
    %2128 = vmatpush1.xpose.msra.mxu0 0.0
    %2129 = vmatprep.subr.mxu0 0.0
    %2130 = vmatpush1.xpose.msra.mxu0 0.0
    %2131 = vmatprep.subr.mxu0 0.0
    %2132 = vmatpush1.xpose.msra.mxu0 0.0
    %2133 = vmatprep.subr.mxu0 0.0
    %2134 = vmatpush1.xpose.msra.mxu0 0.0
    %2135 = vmatprep.subr.mxu0 0.0
    %2136 = vmatpush1.xpose.msra.mxu0 0.0
    %2137 = vmatprep.subr.mxu0 0.0
    %2138 = vmatpush1.xpose.msra.mxu0 0.0
    %2139 = vmatprep.subr.mxu0 0.0
    %2140 = vmatpush1.xpose.msra.mxu0 %v2109
    %2141 = vmatprep.subr.mxu0 0.0
    %2142 = vmatpush1.xpose.msra.mxu0 %v2107
    %2143 = vmatprep.subr.mxu0 0.0
    %2144 = vmatpush2.xpose.msra.mxu0 0.0
    %2145 = vmatprep.subr.mxu0 0.0
    %2146 = vmatpush2.xpose.msra.mxu0 0.0
    %2147 = vmatprep.subr.mxu0 0.0
    %2148 = vmatpush2.xpose.msra.mxu0 0.0
    %2149 = vmatprep.subr.mxu0 0.0
    %2150 = vmatpush2.xpose.msra.mxu0 0.0
    %2151 = vmatprep.subr.mxu0 0.0
    %2152 = vmatpush2.xpose.msra.mxu0 0.0
    %2153 = vmatprep.subr.mxu0 0.0
    %2154 = vmatpush2.xpose.msra.mxu0 0.0
    %2155 = vmatprep.subr.mxu0 0.0
    %2156 = vmatpush2.xpose.msra.mxu0 0.0
    %2157 = vmatprep.subr.mxu0 0.0
    %2158 = vmatpush2.xpose.msra.mxu0 0.0
    %2159 = vmatprep.subr.mxu0 0.0
    %2160 = vmatpush2.xpose.msra.mxu0 0.0
    %2161 = vmatprep.subr.mxu0 0.0
    %2162 = vmatpush2.xpose.msra.mxu0 0.0
    %2163 = vmatprep.subr.mxu0 0.0
    %2164 = vmatpush2.xpose.msra.mxu0 0.0
    %2165 = vmatprep.subr.mxu0 0.0
    %2166 = vmatpush2.xpose.msra.mxu0 0.0
    %2167 = vmatprep.subr.mxu0 0.0
    %2168 = vmatpush2.xpose.msra.mxu0 0.0
    %2169 = vmatprep.subr.mxu0 0.0
    %2170 = vmatpush2.xpose.msra.mxu0 0.0
    %2171 = vmatprep.subr.mxu0 0.0
    %2172 = vmatpush2.xpose.msra.mxu0 0.0
    %2173 = vmatprep.subr.mxu0 0.0
    %2174 = vmatpush2.xpose.msra.mxu0 0.0
    %2175 = vmatprep.mubr.f32.mxu0 0.0
    %2176 = vmatmul.mubr.f32.gmra.mxu0 %v2103
    %v2177 = vpop.f32.mrf.mxu0
    %v2178 = vadd.f32 %v1526, %v2177
    %v2179 = vpop.f32.mrf.mxu0
    %2180 = vmatprep.mubr.f32.mxu0 0.0
    %2181 = vmatmul.mubr.f32.gmra.mxu0 %v2105
    %v2182 = vpop.f32.mrf.mxu0
    %v2183 = vadd.f32 %v1526, %v2182
    %v2184 = vpop.f32.mrf.mxu0
    %2185 = vdwg.mxu0
    %v2186 = vsel %vm474, %v2178, -inf
    %2187 = vmax.xlane.f32.xlu0 %v2186
    %v2188 = vpop.xlane.xlu0 %2187
    %v2189 = vsel %vm478, %v2183, -inf
    %2190 = vmax.xlane.f32.xlu0 %v2189
    %v2191 = vpop.xlane.xlu0 %2190
    %v2192 = vsub.f32 %v2178, %v2188
    %v2193 = vsub.f32 %v2183, %v2191
    %v2194 = vmul.f32 %v2192, 1.442695
    %v2195 = vpow.pop %v2194
    %v2196 = vmul.f32 %v2193, 1.442695
    %v2197 = vpow.pop %v2196
    %v2198 = vsel %vm474, %v2195, 0.0
    %2199 = vadd.xlane.f32.xlu0 %v2198
    %v2200 = vpop.xlane.xlu0 %2199
    %v2201 = vsel %vm478, %v2197, 0.0
    %2202 = vadd.xlane.f32.xlu0 %v2201
    %v2203 = vpop.xlane.xlu0 %2202
    %v2204 = vrcp.pop %v2200
    %v2205 = vmul.f32 %v2195, %v2204
    %v2206 = vrcp.pop %v2203
    %v2207 = vmul.f32 %v2197, %v2206
    %2208 = vrot.lane.b32.xlu0 %v1534, 48
    %v2209 = vpop.permute.xlu0 %2208
    %2210 = vrot.lane.b32.xlu0 %v1533, 48
    %v2211 = vpop.permute.xlu0 %2210
    %v2214 = vsel %vm474, %v2205, 0
    %v2217 = vsel %vm474, %v2207, 0
    %v2219 = vsel %vm509, %v2211, 0
    %2221 = vmatprep.subr.mxu0 0.0
    %2222 = vmatpush1.msra.mxu0 0.0
    %2223 = vmatprep.subr.mxu0 0.0
    %2224 = vmatpush1.msra.mxu0 0.0
    %2225 = vmatprep.subr.mxu0 0.0
    %2226 = vmatpush1.msra.mxu0 0.0
    %2227 = vmatprep.subr.mxu0 0.0
    %2228 = vmatpush1.msra.mxu0 0.0
    %2229 = vmatprep.subr.mxu0 0.0
    %2230 = vmatpush1.msra.mxu0 0.0
    %2231 = vmatprep.subr.mxu0 0.0
    %2232 = vmatpush1.msra.mxu0 0.0
    %2233 = vmatprep.subr.mxu0 0.0
    %2234 = vmatpush1.msra.mxu0 0.0
    %2235 = vmatprep.subr.mxu0 0.0
    %2236 = vmatpush1.msra.mxu0 0.0
    %2237 = vmatprep.subr.mxu0 0.0
    %2238 = vmatpush1.msra.mxu0 0.0
    %2239 = vmatprep.subr.mxu0 0.0
    %2240 = vmatpush1.msra.mxu0 0.0
    %2241 = vmatprep.subr.mxu0 0.0
    %2242 = vmatpush1.msra.mxu0 0.0
    %2243 = vmatprep.subr.mxu0 0.0
    %2244 = vmatpush1.msra.mxu0 0.0
    %2245 = vmatprep.subr.mxu0 0.0
    %2246 = vmatpush1.msra.mxu0 0.0
    %2247 = vmatprep.subr.mxu0 0.0
    %2248 = vmatpush1.msra.mxu0 0.0
    %2249 = vmatprep.subr.mxu0 0.0
    %2250 = vmatpush1.msra.mxu0 %v2219
    %2251 = vmatprep.subr.mxu0 0.0
    %2252 = vmatpush1.msra.mxu0 %v2209
    %2253 = vmatprep.subr.mxu0 0.0
    %2254 = vmatpush2.msra.mxu0 0.0
    %2255 = vmatprep.subr.mxu0 0.0
    %2256 = vmatpush2.msra.mxu0 0.0
    %2257 = vmatprep.subr.mxu0 0.0
    %2258 = vmatpush2.msra.mxu0 0.0
    %2259 = vmatprep.subr.mxu0 0.0
    %2260 = vmatpush2.msra.mxu0 0.0
    %2261 = vmatprep.subr.mxu0 0.0
    %2262 = vmatpush2.msra.mxu0 0.0
    %2263 = vmatprep.subr.mxu0 0.0
    %2264 = vmatpush2.msra.mxu0 0.0
    %2265 = vmatprep.subr.mxu0 0.0
    %2266 = vmatpush2.msra.mxu0 0.0
    %2267 = vmatprep.subr.mxu0 0.0
    %2268 = vmatpush2.msra.mxu0 0.0
    %2269 = vmatprep.subr.mxu0 0.0
    %2270 = vmatpush2.msra.mxu0 0.0
    %2271 = vmatprep.subr.mxu0 0.0
    %2272 = vmatpush2.msra.mxu0 0.0
    %2273 = vmatprep.subr.mxu0 0.0
    %2274 = vmatpush2.msra.mxu0 0.0
    %2275 = vmatprep.subr.mxu0 0.0
    %2276 = vmatpush2.msra.mxu0 0.0
    %2277 = vmatprep.subr.mxu0 0.0
    %2278 = vmatpush2.msra.mxu0 0.0
    %2279 = vmatprep.subr.mxu0 0.0
    %2280 = vmatpush2.msra.mxu0 0.0
    %2281 = vmatprep.subr.mxu0 0.0
    %2282 = vmatpush2.msra.mxu0 0.0
    %2283 = vmatprep.subr.mxu0 0.0
    %2284 = vmatpush2.msra.mxu0 0.0
    %2285 = vmatprep.mubr.f32.mxu0 0.0
    %2286 = vmatmul.mubr.f32.gmra.mxu0 %v2214
    %v2287 = vpop.f32.mrf.mxu0
    %v2288 = vadd.f32 0.0, %v2287
    %v2289 = vpop.f32.mrf.mxu0
    %2290 = vmatprep.mubr.f32.mxu0 0.0
    %2291 = vmatmul.mubr.f32.gmra.mxu0 %v2217
    %v2292 = vpop.f32.mrf.mxu0
    %v2293 = vadd.f32 0.0, %v2292
    %v2294 = vpop.f32.mrf.mxu0
    %2295 = vdwg.mxu0
    %v2297 = vsel %vm388, %v2288, 0
    %v2300 = vsel %vm388, %v2293, 0
    %2302 = vmatprep.subr.mxu0 0.0
    %2303 = vmatpush1.msra.mxu0 0.0
    %2304 = vmatprep.subr.mxu0 0.0
    %2305 = vmatpush1.msra.mxu0 0.0
    %2306 = vmatprep.subr.mxu0 0.0
    %2307 = vmatpush1.msra.mxu0 0.0
    %2308 = vmatprep.subr.mxu0 0.0
    %2309 = vmatpush1.msra.mxu0 0.0
    %2310 = vmatprep.subr.mxu0 0.0
    %2311 = vmatpush1.msra.mxu0 0.0
    %2312 = vmatprep.subr.mxu0 0.0
    %2313 = vmatpush1.msra.mxu0 0.0
    %2314 = vmatprep.subr.mxu0 0.0
    %2315 = vmatpush1.msra.mxu0 0.0
    %2316 = vmatprep.subr.mxu0 0.0
    %2317 = vmatpush1.msra.mxu0 0.0
    %2318 = vmatprep.subr.mxu0 0.0
    %2319 = vmatpush1.msra.mxu0 0.0
    %2320 = vmatprep.subr.mxu0 0.0
    %2321 = vmatpush1.msra.mxu0 0.0
    %2322 = vmatprep.subr.mxu0 0.0
    %2323 = vmatpush1.msra.mxu0 0.0
    %2324 = vmatprep.subr.mxu0 0.0
    %2325 = vmatpush1.msra.mxu0 0.0
    %2326 = vmatprep.subr.mxu0 0.0
    %2327 = vmatpush1.msra.mxu0 0.0
    %2328 = vmatprep.subr.mxu0 0.0
    %2329 = vmatpush1.msra.mxu0 0.0
    %2330 = vmatprep.subr.mxu0 0.0
    %2331 = vmatpush1.msra.mxu0 0.0
    %2332 = vmatprep.subr.mxu0 0.0
    %2333 = vmatpush1.msra.mxu0 %v1153
    %2334 = vmatprep.subr.mxu0 0.0
    %2335 = vmatpush2.msra.mxu0 0.0
    %2336 = vmatprep.subr.mxu0 0.0
    %2337 = vmatpush2.msra.mxu0 0.0
    %2338 = vmatprep.subr.mxu0 0.0
    %2339 = vmatpush2.msra.mxu0 0.0
    %2340 = vmatprep.subr.mxu0 0.0
    %2341 = vmatpush2.msra.mxu0 0.0
    %2342 = vmatprep.subr.mxu0 0.0
    %2343 = vmatpush2.msra.mxu0 0.0
    %2344 = vmatprep.subr.mxu0 0.0
    %2345 = vmatpush2.msra.mxu0 0.0
    %2346 = vmatprep.subr.mxu0 0.0
    %2347 = vmatpush2.msra.mxu0 0.0
    %2348 = vmatprep.subr.mxu0 0.0
    %2349 = vmatpush2.msra.mxu0 0.0
    %2350 = vmatprep.subr.mxu0 0.0
    %2351 = vmatpush2.msra.mxu0 0.0
    %2352 = vmatprep.subr.mxu0 0.0
    %2353 = vmatpush2.msra.mxu0 0.0
    %2354 = vmatprep.subr.mxu0 0.0
    %2355 = vmatpush2.msra.mxu0 0.0
    %2356 = vmatprep.subr.mxu0 0.0
    %2357 = vmatpush2.msra.mxu0 0.0
    %2358 = vmatprep.subr.mxu0 0.0
    %2359 = vmatpush2.msra.mxu0 0.0
    %2360 = vmatprep.subr.mxu0 0.0
    %2361 = vmatpush2.msra.mxu0 0.0
    %2362 = vmatprep.subr.mxu0 0.0
    %2363 = vmatpush2.msra.mxu0 0.0
    %2364 = vmatprep.subr.mxu0 0.0
    %2365 = vmatpush2.msra.mxu0 0.0
    %2366 = vmatprep.mubr.f32.mxu0 0.0
    %2367 = vmatmul.mubr.f32.gmra.mxu0 %v2297
    %v2368 = vpop.f32.mrf.mxu0
    %v2369 = vadd.f32 0.0, %v2368
    %v2370 = vpop.f32.mrf.mxu0
    %2371 = vmatprep.mubr.f32.mxu0 0.0
    %2372 = vmatmul.mubr.f32.gmra.mxu0 %v2300
    %v2373 = vpop.f32.mrf.mxu0
    %v2374 = vadd.f32 0.0, %v2373
    %v2375 = vpop.f32.mrf.mxu0
    %2376 = vdwg.mxu0
    %v2377 = vadd.f32 %v2087, %v2369
    %v2378 = vadd.f32 %v2092, %v2374
    %2379 = vrot.lane.b32.xlu0 %v1530, 104
    %v2380 = vpop.permute.xlu0 %2379
    %2381 = vrot.lane.b32.xlu0 %v1529, 104
    %v2382 = vpop.permute.xlu0 %2381
    %2383 = vrot.lane.b32.xlu0 %v1534, 72
    %v2384 = vpop.permute.xlu0 %2383
    %2385 = vrot.lane.b32.xlu0 %v1533, 72
    %v2386 = vpop.permute.xlu0 %2385
    %v2387 = vsel %vm388, %v2380, 0
    %v2389 = vsel %vm388, %v2382, 0
    %v2391 = vsel %vm388, %v2384, 0
    %v2393 = vsel %vm388, %v2386, 0
    %2395 = vmatprep.subr.mxu0 0.0
    %2396 = vmatpush1.xpose.msra.mxu0 0.0
    %2397 = vmatprep.subr.mxu0 0.0
    %2398 = vmatpush1.xpose.msra.mxu0 0.0
    %2399 = vmatprep.subr.mxu0 0.0
    %2400 = vmatpush1.xpose.msra.mxu0 0.0
    %2401 = vmatprep.subr.mxu0 0.0
    %2402 = vmatpush1.xpose.msra.mxu0 0.0
    %2403 = vmatprep.subr.mxu0 0.0
    %2404 = vmatpush1.xpose.msra.mxu0 0.0
    %2405 = vmatprep.subr.mxu0 0.0
    %2406 = vmatpush1.xpose.msra.mxu0 0.0
    %2407 = vmatprep.subr.mxu0 0.0
    %2408 = vmatpush1.xpose.msra.mxu0 0.0
    %2409 = vmatprep.subr.mxu0 0.0
    %2410 = vmatpush1.xpose.msra.mxu0 0.0
    %2411 = vmatprep.subr.mxu0 0.0
    %2412 = vmatpush1.xpose.msra.mxu0 0.0
    %2413 = vmatprep.subr.mxu0 0.0
    %2414 = vmatpush1.xpose.msra.mxu0 0.0
    %2415 = vmatprep.subr.mxu0 0.0
    %2416 = vmatpush1.xpose.msra.mxu0 0.0
    %2417 = vmatprep.subr.mxu0 0.0
    %2418 = vmatpush1.xpose.msra.mxu0 0.0
    %2419 = vmatprep.subr.mxu0 0.0
    %2420 = vmatpush1.xpose.msra.mxu0 0.0
    %2421 = vmatprep.subr.mxu0 0.0
    %2422 = vmatpush1.xpose.msra.mxu0 0.0
    %2423 = vmatprep.subr.mxu0 0.0
    %2424 = vmatpush1.xpose.msra.mxu0 %v2393
    %2425 = vmatprep.subr.mxu0 0.0
    %2426 = vmatpush1.xpose.msra.mxu0 %v2391
    %2427 = vmatprep.subr.mxu0 0.0
    %2428 = vmatpush2.xpose.msra.mxu0 0.0
    %2429 = vmatprep.subr.mxu0 0.0
    %2430 = vmatpush2.xpose.msra.mxu0 0.0
    %2431 = vmatprep.subr.mxu0 0.0
    %2432 = vmatpush2.xpose.msra.mxu0 0.0
    %2433 = vmatprep.subr.mxu0 0.0
    %2434 = vmatpush2.xpose.msra.mxu0 0.0
    %2435 = vmatprep.subr.mxu0 0.0
    %2436 = vmatpush2.xpose.msra.mxu0 0.0
    %2437 = vmatprep.subr.mxu0 0.0
    %2438 = vmatpush2.xpose.msra.mxu0 0.0
    %2439 = vmatprep.subr.mxu0 0.0
    %2440 = vmatpush2.xpose.msra.mxu0 0.0
    %2441 = vmatprep.subr.mxu0 0.0
    %2442 = vmatpush2.xpose.msra.mxu0 0.0
    %2443 = vmatprep.subr.mxu0 0.0
    %2444 = vmatpush2.xpose.msra.mxu0 0.0
    %2445 = vmatprep.subr.mxu0 0.0
    %2446 = vmatpush2.xpose.msra.mxu0 0.0
    %2447 = vmatprep.subr.mxu0 0.0
    %2448 = vmatpush2.xpose.msra.mxu0 0.0
    %2449 = vmatprep.subr.mxu0 0.0
    %2450 = vmatpush2.xpose.msra.mxu0 0.0
    %2451 = vmatprep.subr.mxu0 0.0
    %2452 = vmatpush2.xpose.msra.mxu0 0.0
    %2453 = vmatprep.subr.mxu0 0.0
    %2454 = vmatpush2.xpose.msra.mxu0 0.0
    %2455 = vmatprep.subr.mxu0 0.0
    %2456 = vmatpush2.xpose.msra.mxu0 0.0
    %2457 = vmatprep.subr.mxu0 0.0
    %2458 = vmatpush2.xpose.msra.mxu0 0.0
    %2459 = vmatprep.mubr.f32.mxu0 0.0
    %2460 = vmatmul.mubr.f32.gmra.mxu0 %v2387
    %v2461 = vpop.f32.mrf.mxu0
    %v2462 = vadd.f32 %v1526, %v2461
    %v2463 = vpop.f32.mrf.mxu0
    %2464 = vmatprep.mubr.f32.mxu0 0.0
    %2465 = vmatmul.mubr.f32.gmra.mxu0 %v2389
    %v2466 = vpop.f32.mrf.mxu0
    %v2467 = vadd.f32 %v1526, %v2466
    %v2468 = vpop.f32.mrf.mxu0
    %2469 = vdwg.mxu0
    %v2470 = vsel %vm474, %v2462, -inf
    %2471 = vmax.xlane.f32.xlu0 %v2470
    %v2472 = vpop.xlane.xlu0 %2471
    %v2473 = vsel %vm478, %v2467, -inf
    %2474 = vmax.xlane.f32.xlu0 %v2473
    %v2475 = vpop.xlane.xlu0 %2474
    %v2476 = vsub.f32 %v2462, %v2472
    %v2477 = vsub.f32 %v2467, %v2475
    %v2478 = vmul.f32 %v2476, 1.442695
    %v2479 = vpow.pop %v2478
    %v2480 = vmul.f32 %v2477, 1.442695
    %v2481 = vpow.pop %v2480
    %v2482 = vsel %vm474, %v2479, 0.0
    %2483 = vadd.xlane.f32.xlu0 %v2482
    %v2484 = vpop.xlane.xlu0 %2483
    %v2485 = vsel %vm478, %v2481, 0.0
    %2486 = vadd.xlane.f32.xlu0 %v2485
    %v2487 = vpop.xlane.xlu0 %2486
    %v2488 = vrcp.pop %v2484
    %v2489 = vmul.f32 %v2479, %v2488
    %v2490 = vrcp.pop %v2487
    %v2491 = vmul.f32 %v2481, %v2490
    %2492 = vrot.lane.b32.xlu0 %v1534, 40
    %v2493 = vpop.permute.xlu0 %2492
    %2494 = vrot.lane.b32.xlu0 %v1533, 40
    %v2495 = vpop.permute.xlu0 %2494
    %v2498 = vsel %vm474, %v2489, 0
    %v2501 = vsel %vm474, %v2491, 0
    %v2503 = vsel %vm509, %v2495, 0
    %2505 = vmatprep.subr.mxu0 0.0
    %2506 = vmatpush1.msra.mxu0 0.0
    %2507 = vmatprep.subr.mxu0 0.0
    %2508 = vmatpush1.msra.mxu0 0.0
    %2509 = vmatprep.subr.mxu0 0.0
    %2510 = vmatpush1.msra.mxu0 0.0
    %2511 = vmatprep.subr.mxu0 0.0
    %2512 = vmatpush1.msra.mxu0 0.0
    %2513 = vmatprep.subr.mxu0 0.0
    %2514 = vmatpush1.msra.mxu0 0.0
    %2515 = vmatprep.subr.mxu0 0.0
    %2516 = vmatpush1.msra.mxu0 0.0
    %2517 = vmatprep.subr.mxu0 0.0
    %2518 = vmatpush1.msra.mxu0 0.0
    %2519 = vmatprep.subr.mxu0 0.0
    %2520 = vmatpush1.msra.mxu0 0.0
    %2521 = vmatprep.subr.mxu0 0.0
    %2522 = vmatpush1.msra.mxu0 0.0
    %2523 = vmatprep.subr.mxu0 0.0
    %2524 = vmatpush1.msra.mxu0 0.0
    %2525 = vmatprep.subr.mxu0 0.0
    %2526 = vmatpush1.msra.mxu0 0.0
    %2527 = vmatprep.subr.mxu0 0.0
    %2528 = vmatpush1.msra.mxu0 0.0
    %2529 = vmatprep.subr.mxu0 0.0
    %2530 = vmatpush1.msra.mxu0 0.0
    %2531 = vmatprep.subr.mxu0 0.0
    %2532 = vmatpush1.msra.mxu0 0.0
    %2533 = vmatprep.subr.mxu0 0.0
    %2534 = vmatpush1.msra.mxu0 %v2503
    %2535 = vmatprep.subr.mxu0 0.0
    %2536 = vmatpush1.msra.mxu0 %v2493
    %2537 = vmatprep.subr.mxu0 0.0
    %2538 = vmatpush2.msra.mxu0 0.0
    %2539 = vmatprep.subr.mxu0 0.0
    %2540 = vmatpush2.msra.mxu0 0.0
    %2541 = vmatprep.subr.mxu0 0.0
    %2542 = vmatpush2.msra.mxu0 0.0
    %2543 = vmatprep.subr.mxu0 0.0
    %2544 = vmatpush2.msra.mxu0 0.0
    %2545 = vmatprep.subr.mxu0 0.0
    %2546 = vmatpush2.msra.mxu0 0.0
    %2547 = vmatprep.subr.mxu0 0.0
    %2548 = vmatpush2.msra.mxu0 0.0
    %2549 = vmatprep.subr.mxu0 0.0
    %2550 = vmatpush2.msra.mxu0 0.0
    %2551 = vmatprep.subr.mxu0 0.0
    %2552 = vmatpush2.msra.mxu0 0.0
    %2553 = vmatprep.subr.mxu0 0.0
    %2554 = vmatpush2.msra.mxu0 0.0
    %2555 = vmatprep.subr.mxu0 0.0
    %2556 = vmatpush2.msra.mxu0 0.0
    %2557 = vmatprep.subr.mxu0 0.0
    %2558 = vmatpush2.msra.mxu0 0.0
    %2559 = vmatprep.subr.mxu0 0.0
    %2560 = vmatpush2.msra.mxu0 0.0
    %2561 = vmatprep.subr.mxu0 0.0
    %2562 = vmatpush2.msra.mxu0 0.0
    %2563 = vmatprep.subr.mxu0 0.0
    %2564 = vmatpush2.msra.mxu0 0.0
    %2565 = vmatprep.subr.mxu0 0.0
    %2566 = vmatpush2.msra.mxu0 0.0
    %2567 = vmatprep.subr.mxu0 0.0
    %2568 = vmatpush2.msra.mxu0 0.0
    %2569 = vmatprep.mubr.f32.mxu0 0.0
    %2570 = vmatmul.mubr.f32.gmra.mxu0 %v2498
    %v2571 = vpop.f32.mrf.mxu0
    %v2572 = vadd.f32 0.0, %v2571
    %v2573 = vpop.f32.mrf.mxu0
    %2574 = vmatprep.mubr.f32.mxu0 0.0
    %2575 = vmatmul.mubr.f32.gmra.mxu0 %v2501
    %v2576 = vpop.f32.mrf.mxu0
    %v2577 = vadd.f32 0.0, %v2576
    %v2578 = vpop.f32.mrf.mxu0
    %2579 = vdwg.mxu0
    %v2581 = vsel %vm388, %v2572, 0
    %v2584 = vsel %vm388, %v2577, 0
    %2586 = vmatprep.subr.mxu0 0.0
    %2587 = vmatpush1.msra.mxu0 0.0
    %2588 = vmatprep.subr.mxu0 0.0
    %2589 = vmatpush1.msra.mxu0 0.0
    %2590 = vmatprep.subr.mxu0 0.0
    %2591 = vmatpush1.msra.mxu0 0.0
    %2592 = vmatprep.subr.mxu0 0.0
    %2593 = vmatpush1.msra.mxu0 0.0
    %2594 = vmatprep.subr.mxu0 0.0
    %2595 = vmatpush1.msra.mxu0 0.0
    %2596 = vmatprep.subr.mxu0 0.0
    %2597 = vmatpush1.msra.mxu0 0.0
    %2598 = vmatprep.subr.mxu0 0.0
    %2599 = vmatpush1.msra.mxu0 0.0
    %2600 = vmatprep.subr.mxu0 0.0
    %2601 = vmatpush1.msra.mxu0 0.0
    %2602 = vmatprep.subr.mxu0 0.0
    %2603 = vmatpush1.msra.mxu0 0.0
    %2604 = vmatprep.subr.mxu0 0.0
    %2605 = vmatpush1.msra.mxu0 0.0
    %2606 = vmatprep.subr.mxu0 0.0
    %2607 = vmatpush1.msra.mxu0 0.0
    %2608 = vmatprep.subr.mxu0 0.0
    %2609 = vmatpush1.msra.mxu0 0.0
    %2610 = vmatprep.subr.mxu0 0.0
    %2611 = vmatpush1.msra.mxu0 0.0
    %2612 = vmatprep.subr.mxu0 0.0
    %2613 = vmatpush1.msra.mxu0 0.0
    %2614 = vmatprep.subr.mxu0 0.0
    %2615 = vmatpush1.msra.mxu0 0.0
    %2616 = vmatprep.subr.mxu0 0.0
    %2617 = vmatpush1.msra.mxu0 %v1438
    %2618 = vmatprep.subr.mxu0 0.0
    %2619 = vmatpush2.msra.mxu0 0.0
    %2620 = vmatprep.subr.mxu0 0.0
    %2621 = vmatpush2.msra.mxu0 0.0
    %2622 = vmatprep.subr.mxu0 0.0
    %2623 = vmatpush2.msra.mxu0 0.0
    %2624 = vmatprep.subr.mxu0 0.0
    %2625 = vmatpush2.msra.mxu0 0.0
    %2626 = vmatprep.subr.mxu0 0.0
    %2627 = vmatpush2.msra.mxu0 0.0
    %2628 = vmatprep.subr.mxu0 0.0
    %2629 = vmatpush2.msra.mxu0 0.0
    %2630 = vmatprep.subr.mxu0 0.0
    %2631 = vmatpush2.msra.mxu0 0.0
    %2632 = vmatprep.subr.mxu0 0.0
    %2633 = vmatpush2.msra.mxu0 0.0
    %2634 = vmatprep.subr.mxu0 0.0
    %2635 = vmatpush2.msra.mxu0 0.0
    %2636 = vmatprep.subr.mxu0 0.0
    %2637 = vmatpush2.msra.mxu0 0.0
    %2638 = vmatprep.subr.mxu0 0.0
    %2639 = vmatpush2.msra.mxu0 0.0
    %2640 = vmatprep.subr.mxu0 0.0
    %2641 = vmatpush2.msra.mxu0 0.0
    %2642 = vmatprep.subr.mxu0 0.0
    %2643 = vmatpush2.msra.mxu0 0.0
    %2644 = vmatprep.subr.mxu0 0.0
    %2645 = vmatpush2.msra.mxu0 0.0
    %2646 = vmatprep.subr.mxu0 0.0
    %2647 = vmatpush2.msra.mxu0 0.0
    %2648 = vmatprep.subr.mxu0 0.0
    %2649 = vmatpush2.msra.mxu0 0.0
    %2650 = vmatprep.mubr.f32.mxu0 0.0
    %2651 = vmatmul.mubr.f32.gmra.mxu0 %v2581
    %v2652 = vpop.f32.mrf.mxu0
    %v2653 = vadd.f32 0.0, %v2652
    %v2654 = vpop.f32.mrf.mxu0
    %2655 = vmatprep.mubr.f32.mxu0 0.0
    %2656 = vmatmul.mubr.f32.gmra.mxu0 %v2584
    %v2657 = vpop.f32.mrf.mxu0
    %v2658 = vadd.f32 0.0, %v2657
    %v2659 = vpop.f32.mrf.mxu0
    %2660 = vdwg.mxu0
    %v2661 = vadd.f32 %v2377, %v2653
    %v2662 = vadd.f32 %v2378, %v2658
    %v2665 = vrot.slane %v2661, 4
    %v2666 = vrot.slane %v2662, 4
    %v2667 = vsel %vm509, %v2665, %v2666
    %v2670 = vsel %vm509, %v1521, %v2665
    %v2671 = vadd.f32 %v186, %v1520
    %v2672 = vadd.f32 %v191, %v2670
    %v2673 = vadd.f32 %v196, %v2667
    %v2674 = vsel %vm109, %v2671, 0.0
    %2675 = vadd.xlane.f32.xlu0 %v2674
    %v2676 = vpop.xlane.xlu0 %2675
    %v2677 = vsel %vm109, %v2672, 0.0
    %2678 = vadd.xlane.f32.xlu0 %v2677
    %v2679 = vpop.xlane.xlu0 %2678
    %v2680 = vsel %vm109, %v2673, 0.0
    %2681 = vadd.xlane.f32.xlu0 %v2680
    %v2682 = vpop.xlane.xlu0 %2681
    %v2683 = vmul.f32 %v2676, %v214
    %v2684 = vmul.f32 %v2679, %v214
    %v2685 = vmul.f32 %v2682, %v214
    %v2686 = vsub.f32 %v2671, %v2683
    %v2687 = vsub.f32 %v2672, %v2684
    %v2688 = vsub.f32 %v2673, %v2685
    %v2689 = vmul.f32 %v2686, %v2686
    %v2690 = vmul.f32 %v2687, %v2687
    %v2691 = vmul.f32 %v2688, %v2688
    %v2692 = vsel %vm109, %v2689, 0.0
    %2693 = vadd.xlane.f32.xlu0 %v2692
    %v2694 = vpop.xlane.xlu0 %2693
    %v2695 = vsel %vm109, %v2690, 0.0
    %2696 = vadd.xlane.f32.xlu0 %v2695
    %v2697 = vpop.xlane.xlu0 %2696
    %v2698 = vsel %vm109, %v2691, 0.0
    %2699 = vadd.xlane.f32.xlu0 %v2698
    %v2700 = vpop.xlane.xlu0 %2699
    %v2701 = vmul.f32 %v2694, %v233
    %v2702 = vmul.f32 %v2697, %v233
    %v2703 = vmul.f32 %v2700, %v233
    %v2704 = vlaneseq
    %v2705 = vshrl.u32 %v2704, 7
    %v2706 = vsub.s32 0, %v2705
    %v2707 = vrot.slane %v201, %v2706
    %v2708 = vmul.f32 %v2707, %v2686
    %v2709 = vmul.f32 %v2707, %v2687
    %v2710 = vmul.f32 %v2707, %v2688
    %v2711 = vrsqrt.pop %v2701
    %v2712 = vmul.f32 %v2701, %v2711
    %vm2713 = vcmp.eq.f32.partialorder %v2701, inf
    %v2714 = vsel %vm2713, %v2701, %v2712
    %vm2715 = vcmp.eq.f32.partialorder %v2701, 0.0
    %v2716 = vand.u32 %v2701, 2147483648
    %v2717 = vsel %vm2715, %v2716, %v2714
    %v2718 = vrsqrt.pop %v2702
    %v2719 = vmul.f32 %v2702, %v2718
    %vm2720 = vcmp.eq.f32.partialorder %v2702, inf
    %v2721 = vsel %vm2720, %v2702, %v2719
    %vm2722 = vcmp.eq.f32.partialorder %v2702, 0.0
    %v2723 = vand.u32 %v2702, 2147483648
    %v2724 = vsel %vm2722, %v2723, %v2721
    %v2725 = vrsqrt.pop %v2703
    %v2726 = vmul.f32 %v2703, %v2725
    %vm2727 = vcmp.eq.f32.partialorder %v2703, inf
    %v2728 = vsel %vm2727, %v2703, %v2726
    %vm2729 = vcmp.eq.f32.partialorder %v2703, 0.0
    %v2730 = vand.u32 %v2703, 2147483648
    %v2731 = vsel %vm2729, %v2730, %v2728
    %v2732 = vadd.f32 %v2717, 1e-06
    %v2733 = vadd.f32 %v2724, 1e-06
    %v2734 = vadd.f32 %v2731, 1e-06
    %v2735 = vrcp.pop %v2732
    %v2736 = vmul.f32 %v2708, %v2735
    %v2737 = vrcp.pop %v2733
    %v2738 = vmul.f32 %v2709, %v2737
    %v2739 = vrcp.pop %v2734
    %v2740 = vmul.f32 %v2710, %v2739
    %v2741 = vlaneseq
    %v2742 = vshrl.u32 %v2741, 7
    %v2743 = vsub.s32 0, %v2742
    %v2744 = vrot.slane %v202, %v2743
    %v2745 = vadd.f32 %v2736, %v2744
    %v2746 = vadd.f32 %v2738, %v2744
    %v2747 = vadd.f32 %v2740, %v2744
    %v2748 = vld [vmem:[#allocation7 + $0x60] sm:$0xff]
    %v2749 = vld [vmem:[#allocation7 + $0x68] sm:$0xff]
    %v2750 = vld [vmem:[#allocation7 + $0x70] sm:$0xff]
    %v2751 = vld [vmem:[#allocation7 + $0x78] sm:$0xff]
    %v2752 = vld [vmem:[#allocation7 + $0x80] sm:$0xff]
    %v2753 = vld [vmem:[#allocation7 + $0x88] sm:$0xff]
    %v2754 = vld [vmem:[#allocation7 + $0x90] sm:$0xff]
    %v2755 = vld [vmem:[#allocation7 + $0x98] sm:$0xff]
    %v2756 = vld [vmem:[#allocation7 + $0xa0] sm:$0xff]
    %v2757 = vld [vmem:[#allocation7 + $0xa8] sm:$0xff]
    %v2758 = vld [vmem:[#allocation7 + $0xb0] sm:$0xff]
    %v2759 = vld [vmem:[#allocation7 + $0xb8] sm:$0xff]
    %vm2763 = vcmask 1040384
    %v2764 = vrot.slane %v2745, 7
    %v2765 = vrot.slane %v2746, 7
    %v2766 = vsel %vm2763, %v2764, %v2765
    %v2767 = vrot.slane %v2747, 7
    %v2768 = vsel %vm2763, %v2765, %v2767
    %v2772 = vsel %vm2763, 0.0, %v2764
    %v2773 = vmul.f32 %v2772, %v93
    %v2774 = vmul.f32 %v2766, %v94
    %v2775 = vmul.f32 %v2768, %v95
    %vm2776 = vcmask 1046528
    %v2777 = vrot.slane %v2745, 1
    %v2778 = vrot.slane %v2746, 1
    %v2779 = vsel %vm2776, %v2777, %v2778
    %v2780 = vrot.slane %v2747, 1
    %v2781 = vsel %vm2776, %v2778, %v2780
    %v2785 = vsel %vm2776, %v2780, 0.0
    %v2786 = vmul.f32 %v2779, %v96
    %v2787 = vmul.f32 %v2781, %v97
    %v2788 = vmul.f32 %v2785, %v98
    %v2789 = vsel %vm109, %v2745, 0
    %v2791 = vsel %vm109, %v2746, 0
    %v2793 = vsel %vm109, %v2747, 0
    %2795 = vmatprep.subr.mxu0 0.0
    %2796 = vmatpush1.msra.mxu0 0.0
    %2797 = vmatprep.subr.mxu0 0.0
    %2798 = vmatpush1.msra.mxu0 0.0
    %2799 = vmatprep.subr.mxu0 0.0
    %2800 = vmatpush1.msra.mxu0 0.0
    %2801 = vmatprep.subr.mxu0 0.0
    %2802 = vmatpush1.msra.mxu0 0.0
    %2803 = vmatprep.subr.mxu0 0.0
    %2804 = vmatpush1.msra.mxu0 0.0
    %2805 = vmatprep.subr.mxu0 0.0
    %2806 = vmatpush1.msra.mxu0 0.0
    %2807 = vmatprep.subr.mxu0 0.0
    %2808 = vmatpush1.msra.mxu0 0.0
    %2809 = vmatprep.subr.mxu0 0.0
    %2810 = vmatpush1.msra.mxu0 0.0
    %2811 = vmatprep.subr.mxu0 0.0
    %2812 = vmatpush1.msra.mxu0 0.0
    %2813 = vmatprep.subr.mxu0 0.0
    %2814 = vmatpush1.msra.mxu0 0.0
    %2815 = vmatprep.subr.mxu0 0.0
    %2816 = vmatpush1.msra.mxu0 0.0
    %2817 = vmatprep.subr.mxu0 0.0
    %2818 = vmatpush1.msra.mxu0 0.0
    %2819 = vmatprep.subr.mxu0 0.0
    %2820 = vmatpush1.msra.mxu0 %v2755
    %2821 = vmatprep.subr.mxu0 0.0
    %2822 = vmatpush1.msra.mxu0 %v2754
    %2823 = vmatprep.subr.mxu0 0.0
    %2824 = vmatpush1.msra.mxu0 %v2753
    %2825 = vmatprep.subr.mxu0 0.0
    %2826 = vmatpush1.msra.mxu0 %v2752
    %2827 = vmatprep.subr.mxu0 0.0
    %2828 = vmatpush2.msra.mxu0 0.0
    %2829 = vmatprep.subr.mxu0 0.0
    %2830 = vmatpush2.msra.mxu0 0.0
    %2831 = vmatprep.subr.mxu0 0.0
    %2832 = vmatpush2.msra.mxu0 0.0
    %2833 = vmatprep.subr.mxu0 0.0
    %2834 = vmatpush2.msra.mxu0 0.0
    %2835 = vmatprep.subr.mxu0 0.0
    %2836 = vmatpush2.msra.mxu0 0.0
    %2837 = vmatprep.subr.mxu0 0.0
    %2838 = vmatpush2.msra.mxu0 0.0
    %2839 = vmatprep.subr.mxu0 0.0
    %2840 = vmatpush2.msra.mxu0 0.0
    %2841 = vmatprep.subr.mxu0 0.0
    %2842 = vmatpush2.msra.mxu0 0.0
    %2843 = vmatprep.subr.mxu0 0.0
    %2844 = vmatpush2.msra.mxu0 0.0
    %2845 = vmatprep.subr.mxu0 0.0
    %2846 = vmatpush2.msra.mxu0 0.0
    %2847 = vmatprep.subr.mxu0 0.0
    %2848 = vmatpush2.msra.mxu0 0.0
    %2849 = vmatprep.subr.mxu0 0.0
    %2850 = vmatpush2.msra.mxu0 0.0
    %2851 = vmatprep.subr.mxu0 0.0
    %2852 = vmatpush2.msra.mxu0 0.0
    %2853 = vmatprep.subr.mxu0 0.0
    %2854 = vmatpush2.msra.mxu0 0.0
    %2855 = vmatprep.subr.mxu0 0.0
    %2856 = vmatpush2.msra.mxu0 0.0
    %2857 = vmatprep.subr.mxu0 0.0
    %2858 = vmatpush2.msra.mxu0 0.0
    %2859 = vmatprep.mubr.f32.mxu0 0.0
    %2860 = vmatmul.mubr.f32.gmra.mxu0 %v2789
    %v2861 = vpop.f32.mrf.mxu0
    %v2862 = vadd.f32 0.0, %v2861
    %v2863 = vpop.f32.mrf.mxu0
    %2864 = vmatprep.mubr.f32.mxu0 0.0
    %2865 = vmatmul.mubr.f32.gmra.mxu0 %v2791
    %v2866 = vpop.f32.mrf.mxu0
    %v2867 = vadd.f32 0.0, %v2866
    %v2868 = vpop.f32.mrf.mxu0
    %2869 = vmatprep.mubr.f32.mxu0 0.0
    %2870 = vmatmul.mubr.f32.gmra.mxu0 %v2793
    %v2871 = vpop.f32.mrf.mxu0
    %v2872 = vadd.f32 0.0, %v2871
    %v2873 = vpop.f32.mrf.mxu0
    %2874 = vdwg.mxu0
    %v2876 = vsel %vm109, %v2773, 0
    %v2879 = vsel %vm109, %v2774, 0
    %v2882 = vsel %vm109, %v2775, 0
    %2884 = vmatprep.subr.mxu0 0.0
    %2885 = vmatpush1.msra.mxu0 0.0
    %2886 = vmatprep.subr.mxu0 0.0
    %2887 = vmatpush1.msra.mxu0 0.0
    %2888 = vmatprep.subr.mxu0 0.0
    %2889 = vmatpush1.msra.mxu0 0.0
    %2890 = vmatprep.subr.mxu0 0.0
    %2891 = vmatpush1.msra.mxu0 0.0
    %2892 = vmatprep.subr.mxu0 0.0
    %2893 = vmatpush1.msra.mxu0 0.0
    %2894 = vmatprep.subr.mxu0 0.0
    %2895 = vmatpush1.msra.mxu0 0.0
    %2896 = vmatprep.subr.mxu0 0.0
    %2897 = vmatpush1.msra.mxu0 0.0
    %2898 = vmatprep.subr.mxu0 0.0
    %2899 = vmatpush1.msra.mxu0 0.0
    %2900 = vmatprep.subr.mxu0 0.0
    %2901 = vmatpush1.msra.mxu0 0.0
    %2902 = vmatprep.subr.mxu0 0.0
    %2903 = vmatpush1.msra.mxu0 0.0
    %2904 = vmatprep.subr.mxu0 0.0
    %2905 = vmatpush1.msra.mxu0 0.0
    %2906 = vmatprep.subr.mxu0 0.0
    %2907 = vmatpush1.msra.mxu0 0.0
    %2908 = vmatprep.subr.mxu0 0.0
    %2909 = vmatpush1.msra.mxu0 %v2751
    %2910 = vmatprep.subr.mxu0 0.0
    %2911 = vmatpush1.msra.mxu0 %v2750
    %2912 = vmatprep.subr.mxu0 0.0
    %2913 = vmatpush1.msra.mxu0 %v2749
    %2914 = vmatprep.subr.mxu0 0.0
    %2915 = vmatpush1.msra.mxu0 %v2748
    %2916 = vmatprep.subr.mxu0 0.0
    %2917 = vmatpush2.msra.mxu0 0.0
    %2918 = vmatprep.subr.mxu0 0.0
    %2919 = vmatpush2.msra.mxu0 0.0
    %2920 = vmatprep.subr.mxu0 0.0
    %2921 = vmatpush2.msra.mxu0 0.0
    %2922 = vmatprep.subr.mxu0 0.0
    %2923 = vmatpush2.msra.mxu0 0.0
    %2924 = vmatprep.subr.mxu0 0.0
    %2925 = vmatpush2.msra.mxu0 0.0
    %2926 = vmatprep.subr.mxu0 0.0
    %2927 = vmatpush2.msra.mxu0 0.0
    %2928 = vmatprep.subr.mxu0 0.0
    %2929 = vmatpush2.msra.mxu0 0.0
    %2930 = vmatprep.subr.mxu0 0.0
    %2931 = vmatpush2.msra.mxu0 0.0
    %2932 = vmatprep.subr.mxu0 0.0
    %2933 = vmatpush2.msra.mxu0 0.0
    %2934 = vmatprep.subr.mxu0 0.0
    %2935 = vmatpush2.msra.mxu0 0.0
    %2936 = vmatprep.subr.mxu0 0.0
    %2937 = vmatpush2.msra.mxu0 0.0
    %2938 = vmatprep.subr.mxu0 0.0
    %2939 = vmatpush2.msra.mxu0 0.0
    %2940 = vmatprep.subr.mxu0 0.0
    %2941 = vmatpush2.msra.mxu0 0.0
    %2942 = vmatprep.subr.mxu0 0.0
    %2943 = vmatpush2.msra.mxu0 0.0
    %2944 = vmatprep.subr.mxu0 0.0
    %2945 = vmatpush2.msra.mxu0 0.0
    %2946 = vmatprep.subr.mxu0 0.0
    %2947 = vmatpush2.msra.mxu0 0.0
    %2948 = vmatprep.mubr.f32.mxu0 0.0
    %2949 = vmatmul.mubr.f32.gmra.mxu0 %v2876
    %v2950 = vpop.f32.mrf.mxu0
    %v2951 = vadd.f32 %v2862, %v2950
    %v2952 = vpop.f32.mrf.mxu0
    %2953 = vmatprep.mubr.f32.mxu0 0.0
    %2954 = vmatmul.mubr.f32.gmra.mxu0 %v2879
    %v2955 = vpop.f32.mrf.mxu0
    %v2956 = vadd.f32 %v2867, %v2955
    %v2957 = vpop.f32.mrf.mxu0
    %2958 = vmatprep.mubr.f32.mxu0 0.0
    %2959 = vmatmul.mubr.f32.gmra.mxu0 %v2882
    %v2960 = vpop.f32.mrf.mxu0
    %v2961 = vadd.f32 %v2872, %v2960
    %v2962 = vpop.f32.mrf.mxu0
    %2963 = vdwg.mxu0
    %v2965 = vsel %vm109, %v2786, 0
    %v2968 = vsel %vm109, %v2787, 0
    %v2971 = vsel %vm109, %v2788, 0
    %2973 = vmatprep.subr.mxu0 0.0
    %2974 = vmatpush1.msra.mxu0 0.0
    %2975 = vmatprep.subr.mxu0 0.0
    %2976 = vmatpush1.msra.mxu0 0.0
    %2977 = vmatprep.subr.mxu0 0.0
    %2978 = vmatpush1.msra.mxu0 0.0
    %2979 = vmatprep.subr.mxu0 0.0
    %2980 = vmatpush1.msra.mxu0 0.0
    %2981 = vmatprep.subr.mxu0 0.0
    %2982 = vmatpush1.msra.mxu0 0.0
    %2983 = vmatprep.subr.mxu0 0.0
    %2984 = vmatpush1.msra.mxu0 0.0
    %2985 = vmatprep.subr.mxu0 0.0
    %2986 = vmatpush1.msra.mxu0 0.0
    %2987 = vmatprep.subr.mxu0 0.0
    %2988 = vmatpush1.msra.mxu0 0.0
    %2989 = vmatprep.subr.mxu0 0.0
    %2990 = vmatpush1.msra.mxu0 0.0
    %2991 = vmatprep.subr.mxu0 0.0
    %2992 = vmatpush1.msra.mxu0 0.0
    %2993 = vmatprep.subr.mxu0 0.0
    %2994 = vmatpush1.msra.mxu0 0.0
    %2995 = vmatprep.subr.mxu0 0.0
    %2996 = vmatpush1.msra.mxu0 0.0
    %2997 = vmatprep.subr.mxu0 0.0
    %2998 = vmatpush1.msra.mxu0 %v2759
    %2999 = vmatprep.subr.mxu0 0.0
    %3000 = vmatpush1.msra.mxu0 %v2758
    %3001 = vmatprep.subr.mxu0 0.0
    %3002 = vmatpush1.msra.mxu0 %v2757
    %3003 = vmatprep.subr.mxu0 0.0
    %3004 = vmatpush1.msra.mxu0 %v2756
    %3005 = vmatprep.subr.mxu0 0.0
    %3006 = vmatpush2.msra.mxu0 0.0
    %3007 = vmatprep.subr.mxu0 0.0
    %3008 = vmatpush2.msra.mxu0 0.0
    %3009 = vmatprep.subr.mxu0 0.0
    %3010 = vmatpush2.msra.mxu0 0.0
    %3011 = vmatprep.subr.mxu0 0.0
    %3012 = vmatpush2.msra.mxu0 0.0
    %3013 = vmatprep.subr.mxu0 0.0
    %3014 = vmatpush2.msra.mxu0 0.0
    %3015 = vmatprep.subr.mxu0 0.0
    %3016 = vmatpush2.msra.mxu0 0.0
    %3017 = vmatprep.subr.mxu0 0.0
    %3018 = vmatpush2.msra.mxu0 0.0
    %3019 = vmatprep.subr.mxu0 0.0
    %3020 = vmatpush2.msra.mxu0 0.0
    %3021 = vmatprep.subr.mxu0 0.0
    %3022 = vmatpush2.msra.mxu0 0.0
    %3023 = vmatprep.subr.mxu0 0.0
    %3024 = vmatpush2.msra.mxu0 0.0
    %3025 = vmatprep.subr.mxu0 0.0
    %3026 = vmatpush2.msra.mxu0 0.0
    %3027 = vmatprep.subr.mxu0 0.0
    %3028 = vmatpush2.msra.mxu0 0.0
    %3029 = vmatprep.subr.mxu0 0.0
    %3030 = vmatpush2.msra.mxu0 0.0
    %3031 = vmatprep.subr.mxu0 0.0
    %3032 = vmatpush2.msra.mxu0 0.0
    %3033 = vmatprep.subr.mxu0 0.0
    %3034 = vmatpush2.msra.mxu0 0.0
    %3035 = vmatprep.subr.mxu0 0.0
    %3036 = vmatpush2.msra.mxu0 0.0
    %3037 = vmatprep.mubr.f32.mxu0 0.0
    %3038 = vmatmul.mubr.f32.gmra.mxu0 %v2965
    %v3039 = vpop.f32.mrf.mxu0
    %v3040 = vadd.f32 0.0, %v3039
    %v3041 = vpop.f32.mrf.mxu0
    %3042 = vmatprep.mubr.f32.mxu0 0.0
    %3043 = vmatmul.mubr.f32.gmra.mxu0 %v2968
    %v3044 = vpop.f32.mrf.mxu0
    %v3045 = vadd.f32 0.0, %v3044
    %v3046 = vpop.f32.mrf.mxu0
    %3047 = vmatprep.mubr.f32.mxu0 0.0
    %3048 = vmatmul.mubr.f32.gmra.mxu0 %v2971
    %v3049 = vpop.f32.mrf.mxu0
    %v3050 = vadd.f32 0.0, %v3049
    %v3051 = vpop.f32.mrf.mxu0
    %3052 = vdwg.mxu0
    %v3053 = vadd.f32 %v2951, %v3040
    %v3054 = vadd.f32 %v2956, %v3045
    %v3055 = vadd.f32 %v2961, %v3050
    %v3056 = vlaneseq
    %v3057 = vshrl.u32 %v3056, 7
    %v3058 = vsub.s32 0, %v3057
    %v3059 = vrot.slane %v203, %v3058
    %v3060 = vadd.f32 %v3053, %v3059
    %v3061 = vadd.f32 %v3054, %v3059
    %v3062 = vadd.f32 %v3055, %v3059
    %v3063 = vmax.f32 %v3060, 0.0
    %v3064 = vmax.f32 %v3061, 0.0
    %v3065 = vmax.f32 %v3062, 0.0
    %v3066 = vld [vmem:[#allocation7 + $0xc0] sm:$0xff]
    %v3067 = vld [vmem:[#allocation7 + $0xc8] sm:$0xff]
    %v3068 = vld [vmem:[#allocation7 + $0xd0] sm:$0xff]
    %v3069 = vld [vmem:[#allocation7 + $0xd8] sm:$0xff]
    %v3070 = vld [vmem:[#allocation7 + $0xe0] sm:$0xff]
    %v3071 = vld [vmem:[#allocation7 + $0xe8] sm:$0xff]
    %v3072 = vld [vmem:[#allocation7 + $0xf0] sm:$0xff]
    %v3073 = vld [vmem:[#allocation7 + $0xf8] sm:$0xff]
    %v3074 = vld [vmem:[#allocation7 + $0x100] sm:$0xff]
    %v3075 = vld [vmem:[#allocation7 + $0x108] sm:$0xff]
    %v3076 = vld [vmem:[#allocation7 + $0x110] sm:$0xff]
    %v3077 = vld [vmem:[#allocation7 + $0x118] sm:$0xff]
    %v3078 = vld [vmem:[#allocation7 + $0x120] sm:$0xff]
    %v3079 = vld [vmem:[#allocation7 + $0x128] sm:$0xff]
    %v3080 = vld [vmem:[#allocation7 + $0x130] sm:$0xff]
    %v3081 = vld [vmem:[#allocation7 + $0x138] sm:$0xff]
    %v3082 = vld [vmem:[#allocation7 + $0x140] sm:$0xff]
    %v3083 = vld [vmem:[#allocation7 + $0x148] sm:$0xff]
    %v3084 = vld [vmem:[#allocation7 + $0x150] sm:$0xff]
    %v3085 = vld [vmem:[#allocation7 + $0x158] sm:$0xff]
    %v3086 = vld [vmem:[#allocation7 + $0x160] sm:$0xff]
    %v3087 = vld [vmem:[#allocation7 + $0x168] sm:$0xff]
    %v3088 = vld [vmem:[#allocation7 + $0x170] sm:$0xff]
    %v3089 = vld [vmem:[#allocation7 + $0x178] sm:$0xff]
    %v3093 = vrot.slane %v3063, 7
    %v3094 = vrot.slane %v3064, 7
    %v3095 = vsel %vm2763, %v3093, %v3094
    %v3096 = vrot.slane %v3065, 7
    %v3097 = vsel %vm2763, %v3094, %v3096
    %v3101 = vsel %vm2763, 0.0, %v3093
    %v3102 = vmul.f32 %v3101, %v93
    %v3103 = vmul.f32 %v3095, %v94
    %v3104 = vmul.f32 %v3097, %v95
    %v3105 = vrot.slane %v3063, 1
    %v3106 = vrot.slane %v3064, 1
    %v3107 = vsel %vm2776, %v3105, %v3106
    %v3108 = vrot.slane %v3065, 1
    %v3109 = vsel %vm2776, %v3106, %v3108
    %v3113 = vsel %vm2776, %v3108, 0.0
    %v3114 = vmul.f32 %v3107, %v96
    %v3115 = vmul.f32 %v3109, %v97
    %v3116 = vmul.f32 %v3113, %v98
    %vm3117 = vcmask 523264
    %v3118 = vsel %vm3117, %v3063, 0
    %v3120 = vsel %vm3117, %v3064, 0
    %v3122 = vsel %vm3117, %v3065, 0
    %3124 = vmatprep.subr.mxu0 0.0
    %3125 = vmatpush1.msra.mxu0 0.0
    %3126 = vmatprep.subr.mxu0 0.0
    %3127 = vmatpush1.msra.mxu0 0.0
    %3128 = vmatprep.subr.mxu0 0.0
    %3129 = vmatpush1.msra.mxu0 0.0
    %3130 = vmatprep.subr.mxu0 0.0
    %3131 = vmatpush1.msra.mxu0 0.0
    %3132 = vmatprep.subr.mxu0 0.0
    %3133 = vmatpush1.msra.mxu0 0.0
    %3134 = vmatprep.subr.mxu0 0.0
    %3135 = vmatpush1.msra.mxu0 0.0
    %3136 = vmatprep.subr.mxu0 0.0
    %3137 = vmatpush1.msra.mxu0 0.0
    %3138 = vmatprep.subr.mxu0 0.0
    %3139 = vmatpush1.msra.mxu0 0.0
    %3140 = vmatprep.subr.mxu0 0.0
    %3141 = vmatpush1.msra.mxu0 %v3081
    %3142 = vmatprep.subr.mxu0 0.0
    %3143 = vmatpush1.msra.mxu0 %v3080
    %3144 = vmatprep.subr.mxu0 0.0
    %3145 = vmatpush1.msra.mxu0 %v3079
    %3146 = vmatprep.subr.mxu0 0.0
    %3147 = vmatpush1.msra.mxu0 %v3078
    %3148 = vmatprep.subr.mxu0 0.0
    %3149 = vmatpush1.msra.mxu0 %v3077
    %3150 = vmatprep.subr.mxu0 0.0
    %3151 = vmatpush1.msra.mxu0 %v3076
    %3152 = vmatprep.subr.mxu0 0.0
    %3153 = vmatpush1.msra.mxu0 %v3075
    %3154 = vmatprep.subr.mxu0 0.0
    %3155 = vmatpush1.msra.mxu0 %v3074
    %3156 = vmatprep.subr.mxu0 0.0
    %3157 = vmatpush2.msra.mxu0 0.0
    %3158 = vmatprep.subr.mxu0 0.0
    %3159 = vmatpush2.msra.mxu0 0.0
    %3160 = vmatprep.subr.mxu0 0.0
    %3161 = vmatpush2.msra.mxu0 0.0
    %3162 = vmatprep.subr.mxu0 0.0
    %3163 = vmatpush2.msra.mxu0 0.0
    %3164 = vmatprep.subr.mxu0 0.0
    %3165 = vmatpush2.msra.mxu0 0.0
    %3166 = vmatprep.subr.mxu0 0.0
    %3167 = vmatpush2.msra.mxu0 0.0
    %3168 = vmatprep.subr.mxu0 0.0
    %3169 = vmatpush2.msra.mxu0 0.0
    %3170 = vmatprep.subr.mxu0 0.0
    %3171 = vmatpush2.msra.mxu0 0.0
    %3172 = vmatprep.subr.mxu0 0.0
    %3173 = vmatpush2.msra.mxu0 0.0
    %3174 = vmatprep.subr.mxu0 0.0
    %3175 = vmatpush2.msra.mxu0 0.0
    %3176 = vmatprep.subr.mxu0 0.0
    %3177 = vmatpush2.msra.mxu0 0.0
    %3178 = vmatprep.subr.mxu0 0.0
    %3179 = vmatpush2.msra.mxu0 0.0
    %3180 = vmatprep.subr.mxu0 0.0
    %3181 = vmatpush2.msra.mxu0 0.0
    %3182 = vmatprep.subr.mxu0 0.0
    %3183 = vmatpush2.msra.mxu0 0.0
    %3184 = vmatprep.subr.mxu0 0.0
    %3185 = vmatpush2.msra.mxu0 0.0
    %3186 = vmatprep.subr.mxu0 0.0
    %3187 = vmatpush2.msra.mxu0 0.0
    %3188 = vmatprep.mubr.f32.mxu0 0.0
    %3189 = vmatmul.mubr.f32.gmra.mxu0 %v3118
    %v3190 = vpop.f32.mrf.mxu0
    %v3191 = vadd.f32 0.0, %v3190
    %v3192 = vpop.f32.mrf.mxu0
    %3193 = vmatprep.mubr.f32.mxu0 0.0
    %3194 = vmatmul.mubr.f32.gmra.mxu0 %v3120
    %v3195 = vpop.f32.mrf.mxu0
    %v3196 = vadd.f32 0.0, %v3195
    %v3197 = vpop.f32.mrf.mxu0
    %3198 = vmatprep.mubr.f32.mxu0 0.0
    %3199 = vmatmul.mubr.f32.gmra.mxu0 %v3122
    %v3200 = vpop.f32.mrf.mxu0
    %v3201 = vadd.f32 0.0, %v3200
    %v3202 = vpop.f32.mrf.mxu0
    %3203 = vdwg.mxu0
    %v3205 = vsel %vm3117, %v3102, 0
    %v3208 = vsel %vm3117, %v3103, 0
    %v3211 = vsel %vm3117, %v3104, 0
    %3213 = vmatprep.subr.mxu0 0.0
    %3214 = vmatpush1.msra.mxu0 0.0
    %3215 = vmatprep.subr.mxu0 0.0
    %3216 = vmatpush1.msra.mxu0 0.0
    %3217 = vmatprep.subr.mxu0 0.0
    %3218 = vmatpush1.msra.mxu0 0.0
    %3219 = vmatprep.subr.mxu0 0.0
    %3220 = vmatpush1.msra.mxu0 0.0
    %3221 = vmatprep.subr.mxu0 0.0
    %3222 = vmatpush1.msra.mxu0 0.0
    %3223 = vmatprep.subr.mxu0 0.0
    %3224 = vmatpush1.msra.mxu0 0.0
    %3225 = vmatprep.subr.mxu0 0.0
    %3226 = vmatpush1.msra.mxu0 0.0
    %3227 = vmatprep.subr.mxu0 0.0
    %3228 = vmatpush1.msra.mxu0 0.0
    %3229 = vmatprep.subr.mxu0 0.0
    %3230 = vmatpush1.msra.mxu0 %v3073
    %3231 = vmatprep.subr.mxu0 0.0
    %3232 = vmatpush1.msra.mxu0 %v3072
    %3233 = vmatprep.subr.mxu0 0.0
    %3234 = vmatpush1.msra.mxu0 %v3071
    %3235 = vmatprep.subr.mxu0 0.0
    %3236 = vmatpush1.msra.mxu0 %v3070
    %3237 = vmatprep.subr.mxu0 0.0
    %3238 = vmatpush1.msra.mxu0 %v3069
    %3239 = vmatprep.subr.mxu0 0.0
    %3240 = vmatpush1.msra.mxu0 %v3068
    %3241 = vmatprep.subr.mxu0 0.0
    %3242 = vmatpush1.msra.mxu0 %v3067
    %3243 = vmatprep.subr.mxu0 0.0
    %3244 = vmatpush1.msra.mxu0 %v3066
    %3245 = vmatprep.subr.mxu0 0.0
    %3246 = vmatpush2.msra.mxu0 0.0
    %3247 = vmatprep.subr.mxu0 0.0
    %3248 = vmatpush2.msra.mxu0 0.0
    %3249 = vmatprep.subr.mxu0 0.0
    %3250 = vmatpush2.msra.mxu0 0.0
    %3251 = vmatprep.subr.mxu0 0.0
    %3252 = vmatpush2.msra.mxu0 0.0
    %3253 = vmatprep.subr.mxu0 0.0
    %3254 = vmatpush2.msra.mxu0 0.0
    %3255 = vmatprep.subr.mxu0 0.0
    %3256 = vmatpush2.msra.mxu0 0.0
    %3257 = vmatprep.subr.mxu0 0.0
    %3258 = vmatpush2.msra.mxu0 0.0
    %3259 = vmatprep.subr.mxu0 0.0
    %3260 = vmatpush2.msra.mxu0 0.0
    %3261 = vmatprep.subr.mxu0 0.0
    %3262 = vmatpush2.msra.mxu0 0.0
    %3263 = vmatprep.subr.mxu0 0.0
    %3264 = vmatpush2.msra.mxu0 0.0
    %3265 = vmatprep.subr.mxu0 0.0
    %3266 = vmatpush2.msra.mxu0 0.0
    %3267 = vmatprep.subr.mxu0 0.0
    %3268 = vmatpush2.msra.mxu0 0.0
    %3269 = vmatprep.subr.mxu0 0.0
    %3270 = vmatpush2.msra.mxu0 0.0
    %3271 = vmatprep.subr.mxu0 0.0
    %3272 = vmatpush2.msra.mxu0 0.0
    %3273 = vmatprep.subr.mxu0 0.0
    %3274 = vmatpush2.msra.mxu0 0.0
    %3275 = vmatprep.subr.mxu0 0.0
    %3276 = vmatpush2.msra.mxu0 0.0
    %3277 = vmatprep.mubr.f32.mxu0 0.0
    %3278 = vmatmul.mubr.f32.gmra.mxu0 %v3205
    %v3279 = vpop.f32.mrf.mxu0
    %v3280 = vadd.f32 %v3191, %v3279
    %v3281 = vpop.f32.mrf.mxu0
    %3282 = vmatprep.mubr.f32.mxu0 0.0
    %3283 = vmatmul.mubr.f32.gmra.mxu0 %v3208
    %v3284 = vpop.f32.mrf.mxu0
    %v3285 = vadd.f32 %v3196, %v3284
    %v3286 = vpop.f32.mrf.mxu0
    %3287 = vmatprep.mubr.f32.mxu0 0.0
    %3288 = vmatmul.mubr.f32.gmra.mxu0 %v3211
    %v3289 = vpop.f32.mrf.mxu0
    %v3290 = vadd.f32 %v3201, %v3289
    %v3291 = vpop.f32.mrf.mxu0
    %3292 = vdwg.mxu0
    %v3294 = vsel %vm3117, %v3114, 0
    %v3297 = vsel %vm3117, %v3115, 0
    %v3300 = vsel %vm3117, %v3116, 0
    %3302 = vmatprep.subr.mxu0 0.0
    %3303 = vmatpush1.msra.mxu0 0.0
    %3304 = vmatprep.subr.mxu0 0.0
    %3305 = vmatpush1.msra.mxu0 0.0
    %3306 = vmatprep.subr.mxu0 0.0
    %3307 = vmatpush1.msra.mxu0 0.0
    %3308 = vmatprep.subr.mxu0 0.0
    %3309 = vmatpush1.msra.mxu0 0.0
    %3310 = vmatprep.subr.mxu0 0.0
    %3311 = vmatpush1.msra.mxu0 0.0
    %3312 = vmatprep.subr.mxu0 0.0
    %3313 = vmatpush1.msra.mxu0 0.0
    %3314 = vmatprep.subr.mxu0 0.0
    %3315 = vmatpush1.msra.mxu0 0.0
    %3316 = vmatprep.subr.mxu0 0.0
    %3317 = vmatpush1.msra.mxu0 0.0
    %3318 = vmatprep.subr.mxu0 0.0
    %3319 = vmatpush1.msra.mxu0 %v3089
    %3320 = vmatprep.subr.mxu0 0.0
    %3321 = vmatpush1.msra.mxu0 %v3088
    %3322 = vmatprep.subr.mxu0 0.0
    %3323 = vmatpush1.msra.mxu0 %v3087
    %3324 = vmatprep.subr.mxu0 0.0
    %3325 = vmatpush1.msra.mxu0 %v3086
    %3326 = vmatprep.subr.mxu0 0.0
    %3327 = vmatpush1.msra.mxu0 %v3085
    %3328 = vmatprep.subr.mxu0 0.0
    %3329 = vmatpush1.msra.mxu0 %v3084
    %3330 = vmatprep.subr.mxu0 0.0
    %3331 = vmatpush1.msra.mxu0 %v3083
    %3332 = vmatprep.subr.mxu0 0.0
    %3333 = vmatpush1.msra.mxu0 %v3082
    %3334 = vmatprep.subr.mxu0 0.0
    %3335 = vmatpush2.msra.mxu0 0.0
    %3336 = vmatprep.subr.mxu0 0.0
    %3337 = vmatpush2.msra.mxu0 0.0
    %3338 = vmatprep.subr.mxu0 0.0
    %3339 = vmatpush2.msra.mxu0 0.0
    %3340 = vmatprep.subr.mxu0 0.0
    %3341 = vmatpush2.msra.mxu0 0.0
    %3342 = vmatprep.subr.mxu0 0.0
    %3343 = vmatpush2.msra.mxu0 0.0
    %3344 = vmatprep.subr.mxu0 0.0
    %3345 = vmatpush2.msra.mxu0 0.0
    %3346 = vmatprep.subr.mxu0 0.0
    %3347 = vmatpush2.msra.mxu0 0.0
    %3348 = vmatprep.subr.mxu0 0.0
    %3349 = vmatpush2.msra.mxu0 0.0
    %3350 = vmatprep.subr.mxu0 0.0
    %3351 = vmatpush2.msra.mxu0 0.0
    %3352 = vmatprep.subr.mxu0 0.0
    %3353 = vmatpush2.msra.mxu0 0.0
    %3354 = vmatprep.subr.mxu0 0.0
    %3355 = vmatpush2.msra.mxu0 0.0
    %3356 = vmatprep.subr.mxu0 0.0
    %3357 = vmatpush2.msra.mxu0 0.0
    %3358 = vmatprep.subr.mxu0 0.0
    %3359 = vmatpush2.msra.mxu0 0.0
    %3360 = vmatprep.subr.mxu0 0.0
    %3361 = vmatpush2.msra.mxu0 0.0
    %3362 = vmatprep.subr.mxu0 0.0
    %3363 = vmatpush2.msra.mxu0 0.0
    %3364 = vmatprep.subr.mxu0 0.0
    %3365 = vmatpush2.msra.mxu0 0.0
    %3366 = vmatprep.mubr.f32.mxu0 0.0
    %3367 = vmatmul.mubr.f32.gmra.mxu0 %v3294
    %v3368 = vpop.f32.mrf.mxu0
    %v3369 = vadd.f32 0.0, %v3368
    %v3370 = vpop.f32.mrf.mxu0
    %3371 = vmatprep.mubr.f32.mxu0 0.0
    %3372 = vmatmul.mubr.f32.gmra.mxu0 %v3297
    %v3373 = vpop.f32.mrf.mxu0
    %v3374 = vadd.f32 0.0, %v3373
    %v3375 = vpop.f32.mrf.mxu0
    %3376 = vmatprep.mubr.f32.mxu0 0.0
    %3377 = vmatmul.mubr.f32.gmra.mxu0 %v3300
    %v3378 = vpop.f32.mrf.mxu0
    %v3379 = vadd.f32 0.0, %v3378
    %v3380 = vpop.f32.mrf.mxu0
    %3381 = vdwg.mxu0
    %v3382 = vadd.f32 %v3280, %v3369
    %v3383 = vadd.f32 %v3285, %v3374
    %v3384 = vadd.f32 %v3290, %v3379
    %v3385 = vlaneseq
    %v3386 = vshrl.u32 %v3385, 7
    %v3387 = vsub.s32 0, %v3386
    %v3388 = vrot.slane %v204, %v3387
    %v3389 = vadd.f32 %v3382, %v3388
    %v3390 = vadd.f32 %v3383, %v3388
    %v3391 = vadd.f32 %v3384, %v3388
    %v3392 = vmax.f32 %v3389, 0.0
    %v3393 = vmax.f32 %v3390, 0.0
    %v3394 = vmax.f32 %v3391, 0.0
    %v3395 = vadd.f32 %v2671, %v3392
    %v3396 = vadd.f32 %v2672, %v3393
    %v3397 = vadd.f32 %v2673, %v3394
    %v3398 = vld [vmem:[#allocation8 + $0x1e] sm:$0x1]
    %v3399 = vld [vmem:[#allocation8 + $0x1f] sm:$0x1]
    %v3400 = vld [vmem:[#allocation8 + $0x20] sm:$0x1]
    %v3401 = vld [vmem:[#allocation8 + $0x21] sm:$0x1]
    %v3402 = vld [vmem:[#allocation8 + $0x22] sm:$0x1]
    %v3403 = vld [vmem:[#allocation8 + $0x23] sm:$0x1]
    %v3404 = vsel %vm109, %v3395, 0.0
    %3405 = vadd.xlane.f32.xlu0 %v3404
    %v3406 = vpop.xlane.xlu0 %3405
    %v3407 = vsel %vm109, %v3396, 0.0
    %3408 = vadd.xlane.f32.xlu0 %v3407
    %v3409 = vpop.xlane.xlu0 %3408
    %v3410 = vsel %vm109, %v3397, 0.0
    %3411 = vadd.xlane.f32.xlu0 %v3410
    %v3412 = vpop.xlane.xlu0 %3411
    %v3413 = vmul.f32 %v3406, %v214
    %v3414 = vmul.f32 %v3409, %v214
    %v3415 = vmul.f32 %v3412, %v214
    %v3416 = vsub.f32 %v3395, %v3413
    %v3417 = vsub.f32 %v3396, %v3414
    %v3418 = vsub.f32 %v3397, %v3415
    %v3419 = vmul.f32 %v3416, %v3416
    %v3420 = vmul.f32 %v3417, %v3417
    %v3421 = vmul.f32 %v3418, %v3418
    %v3422 = vsel %vm109, %v3419, 0.0
    %3423 = vadd.xlane.f32.xlu0 %v3422
    %v3424 = vpop.xlane.xlu0 %3423
    %v3425 = vsel %vm109, %v3420, 0.0
    %3426 = vadd.xlane.f32.xlu0 %v3425
    %v3427 = vpop.xlane.xlu0 %3426
    %v3428 = vsel %vm109, %v3421, 0.0
    %3429 = vadd.xlane.f32.xlu0 %v3428
    %v3430 = vpop.xlane.xlu0 %3429
    %v3431 = vmul.f32 %v3424, %v233
    %v3432 = vmul.f32 %v3427, %v233
    %v3433 = vmul.f32 %v3430, %v233
    %v3434 = vlaneseq
    %v3435 = vshrl.u32 %v3434, 7
    %v3436 = vsub.s32 0, %v3435
    %v3437 = vrot.slane %v3398, %v3436
    %v3438 = vmul.f32 %v3437, %v3416
    %v3439 = vmul.f32 %v3437, %v3417
    %v3440 = vmul.f32 %v3437, %v3418
    %v3441 = vrsqrt.pop %v3431
    %v3442 = vmul.f32 %v3431, %v3441
    %vm3443 = vcmp.eq.f32.partialorder %v3431, inf
    %v3444 = vsel %vm3443, %v3431, %v3442
    %vm3445 = vcmp.eq.f32.partialorder %v3431, 0.0
    %v3446 = vand.u32 %v3431, 2147483648
    %v3447 = vsel %vm3445, %v3446, %v3444
    %v3448 = vrsqrt.pop %v3432
    %v3449 = vmul.f32 %v3432, %v3448
    %vm3450 = vcmp.eq.f32.partialorder %v3432, inf
    %v3451 = vsel %vm3450, %v3432, %v3449
    %vm3452 = vcmp.eq.f32.partialorder %v3432, 0.0
    %v3453 = vand.u32 %v3432, 2147483648
    %v3454 = vsel %vm3452, %v3453, %v3451
    %v3455 = vrsqrt.pop %v3433
    %v3456 = vmul.f32 %v3433, %v3455
    %vm3457 = vcmp.eq.f32.partialorder %v3433, inf
    %v3458 = vsel %vm3457, %v3433, %v3456
    %vm3459 = vcmp.eq.f32.partialorder %v3433, 0.0
    %v3460 = vand.u32 %v3433, 2147483648
    %v3461 = vsel %vm3459, %v3460, %v3458
    %v3462 = vadd.f32 %v3447, 1e-06
    %v3463 = vadd.f32 %v3454, 1e-06
    %v3464 = vadd.f32 %v3461, 1e-06
    %v3465 = vrcp.pop %v3462
    %v3466 = vmul.f32 %v3438, %v3465
    %v3467 = vrcp.pop %v3463
    %v3468 = vmul.f32 %v3439, %v3467
    %v3469 = vrcp.pop %v3464
    %v3470 = vmul.f32 %v3440, %v3469
    %v3471 = vlaneseq
    %v3472 = vshrl.u32 %v3471, 7
    %v3473 = vsub.s32 0, %v3472
    %v3474 = vrot.slane %v3399, %v3473
    %v3475 = vadd.f32 %v3466, %v3474
    %v3476 = vadd.f32 %v3468, %v3474
    %v3477 = vadd.f32 %v3470, %v3474
    %v3478 = vld [vmem:[#allocation7 + $0x180] sm:$0xff]
    %v3479 = vld [vmem:[#allocation7 + $0x188] sm:$0xff]
    %v3480 = vld [vmem:[#allocation7 + $0x190] sm:$0xff]
    %v3481 = vld [vmem:[#allocation7 + $0x198] sm:$0xff]
    %v3483 = vsel %vm109, %v3475, 0
    %v3486 = vsel %vm109, %v3476, 0
    %v3489 = vsel %vm109, %v3477, 0
    %3491 = vmatprep.subr.mxu0 0.0
    %3492 = vmatpush1.msra.mxu0 0.0
    %3493 = vmatprep.subr.mxu0 0.0
    %3494 = vmatpush1.msra.mxu0 0.0
    %3495 = vmatprep.subr.mxu0 0.0
    %3496 = vmatpush1.msra.mxu0 0.0
    %3497 = vmatprep.subr.mxu0 0.0
    %3498 = vmatpush1.msra.mxu0 0.0
    %3499 = vmatprep.subr.mxu0 0.0
    %3500 = vmatpush1.msra.mxu0 0.0
    %3501 = vmatprep.subr.mxu0 0.0
    %3502 = vmatpush1.msra.mxu0 0.0
    %3503 = vmatprep.subr.mxu0 0.0
    %3504 = vmatpush1.msra.mxu0 0.0
    %3505 = vmatprep.subr.mxu0 0.0
    %3506 = vmatpush1.msra.mxu0 0.0
    %3507 = vmatprep.subr.mxu0 0.0
    %3508 = vmatpush1.msra.mxu0 0.0
    %3509 = vmatprep.subr.mxu0 0.0
    %3510 = vmatpush1.msra.mxu0 0.0
    %3511 = vmatprep.subr.mxu0 0.0
    %3512 = vmatpush1.msra.mxu0 0.0
    %3513 = vmatprep.subr.mxu0 0.0
    %3514 = vmatpush1.msra.mxu0 0.0
    %3515 = vmatprep.subr.mxu0 0.0
    %3516 = vmatpush1.msra.mxu0 %v3481
    %3517 = vmatprep.subr.mxu0 0.0
    %3518 = vmatpush1.msra.mxu0 %v3480
    %3519 = vmatprep.subr.mxu0 0.0
    %3520 = vmatpush1.msra.mxu0 %v3479
    %3521 = vmatprep.subr.mxu0 0.0
    %3522 = vmatpush1.msra.mxu0 %v3478
    %3523 = vmatprep.subr.mxu0 0.0
    %3524 = vmatpush2.msra.mxu0 0.0
    %3525 = vmatprep.subr.mxu0 0.0
    %3526 = vmatpush2.msra.mxu0 0.0
    %3527 = vmatprep.subr.mxu0 0.0
    %3528 = vmatpush2.msra.mxu0 0.0
    %3529 = vmatprep.subr.mxu0 0.0
    %3530 = vmatpush2.msra.mxu0 0.0
    %3531 = vmatprep.subr.mxu0 0.0
    %3532 = vmatpush2.msra.mxu0 0.0
    %3533 = vmatprep.subr.mxu0 0.0
    %3534 = vmatpush2.msra.mxu0 0.0
    %3535 = vmatprep.subr.mxu0 0.0
    %3536 = vmatpush2.msra.mxu0 0.0
    %3537 = vmatprep.subr.mxu0 0.0
    %3538 = vmatpush2.msra.mxu0 0.0
    %3539 = vmatprep.subr.mxu0 0.0
    %3540 = vmatpush2.msra.mxu0 0.0
    %3541 = vmatprep.subr.mxu0 0.0
    %3542 = vmatpush2.msra.mxu0 0.0
    %3543 = vmatprep.subr.mxu0 0.0
    %3544 = vmatpush2.msra.mxu0 0.0
    %3545 = vmatprep.subr.mxu0 0.0
    %3546 = vmatpush2.msra.mxu0 0.0
    %3547 = vmatprep.subr.mxu0 0.0
    %3548 = vmatpush2.msra.mxu0 0.0
    %3549 = vmatprep.subr.mxu0 0.0
    %3550 = vmatpush2.msra.mxu0 0.0
    %3551 = vmatprep.subr.mxu0 0.0
    %3552 = vmatpush2.msra.mxu0 0.0
    %3553 = vmatprep.subr.mxu0 0.0
    %3554 = vmatpush2.msra.mxu0 0.0
    %3555 = vmatprep.mubr.f32.mxu0 0.0
    %3556 = vmatmul.mubr.f32.gmra.mxu0 %v3483
    %v3557 = vpop.f32.mrf.mxu0
    %v3558 = vadd.f32 0.0, %v3557
    %v3559 = vpop.f32.mrf.mxu0
    %3560 = vmatprep.mubr.f32.mxu0 0.0
    %3561 = vmatmul.mubr.f32.gmra.mxu0 %v3486
    %v3562 = vpop.f32.mrf.mxu0
    %v3563 = vadd.f32 0.0, %v3562
    %v3564 = vpop.f32.mrf.mxu0
    %3565 = vmatprep.mubr.f32.mxu0 0.0
    %3566 = vmatmul.mubr.f32.gmra.mxu0 %v3489
    %v3567 = vpop.f32.mrf.mxu0
    %v3568 = vadd.f32 0.0, %v3567
    %v3569 = vpop.f32.mrf.mxu0
    %3570 = vdwg.mxu0
    %v3571 = vmul.f32 %v3558, 0.35355338
    %v3572 = vmul.f32 %v3563, 0.35355338
    %v3573 = vmul.f32 %v3568, 0.35355338
    %3576 = vrot.lane.b32.xlu0 %v3558, 96
    %v3577 = vpop.permute.xlu0 %3576
    %3578 = vrot.lane.b32.xlu0 %v3563, 96
    %v3579 = vpop.permute.xlu0 %3578
    %v3581 = vsel %vm388, %v3571, 0
    %v3584 = vsel %vm388, %v3572, 0
    %v3586 = vsel %vm388, %v3577, 0
    %v3588 = vsel %vm388, %v3579, 0
    %3590 = vmatprep.subr.mxu0 0.0
    %3591 = vmatpush1.xpose.msra.mxu0 0.0
    %3592 = vmatprep.subr.mxu0 0.0
    %3593 = vmatpush1.xpose.msra.mxu0 0.0
    %3594 = vmatprep.subr.mxu0 0.0
    %3595 = vmatpush1.xpose.msra.mxu0 0.0
    %3596 = vmatprep.subr.mxu0 0.0
    %3597 = vmatpush1.xpose.msra.mxu0 0.0
    %3598 = vmatprep.subr.mxu0 0.0
    %3599 = vmatpush1.xpose.msra.mxu0 0.0
    %3600 = vmatprep.subr.mxu0 0.0
    %3601 = vmatpush1.xpose.msra.mxu0 0.0
    %3602 = vmatprep.subr.mxu0 0.0
    %3603 = vmatpush1.xpose.msra.mxu0 0.0
    %3604 = vmatprep.subr.mxu0 0.0
    %3605 = vmatpush1.xpose.msra.mxu0 0.0
    %3606 = vmatprep.subr.mxu0 0.0
    %3607 = vmatpush1.xpose.msra.mxu0 0.0
    %3608 = vmatprep.subr.mxu0 0.0
    %3609 = vmatpush1.xpose.msra.mxu0 0.0
    %3610 = vmatprep.subr.mxu0 0.0
    %3611 = vmatpush1.xpose.msra.mxu0 0.0
    %3612 = vmatprep.subr.mxu0 0.0
    %3613 = vmatpush1.xpose.msra.mxu0 0.0
    %3614 = vmatprep.subr.mxu0 0.0
    %3615 = vmatpush1.xpose.msra.mxu0 0.0
    %3616 = vmatprep.subr.mxu0 0.0
    %3617 = vmatpush1.xpose.msra.mxu0 0.0
    %3618 = vmatprep.subr.mxu0 0.0
    %3619 = vmatpush1.xpose.msra.mxu0 %v3588
    %3620 = vmatprep.subr.mxu0 0.0
    %3621 = vmatpush1.xpose.msra.mxu0 %v3586
    %3622 = vmatprep.subr.mxu0 0.0
    %3623 = vmatpush2.xpose.msra.mxu0 0.0
    %3624 = vmatprep.subr.mxu0 0.0
    %3625 = vmatpush2.xpose.msra.mxu0 0.0
    %3626 = vmatprep.subr.mxu0 0.0
    %3627 = vmatpush2.xpose.msra.mxu0 0.0
    %3628 = vmatprep.subr.mxu0 0.0
    %3629 = vmatpush2.xpose.msra.mxu0 0.0
    %3630 = vmatprep.subr.mxu0 0.0
    %3631 = vmatpush2.xpose.msra.mxu0 0.0
    %3632 = vmatprep.subr.mxu0 0.0
    %3633 = vmatpush2.xpose.msra.mxu0 0.0
    %3634 = vmatprep.subr.mxu0 0.0
    %3635 = vmatpush2.xpose.msra.mxu0 0.0
    %3636 = vmatprep.subr.mxu0 0.0
    %3637 = vmatpush2.xpose.msra.mxu0 0.0
    %3638 = vmatprep.subr.mxu0 0.0
    %3639 = vmatpush2.xpose.msra.mxu0 0.0
    %3640 = vmatprep.subr.mxu0 0.0
    %3641 = vmatpush2.xpose.msra.mxu0 0.0
    %3642 = vmatprep.subr.mxu0 0.0
    %3643 = vmatpush2.xpose.msra.mxu0 0.0
    %3644 = vmatprep.subr.mxu0 0.0
    %3645 = vmatpush2.xpose.msra.mxu0 0.0
    %3646 = vmatprep.subr.mxu0 0.0
    %3647 = vmatpush2.xpose.msra.mxu0 0.0
    %3648 = vmatprep.subr.mxu0 0.0
    %3649 = vmatpush2.xpose.msra.mxu0 0.0
    %3650 = vmatprep.subr.mxu0 0.0
    %3651 = vmatpush2.xpose.msra.mxu0 0.0
    %3652 = vmatprep.subr.mxu0 0.0
    %3653 = vmatpush2.xpose.msra.mxu0 0.0
    %3654 = vmatprep.mubr.f32.mxu0 0.0
    %3655 = vmatmul.mubr.f32.gmra.mxu0 %v3581
    %v3656 = vpop.f32.mrf.mxu0
    %v3657 = vadd.f32 %v381, %v3656
    %v3658 = vpop.f32.mrf.mxu0
    %3659 = vmatprep.mubr.f32.mxu0 0.0
    %3660 = vmatmul.mubr.f32.gmra.mxu0 %v3584
    %v3661 = vpop.f32.mrf.mxu0
    %v3662 = vadd.f32 %v381, %v3661
    %v3663 = vpop.f32.mrf.mxu0
    %3664 = vdwg.mxu0
    %v3665 = vsel %vm474, %v3657, -inf
    %3666 = vmax.xlane.f32.xlu0 %v3665
    %v3667 = vpop.xlane.xlu0 %3666
    %v3668 = vsel %vm478, %v3662, -inf
    %3669 = vmax.xlane.f32.xlu0 %v3668
    %v3670 = vpop.xlane.xlu0 %3669
    %v3671 = vsub.f32 %v3657, %v3667
    %v3672 = vsub.f32 %v3662, %v3670
    %v3673 = vmul.f32 %v3671, 1.442695
    %v3674 = vpow.pop %v3673
    %v3675 = vmul.f32 %v3672, 1.442695
    %v3676 = vpow.pop %v3675
    %v3677 = vsel %vm474, %v3674, 0.0
    %3678 = vadd.xlane.f32.xlu0 %v3677
    %v3679 = vpop.xlane.xlu0 %3678
    %v3680 = vsel %vm478, %v3676, 0.0
    %3681 = vadd.xlane.f32.xlu0 %v3680
    %v3682 = vpop.xlane.xlu0 %3681
    %v3683 = vrcp.pop %v3679
    %v3684 = vmul.f32 %v3674, %v3683
    %v3685 = vrcp.pop %v3682
    %v3686 = vmul.f32 %v3676, %v3685
    %3687 = vrot.lane.b32.xlu0 %v3558, 64
    %v3688 = vpop.permute.xlu0 %3687
    %3689 = vrot.lane.b32.xlu0 %v3563, 64
    %v3690 = vpop.permute.xlu0 %3689
    %v3693 = vsel %vm474, %v3684, 0
    %v3696 = vsel %vm474, %v3686, 0
    %v3698 = vsel %vm509, %v3690, 0
    %3700 = vmatprep.subr.mxu0 0.0
    %3701 = vmatpush1.msra.mxu0 0.0
    %3702 = vmatprep.subr.mxu0 0.0
    %3703 = vmatpush1.msra.mxu0 0.0
    %3704 = vmatprep.subr.mxu0 0.0
    %3705 = vmatpush1.msra.mxu0 0.0
    %3706 = vmatprep.subr.mxu0 0.0
    %3707 = vmatpush1.msra.mxu0 0.0
    %3708 = vmatprep.subr.mxu0 0.0
    %3709 = vmatpush1.msra.mxu0 0.0
    %3710 = vmatprep.subr.mxu0 0.0
    %3711 = vmatpush1.msra.mxu0 0.0
    %3712 = vmatprep.subr.mxu0 0.0
    %3713 = vmatpush1.msra.mxu0 0.0
    %3714 = vmatprep.subr.mxu0 0.0
    %3715 = vmatpush1.msra.mxu0 0.0
    %3716 = vmatprep.subr.mxu0 0.0
    %3717 = vmatpush1.msra.mxu0 0.0
    %3718 = vmatprep.subr.mxu0 0.0
    %3719 = vmatpush1.msra.mxu0 0.0
    %3720 = vmatprep.subr.mxu0 0.0
    %3721 = vmatpush1.msra.mxu0 0.0
    %3722 = vmatprep.subr.mxu0 0.0
    %3723 = vmatpush1.msra.mxu0 0.0
    %3724 = vmatprep.subr.mxu0 0.0
    %3725 = vmatpush1.msra.mxu0 0.0
    %3726 = vmatprep.subr.mxu0 0.0
    %3727 = vmatpush1.msra.mxu0 0.0
    %3728 = vmatprep.subr.mxu0 0.0
    %3729 = vmatpush1.msra.mxu0 %v3698
    %3730 = vmatprep.subr.mxu0 0.0
    %3731 = vmatpush1.msra.mxu0 %v3688
    %3732 = vmatprep.subr.mxu0 0.0
    %3733 = vmatpush2.msra.mxu0 0.0
    %3734 = vmatprep.subr.mxu0 0.0
    %3735 = vmatpush2.msra.mxu0 0.0
    %3736 = vmatprep.subr.mxu0 0.0
    %3737 = vmatpush2.msra.mxu0 0.0
    %3738 = vmatprep.subr.mxu0 0.0
    %3739 = vmatpush2.msra.mxu0 0.0
    %3740 = vmatprep.subr.mxu0 0.0
    %3741 = vmatpush2.msra.mxu0 0.0
    %3742 = vmatprep.subr.mxu0 0.0
    %3743 = vmatpush2.msra.mxu0 0.0
    %3744 = vmatprep.subr.mxu0 0.0
    %3745 = vmatpush2.msra.mxu0 0.0
    %3746 = vmatprep.subr.mxu0 0.0
    %3747 = vmatpush2.msra.mxu0 0.0
    %3748 = vmatprep.subr.mxu0 0.0
    %3749 = vmatpush2.msra.mxu0 0.0
    %3750 = vmatprep.subr.mxu0 0.0
    %3751 = vmatpush2.msra.mxu0 0.0
    %3752 = vmatprep.subr.mxu0 0.0
    %3753 = vmatpush2.msra.mxu0 0.0
    %3754 = vmatprep.subr.mxu0 0.0
    %3755 = vmatpush2.msra.mxu0 0.0
    %3756 = vmatprep.subr.mxu0 0.0
    %3757 = vmatpush2.msra.mxu0 0.0
    %3758 = vmatprep.subr.mxu0 0.0
    %3759 = vmatpush2.msra.mxu0 0.0
    %3760 = vmatprep.subr.mxu0 0.0
    %3761 = vmatpush2.msra.mxu0 0.0
    %3762 = vmatprep.subr.mxu0 0.0
    %3763 = vmatpush2.msra.mxu0 0.0
    %3764 = vmatprep.mubr.f32.mxu0 0.0
    %3765 = vmatmul.mubr.f32.gmra.mxu0 %v3693
    %v3766 = vpop.f32.mrf.mxu0
    %v3767 = vadd.f32 0.0, %v3766
    %v3768 = vpop.f32.mrf.mxu0
    %3769 = vmatprep.mubr.f32.mxu0 0.0
    %3770 = vmatmul.mubr.f32.gmra.mxu0 %v3696
    %v3771 = vpop.f32.mrf.mxu0
    %v3772 = vadd.f32 0.0, %v3771
    %v3773 = vpop.f32.mrf.mxu0
    %3774 = vdwg.mxu0
    %v3775 = vld [vmem:[#allocation7 + $0x1a0] sm:$0xff]
    %3776 = vrot.lane.b32.xlu0 %v3571, 120
    %v3777 = vpop.permute.xlu0 %3776
    %3778 = vrot.lane.b32.xlu0 %v3572, 120
    %v3779 = vpop.permute.xlu0 %3778
    %3780 = vrot.lane.b32.xlu0 %v3558, 88
    %v3781 = vpop.permute.xlu0 %3780
    %3782 = vrot.lane.b32.xlu0 %v3563, 88
    %v3783 = vpop.permute.xlu0 %3782
    %v3784 = vsel %vm388, %v3777, 0
    %v3786 = vsel %vm388, %v3779, 0
    %v3788 = vsel %vm388, %v3781, 0
    %v3790 = vsel %vm388, %v3783, 0
    %3792 = vmatprep.subr.mxu0 0.0
    %3793 = vmatpush1.xpose.msra.mxu0 0.0
    %3794 = vmatprep.subr.mxu0 0.0
    %3795 = vmatpush1.xpose.msra.mxu0 0.0
    %3796 = vmatprep.subr.mxu0 0.0
    %3797 = vmatpush1.xpose.msra.mxu0 0.0
    %3798 = vmatprep.subr.mxu0 0.0
    %3799 = vmatpush1.xpose.msra.mxu0 0.0
    %3800 = vmatprep.subr.mxu0 0.0
    %3801 = vmatpush1.xpose.msra.mxu0 0.0
    %3802 = vmatprep.subr.mxu0 0.0
    %3803 = vmatpush1.xpose.msra.mxu0 0.0
    %3804 = vmatprep.subr.mxu0 0.0
    %3805 = vmatpush1.xpose.msra.mxu0 0.0
    %3806 = vmatprep.subr.mxu0 0.0
    %3807 = vmatpush1.xpose.msra.mxu0 0.0
    %3808 = vmatprep.subr.mxu0 0.0
    %3809 = vmatpush1.xpose.msra.mxu0 0.0
    %3810 = vmatprep.subr.mxu0 0.0
    %3811 = vmatpush1.xpose.msra.mxu0 0.0
    %3812 = vmatprep.subr.mxu0 0.0
    %3813 = vmatpush1.xpose.msra.mxu0 0.0
    %3814 = vmatprep.subr.mxu0 0.0
    %3815 = vmatpush1.xpose.msra.mxu0 0.0
    %3816 = vmatprep.subr.mxu0 0.0
    %3817 = vmatpush1.xpose.msra.mxu0 0.0
    %3818 = vmatprep.subr.mxu0 0.0
    %3819 = vmatpush1.xpose.msra.mxu0 0.0
    %3820 = vmatprep.subr.mxu0 0.0
    %3821 = vmatpush1.xpose.msra.mxu0 %v3790
    %3822 = vmatprep.subr.mxu0 0.0
    %3823 = vmatpush1.xpose.msra.mxu0 %v3788
    %3824 = vmatprep.subr.mxu0 0.0
    %3825 = vmatpush2.xpose.msra.mxu0 0.0
    %3826 = vmatprep.subr.mxu0 0.0
    %3827 = vmatpush2.xpose.msra.mxu0 0.0
    %3828 = vmatprep.subr.mxu0 0.0
    %3829 = vmatpush2.xpose.msra.mxu0 0.0
    %3830 = vmatprep.subr.mxu0 0.0
    %3831 = vmatpush2.xpose.msra.mxu0 0.0
    %3832 = vmatprep.subr.mxu0 0.0
    %3833 = vmatpush2.xpose.msra.mxu0 0.0
    %3834 = vmatprep.subr.mxu0 0.0
    %3835 = vmatpush2.xpose.msra.mxu0 0.0
    %3836 = vmatprep.subr.mxu0 0.0
    %3837 = vmatpush2.xpose.msra.mxu0 0.0
    %3838 = vmatprep.subr.mxu0 0.0
    %3839 = vmatpush2.xpose.msra.mxu0 0.0
    %3840 = vmatprep.subr.mxu0 0.0
    %3841 = vmatpush2.xpose.msra.mxu0 0.0
    %3842 = vmatprep.subr.mxu0 0.0
    %3843 = vmatpush2.xpose.msra.mxu0 0.0
    %3844 = vmatprep.subr.mxu0 0.0
    %3845 = vmatpush2.xpose.msra.mxu0 0.0
    %3846 = vmatprep.subr.mxu0 0.0
    %3847 = vmatpush2.xpose.msra.mxu0 0.0
    %3848 = vmatprep.subr.mxu0 0.0
    %3849 = vmatpush2.xpose.msra.mxu0 0.0
    %3850 = vmatprep.subr.mxu0 0.0
    %3851 = vmatpush2.xpose.msra.mxu0 0.0
    %3852 = vmatprep.subr.mxu0 0.0
    %3853 = vmatpush2.xpose.msra.mxu0 0.0
    %3854 = vmatprep.subr.mxu0 0.0
    %3855 = vmatpush2.xpose.msra.mxu0 0.0
    %3856 = vmatprep.mubr.f32.mxu0 0.0
    %3857 = vmatmul.mubr.f32.gmra.mxu0 %v3784
    %v3858 = vpop.f32.mrf.mxu0
    %v3859 = vadd.f32 %v381, %v3858
    %v3860 = vpop.f32.mrf.mxu0
    %3861 = vmatprep.mubr.f32.mxu0 0.0
    %3862 = vmatmul.mubr.f32.gmra.mxu0 %v3786
    %v3863 = vpop.f32.mrf.mxu0
    %v3864 = vadd.f32 %v381, %v3863
    %v3865 = vpop.f32.mrf.mxu0
    %3866 = vdwg.mxu0
    %v3867 = vsel %vm474, %v3859, -inf
    %3868 = vmax.xlane.f32.xlu0 %v3867
    %v3869 = vpop.xlane.xlu0 %3868
    %v3870 = vsel %vm478, %v3864, -inf
    %3871 = vmax.xlane.f32.xlu0 %v3870
    %v3872 = vpop.xlane.xlu0 %3871
    %v3873 = vsub.f32 %v3859, %v3869
    %v3874 = vsub.f32 %v3864, %v3872
    %v3875 = vmul.f32 %v3873, 1.442695
    %v3876 = vpow.pop %v3875
    %v3877 = vmul.f32 %v3874, 1.442695
    %v3878 = vpow.pop %v3877
    %v3879 = vsel %vm474, %v3876, 0.0
    %3880 = vadd.xlane.f32.xlu0 %v3879
    %v3881 = vpop.xlane.xlu0 %3880
    %v3882 = vsel %vm478, %v3878, 0.0
    %3883 = vadd.xlane.f32.xlu0 %v3882
    %v3884 = vpop.xlane.xlu0 %3883
    %v3885 = vrcp.pop %v3881
    %v3886 = vmul.f32 %v3876, %v3885
    %v3887 = vrcp.pop %v3884
    %v3888 = vmul.f32 %v3878, %v3887
    %3889 = vrot.lane.b32.xlu0 %v3558, 56
    %v3890 = vpop.permute.xlu0 %3889
    %3891 = vrot.lane.b32.xlu0 %v3563, 56
    %v3892 = vpop.permute.xlu0 %3891
    %v3895 = vsel %vm474, %v3886, 0
    %v3898 = vsel %vm474, %v3888, 0
    %v3900 = vsel %vm509, %v3892, 0
    %3902 = vmatprep.subr.mxu0 0.0
    %3903 = vmatpush1.msra.mxu0 0.0
    %3904 = vmatprep.subr.mxu0 0.0
    %3905 = vmatpush1.msra.mxu0 0.0
    %3906 = vmatprep.subr.mxu0 0.0
    %3907 = vmatpush1.msra.mxu0 0.0
    %3908 = vmatprep.subr.mxu0 0.0
    %3909 = vmatpush1.msra.mxu0 0.0
    %3910 = vmatprep.subr.mxu0 0.0
    %3911 = vmatpush1.msra.mxu0 0.0
    %3912 = vmatprep.subr.mxu0 0.0
    %3913 = vmatpush1.msra.mxu0 0.0
    %3914 = vmatprep.subr.mxu0 0.0
    %3915 = vmatpush1.msra.mxu0 0.0
    %3916 = vmatprep.subr.mxu0 0.0
    %3917 = vmatpush1.msra.mxu0 0.0
    %3918 = vmatprep.subr.mxu0 0.0
    %3919 = vmatpush1.msra.mxu0 0.0
    %3920 = vmatprep.subr.mxu0 0.0
    %3921 = vmatpush1.msra.mxu0 0.0
    %3922 = vmatprep.subr.mxu0 0.0
    %3923 = vmatpush1.msra.mxu0 0.0
    %3924 = vmatprep.subr.mxu0 0.0
    %3925 = vmatpush1.msra.mxu0 0.0
    %3926 = vmatprep.subr.mxu0 0.0
    %3927 = vmatpush1.msra.mxu0 0.0
    %3928 = vmatprep.subr.mxu0 0.0
    %3929 = vmatpush1.msra.mxu0 0.0
    %3930 = vmatprep.subr.mxu0 0.0
    %3931 = vmatpush1.msra.mxu0 %v3900
    %3932 = vmatprep.subr.mxu0 0.0
    %3933 = vmatpush1.msra.mxu0 %v3890
    %3934 = vmatprep.subr.mxu0 0.0
    %3935 = vmatpush2.msra.mxu0 0.0
    %3936 = vmatprep.subr.mxu0 0.0
    %3937 = vmatpush2.msra.mxu0 0.0
    %3938 = vmatprep.subr.mxu0 0.0
    %3939 = vmatpush2.msra.mxu0 0.0
    %3940 = vmatprep.subr.mxu0 0.0
    %3941 = vmatpush2.msra.mxu0 0.0
    %3942 = vmatprep.subr.mxu0 0.0
    %3943 = vmatpush2.msra.mxu0 0.0
    %3944 = vmatprep.subr.mxu0 0.0
    %3945 = vmatpush2.msra.mxu0 0.0
    %3946 = vmatprep.subr.mxu0 0.0
    %3947 = vmatpush2.msra.mxu0 0.0
    %3948 = vmatprep.subr.mxu0 0.0
    %3949 = vmatpush2.msra.mxu0 0.0
    %3950 = vmatprep.subr.mxu0 0.0
    %3951 = vmatpush2.msra.mxu0 0.0
    %3952 = vmatprep.subr.mxu0 0.0
    %3953 = vmatpush2.msra.mxu0 0.0
    %3954 = vmatprep.subr.mxu0 0.0
    %3955 = vmatpush2.msra.mxu0 0.0
    %3956 = vmatprep.subr.mxu0 0.0
    %3957 = vmatpush2.msra.mxu0 0.0
    %3958 = vmatprep.subr.mxu0 0.0
    %3959 = vmatpush2.msra.mxu0 0.0
    %3960 = vmatprep.subr.mxu0 0.0
    %3961 = vmatpush2.msra.mxu0 0.0
    %3962 = vmatprep.subr.mxu0 0.0
    %3963 = vmatpush2.msra.mxu0 0.0
    %3964 = vmatprep.subr.mxu0 0.0
    %3965 = vmatpush2.msra.mxu0 0.0
    %3966 = vmatprep.mubr.f32.mxu0 0.0
    %3967 = vmatmul.mubr.f32.gmra.mxu0 %v3895
    %v3968 = vpop.f32.mrf.mxu0
    %v3969 = vadd.f32 0.0, %v3968
    %v3970 = vpop.f32.mrf.mxu0
    %3971 = vmatprep.mubr.f32.mxu0 0.0
    %3972 = vmatmul.mubr.f32.gmra.mxu0 %v3898
    %v3973 = vpop.f32.mrf.mxu0
    %v3974 = vadd.f32 0.0, %v3973
    %v3975 = vpop.f32.mrf.mxu0
    %3976 = vdwg.mxu0
    %v3977 = vld [vmem:[#allocation7 + $0x1a8] sm:$0xff]
    %v3979 = vsel %vm388, %v3969, 0
    %v3982 = vsel %vm388, %v3974, 0
    %3984 = vmatprep.subr.mxu0 0.0
    %3985 = vmatpush1.msra.mxu0 0.0
    %3986 = vmatprep.subr.mxu0 0.0
    %3987 = vmatpush1.msra.mxu0 0.0
    %3988 = vmatprep.subr.mxu0 0.0
    %3989 = vmatpush1.msra.mxu0 0.0
    %3990 = vmatprep.subr.mxu0 0.0
    %3991 = vmatpush1.msra.mxu0 0.0
    %3992 = vmatprep.subr.mxu0 0.0
    %3993 = vmatpush1.msra.mxu0 0.0
    %3994 = vmatprep.subr.mxu0 0.0
    %3995 = vmatpush1.msra.mxu0 0.0
    %3996 = vmatprep.subr.mxu0 0.0
    %3997 = vmatpush1.msra.mxu0 0.0
    %3998 = vmatprep.subr.mxu0 0.0
    %3999 = vmatpush1.msra.mxu0 0.0
    %4000 = vmatprep.subr.mxu0 0.0
    %4001 = vmatpush1.msra.mxu0 0.0
    %4002 = vmatprep.subr.mxu0 0.0
    %4003 = vmatpush1.msra.mxu0 0.0
    %4004 = vmatprep.subr.mxu0 0.0
    %4005 = vmatpush1.msra.mxu0 0.0
    %4006 = vmatprep.subr.mxu0 0.0
    %4007 = vmatpush1.msra.mxu0 0.0
    %4008 = vmatprep.subr.mxu0 0.0
    %4009 = vmatpush1.msra.mxu0 0.0
    %4010 = vmatprep.subr.mxu0 0.0
    %4011 = vmatpush1.msra.mxu0 0.0
    %4012 = vmatprep.subr.mxu0 0.0
    %4013 = vmatpush1.msra.mxu0 0.0
    %4014 = vmatprep.subr.mxu0 0.0
    %4015 = vmatpush1.msra.mxu0 %v3977
    %4016 = vmatprep.subr.mxu0 0.0
    %4017 = vmatpush2.msra.mxu0 0.0
    %4018 = vmatprep.subr.mxu0 0.0
    %4019 = vmatpush2.msra.mxu0 0.0
    %4020 = vmatprep.subr.mxu0 0.0
    %4021 = vmatpush2.msra.mxu0 0.0
    %4022 = vmatprep.subr.mxu0 0.0
    %4023 = vmatpush2.msra.mxu0 0.0
    %4024 = vmatprep.subr.mxu0 0.0
    %4025 = vmatpush2.msra.mxu0 0.0
    %4026 = vmatprep.subr.mxu0 0.0
    %4027 = vmatpush2.msra.mxu0 0.0
    %4028 = vmatprep.subr.mxu0 0.0
    %4029 = vmatpush2.msra.mxu0 0.0
    %4030 = vmatprep.subr.mxu0 0.0
    %4031 = vmatpush2.msra.mxu0 0.0
    %4032 = vmatprep.subr.mxu0 0.0
    %4033 = vmatpush2.msra.mxu0 0.0
    %4034 = vmatprep.subr.mxu0 0.0
    %4035 = vmatpush2.msra.mxu0 0.0
    %4036 = vmatprep.subr.mxu0 0.0
    %4037 = vmatpush2.msra.mxu0 0.0
    %4038 = vmatprep.subr.mxu0 0.0
    %4039 = vmatpush2.msra.mxu0 0.0
    %4040 = vmatprep.subr.mxu0 0.0
    %4041 = vmatpush2.msra.mxu0 0.0
    %4042 = vmatprep.subr.mxu0 0.0
    %4043 = vmatpush2.msra.mxu0 0.0
    %4044 = vmatprep.subr.mxu0 0.0
    %4045 = vmatpush2.msra.mxu0 0.0
    %4046 = vmatprep.subr.mxu0 0.0
    %4047 = vmatpush2.msra.mxu0 0.0
    %4048 = vmatprep.mubr.f32.mxu0 0.0
    %4049 = vmatmul.mubr.f32.gmra.mxu0 %v3979
    %v4050 = vpop.f32.mrf.mxu0
    %v4051 = vadd.f32 0.0, %v4050
    %v4052 = vpop.f32.mrf.mxu0
    %4053 = vmatprep.mubr.f32.mxu0 0.0
    %4054 = vmatmul.mubr.f32.gmra.mxu0 %v3982
    %v4055 = vpop.f32.mrf.mxu0
    %v4056 = vadd.f32 0.0, %v4055
    %v4057 = vpop.f32.mrf.mxu0
    %4058 = vdwg.mxu0
    %v4060 = vsel %vm388, %v3767, 0
    %v4063 = vsel %vm388, %v3772, 0
    %4065 = vmatprep.subr.mxu0 0.0
    %4066 = vmatpush1.msra.mxu0 0.0
    %4067 = vmatprep.subr.mxu0 0.0
    %4068 = vmatpush1.msra.mxu0 0.0
    %4069 = vmatprep.subr.mxu0 0.0
    %4070 = vmatpush1.msra.mxu0 0.0
    %4071 = vmatprep.subr.mxu0 0.0
    %4072 = vmatpush1.msra.mxu0 0.0
    %4073 = vmatprep.subr.mxu0 0.0
    %4074 = vmatpush1.msra.mxu0 0.0
    %4075 = vmatprep.subr.mxu0 0.0
    %4076 = vmatpush1.msra.mxu0 0.0
    %4077 = vmatprep.subr.mxu0 0.0
    %4078 = vmatpush1.msra.mxu0 0.0
    %4079 = vmatprep.subr.mxu0 0.0
    %4080 = vmatpush1.msra.mxu0 0.0
    %4081 = vmatprep.subr.mxu0 0.0
    %4082 = vmatpush1.msra.mxu0 0.0
    %4083 = vmatprep.subr.mxu0 0.0
    %4084 = vmatpush1.msra.mxu0 0.0
    %4085 = vmatprep.subr.mxu0 0.0
    %4086 = vmatpush1.msra.mxu0 0.0
    %4087 = vmatprep.subr.mxu0 0.0
    %4088 = vmatpush1.msra.mxu0 0.0
    %4089 = vmatprep.subr.mxu0 0.0
    %4090 = vmatpush1.msra.mxu0 0.0
    %4091 = vmatprep.subr.mxu0 0.0
    %4092 = vmatpush1.msra.mxu0 0.0
    %4093 = vmatprep.subr.mxu0 0.0
    %4094 = vmatpush1.msra.mxu0 0.0
    %4095 = vmatprep.subr.mxu0 0.0
    %4096 = vmatpush1.msra.mxu0 %v3775
    %4097 = vmatprep.subr.mxu0 0.0
    %4098 = vmatpush2.msra.mxu0 0.0
    %4099 = vmatprep.subr.mxu0 0.0
    %4100 = vmatpush2.msra.mxu0 0.0
    %4101 = vmatprep.subr.mxu0 0.0
    %4102 = vmatpush2.msra.mxu0 0.0
    %4103 = vmatprep.subr.mxu0 0.0
    %4104 = vmatpush2.msra.mxu0 0.0
    %4105 = vmatprep.subr.mxu0 0.0
    %4106 = vmatpush2.msra.mxu0 0.0
    %4107 = vmatprep.subr.mxu0 0.0
    %4108 = vmatpush2.msra.mxu0 0.0
    %4109 = vmatprep.subr.mxu0 0.0
    %4110 = vmatpush2.msra.mxu0 0.0
    %4111 = vmatprep.subr.mxu0 0.0
    %4112 = vmatpush2.msra.mxu0 0.0
    %4113 = vmatprep.subr.mxu0 0.0
    %4114 = vmatpush2.msra.mxu0 0.0
    %4115 = vmatprep.subr.mxu0 0.0
    %4116 = vmatpush2.msra.mxu0 0.0
    %4117 = vmatprep.subr.mxu0 0.0
    %4118 = vmatpush2.msra.mxu0 0.0
    %4119 = vmatprep.subr.mxu0 0.0
    %4120 = vmatpush2.msra.mxu0 0.0
    %4121 = vmatprep.subr.mxu0 0.0
    %4122 = vmatpush2.msra.mxu0 0.0
    %4123 = vmatprep.subr.mxu0 0.0
    %4124 = vmatpush2.msra.mxu0 0.0
    %4125 = vmatprep.subr.mxu0 0.0
    %4126 = vmatpush2.msra.mxu0 0.0
    %4127 = vmatprep.subr.mxu0 0.0
    %4128 = vmatpush2.msra.mxu0 0.0
    %4129 = vmatprep.mubr.f32.mxu0 0.0
    %4130 = vmatmul.mubr.f32.gmra.mxu0 %v4060
    %v4131 = vpop.f32.mrf.mxu0
    %v4132 = vadd.f32 %v4051, %v4131
    %v4133 = vpop.f32.mrf.mxu0
    %4134 = vmatprep.mubr.f32.mxu0 0.0
    %4135 = vmatmul.mubr.f32.gmra.mxu0 %v4063
    %v4136 = vpop.f32.mrf.mxu0
    %v4137 = vadd.f32 %v4056, %v4136
    %v4138 = vpop.f32.mrf.mxu0
    %4139 = vdwg.mxu0
    %4140 = vrot.lane.b32.xlu0 %v3571, 112
    %v4141 = vpop.permute.xlu0 %4140
    %4142 = vrot.lane.b32.xlu0 %v3572, 112
    %v4143 = vpop.permute.xlu0 %4142
    %4144 = vrot.lane.b32.xlu0 %v3558, 80
    %v4145 = vpop.permute.xlu0 %4144
    %4146 = vrot.lane.b32.xlu0 %v3563, 80
    %v4147 = vpop.permute.xlu0 %4146
    %v4148 = vsel %vm388, %v4141, 0
    %v4150 = vsel %vm388, %v4143, 0
    %v4152 = vsel %vm388, %v4145, 0
    %v4154 = vsel %vm388, %v4147, 0
    %4156 = vmatprep.subr.mxu0 0.0
    %4157 = vmatpush1.xpose.msra.mxu0 0.0
    %4158 = vmatprep.subr.mxu0 0.0
    %4159 = vmatpush1.xpose.msra.mxu0 0.0
    %4160 = vmatprep.subr.mxu0 0.0
    %4161 = vmatpush1.xpose.msra.mxu0 0.0
    %4162 = vmatprep.subr.mxu0 0.0
    %4163 = vmatpush1.xpose.msra.mxu0 0.0
    %4164 = vmatprep.subr.mxu0 0.0
    %4165 = vmatpush1.xpose.msra.mxu0 0.0
    %4166 = vmatprep.subr.mxu0 0.0
    %4167 = vmatpush1.xpose.msra.mxu0 0.0
    %4168 = vmatprep.subr.mxu0 0.0
    %4169 = vmatpush1.xpose.msra.mxu0 0.0
    %4170 = vmatprep.subr.mxu0 0.0
    %4171 = vmatpush1.xpose.msra.mxu0 0.0
    %4172 = vmatprep.subr.mxu0 0.0
    %4173 = vmatpush1.xpose.msra.mxu0 0.0
    %4174 = vmatprep.subr.mxu0 0.0
    %4175 = vmatpush1.xpose.msra.mxu0 0.0
    %4176 = vmatprep.subr.mxu0 0.0
    %4177 = vmatpush1.xpose.msra.mxu0 0.0
    %4178 = vmatprep.subr.mxu0 0.0
    %4179 = vmatpush1.xpose.msra.mxu0 0.0
    %4180 = vmatprep.subr.mxu0 0.0
    %4181 = vmatpush1.xpose.msra.mxu0 0.0
    %4182 = vmatprep.subr.mxu0 0.0
    %4183 = vmatpush1.xpose.msra.mxu0 0.0
    %4184 = vmatprep.subr.mxu0 0.0
    %4185 = vmatpush1.xpose.msra.mxu0 %v4154
    %4186 = vmatprep.subr.mxu0 0.0
    %4187 = vmatpush1.xpose.msra.mxu0 %v4152
    %4188 = vmatprep.subr.mxu0 0.0
    %4189 = vmatpush2.xpose.msra.mxu0 0.0
    %4190 = vmatprep.subr.mxu0 0.0
    %4191 = vmatpush2.xpose.msra.mxu0 0.0
    %4192 = vmatprep.subr.mxu0 0.0
    %4193 = vmatpush2.xpose.msra.mxu0 0.0
    %4194 = vmatprep.subr.mxu0 0.0
    %4195 = vmatpush2.xpose.msra.mxu0 0.0
    %4196 = vmatprep.subr.mxu0 0.0
    %4197 = vmatpush2.xpose.msra.mxu0 0.0
    %4198 = vmatprep.subr.mxu0 0.0
    %4199 = vmatpush2.xpose.msra.mxu0 0.0
    %4200 = vmatprep.subr.mxu0 0.0
    %4201 = vmatpush2.xpose.msra.mxu0 0.0
    %4202 = vmatprep.subr.mxu0 0.0
    %4203 = vmatpush2.xpose.msra.mxu0 0.0
    %4204 = vmatprep.subr.mxu0 0.0
    %4205 = vmatpush2.xpose.msra.mxu0 0.0
    %4206 = vmatprep.subr.mxu0 0.0
    %4207 = vmatpush2.xpose.msra.mxu0 0.0
    %4208 = vmatprep.subr.mxu0 0.0
    %4209 = vmatpush2.xpose.msra.mxu0 0.0
    %4210 = vmatprep.subr.mxu0 0.0
    %4211 = vmatpush2.xpose.msra.mxu0 0.0
    %4212 = vmatprep.subr.mxu0 0.0
    %4213 = vmatpush2.xpose.msra.mxu0 0.0
    %4214 = vmatprep.subr.mxu0 0.0
    %4215 = vmatpush2.xpose.msra.mxu0 0.0
    %4216 = vmatprep.subr.mxu0 0.0
    %4217 = vmatpush2.xpose.msra.mxu0 0.0
    %4218 = vmatprep.subr.mxu0 0.0
    %4219 = vmatpush2.xpose.msra.mxu0 0.0
    %4220 = vmatprep.mubr.f32.mxu0 0.0
    %4221 = vmatmul.mubr.f32.gmra.mxu0 %v4148
    %v4222 = vpop.f32.mrf.mxu0
    %v4223 = vadd.f32 %v381, %v4222
    %v4224 = vpop.f32.mrf.mxu0
    %4225 = vmatprep.mubr.f32.mxu0 0.0
    %4226 = vmatmul.mubr.f32.gmra.mxu0 %v4150
    %v4227 = vpop.f32.mrf.mxu0
    %v4228 = vadd.f32 %v381, %v4227
    %v4229 = vpop.f32.mrf.mxu0
    %4230 = vdwg.mxu0
    %v4231 = vsel %vm474, %v4223, -inf
    %4232 = vmax.xlane.f32.xlu0 %v4231
    %v4233 = vpop.xlane.xlu0 %4232
    %v4234 = vsel %vm478, %v4228, -inf
    %4235 = vmax.xlane.f32.xlu0 %v4234
    %v4236 = vpop.xlane.xlu0 %4235
    %v4237 = vsub.f32 %v4223, %v4233
    %v4238 = vsub.f32 %v4228, %v4236
    %v4239 = vmul.f32 %v4237, 1.442695
    %v4240 = vpow.pop %v4239
    %v4241 = vmul.f32 %v4238, 1.442695
    %v4242 = vpow.pop %v4241
    %v4243 = vsel %vm474, %v4240, 0.0
    %4244 = vadd.xlane.f32.xlu0 %v4243
    %v4245 = vpop.xlane.xlu0 %4244
    %v4246 = vsel %vm478, %v4242, 0.0
    %4247 = vadd.xlane.f32.xlu0 %v4246
    %v4248 = vpop.xlane.xlu0 %4247
    %v4249 = vrcp.pop %v4245
    %v4250 = vmul.f32 %v4240, %v4249
    %v4251 = vrcp.pop %v4248
    %v4252 = vmul.f32 %v4242, %v4251
    %4253 = vrot.lane.b32.xlu0 %v3558, 48
    %v4254 = vpop.permute.xlu0 %4253
    %4255 = vrot.lane.b32.xlu0 %v3563, 48
    %v4256 = vpop.permute.xlu0 %4255
    %v4259 = vsel %vm474, %v4250, 0
    %v4262 = vsel %vm474, %v4252, 0
    %v4264 = vsel %vm509, %v4256, 0
    %4266 = vmatprep.subr.mxu0 0.0
    %4267 = vmatpush1.msra.mxu0 0.0
    %4268 = vmatprep.subr.mxu0 0.0
    %4269 = vmatpush1.msra.mxu0 0.0
    %4270 = vmatprep.subr.mxu0 0.0
    %4271 = vmatpush1.msra.mxu0 0.0
    %4272 = vmatprep.subr.mxu0 0.0
    %4273 = vmatpush1.msra.mxu0 0.0
    %4274 = vmatprep.subr.mxu0 0.0
    %4275 = vmatpush1.msra.mxu0 0.0
    %4276 = vmatprep.subr.mxu0 0.0
    %4277 = vmatpush1.msra.mxu0 0.0
    %4278 = vmatprep.subr.mxu0 0.0
    %4279 = vmatpush1.msra.mxu0 0.0
    %4280 = vmatprep.subr.mxu0 0.0
    %4281 = vmatpush1.msra.mxu0 0.0
    %4282 = vmatprep.subr.mxu0 0.0
    %4283 = vmatpush1.msra.mxu0 0.0
    %4284 = vmatprep.subr.mxu0 0.0
    %4285 = vmatpush1.msra.mxu0 0.0
    %4286 = vmatprep.subr.mxu0 0.0
    %4287 = vmatpush1.msra.mxu0 0.0
    %4288 = vmatprep.subr.mxu0 0.0
    %4289 = vmatpush1.msra.mxu0 0.0
    %4290 = vmatprep.subr.mxu0 0.0
    %4291 = vmatpush1.msra.mxu0 0.0
    %4292 = vmatprep.subr.mxu0 0.0
    %4293 = vmatpush1.msra.mxu0 0.0
    %4294 = vmatprep.subr.mxu0 0.0
    %4295 = vmatpush1.msra.mxu0 %v4264
    %4296 = vmatprep.subr.mxu0 0.0
    %4297 = vmatpush1.msra.mxu0 %v4254
    %4298 = vmatprep.subr.mxu0 0.0
    %4299 = vmatpush2.msra.mxu0 0.0
    %4300 = vmatprep.subr.mxu0 0.0
    %4301 = vmatpush2.msra.mxu0 0.0
    %4302 = vmatprep.subr.mxu0 0.0
    %4303 = vmatpush2.msra.mxu0 0.0
    %4304 = vmatprep.subr.mxu0 0.0
    %4305 = vmatpush2.msra.mxu0 0.0
    %4306 = vmatprep.subr.mxu0 0.0
    %4307 = vmatpush2.msra.mxu0 0.0
    %4308 = vmatprep.subr.mxu0 0.0
    %4309 = vmatpush2.msra.mxu0 0.0
    %4310 = vmatprep.subr.mxu0 0.0
    %4311 = vmatpush2.msra.mxu0 0.0
    %4312 = vmatprep.subr.mxu0 0.0
    %4313 = vmatpush2.msra.mxu0 0.0
    %4314 = vmatprep.subr.mxu0 0.0
    %4315 = vmatpush2.msra.mxu0 0.0
    %4316 = vmatprep.subr.mxu0 0.0
    %4317 = vmatpush2.msra.mxu0 0.0
    %4318 = vmatprep.subr.mxu0 0.0
    %4319 = vmatpush2.msra.mxu0 0.0
    %4320 = vmatprep.subr.mxu0 0.0
    %4321 = vmatpush2.msra.mxu0 0.0
    %4322 = vmatprep.subr.mxu0 0.0
    %4323 = vmatpush2.msra.mxu0 0.0
    %4324 = vmatprep.subr.mxu0 0.0
    %4325 = vmatpush2.msra.mxu0 0.0
    %4326 = vmatprep.subr.mxu0 0.0
    %4327 = vmatpush2.msra.mxu0 0.0
    %4328 = vmatprep.subr.mxu0 0.0
    %4329 = vmatpush2.msra.mxu0 0.0
    %4330 = vmatprep.mubr.f32.mxu0 0.0
    %4331 = vmatmul.mubr.f32.gmra.mxu0 %v4259
    %v4332 = vpop.f32.mrf.mxu0
    %v4333 = vadd.f32 0.0, %v4332
    %v4334 = vpop.f32.mrf.mxu0
    %4335 = vmatprep.mubr.f32.mxu0 0.0
    %4336 = vmatmul.mubr.f32.gmra.mxu0 %v4262
    %v4337 = vpop.f32.mrf.mxu0
    %v4338 = vadd.f32 0.0, %v4337
    %v4339 = vpop.f32.mrf.mxu0
    %4340 = vdwg.mxu0
    %v4341 = vld [vmem:[#allocation7 + $0x1b0] sm:$0xff]
    %v4343 = vsel %vm388, %v4333, 0
    %v4346 = vsel %vm388, %v4338, 0
    %4348 = vmatprep.subr.mxu0 0.0
    %4349 = vmatpush1.msra.mxu0 0.0
    %4350 = vmatprep.subr.mxu0 0.0
    %4351 = vmatpush1.msra.mxu0 0.0
    %4352 = vmatprep.subr.mxu0 0.0
    %4353 = vmatpush1.msra.mxu0 0.0
    %4354 = vmatprep.subr.mxu0 0.0
    %4355 = vmatpush1.msra.mxu0 0.0
    %4356 = vmatprep.subr.mxu0 0.0
    %4357 = vmatpush1.msra.mxu0 0.0
    %4358 = vmatprep.subr.mxu0 0.0
    %4359 = vmatpush1.msra.mxu0 0.0
    %4360 = vmatprep.subr.mxu0 0.0
    %4361 = vmatpush1.msra.mxu0 0.0
    %4362 = vmatprep.subr.mxu0 0.0
    %4363 = vmatpush1.msra.mxu0 0.0
    %4364 = vmatprep.subr.mxu0 0.0
    %4365 = vmatpush1.msra.mxu0 0.0
    %4366 = vmatprep.subr.mxu0 0.0
    %4367 = vmatpush1.msra.mxu0 0.0
    %4368 = vmatprep.subr.mxu0 0.0
    %4369 = vmatpush1.msra.mxu0 0.0
    %4370 = vmatprep.subr.mxu0 0.0
    %4371 = vmatpush1.msra.mxu0 0.0
    %4372 = vmatprep.subr.mxu0 0.0
    %4373 = vmatpush1.msra.mxu0 0.0
    %4374 = vmatprep.subr.mxu0 0.0
    %4375 = vmatpush1.msra.mxu0 0.0
    %4376 = vmatprep.subr.mxu0 0.0
    %4377 = vmatpush1.msra.mxu0 0.0
    %4378 = vmatprep.subr.mxu0 0.0
    %4379 = vmatpush1.msra.mxu0 %v4341
    %4380 = vmatprep.subr.mxu0 0.0
    %4381 = vmatpush2.msra.mxu0 0.0
    %4382 = vmatprep.subr.mxu0 0.0
    %4383 = vmatpush2.msra.mxu0 0.0
    %4384 = vmatprep.subr.mxu0 0.0
    %4385 = vmatpush2.msra.mxu0 0.0
    %4386 = vmatprep.subr.mxu0 0.0
    %4387 = vmatpush2.msra.mxu0 0.0
    %4388 = vmatprep.subr.mxu0 0.0
    %4389 = vmatpush2.msra.mxu0 0.0
    %4390 = vmatprep.subr.mxu0 0.0
    %4391 = vmatpush2.msra.mxu0 0.0
    %4392 = vmatprep.subr.mxu0 0.0
    %4393 = vmatpush2.msra.mxu0 0.0
    %4394 = vmatprep.subr.mxu0 0.0
    %4395 = vmatpush2.msra.mxu0 0.0
    %4396 = vmatprep.subr.mxu0 0.0
    %4397 = vmatpush2.msra.mxu0 0.0
    %4398 = vmatprep.subr.mxu0 0.0
    %4399 = vmatpush2.msra.mxu0 0.0
    %4400 = vmatprep.subr.mxu0 0.0
    %4401 = vmatpush2.msra.mxu0 0.0
    %4402 = vmatprep.subr.mxu0 0.0
    %4403 = vmatpush2.msra.mxu0 0.0
    %4404 = vmatprep.subr.mxu0 0.0
    %4405 = vmatpush2.msra.mxu0 0.0
    %4406 = vmatprep.subr.mxu0 0.0
    %4407 = vmatpush2.msra.mxu0 0.0
    %4408 = vmatprep.subr.mxu0 0.0
    %4409 = vmatpush2.msra.mxu0 0.0
    %4410 = vmatprep.subr.mxu0 0.0
    %4411 = vmatpush2.msra.mxu0 0.0
    %4412 = vmatprep.mubr.f32.mxu0 0.0
    %4413 = vmatmul.mubr.f32.gmra.mxu0 %v4343
    %v4414 = vpop.f32.mrf.mxu0
    %v4415 = vadd.f32 0.0, %v4414
    %v4416 = vpop.f32.mrf.mxu0
    %4417 = vmatprep.mubr.f32.mxu0 0.0
    %4418 = vmatmul.mubr.f32.gmra.mxu0 %v4346
    %v4419 = vpop.f32.mrf.mxu0
    %v4420 = vadd.f32 0.0, %v4419
    %v4421 = vpop.f32.mrf.mxu0
    %4422 = vdwg.mxu0
    %v4423 = vadd.f32 %v4132, %v4415
    %v4424 = vadd.f32 %v4137, %v4420
    %4425 = vrot.lane.b32.xlu0 %v3571, 104
    %v4426 = vpop.permute.xlu0 %4425
    %4427 = vrot.lane.b32.xlu0 %v3572, 104
    %v4428 = vpop.permute.xlu0 %4427
    %4429 = vrot.lane.b32.xlu0 %v3558, 72
    %v4430 = vpop.permute.xlu0 %4429
    %4431 = vrot.lane.b32.xlu0 %v3563, 72
    %v4432 = vpop.permute.xlu0 %4431
    %v4433 = vsel %vm388, %v4426, 0
    %v4435 = vsel %vm388, %v4428, 0
    %v4437 = vsel %vm388, %v4430, 0
    %v4439 = vsel %vm388, %v4432, 0
    %4441 = vmatprep.subr.mxu0 0.0
    %4442 = vmatpush1.xpose.msra.mxu0 0.0
    %4443 = vmatprep.subr.mxu0 0.0
    %4444 = vmatpush1.xpose.msra.mxu0 0.0
    %4445 = vmatprep.subr.mxu0 0.0
    %4446 = vmatpush1.xpose.msra.mxu0 0.0
    %4447 = vmatprep.subr.mxu0 0.0
    %4448 = vmatpush1.xpose.msra.mxu0 0.0
    %4449 = vmatprep.subr.mxu0 0.0
    %4450 = vmatpush1.xpose.msra.mxu0 0.0
    %4451 = vmatprep.subr.mxu0 0.0
    %4452 = vmatpush1.xpose.msra.mxu0 0.0
    %4453 = vmatprep.subr.mxu0 0.0
    %4454 = vmatpush1.xpose.msra.mxu0 0.0
    %4455 = vmatprep.subr.mxu0 0.0
    %4456 = vmatpush1.xpose.msra.mxu0 0.0
    %4457 = vmatprep.subr.mxu0 0.0
    %4458 = vmatpush1.xpose.msra.mxu0 0.0
    %4459 = vmatprep.subr.mxu0 0.0
    %4460 = vmatpush1.xpose.msra.mxu0 0.0
    %4461 = vmatprep.subr.mxu0 0.0
    %4462 = vmatpush1.xpose.msra.mxu0 0.0
    %4463 = vmatprep.subr.mxu0 0.0
    %4464 = vmatpush1.xpose.msra.mxu0 0.0
    %4465 = vmatprep.subr.mxu0 0.0
    %4466 = vmatpush1.xpose.msra.mxu0 0.0
    %4467 = vmatprep.subr.mxu0 0.0
    %4468 = vmatpush1.xpose.msra.mxu0 0.0
    %4469 = vmatprep.subr.mxu0 0.0
    %4470 = vmatpush1.xpose.msra.mxu0 %v4439
    %4471 = vmatprep.subr.mxu0 0.0
    %4472 = vmatpush1.xpose.msra.mxu0 %v4437
    %4473 = vmatprep.subr.mxu0 0.0
    %4474 = vmatpush2.xpose.msra.mxu0 0.0
    %4475 = vmatprep.subr.mxu0 0.0
    %4476 = vmatpush2.xpose.msra.mxu0 0.0
    %4477 = vmatprep.subr.mxu0 0.0
    %4478 = vmatpush2.xpose.msra.mxu0 0.0
    %4479 = vmatprep.subr.mxu0 0.0
    %4480 = vmatpush2.xpose.msra.mxu0 0.0
    %4481 = vmatprep.subr.mxu0 0.0
    %4482 = vmatpush2.xpose.msra.mxu0 0.0
    %4483 = vmatprep.subr.mxu0 0.0
    %4484 = vmatpush2.xpose.msra.mxu0 0.0
    %4485 = vmatprep.subr.mxu0 0.0
    %4486 = vmatpush2.xpose.msra.mxu0 0.0
    %4487 = vmatprep.subr.mxu0 0.0
    %4488 = vmatpush2.xpose.msra.mxu0 0.0
    %4489 = vmatprep.subr.mxu0 0.0
    %4490 = vmatpush2.xpose.msra.mxu0 0.0
    %4491 = vmatprep.subr.mxu0 0.0
    %4492 = vmatpush2.xpose.msra.mxu0 0.0
    %4493 = vmatprep.subr.mxu0 0.0
    %4494 = vmatpush2.xpose.msra.mxu0 0.0
    %4495 = vmatprep.subr.mxu0 0.0
    %4496 = vmatpush2.xpose.msra.mxu0 0.0
    %4497 = vmatprep.subr.mxu0 0.0
    %4498 = vmatpush2.xpose.msra.mxu0 0.0
    %4499 = vmatprep.subr.mxu0 0.0
    %4500 = vmatpush2.xpose.msra.mxu0 0.0
    %4501 = vmatprep.subr.mxu0 0.0
    %4502 = vmatpush2.xpose.msra.mxu0 0.0
    %4503 = vmatprep.subr.mxu0 0.0
    %4504 = vmatpush2.xpose.msra.mxu0 0.0
    %4505 = vmatprep.mubr.f32.mxu0 0.0
    %4506 = vmatmul.mubr.f32.gmra.mxu0 %v4433
    %v4507 = vpop.f32.mrf.mxu0
    %v4508 = vadd.f32 %v381, %v4507
    %v4509 = vpop.f32.mrf.mxu0
    %4510 = vmatprep.mubr.f32.mxu0 0.0
    %4511 = vmatmul.mubr.f32.gmra.mxu0 %v4435
    %v4512 = vpop.f32.mrf.mxu0
    %v4513 = vadd.f32 %v381, %v4512
    %v4514 = vpop.f32.mrf.mxu0
    %4515 = vdwg.mxu0
    %v4516 = vsel %vm474, %v4508, -inf
    %4517 = vmax.xlane.f32.xlu0 %v4516
    %v4518 = vpop.xlane.xlu0 %4517
    %v4519 = vsel %vm478, %v4513, -inf
    %4520 = vmax.xlane.f32.xlu0 %v4519
    %v4521 = vpop.xlane.xlu0 %4520
    %v4522 = vsub.f32 %v4508, %v4518
    %v4523 = vsub.f32 %v4513, %v4521
    %v4524 = vmul.f32 %v4522, 1.442695
    %v4525 = vpow.pop %v4524
    %v4526 = vmul.f32 %v4523, 1.442695
    %v4527 = vpow.pop %v4526
    %v4528 = vsel %vm474, %v4525, 0.0
    %4529 = vadd.xlane.f32.xlu0 %v4528
    %v4530 = vpop.xlane.xlu0 %4529
    %v4531 = vsel %vm478, %v4527, 0.0
    %4532 = vadd.xlane.f32.xlu0 %v4531
    %v4533 = vpop.xlane.xlu0 %4532
    %v4534 = vrcp.pop %v4530
    %v4535 = vmul.f32 %v4525, %v4534
    %v4536 = vrcp.pop %v4533
    %v4537 = vmul.f32 %v4527, %v4536
    %4538 = vrot.lane.b32.xlu0 %v3558, 40
    %v4539 = vpop.permute.xlu0 %4538
    %4540 = vrot.lane.b32.xlu0 %v3563, 40
    %v4541 = vpop.permute.xlu0 %4540
    %v4544 = vsel %vm474, %v4535, 0
    %v4547 = vsel %vm474, %v4537, 0
    %v4549 = vsel %vm509, %v4541, 0
    %4551 = vmatprep.subr.mxu0 0.0
    %4552 = vmatpush1.msra.mxu0 0.0
    %4553 = vmatprep.subr.mxu0 0.0
    %4554 = vmatpush1.msra.mxu0 0.0
    %4555 = vmatprep.subr.mxu0 0.0
    %4556 = vmatpush1.msra.mxu0 0.0
    %4557 = vmatprep.subr.mxu0 0.0
    %4558 = vmatpush1.msra.mxu0 0.0
    %4559 = vmatprep.subr.mxu0 0.0
    %4560 = vmatpush1.msra.mxu0 0.0
    %4561 = vmatprep.subr.mxu0 0.0
    %4562 = vmatpush1.msra.mxu0 0.0
    %4563 = vmatprep.subr.mxu0 0.0
    %4564 = vmatpush1.msra.mxu0 0.0
    %4565 = vmatprep.subr.mxu0 0.0
    %4566 = vmatpush1.msra.mxu0 0.0
    %4567 = vmatprep.subr.mxu0 0.0
    %4568 = vmatpush1.msra.mxu0 0.0
    %4569 = vmatprep.subr.mxu0 0.0
    %4570 = vmatpush1.msra.mxu0 0.0
    %4571 = vmatprep.subr.mxu0 0.0
    %4572 = vmatpush1.msra.mxu0 0.0
    %4573 = vmatprep.subr.mxu0 0.0
    %4574 = vmatpush1.msra.mxu0 0.0
    %4575 = vmatprep.subr.mxu0 0.0
    %4576 = vmatpush1.msra.mxu0 0.0
    %4577 = vmatprep.subr.mxu0 0.0
    %4578 = vmatpush1.msra.mxu0 0.0
    %4579 = vmatprep.subr.mxu0 0.0
    %4580 = vmatpush1.msra.mxu0 %v4549
    %4581 = vmatprep.subr.mxu0 0.0
    %4582 = vmatpush1.msra.mxu0 %v4539
    %4583 = vmatprep.subr.mxu0 0.0
    %4584 = vmatpush2.msra.mxu0 0.0
    %4585 = vmatprep.subr.mxu0 0.0
    %4586 = vmatpush2.msra.mxu0 0.0
    %4587 = vmatprep.subr.mxu0 0.0
    %4588 = vmatpush2.msra.mxu0 0.0
    %4589 = vmatprep.subr.mxu0 0.0
    %4590 = vmatpush2.msra.mxu0 0.0
    %4591 = vmatprep.subr.mxu0 0.0
    %4592 = vmatpush2.msra.mxu0 0.0
    %4593 = vmatprep.subr.mxu0 0.0
    %4594 = vmatpush2.msra.mxu0 0.0
    %4595 = vmatprep.subr.mxu0 0.0
    %4596 = vmatpush2.msra.mxu0 0.0
    %4597 = vmatprep.subr.mxu0 0.0
    %4598 = vmatpush2.msra.mxu0 0.0
    %4599 = vmatprep.subr.mxu0 0.0
    %4600 = vmatpush2.msra.mxu0 0.0
    %4601 = vmatprep.subr.mxu0 0.0
    %4602 = vmatpush2.msra.mxu0 0.0
    %4603 = vmatprep.subr.mxu0 0.0
    %4604 = vmatpush2.msra.mxu0 0.0
    %4605 = vmatprep.subr.mxu0 0.0
    %4606 = vmatpush2.msra.mxu0 0.0
    %4607 = vmatprep.subr.mxu0 0.0
    %4608 = vmatpush2.msra.mxu0 0.0
    %4609 = vmatprep.subr.mxu0 0.0
    %4610 = vmatpush2.msra.mxu0 0.0
    %4611 = vmatprep.subr.mxu0 0.0
    %4612 = vmatpush2.msra.mxu0 0.0
    %4613 = vmatprep.subr.mxu0 0.0
    %4614 = vmatpush2.msra.mxu0 0.0
    %4615 = vmatprep.mubr.f32.mxu0 0.0
    %4616 = vmatmul.mubr.f32.gmra.mxu0 %v4544
    %v4617 = vpop.f32.mrf.mxu0
    %v4618 = vadd.f32 0.0, %v4617
    %v4619 = vpop.f32.mrf.mxu0
    %4620 = vmatprep.mubr.f32.mxu0 0.0
    %4621 = vmatmul.mubr.f32.gmra.mxu0 %v4547
    %v4622 = vpop.f32.mrf.mxu0
    %v4623 = vadd.f32 0.0, %v4622
    %v4624 = vpop.f32.mrf.mxu0
    %4625 = vdwg.mxu0
    %v4626 = vld [vmem:[#allocation7 + $0x1b8] sm:$0xff]
    %v4628 = vsel %vm388, %v4618, 0
    %v4631 = vsel %vm388, %v4623, 0
    %4633 = vmatprep.subr.mxu0 0.0
    %4634 = vmatpush1.msra.mxu0 0.0
    %4635 = vmatprep.subr.mxu0 0.0
    %4636 = vmatpush1.msra.mxu0 0.0
    %4637 = vmatprep.subr.mxu0 0.0
    %4638 = vmatpush1.msra.mxu0 0.0
    %4639 = vmatprep.subr.mxu0 0.0
    %4640 = vmatpush1.msra.mxu0 0.0
    %4641 = vmatprep.subr.mxu0 0.0
    %4642 = vmatpush1.msra.mxu0 0.0
    %4643 = vmatprep.subr.mxu0 0.0
    %4644 = vmatpush1.msra.mxu0 0.0
    %4645 = vmatprep.subr.mxu0 0.0
    %4646 = vmatpush1.msra.mxu0 0.0
    %4647 = vmatprep.subr.mxu0 0.0
    %4648 = vmatpush1.msra.mxu0 0.0
    %4649 = vmatprep.subr.mxu0 0.0
    %4650 = vmatpush1.msra.mxu0 0.0
    %4651 = vmatprep.subr.mxu0 0.0
    %4652 = vmatpush1.msra.mxu0 0.0
    %4653 = vmatprep.subr.mxu0 0.0
    %4654 = vmatpush1.msra.mxu0 0.0
    %4655 = vmatprep.subr.mxu0 0.0
    %4656 = vmatpush1.msra.mxu0 0.0
    %4657 = vmatprep.subr.mxu0 0.0
    %4658 = vmatpush1.msra.mxu0 0.0
    %4659 = vmatprep.subr.mxu0 0.0
    %4660 = vmatpush1.msra.mxu0 0.0
    %4661 = vmatprep.subr.mxu0 0.0
    %4662 = vmatpush1.msra.mxu0 0.0
    %4663 = vmatprep.subr.mxu0 0.0
    %4664 = vmatpush1.msra.mxu0 %v4626
    %4665 = vmatprep.subr.mxu0 0.0
    %4666 = vmatpush2.msra.mxu0 0.0
    %4667 = vmatprep.subr.mxu0 0.0
    %4668 = vmatpush2.msra.mxu0 0.0
    %4669 = vmatprep.subr.mxu0 0.0
    %4670 = vmatpush2.msra.mxu0 0.0
    %4671 = vmatprep.subr.mxu0 0.0
    %4672 = vmatpush2.msra.mxu0 0.0
    %4673 = vmatprep.subr.mxu0 0.0
    %4674 = vmatpush2.msra.mxu0 0.0
    %4675 = vmatprep.subr.mxu0 0.0
    %4676 = vmatpush2.msra.mxu0 0.0
    %4677 = vmatprep.subr.mxu0 0.0
    %4678 = vmatpush2.msra.mxu0 0.0
    %4679 = vmatprep.subr.mxu0 0.0
    %4680 = vmatpush2.msra.mxu0 0.0
    %4681 = vmatprep.subr.mxu0 0.0
    %4682 = vmatpush2.msra.mxu0 0.0
    %4683 = vmatprep.subr.mxu0 0.0
    %4684 = vmatpush2.msra.mxu0 0.0
    %4685 = vmatprep.subr.mxu0 0.0
    %4686 = vmatpush2.msra.mxu0 0.0
    %4687 = vmatprep.subr.mxu0 0.0
    %4688 = vmatpush2.msra.mxu0 0.0
    %4689 = vmatprep.subr.mxu0 0.0
    %4690 = vmatpush2.msra.mxu0 0.0
    %4691 = vmatprep.subr.mxu0 0.0
    %4692 = vmatpush2.msra.mxu0 0.0
    %4693 = vmatprep.subr.mxu0 0.0
    %4694 = vmatpush2.msra.mxu0 0.0
    %4695 = vmatprep.subr.mxu0 0.0
    %4696 = vmatpush2.msra.mxu0 0.0
    %4697 = vmatprep.mubr.f32.mxu0 0.0
    %4698 = vmatmul.mubr.f32.gmra.mxu0 %v4628
    %v4699 = vpop.f32.mrf.mxu0
    %v4700 = vadd.f32 0.0, %v4699
    %v4701 = vpop.f32.mrf.mxu0
    %4702 = vmatprep.mubr.f32.mxu0 0.0
    %4703 = vmatmul.mubr.f32.gmra.mxu0 %v4631
    %v4704 = vpop.f32.mrf.mxu0
    %v4705 = vadd.f32 0.0, %v4704
    %v4706 = vpop.f32.mrf.mxu0
    %4707 = vdwg.mxu0
    %v4708 = vadd.f32 %v4423, %v4700
    %v4709 = vadd.f32 %v4424, %v4705
    %v4711 = vrot.slane %v3572, 4
    %v4712 = vrot.slane %v3573, 4
    %v4713 = vsel %vm509, %v4711, %v4712
    %v4715 = vrot.slane %v3563, 4
    %v4716 = vrot.slane %v3568, 4
    %v4717 = vsel %vm509, %v4715, %v4716
    %4718 = vrot.lane.b32.xlu0 %v4717, 96
    %v4719 = vpop.permute.xlu0 %4718
    %4720 = vrot.lane.b32.xlu0 %v4716, 96
    %v4721 = vpop.permute.xlu0 %4720
    %v4722 = vsel %vm388, %v4713, 0
    %v4724 = vsel %vm388, %v4712, 0
    %v4726 = vsel %vm388, %v4719, 0
    %v4728 = vsel %vm388, %v4721, 0
    %4730 = vmatprep.subr.mxu0 0.0
    %4731 = vmatpush1.xpose.msra.mxu0 0.0
    %4732 = vmatprep.subr.mxu0 0.0
    %4733 = vmatpush1.xpose.msra.mxu0 0.0
    %4734 = vmatprep.subr.mxu0 0.0
    %4735 = vmatpush1.xpose.msra.mxu0 0.0
    %4736 = vmatprep.subr.mxu0 0.0
    %4737 = vmatpush1.xpose.msra.mxu0 0.0
    %4738 = vmatprep.subr.mxu0 0.0
    %4739 = vmatpush1.xpose.msra.mxu0 0.0
    %4740 = vmatprep.subr.mxu0 0.0
    %4741 = vmatpush1.xpose.msra.mxu0 0.0
    %4742 = vmatprep.subr.mxu0 0.0
    %4743 = vmatpush1.xpose.msra.mxu0 0.0
    %4744 = vmatprep.subr.mxu0 0.0
    %4745 = vmatpush1.xpose.msra.mxu0 0.0
    %4746 = vmatprep.subr.mxu0 0.0
    %4747 = vmatpush1.xpose.msra.mxu0 0.0
    %4748 = vmatprep.subr.mxu0 0.0
    %4749 = vmatpush1.xpose.msra.mxu0 0.0
    %4750 = vmatprep.subr.mxu0 0.0
    %4751 = vmatpush1.xpose.msra.mxu0 0.0
    %4752 = vmatprep.subr.mxu0 0.0
    %4753 = vmatpush1.xpose.msra.mxu0 0.0
    %4754 = vmatprep.subr.mxu0 0.0
    %4755 = vmatpush1.xpose.msra.mxu0 0.0
    %4756 = vmatprep.subr.mxu0 0.0
    %4757 = vmatpush1.xpose.msra.mxu0 0.0
    %4758 = vmatprep.subr.mxu0 0.0
    %4759 = vmatpush1.xpose.msra.mxu0 %v4728
    %4760 = vmatprep.subr.mxu0 0.0
    %4761 = vmatpush1.xpose.msra.mxu0 %v4726
    %4762 = vmatprep.subr.mxu0 0.0
    %4763 = vmatpush2.xpose.msra.mxu0 0.0
    %4764 = vmatprep.subr.mxu0 0.0
    %4765 = vmatpush2.xpose.msra.mxu0 0.0
    %4766 = vmatprep.subr.mxu0 0.0
    %4767 = vmatpush2.xpose.msra.mxu0 0.0
    %4768 = vmatprep.subr.mxu0 0.0
    %4769 = vmatpush2.xpose.msra.mxu0 0.0
    %4770 = vmatprep.subr.mxu0 0.0
    %4771 = vmatpush2.xpose.msra.mxu0 0.0
    %4772 = vmatprep.subr.mxu0 0.0
    %4773 = vmatpush2.xpose.msra.mxu0 0.0
    %4774 = vmatprep.subr.mxu0 0.0
    %4775 = vmatpush2.xpose.msra.mxu0 0.0
    %4776 = vmatprep.subr.mxu0 0.0
    %4777 = vmatpush2.xpose.msra.mxu0 0.0
    %4778 = vmatprep.subr.mxu0 0.0
    %4779 = vmatpush2.xpose.msra.mxu0 0.0
    %4780 = vmatprep.subr.mxu0 0.0
    %4781 = vmatpush2.xpose.msra.mxu0 0.0
    %4782 = vmatprep.subr.mxu0 0.0
    %4783 = vmatpush2.xpose.msra.mxu0 0.0
    %4784 = vmatprep.subr.mxu0 0.0
    %4785 = vmatpush2.xpose.msra.mxu0 0.0
    %4786 = vmatprep.subr.mxu0 0.0
    %4787 = vmatpush2.xpose.msra.mxu0 0.0
    %4788 = vmatprep.subr.mxu0 0.0
    %4789 = vmatpush2.xpose.msra.mxu0 0.0
    %4790 = vmatprep.subr.mxu0 0.0
    %4791 = vmatpush2.xpose.msra.mxu0 0.0
    %4792 = vmatprep.subr.mxu0 0.0
    %4793 = vmatpush2.xpose.msra.mxu0 0.0
    %4794 = vmatprep.mubr.f32.mxu0 0.0
    %4795 = vmatmul.mubr.f32.gmra.mxu0 %v4722
    %v4796 = vpop.f32.mrf.mxu0
    %v4797 = vadd.f32 %v1526, %v4796
    %v4798 = vpop.f32.mrf.mxu0
    %4799 = vmatprep.mubr.f32.mxu0 0.0
    %4800 = vmatmul.mubr.f32.gmra.mxu0 %v4724
    %v4801 = vpop.f32.mrf.mxu0
    %v4802 = vadd.f32 %v1526, %v4801
    %v4803 = vpop.f32.mrf.mxu0
    %4804 = vdwg.mxu0
    %v4805 = vsel %vm474, %v4797, -inf
    %4806 = vmax.xlane.f32.xlu0 %v4805
    %v4807 = vpop.xlane.xlu0 %4806
    %v4808 = vsel %vm478, %v4802, -inf
    %4809 = vmax.xlane.f32.xlu0 %v4808
    %v4810 = vpop.xlane.xlu0 %4809
    %v4811 = vsub.f32 %v4797, %v4807
    %v4812 = vsub.f32 %v4802, %v4810
    %v4813 = vmul.f32 %v4811, 1.442695
    %v4814 = vpow.pop %v4813
    %v4815 = vmul.f32 %v4812, 1.442695
    %v4816 = vpow.pop %v4815
    %v4817 = vsel %vm474, %v4814, 0.0
    %4818 = vadd.xlane.f32.xlu0 %v4817
    %v4819 = vpop.xlane.xlu0 %4818
    %v4820 = vsel %vm478, %v4816, 0.0
    %4821 = vadd.xlane.f32.xlu0 %v4820
    %v4822 = vpop.xlane.xlu0 %4821
    %v4823 = vrcp.pop %v4819
    %v4824 = vmul.f32 %v4814, %v4823
    %v4825 = vrcp.pop %v4822
    %v4826 = vmul.f32 %v4816, %v4825
    %4827 = vrot.lane.b32.xlu0 %v4717, 64
    %v4828 = vpop.permute.xlu0 %4827
    %4829 = vrot.lane.b32.xlu0 %v4716, 64
    %v4830 = vpop.permute.xlu0 %4829
    %v4833 = vsel %vm474, %v4824, 0
    %v4836 = vsel %vm474, %v4826, 0
    %v4838 = vsel %vm509, %v4830, 0
    %4840 = vmatprep.subr.mxu0 0.0
    %4841 = vmatpush1.msra.mxu0 0.0
    %4842 = vmatprep.subr.mxu0 0.0
    %4843 = vmatpush1.msra.mxu0 0.0
    %4844 = vmatprep.subr.mxu0 0.0
    %4845 = vmatpush1.msra.mxu0 0.0
    %4846 = vmatprep.subr.mxu0 0.0
    %4847 = vmatpush1.msra.mxu0 0.0
    %4848 = vmatprep.subr.mxu0 0.0
    %4849 = vmatpush1.msra.mxu0 0.0
    %4850 = vmatprep.subr.mxu0 0.0
    %4851 = vmatpush1.msra.mxu0 0.0
    %4852 = vmatprep.subr.mxu0 0.0
    %4853 = vmatpush1.msra.mxu0 0.0
    %4854 = vmatprep.subr.mxu0 0.0
    %4855 = vmatpush1.msra.mxu0 0.0
    %4856 = vmatprep.subr.mxu0 0.0
    %4857 = vmatpush1.msra.mxu0 0.0
    %4858 = vmatprep.subr.mxu0 0.0
    %4859 = vmatpush1.msra.mxu0 0.0
    %4860 = vmatprep.subr.mxu0 0.0
    %4861 = vmatpush1.msra.mxu0 0.0
    %4862 = vmatprep.subr.mxu0 0.0
    %4863 = vmatpush1.msra.mxu0 0.0
    %4864 = vmatprep.subr.mxu0 0.0
    %4865 = vmatpush1.msra.mxu0 0.0
    %4866 = vmatprep.subr.mxu0 0.0
    %4867 = vmatpush1.msra.mxu0 0.0
    %4868 = vmatprep.subr.mxu0 0.0
    %4869 = vmatpush1.msra.mxu0 %v4838
    %4870 = vmatprep.subr.mxu0 0.0
    %4871 = vmatpush1.msra.mxu0 %v4828
    %4872 = vmatprep.subr.mxu0 0.0
    %4873 = vmatpush2.msra.mxu0 0.0
    %4874 = vmatprep.subr.mxu0 0.0
    %4875 = vmatpush2.msra.mxu0 0.0
    %4876 = vmatprep.subr.mxu0 0.0
    %4877 = vmatpush2.msra.mxu0 0.0
    %4878 = vmatprep.subr.mxu0 0.0
    %4879 = vmatpush2.msra.mxu0 0.0
    %4880 = vmatprep.subr.mxu0 0.0
    %4881 = vmatpush2.msra.mxu0 0.0
    %4882 = vmatprep.subr.mxu0 0.0
    %4883 = vmatpush2.msra.mxu0 0.0
    %4884 = vmatprep.subr.mxu0 0.0
    %4885 = vmatpush2.msra.mxu0 0.0
    %4886 = vmatprep.subr.mxu0 0.0
    %4887 = vmatpush2.msra.mxu0 0.0
    %4888 = vmatprep.subr.mxu0 0.0
    %4889 = vmatpush2.msra.mxu0 0.0
    %4890 = vmatprep.subr.mxu0 0.0
    %4891 = vmatpush2.msra.mxu0 0.0
    %4892 = vmatprep.subr.mxu0 0.0
    %4893 = vmatpush2.msra.mxu0 0.0
    %4894 = vmatprep.subr.mxu0 0.0
    %4895 = vmatpush2.msra.mxu0 0.0
    %4896 = vmatprep.subr.mxu0 0.0
    %4897 = vmatpush2.msra.mxu0 0.0
    %4898 = vmatprep.subr.mxu0 0.0
    %4899 = vmatpush2.msra.mxu0 0.0
    %4900 = vmatprep.subr.mxu0 0.0
    %4901 = vmatpush2.msra.mxu0 0.0
    %4902 = vmatprep.subr.mxu0 0.0
    %4903 = vmatpush2.msra.mxu0 0.0
    %4904 = vmatprep.mubr.f32.mxu0 0.0
    %4905 = vmatmul.mubr.f32.gmra.mxu0 %v4833
    %v4906 = vpop.f32.mrf.mxu0
    %v4907 = vadd.f32 0.0, %v4906
    %v4908 = vpop.f32.mrf.mxu0
    %4909 = vmatprep.mubr.f32.mxu0 0.0
    %4910 = vmatmul.mubr.f32.gmra.mxu0 %v4836
    %v4911 = vpop.f32.mrf.mxu0
    %v4912 = vadd.f32 0.0, %v4911
    %v4913 = vpop.f32.mrf.mxu0
    %4914 = vdwg.mxu0
    %4915 = vrot.lane.b32.xlu0 %v4713, 120
    %v4916 = vpop.permute.xlu0 %4915
    %4917 = vrot.lane.b32.xlu0 %v4712, 120
    %v4918 = vpop.permute.xlu0 %4917
    %4919 = vrot.lane.b32.xlu0 %v4717, 88
    %v4920 = vpop.permute.xlu0 %4919
    %4921 = vrot.lane.b32.xlu0 %v4716, 88
    %v4922 = vpop.permute.xlu0 %4921
    %v4923 = vsel %vm388, %v4916, 0
    %v4925 = vsel %vm388, %v4918, 0
    %v4927 = vsel %vm388, %v4920, 0
    %v4929 = vsel %vm388, %v4922, 0
    %4931 = vmatprep.subr.mxu0 0.0
    %4932 = vmatpush1.xpose.msra.mxu0 0.0
    %4933 = vmatprep.subr.mxu0 0.0
    %4934 = vmatpush1.xpose.msra.mxu0 0.0
    %4935 = vmatprep.subr.mxu0 0.0
    %4936 = vmatpush1.xpose.msra.mxu0 0.0
    %4937 = vmatprep.subr.mxu0 0.0
    %4938 = vmatpush1.xpose.msra.mxu0 0.0
    %4939 = vmatprep.subr.mxu0 0.0
    %4940 = vmatpush1.xpose.msra.mxu0 0.0
    %4941 = vmatprep.subr.mxu0 0.0
    %4942 = vmatpush1.xpose.msra.mxu0 0.0
    %4943 = vmatprep.subr.mxu0 0.0
    %4944 = vmatpush1.xpose.msra.mxu0 0.0
    %4945 = vmatprep.subr.mxu0 0.0
    %4946 = vmatpush1.xpose.msra.mxu0 0.0
    %4947 = vmatprep.subr.mxu0 0.0
    %4948 = vmatpush1.xpose.msra.mxu0 0.0
    %4949 = vmatprep.subr.mxu0 0.0
    %4950 = vmatpush1.xpose.msra.mxu0 0.0
    %4951 = vmatprep.subr.mxu0 0.0
    %4952 = vmatpush1.xpose.msra.mxu0 0.0
    %4953 = vmatprep.subr.mxu0 0.0
    %4954 = vmatpush1.xpose.msra.mxu0 0.0
    %4955 = vmatprep.subr.mxu0 0.0
    %4956 = vmatpush1.xpose.msra.mxu0 0.0
    %4957 = vmatprep.subr.mxu0 0.0
    %4958 = vmatpush1.xpose.msra.mxu0 0.0
    %4959 = vmatprep.subr.mxu0 0.0
    %4960 = vmatpush1.xpose.msra.mxu0 %v4929
    %4961 = vmatprep.subr.mxu0 0.0
    %4962 = vmatpush1.xpose.msra.mxu0 %v4927
    %4963 = vmatprep.subr.mxu0 0.0
    %4964 = vmatpush2.xpose.msra.mxu0 0.0
    %4965 = vmatprep.subr.mxu0 0.0
    %4966 = vmatpush2.xpose.msra.mxu0 0.0
    %4967 = vmatprep.subr.mxu0 0.0
    %4968 = vmatpush2.xpose.msra.mxu0 0.0
    %4969 = vmatprep.subr.mxu0 0.0
    %4970 = vmatpush2.xpose.msra.mxu0 0.0
    %4971 = vmatprep.subr.mxu0 0.0
    %4972 = vmatpush2.xpose.msra.mxu0 0.0
    %4973 = vmatprep.subr.mxu0 0.0
    %4974 = vmatpush2.xpose.msra.mxu0 0.0
    %4975 = vmatprep.subr.mxu0 0.0
    %4976 = vmatpush2.xpose.msra.mxu0 0.0
    %4977 = vmatprep.subr.mxu0 0.0
    %4978 = vmatpush2.xpose.msra.mxu0 0.0
    %4979 = vmatprep.subr.mxu0 0.0
    %4980 = vmatpush2.xpose.msra.mxu0 0.0
    %4981 = vmatprep.subr.mxu0 0.0
    %4982 = vmatpush2.xpose.msra.mxu0 0.0
    %4983 = vmatprep.subr.mxu0 0.0
    %4984 = vmatpush2.xpose.msra.mxu0 0.0
    %4985 = vmatprep.subr.mxu0 0.0
    %4986 = vmatpush2.xpose.msra.mxu0 0.0
    %4987 = vmatprep.subr.mxu0 0.0
    %4988 = vmatpush2.xpose.msra.mxu0 0.0
    %4989 = vmatprep.subr.mxu0 0.0
    %4990 = vmatpush2.xpose.msra.mxu0 0.0
    %4991 = vmatprep.subr.mxu0 0.0
    %4992 = vmatpush2.xpose.msra.mxu0 0.0
    %4993 = vmatprep.subr.mxu0 0.0
    %4994 = vmatpush2.xpose.msra.mxu0 0.0
    %4995 = vmatprep.mubr.f32.mxu0 0.0
    %4996 = vmatmul.mubr.f32.gmra.mxu0 %v4923
    %v4997 = vpop.f32.mrf.mxu0
    %v4998 = vadd.f32 %v1526, %v4997
    %v4999 = vpop.f32.mrf.mxu0
    %5000 = vmatprep.mubr.f32.mxu0 0.0
    %5001 = vmatmul.mubr.f32.gmra.mxu0 %v4925
    %v5002 = vpop.f32.mrf.mxu0
    %v5003 = vadd.f32 %v1526, %v5002
    %v5004 = vpop.f32.mrf.mxu0
    %5005 = vdwg.mxu0
    %v5006 = vsel %vm474, %v4998, -inf
    %5007 = vmax.xlane.f32.xlu0 %v5006
    %v5008 = vpop.xlane.xlu0 %5007
    %v5009 = vsel %vm478, %v5003, -inf
    %5010 = vmax.xlane.f32.xlu0 %v5009
    %v5011 = vpop.xlane.xlu0 %5010
    %v5012 = vsub.f32 %v4998, %v5008
    %v5013 = vsub.f32 %v5003, %v5011
    %v5014 = vmul.f32 %v5012, 1.442695
    %v5015 = vpow.pop %v5014
    %v5016 = vmul.f32 %v5013, 1.442695
    %v5017 = vpow.pop %v5016
    %v5018 = vsel %vm474, %v5015, 0.0
    %5019 = vadd.xlane.f32.xlu0 %v5018
    %v5020 = vpop.xlane.xlu0 %5019
    %v5021 = vsel %vm478, %v5017, 0.0
    %5022 = vadd.xlane.f32.xlu0 %v5021
    %v5023 = vpop.xlane.xlu0 %5022
    %v5024 = vrcp.pop %v5020
    %v5025 = vmul.f32 %v5015, %v5024
    %v5026 = vrcp.pop %v5023
    %v5027 = vmul.f32 %v5017, %v5026
    %5028 = vrot.lane.b32.xlu0 %v4717, 56
    %v5029 = vpop.permute.xlu0 %5028
    %5030 = vrot.lane.b32.xlu0 %v4716, 56
    %v5031 = vpop.permute.xlu0 %5030
    %v5034 = vsel %vm474, %v5025, 0
    %v5037 = vsel %vm474, %v5027, 0
    %v5039 = vsel %vm509, %v5031, 0
    %5041 = vmatprep.subr.mxu0 0.0
    %5042 = vmatpush1.msra.mxu0 0.0
    %5043 = vmatprep.subr.mxu0 0.0
    %5044 = vmatpush1.msra.mxu0 0.0
    %5045 = vmatprep.subr.mxu0 0.0
    %5046 = vmatpush1.msra.mxu0 0.0
    %5047 = vmatprep.subr.mxu0 0.0
    %5048 = vmatpush1.msra.mxu0 0.0
    %5049 = vmatprep.subr.mxu0 0.0
    %5050 = vmatpush1.msra.mxu0 0.0
    %5051 = vmatprep.subr.mxu0 0.0
    %5052 = vmatpush1.msra.mxu0 0.0
    %5053 = vmatprep.subr.mxu0 0.0
    %5054 = vmatpush1.msra.mxu0 0.0
    %5055 = vmatprep.subr.mxu0 0.0
    %5056 = vmatpush1.msra.mxu0 0.0
    %5057 = vmatprep.subr.mxu0 0.0
    %5058 = vmatpush1.msra.mxu0 0.0
    %5059 = vmatprep.subr.mxu0 0.0
    %5060 = vmatpush1.msra.mxu0 0.0
    %5061 = vmatprep.subr.mxu0 0.0
    %5062 = vmatpush1.msra.mxu0 0.0
    %5063 = vmatprep.subr.mxu0 0.0
    %5064 = vmatpush1.msra.mxu0 0.0
    %5065 = vmatprep.subr.mxu0 0.0
    %5066 = vmatpush1.msra.mxu0 0.0
    %5067 = vmatprep.subr.mxu0 0.0
    %5068 = vmatpush1.msra.mxu0 0.0
    %5069 = vmatprep.subr.mxu0 0.0
    %5070 = vmatpush1.msra.mxu0 %v5039
    %5071 = vmatprep.subr.mxu0 0.0
    %5072 = vmatpush1.msra.mxu0 %v5029
    %5073 = vmatprep.subr.mxu0 0.0
    %5074 = vmatpush2.msra.mxu0 0.0
    %5075 = vmatprep.subr.mxu0 0.0
    %5076 = vmatpush2.msra.mxu0 0.0
    %5077 = vmatprep.subr.mxu0 0.0
    %5078 = vmatpush2.msra.mxu0 0.0
    %5079 = vmatprep.subr.mxu0 0.0
    %5080 = vmatpush2.msra.mxu0 0.0
    %5081 = vmatprep.subr.mxu0 0.0
    %5082 = vmatpush2.msra.mxu0 0.0
    %5083 = vmatprep.subr.mxu0 0.0
    %5084 = vmatpush2.msra.mxu0 0.0
    %5085 = vmatprep.subr.mxu0 0.0
    %5086 = vmatpush2.msra.mxu0 0.0
    %5087 = vmatprep.subr.mxu0 0.0
    %5088 = vmatpush2.msra.mxu0 0.0
    %5089 = vmatprep.subr.mxu0 0.0
    %5090 = vmatpush2.msra.mxu0 0.0
    %5091 = vmatprep.subr.mxu0 0.0
    %5092 = vmatpush2.msra.mxu0 0.0
    %5093 = vmatprep.subr.mxu0 0.0
    %5094 = vmatpush2.msra.mxu0 0.0
    %5095 = vmatprep.subr.mxu0 0.0
    %5096 = vmatpush2.msra.mxu0 0.0
    %5097 = vmatprep.subr.mxu0 0.0
    %5098 = vmatpush2.msra.mxu0 0.0
    %5099 = vmatprep.subr.mxu0 0.0
    %5100 = vmatpush2.msra.mxu0 0.0
    %5101 = vmatprep.subr.mxu0 0.0
    %5102 = vmatpush2.msra.mxu0 0.0
    %5103 = vmatprep.subr.mxu0 0.0
    %5104 = vmatpush2.msra.mxu0 0.0
    %5105 = vmatprep.mubr.f32.mxu0 0.0
    %5106 = vmatmul.mubr.f32.gmra.mxu0 %v5034
    %v5107 = vpop.f32.mrf.mxu0
    %v5108 = vadd.f32 0.0, %v5107
    %v5109 = vpop.f32.mrf.mxu0
    %5110 = vmatprep.mubr.f32.mxu0 0.0
    %5111 = vmatmul.mubr.f32.gmra.mxu0 %v5037
    %v5112 = vpop.f32.mrf.mxu0
    %v5113 = vadd.f32 0.0, %v5112
    %v5114 = vpop.f32.mrf.mxu0
    %5115 = vdwg.mxu0
    %v5117 = vsel %vm388, %v5108, 0
    %v5120 = vsel %vm388, %v5113, 0
    %5122 = vmatprep.subr.mxu0 0.0
    %5123 = vmatpush1.msra.mxu0 0.0
    %5124 = vmatprep.subr.mxu0 0.0
    %5125 = vmatpush1.msra.mxu0 0.0
    %5126 = vmatprep.subr.mxu0 0.0
    %5127 = vmatpush1.msra.mxu0 0.0
    %5128 = vmatprep.subr.mxu0 0.0
    %5129 = vmatpush1.msra.mxu0 0.0
    %5130 = vmatprep.subr.mxu0 0.0
    %5131 = vmatpush1.msra.mxu0 0.0
    %5132 = vmatprep.subr.mxu0 0.0
    %5133 = vmatpush1.msra.mxu0 0.0
    %5134 = vmatprep.subr.mxu0 0.0
    %5135 = vmatpush1.msra.mxu0 0.0
    %5136 = vmatprep.subr.mxu0 0.0
    %5137 = vmatpush1.msra.mxu0 0.0
    %5138 = vmatprep.subr.mxu0 0.0
    %5139 = vmatpush1.msra.mxu0 0.0
    %5140 = vmatprep.subr.mxu0 0.0
    %5141 = vmatpush1.msra.mxu0 0.0
    %5142 = vmatprep.subr.mxu0 0.0
    %5143 = vmatpush1.msra.mxu0 0.0
    %5144 = vmatprep.subr.mxu0 0.0
    %5145 = vmatpush1.msra.mxu0 0.0
    %5146 = vmatprep.subr.mxu0 0.0
    %5147 = vmatpush1.msra.mxu0 0.0
    %5148 = vmatprep.subr.mxu0 0.0
    %5149 = vmatpush1.msra.mxu0 0.0
    %5150 = vmatprep.subr.mxu0 0.0
    %5151 = vmatpush1.msra.mxu0 0.0
    %5152 = vmatprep.subr.mxu0 0.0
    %5153 = vmatpush1.msra.mxu0 %v3977
    %5154 = vmatprep.subr.mxu0 0.0
    %5155 = vmatpush2.msra.mxu0 0.0
    %5156 = vmatprep.subr.mxu0 0.0
    %5157 = vmatpush2.msra.mxu0 0.0
    %5158 = vmatprep.subr.mxu0 0.0
    %5159 = vmatpush2.msra.mxu0 0.0
    %5160 = vmatprep.subr.mxu0 0.0
    %5161 = vmatpush2.msra.mxu0 0.0
    %5162 = vmatprep.subr.mxu0 0.0
    %5163 = vmatpush2.msra.mxu0 0.0
    %5164 = vmatprep.subr.mxu0 0.0
    %5165 = vmatpush2.msra.mxu0 0.0
    %5166 = vmatprep.subr.mxu0 0.0
    %5167 = vmatpush2.msra.mxu0 0.0
    %5168 = vmatprep.subr.mxu0 0.0
    %5169 = vmatpush2.msra.mxu0 0.0
    %5170 = vmatprep.subr.mxu0 0.0
    %5171 = vmatpush2.msra.mxu0 0.0
    %5172 = vmatprep.subr.mxu0 0.0
    %5173 = vmatpush2.msra.mxu0 0.0
    %5174 = vmatprep.subr.mxu0 0.0
    %5175 = vmatpush2.msra.mxu0 0.0
    %5176 = vmatprep.subr.mxu0 0.0
    %5177 = vmatpush2.msra.mxu0 0.0
    %5178 = vmatprep.subr.mxu0 0.0
    %5179 = vmatpush2.msra.mxu0 0.0
    %5180 = vmatprep.subr.mxu0 0.0
    %5181 = vmatpush2.msra.mxu0 0.0
    %5182 = vmatprep.subr.mxu0 0.0
    %5183 = vmatpush2.msra.mxu0 0.0
    %5184 = vmatprep.subr.mxu0 0.0
    %5185 = vmatpush2.msra.mxu0 0.0
    %5186 = vmatprep.mubr.f32.mxu0 0.0
    %5187 = vmatmul.mubr.f32.gmra.mxu0 %v5117
    %v5188 = vpop.f32.mrf.mxu0
    %v5189 = vadd.f32 0.0, %v5188
    %v5190 = vpop.f32.mrf.mxu0
    %5191 = vmatprep.mubr.f32.mxu0 0.0
    %5192 = vmatmul.mubr.f32.gmra.mxu0 %v5120
    %v5193 = vpop.f32.mrf.mxu0
    %v5194 = vadd.f32 0.0, %v5193
    %v5195 = vpop.f32.mrf.mxu0
    %5196 = vdwg.mxu0
    %v5198 = vsel %vm388, %v4907, 0
    %v5201 = vsel %vm388, %v4912, 0
    %5203 = vmatprep.subr.mxu0 0.0
    %5204 = vmatpush1.msra.mxu0 0.0
    %5205 = vmatprep.subr.mxu0 0.0
    %5206 = vmatpush1.msra.mxu0 0.0
    %5207 = vmatprep.subr.mxu0 0.0
    %5208 = vmatpush1.msra.mxu0 0.0
    %5209 = vmatprep.subr.mxu0 0.0
    %5210 = vmatpush1.msra.mxu0 0.0
    %5211 = vmatprep.subr.mxu0 0.0
    %5212 = vmatpush1.msra.mxu0 0.0
    %5213 = vmatprep.subr.mxu0 0.0
    %5214 = vmatpush1.msra.mxu0 0.0
    %5215 = vmatprep.subr.mxu0 0.0
    %5216 = vmatpush1.msra.mxu0 0.0
    %5217 = vmatprep.subr.mxu0 0.0
    %5218 = vmatpush1.msra.mxu0 0.0
    %5219 = vmatprep.subr.mxu0 0.0
    %5220 = vmatpush1.msra.mxu0 0.0
    %5221 = vmatprep.subr.mxu0 0.0
    %5222 = vmatpush1.msra.mxu0 0.0
    %5223 = vmatprep.subr.mxu0 0.0
    %5224 = vmatpush1.msra.mxu0 0.0
    %5225 = vmatprep.subr.mxu0 0.0
    %5226 = vmatpush1.msra.mxu0 0.0
    %5227 = vmatprep.subr.mxu0 0.0
    %5228 = vmatpush1.msra.mxu0 0.0
    %5229 = vmatprep.subr.mxu0 0.0
    %5230 = vmatpush1.msra.mxu0 0.0
    %5231 = vmatprep.subr.mxu0 0.0
    %5232 = vmatpush1.msra.mxu0 0.0
    %5233 = vmatprep.subr.mxu0 0.0
    %5234 = vmatpush1.msra.mxu0 %v3775
    %5235 = vmatprep.subr.mxu0 0.0
    %5236 = vmatpush2.msra.mxu0 0.0
    %5237 = vmatprep.subr.mxu0 0.0
    %5238 = vmatpush2.msra.mxu0 0.0
    %5239 = vmatprep.subr.mxu0 0.0
    %5240 = vmatpush2.msra.mxu0 0.0
    %5241 = vmatprep.subr.mxu0 0.0
    %5242 = vmatpush2.msra.mxu0 0.0
    %5243 = vmatprep.subr.mxu0 0.0
    %5244 = vmatpush2.msra.mxu0 0.0
    %5245 = vmatprep.subr.mxu0 0.0
    %5246 = vmatpush2.msra.mxu0 0.0
    %5247 = vmatprep.subr.mxu0 0.0
    %5248 = vmatpush2.msra.mxu0 0.0
    %5249 = vmatprep.subr.mxu0 0.0
    %5250 = vmatpush2.msra.mxu0 0.0
    %5251 = vmatprep.subr.mxu0 0.0
    %5252 = vmatpush2.msra.mxu0 0.0
    %5253 = vmatprep.subr.mxu0 0.0
    %5254 = vmatpush2.msra.mxu0 0.0
    %5255 = vmatprep.subr.mxu0 0.0
    %5256 = vmatpush2.msra.mxu0 0.0
    %5257 = vmatprep.subr.mxu0 0.0
    %5258 = vmatpush2.msra.mxu0 0.0
    %5259 = vmatprep.subr.mxu0 0.0
    %5260 = vmatpush2.msra.mxu0 0.0
    %5261 = vmatprep.subr.mxu0 0.0
    %5262 = vmatpush2.msra.mxu0 0.0
    %5263 = vmatprep.subr.mxu0 0.0
    %5264 = vmatpush2.msra.mxu0 0.0
    %5265 = vmatprep.subr.mxu0 0.0
    %5266 = vmatpush2.msra.mxu0 0.0
    %5267 = vmatprep.mubr.f32.mxu0 0.0
    %5268 = vmatmul.mubr.f32.gmra.mxu0 %v5198
    %v5269 = vpop.f32.mrf.mxu0
    %v5270 = vadd.f32 %v5189, %v5269
    %v5271 = vpop.f32.mrf.mxu0
    %5272 = vmatprep.mubr.f32.mxu0 0.0
    %5273 = vmatmul.mubr.f32.gmra.mxu0 %v5201
    %v5274 = vpop.f32.mrf.mxu0
    %v5275 = vadd.f32 %v5194, %v5274
    %v5276 = vpop.f32.mrf.mxu0
    %5277 = vdwg.mxu0
    %5278 = vrot.lane.b32.xlu0 %v4713, 112
    %v5279 = vpop.permute.xlu0 %5278
    %5280 = vrot.lane.b32.xlu0 %v4712, 112
    %v5281 = vpop.permute.xlu0 %5280
    %5282 = vrot.lane.b32.xlu0 %v4717, 80
    %v5283 = vpop.permute.xlu0 %5282
    %5284 = vrot.lane.b32.xlu0 %v4716, 80
    %v5285 = vpop.permute.xlu0 %5284
    %v5286 = vsel %vm388, %v5279, 0
    %v5288 = vsel %vm388, %v5281, 0
    %v5290 = vsel %vm388, %v5283, 0
    %v5292 = vsel %vm388, %v5285, 0
    %5294 = vmatprep.subr.mxu0 0.0
    %5295 = vmatpush1.xpose.msra.mxu0 0.0
    %5296 = vmatprep.subr.mxu0 0.0
    %5297 = vmatpush1.xpose.msra.mxu0 0.0
    %5298 = vmatprep.subr.mxu0 0.0
    %5299 = vmatpush1.xpose.msra.mxu0 0.0
    %5300 = vmatprep.subr.mxu0 0.0
    %5301 = vmatpush1.xpose.msra.mxu0 0.0
    %5302 = vmatprep.subr.mxu0 0.0
    %5303 = vmatpush1.xpose.msra.mxu0 0.0
    %5304 = vmatprep.subr.mxu0 0.0
    %5305 = vmatpush1.xpose.msra.mxu0 0.0
    %5306 = vmatprep.subr.mxu0 0.0
    %5307 = vmatpush1.xpose.msra.mxu0 0.0
    %5308 = vmatprep.subr.mxu0 0.0
    %5309 = vmatpush1.xpose.msra.mxu0 0.0
    %5310 = vmatprep.subr.mxu0 0.0
    %5311 = vmatpush1.xpose.msra.mxu0 0.0
    %5312 = vmatprep.subr.mxu0 0.0
    %5313 = vmatpush1.xpose.msra.mxu0 0.0
    %5314 = vmatprep.subr.mxu0 0.0
    %5315 = vmatpush1.xpose.msra.mxu0 0.0
    %5316 = vmatprep.subr.mxu0 0.0
    %5317 = vmatpush1.xpose.msra.mxu0 0.0
    %5318 = vmatprep.subr.mxu0 0.0
    %5319 = vmatpush1.xpose.msra.mxu0 0.0
    %5320 = vmatprep.subr.mxu0 0.0
    %5321 = vmatpush1.xpose.msra.mxu0 0.0
    %5322 = vmatprep.subr.mxu0 0.0
    %5323 = vmatpush1.xpose.msra.mxu0 %v5292
    %5324 = vmatprep.subr.mxu0 0.0
    %5325 = vmatpush1.xpose.msra.mxu0 %v5290
    %5326 = vmatprep.subr.mxu0 0.0
    %5327 = vmatpush2.xpose.msra.mxu0 0.0
    %5328 = vmatprep.subr.mxu0 0.0
    %5329 = vmatpush2.xpose.msra.mxu0 0.0
    %5330 = vmatprep.subr.mxu0 0.0
    %5331 = vmatpush2.xpose.msra.mxu0 0.0
    %5332 = vmatprep.subr.mxu0 0.0
    %5333 = vmatpush2.xpose.msra.mxu0 0.0
    %5334 = vmatprep.subr.mxu0 0.0
    %5335 = vmatpush2.xpose.msra.mxu0 0.0
    %5336 = vmatprep.subr.mxu0 0.0
    %5337 = vmatpush2.xpose.msra.mxu0 0.0
    %5338 = vmatprep.subr.mxu0 0.0
    %5339 = vmatpush2.xpose.msra.mxu0 0.0
    %5340 = vmatprep.subr.mxu0 0.0
    %5341 = vmatpush2.xpose.msra.mxu0 0.0
    %5342 = vmatprep.subr.mxu0 0.0
    %5343 = vmatpush2.xpose.msra.mxu0 0.0
    %5344 = vmatprep.subr.mxu0 0.0
    %5345 = vmatpush2.xpose.msra.mxu0 0.0
    %5346 = vmatprep.subr.mxu0 0.0
    %5347 = vmatpush2.xpose.msra.mxu0 0.0
    %5348 = vmatprep.subr.mxu0 0.0
    %5349 = vmatpush2.xpose.msra.mxu0 0.0
    %5350 = vmatprep.subr.mxu0 0.0
    %5351 = vmatpush2.xpose.msra.mxu0 0.0
    %5352 = vmatprep.subr.mxu0 0.0
    %5353 = vmatpush2.xpose.msra.mxu0 0.0
    %5354 = vmatprep.subr.mxu0 0.0
    %5355 = vmatpush2.xpose.msra.mxu0 0.0
    %5356 = vmatprep.subr.mxu0 0.0
    %5357 = vmatpush2.xpose.msra.mxu0 0.0
    %5358 = vmatprep.mubr.f32.mxu0 0.0
    %5359 = vmatmul.mubr.f32.gmra.mxu0 %v5286
    %v5360 = vpop.f32.mrf.mxu0
    %v5361 = vadd.f32 %v1526, %v5360
    %v5362 = vpop.f32.mrf.mxu0
    %5363 = vmatprep.mubr.f32.mxu0 0.0
    %5364 = vmatmul.mubr.f32.gmra.mxu0 %v5288
    %v5365 = vpop.f32.mrf.mxu0
    %v5366 = vadd.f32 %v1526, %v5365
    %v5367 = vpop.f32.mrf.mxu0
    %5368 = vdwg.mxu0
    %v5369 = vsel %vm474, %v5361, -inf
    %5370 = vmax.xlane.f32.xlu0 %v5369
    %v5371 = vpop.xlane.xlu0 %5370
    %v5372 = vsel %vm478, %v5366, -inf
    %5373 = vmax.xlane.f32.xlu0 %v5372
    %v5374 = vpop.xlane.xlu0 %5373
    %v5375 = vsub.f32 %v5361, %v5371
    %v5376 = vsub.f32 %v5366, %v5374
    %v5377 = vmul.f32 %v5375, 1.442695
    %v5378 = vpow.pop %v5377
    %v5379 = vmul.f32 %v5376, 1.442695
    %v5380 = vpow.pop %v5379
    %v5381 = vsel %vm474, %v5378, 0.0
    %5382 = vadd.xlane.f32.xlu0 %v5381
    %v5383 = vpop.xlane.xlu0 %5382
    %v5384 = vsel %vm478, %v5380, 0.0
    %5385 = vadd.xlane.f32.xlu0 %v5384
    %v5386 = vpop.xlane.xlu0 %5385
    %v5387 = vrcp.pop %v5383
    %v5388 = vmul.f32 %v5378, %v5387
    %v5389 = vrcp.pop %v5386
    %v5390 = vmul.f32 %v5380, %v5389
    %5391 = vrot.lane.b32.xlu0 %v4717, 48
    %v5392 = vpop.permute.xlu0 %5391
    %5393 = vrot.lane.b32.xlu0 %v4716, 48
    %v5394 = vpop.permute.xlu0 %5393
    %v5397 = vsel %vm474, %v5388, 0
    %v5400 = vsel %vm474, %v5390, 0
    %v5402 = vsel %vm509, %v5394, 0
    %5404 = vmatprep.subr.mxu0 0.0
    %5405 = vmatpush1.msra.mxu0 0.0
    %5406 = vmatprep.subr.mxu0 0.0
    %5407 = vmatpush1.msra.mxu0 0.0
    %5408 = vmatprep.subr.mxu0 0.0
    %5409 = vmatpush1.msra.mxu0 0.0
    %5410 = vmatprep.subr.mxu0 0.0
    %5411 = vmatpush1.msra.mxu0 0.0
    %5412 = vmatprep.subr.mxu0 0.0
    %5413 = vmatpush1.msra.mxu0 0.0
    %5414 = vmatprep.subr.mxu0 0.0
    %5415 = vmatpush1.msra.mxu0 0.0
    %5416 = vmatprep.subr.mxu0 0.0
    %5417 = vmatpush1.msra.mxu0 0.0
    %5418 = vmatprep.subr.mxu0 0.0
    %5419 = vmatpush1.msra.mxu0 0.0
    %5420 = vmatprep.subr.mxu0 0.0
    %5421 = vmatpush1.msra.mxu0 0.0
    %5422 = vmatprep.subr.mxu0 0.0
    %5423 = vmatpush1.msra.mxu0 0.0
    %5424 = vmatprep.subr.mxu0 0.0
    %5425 = vmatpush1.msra.mxu0 0.0
    %5426 = vmatprep.subr.mxu0 0.0
    %5427 = vmatpush1.msra.mxu0 0.0
    %5428 = vmatprep.subr.mxu0 0.0
    %5429 = vmatpush1.msra.mxu0 0.0
    %5430 = vmatprep.subr.mxu0 0.0
    %5431 = vmatpush1.msra.mxu0 0.0
    %5432 = vmatprep.subr.mxu0 0.0
    %5433 = vmatpush1.msra.mxu0 %v5402
    %5434 = vmatprep.subr.mxu0 0.0
    %5435 = vmatpush1.msra.mxu0 %v5392
    %5436 = vmatprep.subr.mxu0 0.0
    %5437 = vmatpush2.msra.mxu0 0.0
    %5438 = vmatprep.subr.mxu0 0.0
    %5439 = vmatpush2.msra.mxu0 0.0
    %5440 = vmatprep.subr.mxu0 0.0
    %5441 = vmatpush2.msra.mxu0 0.0
    %5442 = vmatprep.subr.mxu0 0.0
    %5443 = vmatpush2.msra.mxu0 0.0
    %5444 = vmatprep.subr.mxu0 0.0
    %5445 = vmatpush2.msra.mxu0 0.0
    %5446 = vmatprep.subr.mxu0 0.0
    %5447 = vmatpush2.msra.mxu0 0.0
    %5448 = vmatprep.subr.mxu0 0.0
    %5449 = vmatpush2.msra.mxu0 0.0
    %5450 = vmatprep.subr.mxu0 0.0
    %5451 = vmatpush2.msra.mxu0 0.0
    %5452 = vmatprep.subr.mxu0 0.0
    %5453 = vmatpush2.msra.mxu0 0.0
    %5454 = vmatprep.subr.mxu0 0.0
    %5455 = vmatpush2.msra.mxu0 0.0
    %5456 = vmatprep.subr.mxu0 0.0
    %5457 = vmatpush2.msra.mxu0 0.0
    %5458 = vmatprep.subr.mxu0 0.0
    %5459 = vmatpush2.msra.mxu0 0.0
    %5460 = vmatprep.subr.mxu0 0.0
    %5461 = vmatpush2.msra.mxu0 0.0
    %5462 = vmatprep.subr.mxu0 0.0
    %5463 = vmatpush2.msra.mxu0 0.0
    %5464 = vmatprep.subr.mxu0 0.0
    %5465 = vmatpush2.msra.mxu0 0.0
    %5466 = vmatprep.subr.mxu0 0.0
    %5467 = vmatpush2.msra.mxu0 0.0
    %5468 = vmatprep.mubr.f32.mxu0 0.0
    %5469 = vmatmul.mubr.f32.gmra.mxu0 %v5397
    %v5470 = vpop.f32.mrf.mxu0
    %v5471 = vadd.f32 0.0, %v5470
    %v5472 = vpop.f32.mrf.mxu0
    %5473 = vmatprep.mubr.f32.mxu0 0.0
    %5474 = vmatmul.mubr.f32.gmra.mxu0 %v5400
    %v5475 = vpop.f32.mrf.mxu0
    %v5476 = vadd.f32 0.0, %v5475
    %v5477 = vpop.f32.mrf.mxu0
    %5478 = vdwg.mxu0
    %v5480 = vsel %vm388, %v5471, 0
    %v5483 = vsel %vm388, %v5476, 0
    %5485 = vmatprep.subr.mxu0 0.0
    %5486 = vmatpush1.msra.mxu0 0.0
    %5487 = vmatprep.subr.mxu0 0.0
    %5488 = vmatpush1.msra.mxu0 0.0
    %5489 = vmatprep.subr.mxu0 0.0
    %5490 = vmatpush1.msra.mxu0 0.0
    %5491 = vmatprep.subr.mxu0 0.0
    %5492 = vmatpush1.msra.mxu0 0.0
    %5493 = vmatprep.subr.mxu0 0.0
    %5494 = vmatpush1.msra.mxu0 0.0
    %5495 = vmatprep.subr.mxu0 0.0
    %5496 = vmatpush1.msra.mxu0 0.0
    %5497 = vmatprep.subr.mxu0 0.0
    %5498 = vmatpush1.msra.mxu0 0.0
    %5499 = vmatprep.subr.mxu0 0.0
    %5500 = vmatpush1.msra.mxu0 0.0
    %5501 = vmatprep.subr.mxu0 0.0
    %5502 = vmatpush1.msra.mxu0 0.0
    %5503 = vmatprep.subr.mxu0 0.0
    %5504 = vmatpush1.msra.mxu0 0.0
    %5505 = vmatprep.subr.mxu0 0.0
    %5506 = vmatpush1.msra.mxu0 0.0
    %5507 = vmatprep.subr.mxu0 0.0
    %5508 = vmatpush1.msra.mxu0 0.0
    %5509 = vmatprep.subr.mxu0 0.0
    %5510 = vmatpush1.msra.mxu0 0.0
    %5511 = vmatprep.subr.mxu0 0.0
    %5512 = vmatpush1.msra.mxu0 0.0
    %5513 = vmatprep.subr.mxu0 0.0
    %5514 = vmatpush1.msra.mxu0 0.0
    %5515 = vmatprep.subr.mxu0 0.0
    %5516 = vmatpush1.msra.mxu0 %v4341
    %5517 = vmatprep.subr.mxu0 0.0
    %5518 = vmatpush2.msra.mxu0 0.0
    %5519 = vmatprep.subr.mxu0 0.0
    %5520 = vmatpush2.msra.mxu0 0.0
    %5521 = vmatprep.subr.mxu0 0.0
    %5522 = vmatpush2.msra.mxu0 0.0
    %5523 = vmatprep.subr.mxu0 0.0
    %5524 = vmatpush2.msra.mxu0 0.0
    %5525 = vmatprep.subr.mxu0 0.0
    %5526 = vmatpush2.msra.mxu0 0.0
    %5527 = vmatprep.subr.mxu0 0.0
    %5528 = vmatpush2.msra.mxu0 0.0
    %5529 = vmatprep.subr.mxu0 0.0
    %5530 = vmatpush2.msra.mxu0 0.0
    %5531 = vmatprep.subr.mxu0 0.0
    %5532 = vmatpush2.msra.mxu0 0.0
    %5533 = vmatprep.subr.mxu0 0.0
    %5534 = vmatpush2.msra.mxu0 0.0
    %5535 = vmatprep.subr.mxu0 0.0
    %5536 = vmatpush2.msra.mxu0 0.0
    %5537 = vmatprep.subr.mxu0 0.0
    %5538 = vmatpush2.msra.mxu0 0.0
    %5539 = vmatprep.subr.mxu0 0.0
    %5540 = vmatpush2.msra.mxu0 0.0
    %5541 = vmatprep.subr.mxu0 0.0
    %5542 = vmatpush2.msra.mxu0 0.0
    %5543 = vmatprep.subr.mxu0 0.0
    %5544 = vmatpush2.msra.mxu0 0.0
    %5545 = vmatprep.subr.mxu0 0.0
    %5546 = vmatpush2.msra.mxu0 0.0
    %5547 = vmatprep.subr.mxu0 0.0
    %5548 = vmatpush2.msra.mxu0 0.0
    %5549 = vmatprep.mubr.f32.mxu0 0.0
    %5550 = vmatmul.mubr.f32.gmra.mxu0 %v5480
    %v5551 = vpop.f32.mrf.mxu0
    %v5552 = vadd.f32 0.0, %v5551
    %v5553 = vpop.f32.mrf.mxu0
    %5554 = vmatprep.mubr.f32.mxu0 0.0
    %5555 = vmatmul.mubr.f32.gmra.mxu0 %v5483
    %v5556 = vpop.f32.mrf.mxu0
    %v5557 = vadd.f32 0.0, %v5556
    %v5558 = vpop.f32.mrf.mxu0
    %5559 = vdwg.mxu0
    %v5560 = vadd.f32 %v5270, %v5552
    %v5561 = vadd.f32 %v5275, %v5557
    %5562 = vrot.lane.b32.xlu0 %v4713, 104
    %v5563 = vpop.permute.xlu0 %5562
    %5564 = vrot.lane.b32.xlu0 %v4712, 104
    %v5565 = vpop.permute.xlu0 %5564
    %5566 = vrot.lane.b32.xlu0 %v4717, 72
    %v5567 = vpop.permute.xlu0 %5566
    %5568 = vrot.lane.b32.xlu0 %v4716, 72
    %v5569 = vpop.permute.xlu0 %5568
    %v5570 = vsel %vm388, %v5563, 0
    %v5572 = vsel %vm388, %v5565, 0
    %v5574 = vsel %vm388, %v5567, 0
    %v5576 = vsel %vm388, %v5569, 0
    %5578 = vmatprep.subr.mxu0 0.0
    %5579 = vmatpush1.xpose.msra.mxu0 0.0
    %5580 = vmatprep.subr.mxu0 0.0
    %5581 = vmatpush1.xpose.msra.mxu0 0.0
    %5582 = vmatprep.subr.mxu0 0.0
    %5583 = vmatpush1.xpose.msra.mxu0 0.0
    %5584 = vmatprep.subr.mxu0 0.0
    %5585 = vmatpush1.xpose.msra.mxu0 0.0
    %5586 = vmatprep.subr.mxu0 0.0
    %5587 = vmatpush1.xpose.msra.mxu0 0.0
    %5588 = vmatprep.subr.mxu0 0.0
    %5589 = vmatpush1.xpose.msra.mxu0 0.0
    %5590 = vmatprep.subr.mxu0 0.0
    %5591 = vmatpush1.xpose.msra.mxu0 0.0
    %5592 = vmatprep.subr.mxu0 0.0
    %5593 = vmatpush1.xpose.msra.mxu0 0.0
    %5594 = vmatprep.subr.mxu0 0.0
    %5595 = vmatpush1.xpose.msra.mxu0 0.0
    %5596 = vmatprep.subr.mxu0 0.0
    %5597 = vmatpush1.xpose.msra.mxu0 0.0
    %5598 = vmatprep.subr.mxu0 0.0
    %5599 = vmatpush1.xpose.msra.mxu0 0.0
    %5600 = vmatprep.subr.mxu0 0.0
    %5601 = vmatpush1.xpose.msra.mxu0 0.0
    %5602 = vmatprep.subr.mxu0 0.0
    %5603 = vmatpush1.xpose.msra.mxu0 0.0
    %5604 = vmatprep.subr.mxu0 0.0
    %5605 = vmatpush1.xpose.msra.mxu0 0.0
    %5606 = vmatprep.subr.mxu0 0.0
    %5607 = vmatpush1.xpose.msra.mxu0 %v5576
    %5608 = vmatprep.subr.mxu0 0.0
    %5609 = vmatpush1.xpose.msra.mxu0 %v5574
    %5610 = vmatprep.subr.mxu0 0.0
    %5611 = vmatpush2.xpose.msra.mxu0 0.0
    %5612 = vmatprep.subr.mxu0 0.0
    %5613 = vmatpush2.xpose.msra.mxu0 0.0
    %5614 = vmatprep.subr.mxu0 0.0
    %5615 = vmatpush2.xpose.msra.mxu0 0.0
    %5616 = vmatprep.subr.mxu0 0.0
    %5617 = vmatpush2.xpose.msra.mxu0 0.0
    %5618 = vmatprep.subr.mxu0 0.0
    %5619 = vmatpush2.xpose.msra.mxu0 0.0
    %5620 = vmatprep.subr.mxu0 0.0
    %5621 = vmatpush2.xpose.msra.mxu0 0.0
    %5622 = vmatprep.subr.mxu0 0.0
    %5623 = vmatpush2.xpose.msra.mxu0 0.0
    %5624 = vmatprep.subr.mxu0 0.0
    %5625 = vmatpush2.xpose.msra.mxu0 0.0
    %5626 = vmatprep.subr.mxu0 0.0
    %5627 = vmatpush2.xpose.msra.mxu0 0.0
    %5628 = vmatprep.subr.mxu0 0.0
    %5629 = vmatpush2.xpose.msra.mxu0 0.0
    %5630 = vmatprep.subr.mxu0 0.0
    %5631 = vmatpush2.xpose.msra.mxu0 0.0
    %5632 = vmatprep.subr.mxu0 0.0
    %5633 = vmatpush2.xpose.msra.mxu0 0.0
    %5634 = vmatprep.subr.mxu0 0.0
    %5635 = vmatpush2.xpose.msra.mxu0 0.0
    %5636 = vmatprep.subr.mxu0 0.0
    %5637 = vmatpush2.xpose.msra.mxu0 0.0
    %5638 = vmatprep.subr.mxu0 0.0
    %5639 = vmatpush2.xpose.msra.mxu0 0.0
    %5640 = vmatprep.subr.mxu0 0.0
    %5641 = vmatpush2.xpose.msra.mxu0 0.0
    %5642 = vmatprep.mubr.f32.mxu0 0.0
    %5643 = vmatmul.mubr.f32.gmra.mxu0 %v5570
    %v5644 = vpop.f32.mrf.mxu0
    %v5645 = vadd.f32 %v1526, %v5644
    %v5646 = vpop.f32.mrf.mxu0
    %5647 = vmatprep.mubr.f32.mxu0 0.0
    %5648 = vmatmul.mubr.f32.gmra.mxu0 %v5572
    %v5649 = vpop.f32.mrf.mxu0
    %v5650 = vadd.f32 %v1526, %v5649
    %v5651 = vpop.f32.mrf.mxu0
    %5652 = vdwg.mxu0
    %v5653 = vsel %vm474, %v5645, -inf
    %5654 = vmax.xlane.f32.xlu0 %v5653
    %v5655 = vpop.xlane.xlu0 %5654
    %v5656 = vsel %vm478, %v5650, -inf
    %5657 = vmax.xlane.f32.xlu0 %v5656
    %v5658 = vpop.xlane.xlu0 %5657
    %v5659 = vsub.f32 %v5645, %v5655
    %v5660 = vsub.f32 %v5650, %v5658
    %v5661 = vmul.f32 %v5659, 1.442695
    %v5662 = vpow.pop %v5661
    %v5663 = vmul.f32 %v5660, 1.442695
    %v5664 = vpow.pop %v5663
    %v5665 = vsel %vm474, %v5662, 0.0
    %5666 = vadd.xlane.f32.xlu0 %v5665
    %v5667 = vpop.xlane.xlu0 %5666
    %v5668 = vsel %vm478, %v5664, 0.0
    %5669 = vadd.xlane.f32.xlu0 %v5668
    %v5670 = vpop.xlane.xlu0 %5669
    %v5671 = vrcp.pop %v5667
    %v5672 = vmul.f32 %v5662, %v5671
    %v5673 = vrcp.pop %v5670
    %v5674 = vmul.f32 %v5664, %v5673
    %5675 = vrot.lane.b32.xlu0 %v4717, 40
    %v5676 = vpop.permute.xlu0 %5675
    %5677 = vrot.lane.b32.xlu0 %v4716, 40
    %v5678 = vpop.permute.xlu0 %5677
    %v5681 = vsel %vm474, %v5672, 0
    %v5684 = vsel %vm474, %v5674, 0
    %v5686 = vsel %vm509, %v5678, 0
    %5688 = vmatprep.subr.mxu0 0.0
    %5689 = vmatpush1.msra.mxu0 0.0
    %5690 = vmatprep.subr.mxu0 0.0
    %5691 = vmatpush1.msra.mxu0 0.0
    %5692 = vmatprep.subr.mxu0 0.0
    %5693 = vmatpush1.msra.mxu0 0.0
    %5694 = vmatprep.subr.mxu0 0.0
    %5695 = vmatpush1.msra.mxu0 0.0
    %5696 = vmatprep.subr.mxu0 0.0
    %5697 = vmatpush1.msra.mxu0 0.0
    %5698 = vmatprep.subr.mxu0 0.0
    %5699 = vmatpush1.msra.mxu0 0.0
    %5700 = vmatprep.subr.mxu0 0.0
    %5701 = vmatpush1.msra.mxu0 0.0
    %5702 = vmatprep.subr.mxu0 0.0
    %5703 = vmatpush1.msra.mxu0 0.0
    %5704 = vmatprep.subr.mxu0 0.0
    %5705 = vmatpush1.msra.mxu0 0.0
    %5706 = vmatprep.subr.mxu0 0.0
    %5707 = vmatpush1.msra.mxu0 0.0
    %5708 = vmatprep.subr.mxu0 0.0
    %5709 = vmatpush1.msra.mxu0 0.0
    %5710 = vmatprep.subr.mxu0 0.0
    %5711 = vmatpush1.msra.mxu0 0.0
    %5712 = vmatprep.subr.mxu0 0.0
    %5713 = vmatpush1.msra.mxu0 0.0
    %5714 = vmatprep.subr.mxu0 0.0
    %5715 = vmatpush1.msra.mxu0 0.0
    %5716 = vmatprep.subr.mxu0 0.0
    %5717 = vmatpush1.msra.mxu0 %v5686
    %5718 = vmatprep.subr.mxu0 0.0
    %5719 = vmatpush1.msra.mxu0 %v5676
    %5720 = vmatprep.subr.mxu0 0.0
    %5721 = vmatpush2.msra.mxu0 0.0
    %5722 = vmatprep.subr.mxu0 0.0
    %5723 = vmatpush2.msra.mxu0 0.0
    %5724 = vmatprep.subr.mxu0 0.0
    %5725 = vmatpush2.msra.mxu0 0.0
    %5726 = vmatprep.subr.mxu0 0.0
    %5727 = vmatpush2.msra.mxu0 0.0
    %5728 = vmatprep.subr.mxu0 0.0
    %5729 = vmatpush2.msra.mxu0 0.0
    %5730 = vmatprep.subr.mxu0 0.0
    %5731 = vmatpush2.msra.mxu0 0.0
    %5732 = vmatprep.subr.mxu0 0.0
    %5733 = vmatpush2.msra.mxu0 0.0
    %5734 = vmatprep.subr.mxu0 0.0
    %5735 = vmatpush2.msra.mxu0 0.0
    %5736 = vmatprep.subr.mxu0 0.0
    %5737 = vmatpush2.msra.mxu0 0.0
    %5738 = vmatprep.subr.mxu0 0.0
    %5739 = vmatpush2.msra.mxu0 0.0
    %5740 = vmatprep.subr.mxu0 0.0
    %5741 = vmatpush2.msra.mxu0 0.0
    %5742 = vmatprep.subr.mxu0 0.0
    %5743 = vmatpush2.msra.mxu0 0.0
    %5744 = vmatprep.subr.mxu0 0.0
    %5745 = vmatpush2.msra.mxu0 0.0
    %5746 = vmatprep.subr.mxu0 0.0
    %5747 = vmatpush2.msra.mxu0 0.0
    %5748 = vmatprep.subr.mxu0 0.0
    %5749 = vmatpush2.msra.mxu0 0.0
    %5750 = vmatprep.subr.mxu0 0.0
    %5751 = vmatpush2.msra.mxu0 0.0
    %5752 = vmatprep.mubr.f32.mxu0 0.0
    %5753 = vmatmul.mubr.f32.gmra.mxu0 %v5681
    %v5754 = vpop.f32.mrf.mxu0
    %v5755 = vadd.f32 0.0, %v5754
    %v5756 = vpop.f32.mrf.mxu0
    %5757 = vmatprep.mubr.f32.mxu0 0.0
    %5758 = vmatmul.mubr.f32.gmra.mxu0 %v5684
    %v5759 = vpop.f32.mrf.mxu0
    %v5760 = vadd.f32 0.0, %v5759
    %v5761 = vpop.f32.mrf.mxu0
    %5762 = vdwg.mxu0
    %v5764 = vsel %vm388, %v5755, 0
    %v5767 = vsel %vm388, %v5760, 0
    %5769 = vmatprep.subr.mxu0 0.0
    %5770 = vmatpush1.msra.mxu0 0.0
    %5771 = vmatprep.subr.mxu0 0.0
    %5772 = vmatpush1.msra.mxu0 0.0
    %5773 = vmatprep.subr.mxu0 0.0
    %5774 = vmatpush1.msra.mxu0 0.0
    %5775 = vmatprep.subr.mxu0 0.0
    %5776 = vmatpush1.msra.mxu0 0.0
    %5777 = vmatprep.subr.mxu0 0.0
    %5778 = vmatpush1.msra.mxu0 0.0
    %5779 = vmatprep.subr.mxu0 0.0
    %5780 = vmatpush1.msra.mxu0 0.0
    %5781 = vmatprep.subr.mxu0 0.0
    %5782 = vmatpush1.msra.mxu0 0.0
    %5783 = vmatprep.subr.mxu0 0.0
    %5784 = vmatpush1.msra.mxu0 0.0
    %5785 = vmatprep.subr.mxu0 0.0
    %5786 = vmatpush1.msra.mxu0 0.0
    %5787 = vmatprep.subr.mxu0 0.0
    %5788 = vmatpush1.msra.mxu0 0.0
    %5789 = vmatprep.subr.mxu0 0.0
    %5790 = vmatpush1.msra.mxu0 0.0
    %5791 = vmatprep.subr.mxu0 0.0
    %5792 = vmatpush1.msra.mxu0 0.0
    %5793 = vmatprep.subr.mxu0 0.0
    %5794 = vmatpush1.msra.mxu0 0.0
    %5795 = vmatprep.subr.mxu0 0.0
    %5796 = vmatpush1.msra.mxu0 0.0
    %5797 = vmatprep.subr.mxu0 0.0
    %5798 = vmatpush1.msra.mxu0 0.0
    %5799 = vmatprep.subr.mxu0 0.0
    %5800 = vmatpush1.msra.mxu0 %v4626
    %5801 = vmatprep.subr.mxu0 0.0
    %5802 = vmatpush2.msra.mxu0 0.0
    %5803 = vmatprep.subr.mxu0 0.0
    %5804 = vmatpush2.msra.mxu0 0.0
    %5805 = vmatprep.subr.mxu0 0.0
    %5806 = vmatpush2.msra.mxu0 0.0
    %5807 = vmatprep.subr.mxu0 0.0
    %5808 = vmatpush2.msra.mxu0 0.0
    %5809 = vmatprep.subr.mxu0 0.0
    %5810 = vmatpush2.msra.mxu0 0.0
    %5811 = vmatprep.subr.mxu0 0.0
    %5812 = vmatpush2.msra.mxu0 0.0
    %5813 = vmatprep.subr.mxu0 0.0
    %5814 = vmatpush2.msra.mxu0 0.0
    %5815 = vmatprep.subr.mxu0 0.0
    %5816 = vmatpush2.msra.mxu0 0.0
    %5817 = vmatprep.subr.mxu0 0.0
    %5818 = vmatpush2.msra.mxu0 0.0
    %5819 = vmatprep.subr.mxu0 0.0
    %5820 = vmatpush2.msra.mxu0 0.0
    %5821 = vmatprep.subr.mxu0 0.0
    %5822 = vmatpush2.msra.mxu0 0.0
    %5823 = vmatprep.subr.mxu0 0.0
    %5824 = vmatpush2.msra.mxu0 0.0
    %5825 = vmatprep.subr.mxu0 0.0
    %5826 = vmatpush2.msra.mxu0 0.0
    %5827 = vmatprep.subr.mxu0 0.0
    %5828 = vmatpush2.msra.mxu0 0.0
    %5829 = vmatprep.subr.mxu0 0.0
    %5830 = vmatpush2.msra.mxu0 0.0
    %5831 = vmatprep.subr.mxu0 0.0
    %5832 = vmatpush2.msra.mxu0 0.0
    %5833 = vmatprep.mubr.f32.mxu0 0.0
    %5834 = vmatmul.mubr.f32.gmra.mxu0 %v5764
    %v5835 = vpop.f32.mrf.mxu0
    %v5836 = vadd.f32 0.0, %v5835
    %v5837 = vpop.f32.mrf.mxu0
    %5838 = vmatprep.mubr.f32.mxu0 0.0
    %5839 = vmatmul.mubr.f32.gmra.mxu0 %v5767
    %v5840 = vpop.f32.mrf.mxu0
    %v5841 = vadd.f32 0.0, %v5840
    %v5842 = vpop.f32.mrf.mxu0
    %5843 = vdwg.mxu0
    %v5844 = vadd.f32 %v5560, %v5836
    %v5845 = vadd.f32 %v5561, %v5841
    %v5848 = vrot.slane %v5844, 4
    %v5849 = vrot.slane %v5845, 4
    %v5850 = vsel %vm509, %v5848, %v5849
    %v5853 = vsel %vm509, %v4709, %v5848
    %v5854 = vadd.f32 %v3395, %v4708
    %v5855 = vadd.f32 %v3396, %v5853
    %v5856 = vadd.f32 %v3397, %v5850
    %v5857 = vsel %vm109, %v5854, 0.0
    %5858 = vadd.xlane.f32.xlu0 %v5857
    %v5859 = vpop.xlane.xlu0 %5858
    %v5860 = vsel %vm109, %v5855, 0.0
    %5861 = vadd.xlane.f32.xlu0 %v5860
    %v5862 = vpop.xlane.xlu0 %5861
    %v5863 = vsel %vm109, %v5856, 0.0
    %5864 = vadd.xlane.f32.xlu0 %v5863
    %v5865 = vpop.xlane.xlu0 %5864
    %v5866 = vmul.f32 %v5859, %v214
    %v5867 = vmul.f32 %v5862, %v214
    %v5868 = vmul.f32 %v5865, %v214
    %v5869 = vsub.f32 %v5854, %v5866
    %v5870 = vsub.f32 %v5855, %v5867
    %v5871 = vsub.f32 %v5856, %v5868
    %v5872 = vmul.f32 %v5869, %v5869
    %v5873 = vmul.f32 %v5870, %v5870
    %v5874 = vmul.f32 %v5871, %v5871
    %v5875 = vsel %vm109, %v5872, 0.0
    %5876 = vadd.xlane.f32.xlu0 %v5875
    %v5877 = vpop.xlane.xlu0 %5876
    %v5878 = vsel %vm109, %v5873, 0.0
    %5879 = vadd.xlane.f32.xlu0 %v5878
    %v5880 = vpop.xlane.xlu0 %5879
    %v5881 = vsel %vm109, %v5874, 0.0
    %5882 = vadd.xlane.f32.xlu0 %v5881
    %v5883 = vpop.xlane.xlu0 %5882
    %v5884 = vmul.f32 %v5877, %v233
    %v5885 = vmul.f32 %v5880, %v233
    %v5886 = vmul.f32 %v5883, %v233
    %v5887 = vlaneseq
    %v5888 = vshrl.u32 %v5887, 7
    %v5889 = vsub.s32 0, %v5888
    %v5890 = vrot.slane %v3400, %v5889
    %v5891 = vmul.f32 %v5890, %v5869
    %v5892 = vmul.f32 %v5890, %v5870
    %v5893 = vmul.f32 %v5890, %v5871
    %v5894 = vrsqrt.pop %v5884
    %v5895 = vmul.f32 %v5884, %v5894
    %vm5896 = vcmp.eq.f32.partialorder %v5884, inf
    %v5897 = vsel %vm5896, %v5884, %v5895
    %vm5898 = vcmp.eq.f32.partialorder %v5884, 0.0
    %v5899 = vand.u32 %v5884, 2147483648
    %v5900 = vsel %vm5898, %v5899, %v5897
    %v5901 = vrsqrt.pop %v5885
    %v5902 = vmul.f32 %v5885, %v5901
    %vm5903 = vcmp.eq.f32.partialorder %v5885, inf
    %v5904 = vsel %vm5903, %v5885, %v5902
    %vm5905 = vcmp.eq.f32.partialorder %v5885, 0.0
    %v5906 = vand.u32 %v5885, 2147483648
    %v5907 = vsel %vm5905, %v5906, %v5904
    %v5908 = vrsqrt.pop %v5886
    %v5909 = vmul.f32 %v5886, %v5908
    %vm5910 = vcmp.eq.f32.partialorder %v5886, inf
    %v5911 = vsel %vm5910, %v5886, %v5909
    %vm5912 = vcmp.eq.f32.partialorder %v5886, 0.0
    %v5913 = vand.u32 %v5886, 2147483648
    %v5914 = vsel %vm5912, %v5913, %v5911
    %v5915 = vadd.f32 %v5900, 1e-06
    %v5916 = vadd.f32 %v5907, 1e-06
    %v5917 = vadd.f32 %v5914, 1e-06
    %v5918 = vrcp.pop %v5915
    %v5919 = vmul.f32 %v5891, %v5918
    %v5920 = vrcp.pop %v5916
    %v5921 = vmul.f32 %v5892, %v5920
    %v5922 = vrcp.pop %v5917
    %v5923 = vmul.f32 %v5893, %v5922
    %v5924 = vlaneseq
    %v5925 = vshrl.u32 %v5924, 7
    %v5926 = vsub.s32 0, %v5925
    %v5927 = vrot.slane %v3401, %v5926
    %v5928 = vadd.f32 %v5919, %v5927
    %v5929 = vadd.f32 %v5921, %v5927
    %v5930 = vadd.f32 %v5923, %v5927
    %v5931 = vld [vmem:[#allocation7 + $0x1c0] sm:$0xff]
    %v5932 = vld [vmem:[#allocation7 + $0x1c8] sm:$0xff]
    %v5933 = vld [vmem:[#allocation7 + $0x1d0] sm:$0xff]
    %v5934 = vld [vmem:[#allocation7 + $0x1d8] sm:$0xff]
    %v5935 = vld [vmem:[#allocation7 + $0x1e0] sm:$0xff]
    %v5936 = vld [vmem:[#allocation7 + $0x1e8] sm:$0xff]
    %v5937 = vld [vmem:[#allocation7 + $0x1f0] sm:$0xff]
    %v5938 = vld [vmem:[#allocation7 + $0x1f8] sm:$0xff]
    %v5939 = vld [vmem:[#allocation7 + $0x200] sm:$0xff]
    %v5940 = vld [vmem:[#allocation7 + $0x208] sm:$0xff]
    %v5941 = vld [vmem:[#allocation7 + $0x210] sm:$0xff]
    %v5942 = vld [vmem:[#allocation7 + $0x218] sm:$0xff]
    %v5946 = vrot.slane %v5928, 7
    %v5947 = vrot.slane %v5929, 7
    %v5948 = vsel %vm2763, %v5946, %v5947
    %v5949 = vrot.slane %v5930, 7
    %v5950 = vsel %vm2763, %v5947, %v5949
    %v5954 = vsel %vm2763, 0.0, %v5946
    %v5955 = vmul.f32 %v5954, %v93
    %v5956 = vmul.f32 %v5948, %v94
    %v5957 = vmul.f32 %v5950, %v95
    %v5958 = vrot.slane %v5928, 1
    %v5959 = vrot.slane %v5929, 1
    %v5960 = vsel %vm2776, %v5958, %v5959
    %v5961 = vrot.slane %v5930, 1
    %v5962 = vsel %vm2776, %v5959, %v5961
    %v5966 = vsel %vm2776, %v5961, 0.0
    %v5967 = vmul.f32 %v5960, %v96
    %v5968 = vmul.f32 %v5962, %v97
    %v5969 = vmul.f32 %v5966, %v98
    %v5970 = vsel %vm109, %v5928, 0
    %v5972 = vsel %vm109, %v5929, 0
    %v5974 = vsel %vm109, %v5930, 0
    %5976 = vmatprep.subr.mxu0 0.0
    %5977 = vmatpush1.msra.mxu0 0.0
    %5978 = vmatprep.subr.mxu0 0.0
    %5979 = vmatpush1.msra.mxu0 0.0
    %5980 = vmatprep.subr.mxu0 0.0
    %5981 = vmatpush1.msra.mxu0 0.0
    %5982 = vmatprep.subr.mxu0 0.0
    %5983 = vmatpush1.msra.mxu0 0.0
    %5984 = vmatprep.subr.mxu0 0.0
    %5985 = vmatpush1.msra.mxu0 0.0
    %5986 = vmatprep.subr.mxu0 0.0
    %5987 = vmatpush1.msra.mxu0 0.0
    %5988 = vmatprep.subr.mxu0 0.0
    %5989 = vmatpush1.msra.mxu0 0.0
    %5990 = vmatprep.subr.mxu0 0.0
    %5991 = vmatpush1.msra.mxu0 0.0
    %5992 = vmatprep.subr.mxu0 0.0
    %5993 = vmatpush1.msra.mxu0 0.0
    %5994 = vmatprep.subr.mxu0 0.0
    %5995 = vmatpush1.msra.mxu0 0.0
    %5996 = vmatprep.subr.mxu0 0.0
    %5997 = vmatpush1.msra.mxu0 0.0
    %5998 = vmatprep.subr.mxu0 0.0
    %5999 = vmatpush1.msra.mxu0 0.0
    %6000 = vmatprep.subr.mxu0 0.0
    %6001 = vmatpush1.msra.mxu0 %v5938
    %6002 = vmatprep.subr.mxu0 0.0
    %6003 = vmatpush1.msra.mxu0 %v5937
    %6004 = vmatprep.subr.mxu0 0.0
    %6005 = vmatpush1.msra.mxu0 %v5936
    %6006 = vmatprep.subr.mxu0 0.0
    %6007 = vmatpush1.msra.mxu0 %v5935
    %6008 = vmatprep.subr.mxu0 0.0
    %6009 = vmatpush2.msra.mxu0 0.0
    %6010 = vmatprep.subr.mxu0 0.0
    %6011 = vmatpush2.msra.mxu0 0.0
    %6012 = vmatprep.subr.mxu0 0.0
    %6013 = vmatpush2.msra.mxu0 0.0
    %6014 = vmatprep.subr.mxu0 0.0
    %6015 = vmatpush2.msra.mxu0 0.0
    %6016 = vmatprep.subr.mxu0 0.0
    %6017 = vmatpush2.msra.mxu0 0.0
    %6018 = vmatprep.subr.mxu0 0.0
    %6019 = vmatpush2.msra.mxu0 0.0
    %6020 = vmatprep.subr.mxu0 0.0
    %6021 = vmatpush2.msra.mxu0 0.0
    %6022 = vmatprep.subr.mxu0 0.0
    %6023 = vmatpush2.msra.mxu0 0.0
    %6024 = vmatprep.subr.mxu0 0.0
    %6025 = vmatpush2.msra.mxu0 0.0
    %6026 = vmatprep.subr.mxu0 0.0
    %6027 = vmatpush2.msra.mxu0 0.0
    %6028 = vmatprep.subr.mxu0 0.0
    %6029 = vmatpush2.msra.mxu0 0.0
    %6030 = vmatprep.subr.mxu0 0.0
    %6031 = vmatpush2.msra.mxu0 0.0
    %6032 = vmatprep.subr.mxu0 0.0
    %6033 = vmatpush2.msra.mxu0 0.0
    %6034 = vmatprep.subr.mxu0 0.0
    %6035 = vmatpush2.msra.mxu0 0.0
    %6036 = vmatprep.subr.mxu0 0.0
    %6037 = vmatpush2.msra.mxu0 0.0
    %6038 = vmatprep.subr.mxu0 0.0
    %6039 = vmatpush2.msra.mxu0 0.0
    %6040 = vmatprep.mubr.f32.mxu0 0.0
    %6041 = vmatmul.mubr.f32.gmra.mxu0 %v5970
    %v6042 = vpop.f32.mrf.mxu0
    %v6043 = vadd.f32 0.0, %v6042
    %v6044 = vpop.f32.mrf.mxu0
    %6045 = vmatprep.mubr.f32.mxu0 0.0
    %6046 = vmatmul.mubr.f32.gmra.mxu0 %v5972
    %v6047 = vpop.f32.mrf.mxu0
    %v6048 = vadd.f32 0.0, %v6047
    %v6049 = vpop.f32.mrf.mxu0
    %6050 = vmatprep.mubr.f32.mxu0 0.0
    %6051 = vmatmul.mubr.f32.gmra.mxu0 %v5974
    %v6052 = vpop.f32.mrf.mxu0
    %v6053 = vadd.f32 0.0, %v6052
    %v6054 = vpop.f32.mrf.mxu0
    %6055 = vdwg.mxu0
    %v6057 = vsel %vm109, %v5955, 0
    %v6060 = vsel %vm109, %v5956, 0
    %v6063 = vsel %vm109, %v5957, 0
    %6065 = vmatprep.subr.mxu0 0.0
    %6066 = vmatpush1.msra.mxu0 0.0
    %6067 = vmatprep.subr.mxu0 0.0
    %6068 = vmatpush1.msra.mxu0 0.0
    %6069 = vmatprep.subr.mxu0 0.0
    %6070 = vmatpush1.msra.mxu0 0.0
    %6071 = vmatprep.subr.mxu0 0.0
    %6072 = vmatpush1.msra.mxu0 0.0
    %6073 = vmatprep.subr.mxu0 0.0
    %6074 = vmatpush1.msra.mxu0 0.0
    %6075 = vmatprep.subr.mxu0 0.0
    %6076 = vmatpush1.msra.mxu0 0.0
    %6077 = vmatprep.subr.mxu0 0.0
    %6078 = vmatpush1.msra.mxu0 0.0
    %6079 = vmatprep.subr.mxu0 0.0
    %6080 = vmatpush1.msra.mxu0 0.0
    %6081 = vmatprep.subr.mxu0 0.0
    %6082 = vmatpush1.msra.mxu0 0.0
    %6083 = vmatprep.subr.mxu0 0.0
    %6084 = vmatpush1.msra.mxu0 0.0
    %6085 = vmatprep.subr.mxu0 0.0
    %6086 = vmatpush1.msra.mxu0 0.0
    %6087 = vmatprep.subr.mxu0 0.0
    %6088 = vmatpush1.msra.mxu0 0.0
    %6089 = vmatprep.subr.mxu0 0.0
    %6090 = vmatpush1.msra.mxu0 %v5934
    %6091 = vmatprep.subr.mxu0 0.0
    %6092 = vmatpush1.msra.mxu0 %v5933
    %6093 = vmatprep.subr.mxu0 0.0
    %6094 = vmatpush1.msra.mxu0 %v5932
    %6095 = vmatprep.subr.mxu0 0.0
    %6096 = vmatpush1.msra.mxu0 %v5931
    %6097 = vmatprep.subr.mxu0 0.0
    %6098 = vmatpush2.msra.mxu0 0.0
    %6099 = vmatprep.subr.mxu0 0.0
    %6100 = vmatpush2.msra.mxu0 0.0
    %6101 = vmatprep.subr.mxu0 0.0
    %6102 = vmatpush2.msra.mxu0 0.0
    %6103 = vmatprep.subr.mxu0 0.0
    %6104 = vmatpush2.msra.mxu0 0.0
    %6105 = vmatprep.subr.mxu0 0.0
    %6106 = vmatpush2.msra.mxu0 0.0
    %6107 = vmatprep.subr.mxu0 0.0
    %6108 = vmatpush2.msra.mxu0 0.0
    %6109 = vmatprep.subr.mxu0 0.0
    %6110 = vmatpush2.msra.mxu0 0.0
    %6111 = vmatprep.subr.mxu0 0.0
    %6112 = vmatpush2.msra.mxu0 0.0
    %6113 = vmatprep.subr.mxu0 0.0
    %6114 = vmatpush2.msra.mxu0 0.0
    %6115 = vmatprep.subr.mxu0 0.0
    %6116 = vmatpush2.msra.mxu0 0.0
    %6117 = vmatprep.subr.mxu0 0.0
    %6118 = vmatpush2.msra.mxu0 0.0
    %6119 = vmatprep.subr.mxu0 0.0
    %6120 = vmatpush2.msra.mxu0 0.0
    %6121 = vmatprep.subr.mxu0 0.0
    %6122 = vmatpush2.msra.mxu0 0.0
    %6123 = vmatprep.subr.mxu0 0.0
    %6124 = vmatpush2.msra.mxu0 0.0
    %6125 = vmatprep.subr.mxu0 0.0
    %6126 = vmatpush2.msra.mxu0 0.0
    %6127 = vmatprep.subr.mxu0 0.0
    %6128 = vmatpush2.msra.mxu0 0.0
    %6129 = vmatprep.mubr.f32.mxu0 0.0
    %6130 = vmatmul.mubr.f32.gmra.mxu0 %v6057
    %v6131 = vpop.f32.mrf.mxu0
    %v6132 = vadd.f32 %v6043, %v6131
    %v6133 = vpop.f32.mrf.mxu0
    %6134 = vmatprep.mubr.f32.mxu0 0.0
    %6135 = vmatmul.mubr.f32.gmra.mxu0 %v6060
    %v6136 = vpop.f32.mrf.mxu0
    %v6137 = vadd.f32 %v6048, %v6136
    %v6138 = vpop.f32.mrf.mxu0
    %6139 = vmatprep.mubr.f32.mxu0 0.0
    %6140 = vmatmul.mubr.f32.gmra.mxu0 %v6063
    %v6141 = vpop.f32.mrf.mxu0
    %v6142 = vadd.f32 %v6053, %v6141
    %v6143 = vpop.f32.mrf.mxu0
    %6144 = vdwg.mxu0
    %v6146 = vsel %vm109, %v5967, 0
    %v6149 = vsel %vm109, %v5968, 0
    %v6152 = vsel %vm109, %v5969, 0
    %6154 = vmatprep.subr.mxu0 0.0
    %6155 = vmatpush1.msra.mxu0 0.0
    %6156 = vmatprep.subr.mxu0 0.0
    %6157 = vmatpush1.msra.mxu0 0.0
    %6158 = vmatprep.subr.mxu0 0.0
    %6159 = vmatpush1.msra.mxu0 0.0
    %6160 = vmatprep.subr.mxu0 0.0
    %6161 = vmatpush1.msra.mxu0 0.0
    %6162 = vmatprep.subr.mxu0 0.0
    %6163 = vmatpush1.msra.mxu0 0.0
    %6164 = vmatprep.subr.mxu0 0.0
    %6165 = vmatpush1.msra.mxu0 0.0
    %6166 = vmatprep.subr.mxu0 0.0
    %6167 = vmatpush1.msra.mxu0 0.0
    %6168 = vmatprep.subr.mxu0 0.0
    %6169 = vmatpush1.msra.mxu0 0.0
    %6170 = vmatprep.subr.mxu0 0.0
    %6171 = vmatpush1.msra.mxu0 0.0
    %6172 = vmatprep.subr.mxu0 0.0
    %6173 = vmatpush1.msra.mxu0 0.0
    %6174 = vmatprep.subr.mxu0 0.0
    %6175 = vmatpush1.msra.mxu0 0.0
    %6176 = vmatprep.subr.mxu0 0.0
    %6177 = vmatpush1.msra.mxu0 0.0
    %6178 = vmatprep.subr.mxu0 0.0
    %6179 = vmatpush1.msra.mxu0 %v5942
    %6180 = vmatprep.subr.mxu0 0.0
    %6181 = vmatpush1.msra.mxu0 %v5941
    %6182 = vmatprep.subr.mxu0 0.0
    %6183 = vmatpush1.msra.mxu0 %v5940
    %6184 = vmatprep.subr.mxu0 0.0
    %6185 = vmatpush1.msra.mxu0 %v5939
    %6186 = vmatprep.subr.mxu0 0.0
    %6187 = vmatpush2.msra.mxu0 0.0
    %6188 = vmatprep.subr.mxu0 0.0
    %6189 = vmatpush2.msra.mxu0 0.0
    %6190 = vmatprep.subr.mxu0 0.0
    %6191 = vmatpush2.msra.mxu0 0.0
    %6192 = vmatprep.subr.mxu0 0.0
    %6193 = vmatpush2.msra.mxu0 0.0
    %6194 = vmatprep.subr.mxu0 0.0
    %6195 = vmatpush2.msra.mxu0 0.0
    %6196 = vmatprep.subr.mxu0 0.0
    %6197 = vmatpush2.msra.mxu0 0.0
    %6198 = vmatprep.subr.mxu0 0.0
    %6199 = vmatpush2.msra.mxu0 0.0
    %6200 = vmatprep.subr.mxu0 0.0
    %6201 = vmatpush2.msra.mxu0 0.0
    %6202 = vmatprep.subr.mxu0 0.0
    %6203 = vmatpush2.msra.mxu0 0.0
    %6204 = vmatprep.subr.mxu0 0.0
    %6205 = vmatpush2.msra.mxu0 0.0
    %6206 = vmatprep.subr.mxu0 0.0
    %6207 = vmatpush2.msra.mxu0 0.0
    %6208 = vmatprep.subr.mxu0 0.0
    %6209 = vmatpush2.msra.mxu0 0.0
    %6210 = vmatprep.subr.mxu0 0.0
    %6211 = vmatpush2.msra.mxu0 0.0
    %6212 = vmatprep.subr.mxu0 0.0
    %6213 = vmatpush2.msra.mxu0 0.0
    %6214 = vmatprep.subr.mxu0 0.0
    %6215 = vmatpush2.msra.mxu0 0.0
    %6216 = vmatprep.subr.mxu0 0.0
    %6217 = vmatpush2.msra.mxu0 0.0
    %6218 = vmatprep.mubr.f32.mxu0 0.0
    %6219 = vmatmul.mubr.f32.gmra.mxu0 %v6146
    %v6220 = vpop.f32.mrf.mxu0
    %v6221 = vadd.f32 0.0, %v6220
    %v6222 = vpop.f32.mrf.mxu0
    %6223 = vmatprep.mubr.f32.mxu0 0.0
    %6224 = vmatmul.mubr.f32.gmra.mxu0 %v6149
    %v6225 = vpop.f32.mrf.mxu0
    %v6226 = vadd.f32 0.0, %v6225
    %v6227 = vpop.f32.mrf.mxu0
    %6228 = vmatprep.mubr.f32.mxu0 0.0
    %6229 = vmatmul.mubr.f32.gmra.mxu0 %v6152
    %v6230 = vpop.f32.mrf.mxu0
    %v6231 = vadd.f32 0.0, %v6230
    %v6232 = vpop.f32.mrf.mxu0
    %6233 = vdwg.mxu0
    %v6234 = vadd.f32 %v6132, %v6221
    %v6235 = vadd.f32 %v6137, %v6226
    %v6236 = vadd.f32 %v6142, %v6231
    %v6237 = vlaneseq
    %v6238 = vshrl.u32 %v6237, 7
    %v6239 = vsub.s32 0, %v6238
    %v6240 = vrot.slane %v3402, %v6239
    %v6241 = vadd.f32 %v6234, %v6240
    %v6242 = vadd.f32 %v6235, %v6240
    %v6243 = vadd.f32 %v6236, %v6240
    %v6244 = vmax.f32 %v6241, 0.0
    %v6245 = vmax.f32 %v6242, 0.0
    %v6246 = vmax.f32 %v6243, 0.0
    %v6247 = vld [vmem:[#allocation7 + $0x220] sm:$0xff]
    %v6248 = vld [vmem:[#allocation7 + $0x228] sm:$0xff]
    %v6249 = vld [vmem:[#allocation7 + $0x230] sm:$0xff]
    %v6250 = vld [vmem:[#allocation7 + $0x238] sm:$0xff]
    %v6251 = vld [vmem:[#allocation7 + $0x240] sm:$0xff]
    %v6252 = vld [vmem:[#allocation7 + $0x248] sm:$0xff]
    %v6253 = vld [vmem:[#allocation7 + $0x250] sm:$0xff]
    %v6254 = vld [vmem:[#allocation7 + $0x258] sm:$0xff]
    %v6255 = vld [vmem:[#allocation7 + $0x260] sm:$0xff]
    %v6256 = vld [vmem:[#allocation7 + $0x268] sm:$0xff]
    %v6257 = vld [vmem:[#allocation7 + $0x270] sm:$0xff]
    %v6258 = vld [vmem:[#allocation7 + $0x278] sm:$0xff]
    %v6259 = vld [vmem:[#allocation7 + $0x280] sm:$0xff]
    %v6260 = vld [vmem:[#allocation7 + $0x288] sm:$0xff]
    %v6261 = vld [vmem:[#allocation7 + $0x290] sm:$0xff]
    %v6262 = vld [vmem:[#allocation7 + $0x298] sm:$0xff]
    %v6263 = vld [vmem:[#allocation7 + $0x2a0] sm:$0xff]
    %v6264 = vld [vmem:[#allocation7 + $0x2a8] sm:$0xff]
    %v6265 = vld [vmem:[#allocation7 + $0x2b0] sm:$0xff]
    %v6266 = vld [vmem:[#allocation7 + $0x2b8] sm:$0xff]
    %v6267 = vld [vmem:[#allocation7 + $0x2c0] sm:$0xff]
    %v6268 = vld [vmem:[#allocation7 + $0x2c8] sm:$0xff]
    %v6269 = vld [vmem:[#allocation7 + $0x2d0] sm:$0xff]
    %v6270 = vld [vmem:[#allocation7 + $0x2d8] sm:$0xff]
    %v6274 = vrot.slane %v6244, 7
    %v6275 = vrot.slane %v6245, 7
    %v6276 = vsel %vm2763, %v6274, %v6275
    %v6277 = vrot.slane %v6246, 7
    %v6278 = vsel %vm2763, %v6275, %v6277
    %v6282 = vsel %vm2763, 0.0, %v6274
    %v6283 = vmul.f32 %v6282, %v93
    %v6284 = vmul.f32 %v6276, %v94
    %v6285 = vmul.f32 %v6278, %v95
    %v6286 = vrot.slane %v6244, 1
    %v6287 = vrot.slane %v6245, 1
    %v6288 = vsel %vm2776, %v6286, %v6287
    %v6289 = vrot.slane %v6246, 1
    %v6290 = vsel %vm2776, %v6287, %v6289
    %v6294 = vsel %vm2776, %v6289, 0.0
    %v6295 = vmul.f32 %v6288, %v96
    %v6296 = vmul.f32 %v6290, %v97
    %v6297 = vmul.f32 %v6294, %v98
    %v6298 = vsel %vm3117, %v6244, 0
    %v6300 = vsel %vm3117, %v6245, 0
    %v6302 = vsel %vm3117, %v6246, 0
    %6304 = vmatprep.subr.mxu0 0.0
    %6305 = vmatpush1.msra.mxu0 0.0
    %6306 = vmatprep.subr.mxu0 0.0
    %6307 = vmatpush1.msra.mxu0 0.0
    %6308 = vmatprep.subr.mxu0 0.0
    %6309 = vmatpush1.msra.mxu0 0.0
    %6310 = vmatprep.subr.mxu0 0.0
    %6311 = vmatpush1.msra.mxu0 0.0
    %6312 = vmatprep.subr.mxu0 0.0
    %6313 = vmatpush1.msra.mxu0 0.0
    %6314 = vmatprep.subr.mxu0 0.0
    %6315 = vmatpush1.msra.mxu0 0.0
    %6316 = vmatprep.subr.mxu0 0.0
    %6317 = vmatpush1.msra.mxu0 0.0
    %6318 = vmatprep.subr.mxu0 0.0
    %6319 = vmatpush1.msra.mxu0 0.0
    %6320 = vmatprep.subr.mxu0 0.0
    %6321 = vmatpush1.msra.mxu0 %v6262
    %6322 = vmatprep.subr.mxu0 0.0
    %6323 = vmatpush1.msra.mxu0 %v6261
    %6324 = vmatprep.subr.mxu0 0.0
    %6325 = vmatpush1.msra.mxu0 %v6260
    %6326 = vmatprep.subr.mxu0 0.0
    %6327 = vmatpush1.msra.mxu0 %v6259
    %6328 = vmatprep.subr.mxu0 0.0
    %6329 = vmatpush1.msra.mxu0 %v6258
    %6330 = vmatprep.subr.mxu0 0.0
    %6331 = vmatpush1.msra.mxu0 %v6257
    %6332 = vmatprep.subr.mxu0 0.0
    %6333 = vmatpush1.msra.mxu0 %v6256
    %6334 = vmatprep.subr.mxu0 0.0
    %6335 = vmatpush1.msra.mxu0 %v6255
    %6336 = vmatprep.subr.mxu0 0.0
    %6337 = vmatpush2.msra.mxu0 0.0
    %6338 = vmatprep.subr.mxu0 0.0
    %6339 = vmatpush2.msra.mxu0 0.0
    %6340 = vmatprep.subr.mxu0 0.0
    %6341 = vmatpush2.msra.mxu0 0.0
    %6342 = vmatprep.subr.mxu0 0.0
    %6343 = vmatpush2.msra.mxu0 0.0
    %6344 = vmatprep.subr.mxu0 0.0
    %6345 = vmatpush2.msra.mxu0 0.0
    %6346 = vmatprep.subr.mxu0 0.0
    %6347 = vmatpush2.msra.mxu0 0.0
    %6348 = vmatprep.subr.mxu0 0.0
    %6349 = vmatpush2.msra.mxu0 0.0
    %6350 = vmatprep.subr.mxu0 0.0
    %6351 = vmatpush2.msra.mxu0 0.0
    %6352 = vmatprep.subr.mxu0 0.0
    %6353 = vmatpush2.msra.mxu0 0.0
    %6354 = vmatprep.subr.mxu0 0.0
    %6355 = vmatpush2.msra.mxu0 0.0
    %6356 = vmatprep.subr.mxu0 0.0
    %6357 = vmatpush2.msra.mxu0 0.0
    %6358 = vmatprep.subr.mxu0 0.0
    %6359 = vmatpush2.msra.mxu0 0.0
    %6360 = vmatprep.subr.mxu0 0.0
    %6361 = vmatpush2.msra.mxu0 0.0
    %6362 = vmatprep.subr.mxu0 0.0
    %6363 = vmatpush2.msra.mxu0 0.0
    %6364 = vmatprep.subr.mxu0 0.0
    %6365 = vmatpush2.msra.mxu0 0.0
    %6366 = vmatprep.subr.mxu0 0.0
    %6367 = vmatpush2.msra.mxu0 0.0
    %6368 = vmatprep.mubr.f32.mxu0 0.0
    %6369 = vmatmul.mubr.f32.gmra.mxu0 %v6298
    %v6370 = vpop.f32.mrf.mxu0
    %v6371 = vadd.f32 0.0, %v6370
    %v6372 = vpop.f32.mrf.mxu0
    %6373 = vmatprep.mubr.f32.mxu0 0.0
    %6374 = vmatmul.mubr.f32.gmra.mxu0 %v6300
    %v6375 = vpop.f32.mrf.mxu0
    %v6376 = vadd.f32 0.0, %v6375
    %v6377 = vpop.f32.mrf.mxu0
    %6378 = vmatprep.mubr.f32.mxu0 0.0
    %6379 = vmatmul.mubr.f32.gmra.mxu0 %v6302
    %v6380 = vpop.f32.mrf.mxu0
    %v6381 = vadd.f32 0.0, %v6380
    %v6382 = vpop.f32.mrf.mxu0
    %6383 = vdwg.mxu0
    %v6385 = vsel %vm3117, %v6283, 0
    %v6388 = vsel %vm3117, %v6284, 0
    %v6391 = vsel %vm3117, %v6285, 0
    %6393 = vmatprep.subr.mxu0 0.0
    %6394 = vmatpush1.msra.mxu0 0.0
    %6395 = vmatprep.subr.mxu0 0.0
    %6396 = vmatpush1.msra.mxu0 0.0
    %6397 = vmatprep.subr.mxu0 0.0
    %6398 = vmatpush1.msra.mxu0 0.0
    %6399 = vmatprep.subr.mxu0 0.0
    %6400 = vmatpush1.msra.mxu0 0.0
    %6401 = vmatprep.subr.mxu0 0.0
    %6402 = vmatpush1.msra.mxu0 0.0
    %6403 = vmatprep.subr.mxu0 0.0
    %6404 = vmatpush1.msra.mxu0 0.0
    %6405 = vmatprep.subr.mxu0 0.0
    %6406 = vmatpush1.msra.mxu0 0.0
    %6407 = vmatprep.subr.mxu0 0.0
    %6408 = vmatpush1.msra.mxu0 0.0
    %6409 = vmatprep.subr.mxu0 0.0
    %6410 = vmatpush1.msra.mxu0 %v6254
    %6411 = vmatprep.subr.mxu0 0.0
    %6412 = vmatpush1.msra.mxu0 %v6253
    %6413 = vmatprep.subr.mxu0 0.0
    %6414 = vmatpush1.msra.mxu0 %v6252
    %6415 = vmatprep.subr.mxu0 0.0
    %6416 = vmatpush1.msra.mxu0 %v6251
    %6417 = vmatprep.subr.mxu0 0.0
    %6418 = vmatpush1.msra.mxu0 %v6250
    %6419 = vmatprep.subr.mxu0 0.0
    %6420 = vmatpush1.msra.mxu0 %v6249
    %6421 = vmatprep.subr.mxu0 0.0
    %6422 = vmatpush1.msra.mxu0 %v6248
    %6423 = vmatprep.subr.mxu0 0.0
    %6424 = vmatpush1.msra.mxu0 %v6247
    %6425 = vmatprep.subr.mxu0 0.0
    %6426 = vmatpush2.msra.mxu0 0.0
    %6427 = vmatprep.subr.mxu0 0.0
    %6428 = vmatpush2.msra.mxu0 0.0
    %6429 = vmatprep.subr.mxu0 0.0
    %6430 = vmatpush2.msra.mxu0 0.0
    %6431 = vmatprep.subr.mxu0 0.0
    %6432 = vmatpush2.msra.mxu0 0.0
    %6433 = vmatprep.subr.mxu0 0.0
    %6434 = vmatpush2.msra.mxu0 0.0
    %6435 = vmatprep.subr.mxu0 0.0
    %6436 = vmatpush2.msra.mxu0 0.0
    %6437 = vmatprep.subr.mxu0 0.0
    %6438 = vmatpush2.msra.mxu0 0.0
    %6439 = vmatprep.subr.mxu0 0.0
    %6440 = vmatpush2.msra.mxu0 0.0
    %6441 = vmatprep.subr.mxu0 0.0
    %6442 = vmatpush2.msra.mxu0 0.0
    %6443 = vmatprep.subr.mxu0 0.0
    %6444 = vmatpush2.msra.mxu0 0.0
    %6445 = vmatprep.subr.mxu0 0.0
    %6446 = vmatpush2.msra.mxu0 0.0
    %6447 = vmatprep.subr.mxu0 0.0
    %6448 = vmatpush2.msra.mxu0 0.0
    %6449 = vmatprep.subr.mxu0 0.0
    %6450 = vmatpush2.msra.mxu0 0.0
    %6451 = vmatprep.subr.mxu0 0.0
    %6452 = vmatpush2.msra.mxu0 0.0
    %6453 = vmatprep.subr.mxu0 0.0
    %6454 = vmatpush2.msra.mxu0 0.0
    %6455 = vmatprep.subr.mxu0 0.0
    %6456 = vmatpush2.msra.mxu0 0.0
    %6457 = vmatprep.mubr.f32.mxu0 0.0
    %6458 = vmatmul.mubr.f32.gmra.mxu0 %v6385
    %v6459 = vpop.f32.mrf.mxu0
    %v6460 = vadd.f32 %v6371, %v6459
    %v6461 = vpop.f32.mrf.mxu0
    %6462 = vmatprep.mubr.f32.mxu0 0.0
    %6463 = vmatmul.mubr.f32.gmra.mxu0 %v6388
    %v6464 = vpop.f32.mrf.mxu0
    %v6465 = vadd.f32 %v6376, %v6464
    %v6466 = vpop.f32.mrf.mxu0
    %6467 = vmatprep.mubr.f32.mxu0 0.0
    %6468 = vmatmul.mubr.f32.gmra.mxu0 %v6391
    %v6469 = vpop.f32.mrf.mxu0
    %v6470 = vadd.f32 %v6381, %v6469
    %v6471 = vpop.f32.mrf.mxu0
    %6472 = vdwg.mxu0
    %v6474 = vsel %vm3117, %v6295, 0
    %v6477 = vsel %vm3117, %v6296, 0
    %v6480 = vsel %vm3117, %v6297, 0
    %6482 = vmatprep.subr.mxu0 0.0
    %6483 = vmatpush1.msra.mxu0 0.0
    %6484 = vmatprep.subr.mxu0 0.0
    %6485 = vmatpush1.msra.mxu0 0.0
    %6486 = vmatprep.subr.mxu0 0.0
    %6487 = vmatpush1.msra.mxu0 0.0
    %6488 = vmatprep.subr.mxu0 0.0
    %6489 = vmatpush1.msra.mxu0 0.0
    %6490 = vmatprep.subr.mxu0 0.0
    %6491 = vmatpush1.msra.mxu0 0.0
    %6492 = vmatprep.subr.mxu0 0.0
    %6493 = vmatpush1.msra.mxu0 0.0
    %6494 = vmatprep.subr.mxu0 0.0
    %6495 = vmatpush1.msra.mxu0 0.0
    %6496 = vmatprep.subr.mxu0 0.0
    %6497 = vmatpush1.msra.mxu0 0.0
    %6498 = vmatprep.subr.mxu0 0.0
    %6499 = vmatpush1.msra.mxu0 %v6270
    %6500 = vmatprep.subr.mxu0 0.0
    %6501 = vmatpush1.msra.mxu0 %v6269
    %6502 = vmatprep.subr.mxu0 0.0
    %6503 = vmatpush1.msra.mxu0 %v6268
    %6504 = vmatprep.subr.mxu0 0.0
    %6505 = vmatpush1.msra.mxu0 %v6267
    %6506 = vmatprep.subr.mxu0 0.0
    %6507 = vmatpush1.msra.mxu0 %v6266
    %6508 = vmatprep.subr.mxu0 0.0
    %6509 = vmatpush1.msra.mxu0 %v6265
    %6510 = vmatprep.subr.mxu0 0.0
    %6511 = vmatpush1.msra.mxu0 %v6264
    %6512 = vmatprep.subr.mxu0 0.0
    %6513 = vmatpush1.msra.mxu0 %v6263
    %6514 = vmatprep.subr.mxu0 0.0
    %6515 = vmatpush2.msra.mxu0 0.0
    %6516 = vmatprep.subr.mxu0 0.0
    %6517 = vmatpush2.msra.mxu0 0.0
    %6518 = vmatprep.subr.mxu0 0.0
    %6519 = vmatpush2.msra.mxu0 0.0
    %6520 = vmatprep.subr.mxu0 0.0
    %6521 = vmatpush2.msra.mxu0 0.0
    %6522 = vmatprep.subr.mxu0 0.0
    %6523 = vmatpush2.msra.mxu0 0.0
    %6524 = vmatprep.subr.mxu0 0.0
    %6525 = vmatpush2.msra.mxu0 0.0
    %6526 = vmatprep.subr.mxu0 0.0
    %6527 = vmatpush2.msra.mxu0 0.0
    %6528 = vmatprep.subr.mxu0 0.0
    %6529 = vmatpush2.msra.mxu0 0.0
    %6530 = vmatprep.subr.mxu0 0.0
    %6531 = vmatpush2.msra.mxu0 0.0
    %6532 = vmatprep.subr.mxu0 0.0
    %6533 = vmatpush2.msra.mxu0 0.0
    %6534 = vmatprep.subr.mxu0 0.0
    %6535 = vmatpush2.msra.mxu0 0.0
    %6536 = vmatprep.subr.mxu0 0.0
    %6537 = vmatpush2.msra.mxu0 0.0
    %6538 = vmatprep.subr.mxu0 0.0
    %6539 = vmatpush2.msra.mxu0 0.0
    %6540 = vmatprep.subr.mxu0 0.0
    %6541 = vmatpush2.msra.mxu0 0.0
    %6542 = vmatprep.subr.mxu0 0.0
    %6543 = vmatpush2.msra.mxu0 0.0
    %6544 = vmatprep.subr.mxu0 0.0
    %6545 = vmatpush2.msra.mxu0 0.0
    %6546 = vmatprep.mubr.f32.mxu0 0.0
    %6547 = vmatmul.mubr.f32.gmra.mxu0 %v6474
    %v6548 = vpop.f32.mrf.mxu0
    %v6549 = vadd.f32 0.0, %v6548
    %v6550 = vpop.f32.mrf.mxu0
    %6551 = vmatprep.mubr.f32.mxu0 0.0
    %6552 = vmatmul.mubr.f32.gmra.mxu0 %v6477
    %v6553 = vpop.f32.mrf.mxu0
    %v6554 = vadd.f32 0.0, %v6553
    %v6555 = vpop.f32.mrf.mxu0
    %6556 = vmatprep.mubr.f32.mxu0 0.0
    %6557 = vmatmul.mubr.f32.gmra.mxu0 %v6480
    %v6558 = vpop.f32.mrf.mxu0
    %v6559 = vadd.f32 0.0, %v6558
    %v6560 = vpop.f32.mrf.mxu0
    %6561 = vdwg.mxu0
    %v6562 = vadd.f32 %v6460, %v6549
    %v6563 = vadd.f32 %v6465, %v6554
    %v6564 = vadd.f32 %v6470, %v6559
    %v6565 = vlaneseq
    %v6566 = vshrl.u32 %v6565, 7
    %v6567 = vsub.s32 0, %v6566
    %v6568 = vrot.slane %v3403, %v6567
    %v6569 = vadd.f32 %v6562, %v6568
    %v6570 = vadd.f32 %v6563, %v6568
    %v6571 = vadd.f32 %v6564, %v6568
    %v6572 = vmax.f32 %v6569, 0.0
    %v6573 = vmax.f32 %v6570, 0.0
    %v6574 = vmax.f32 %v6571, 0.0
    %v6575 = vadd.f32 %v5854, %v6572
    %v6576 = vadd.f32 %v5855, %v6573
    %v6577 = vadd.f32 %v5856, %v6574
    %v6578 = vld [vmem:[#allocation8 + $0x24] sm:$0x1]
    %v6579 = vld [vmem:[#allocation8 + $0x25] sm:$0x1]
    %v6580 = vsel %vm109, %v6575, 0.0
    %6581 = vadd.xlane.f32.xlu0 %v6580
    %v6582 = vpop.xlane.xlu0 %6581
    %v6583 = vsel %vm109, %v6576, 0.0
    %6584 = vadd.xlane.f32.xlu0 %v6583
    %v6585 = vpop.xlane.xlu0 %6584
    %v6586 = vsel %vm109, %v6577, 0.0
    %6587 = vadd.xlane.f32.xlu0 %v6586
    %v6588 = vpop.xlane.xlu0 %6587
    %v6589 = vmul.f32 %v6582, %v214
    %v6590 = vmul.f32 %v6585, %v214
    %v6591 = vmul.f32 %v6588, %v214
    %v6592 = vsub.f32 %v6575, %v6589
    %v6593 = vsub.f32 %v6576, %v6590
    %v6594 = vsub.f32 %v6577, %v6591
    %v6595 = vmul.f32 %v6592, %v6592
    %v6596 = vmul.f32 %v6593, %v6593
    %v6597 = vmul.f32 %v6594, %v6594
    %v6598 = vsel %vm109, %v6595, 0.0
    %6599 = vadd.xlane.f32.xlu0 %v6598
    %v6600 = vpop.xlane.xlu0 %6599
    %v6601 = vsel %vm109, %v6596, 0.0
    %6602 = vadd.xlane.f32.xlu0 %v6601
    %v6603 = vpop.xlane.xlu0 %6602
    %v6604 = vsel %vm109, %v6597, 0.0
    %6605 = vadd.xlane.f32.xlu0 %v6604
    %v6606 = vpop.xlane.xlu0 %6605
    %v6607 = vmul.f32 %v6600, %v233
    %v6608 = vmul.f32 %v6603, %v233
    %v6609 = vmul.f32 %v6606, %v233
    %v6610 = vlaneseq
    %v6611 = vshrl.u32 %v6610, 7
    %v6612 = vsub.s32 0, %v6611
    %v6613 = vrot.slane %v6578, %v6612
    %v6614 = vmul.f32 %v6613, %v6592
    %v6615 = vmul.f32 %v6613, %v6593
    %v6616 = vmul.f32 %v6613, %v6594
    %v6617 = vrsqrt.pop %v6607
    %v6618 = vmul.f32 %v6607, %v6617
    %vm6619 = vcmp.eq.f32.partialorder %v6607, inf
    %v6620 = vsel %vm6619, %v6607, %v6618
    %vm6621 = vcmp.eq.f32.partialorder %v6607, 0.0
    %v6622 = vand.u32 %v6607, 2147483648
    %v6623 = vsel %vm6621, %v6622, %v6620
    %v6624 = vrsqrt.pop %v6608
    %v6625 = vmul.f32 %v6608, %v6624
    %vm6626 = vcmp.eq.f32.partialorder %v6608, inf
    %v6627 = vsel %vm6626, %v6608, %v6625
    %vm6628 = vcmp.eq.f32.partialorder %v6608, 0.0
    %v6629 = vand.u32 %v6608, 2147483648
    %v6630 = vsel %vm6628, %v6629, %v6627
    %v6631 = vrsqrt.pop %v6609
    %v6632 = vmul.f32 %v6609, %v6631
    %vm6633 = vcmp.eq.f32.partialorder %v6609, inf
    %v6634 = vsel %vm6633, %v6609, %v6632
    %vm6635 = vcmp.eq.f32.partialorder %v6609, 0.0
    %v6636 = vand.u32 %v6609, 2147483648
    %v6637 = vsel %vm6635, %v6636, %v6634
    %v6638 = vadd.f32 %v6623, 1e-06
    %v6639 = vadd.f32 %v6630, 1e-06
    %v6640 = vadd.f32 %v6637, 1e-06
    %v6641 = vrcp.pop %v6638
    %v6642 = vmul.f32 %v6614, %v6641
    %v6643 = vrcp.pop %v6639
    %v6644 = vmul.f32 %v6615, %v6643
    %v6645 = vrcp.pop %v6640
    %v6646 = vmul.f32 %v6616, %v6645
    %v6647 = vlaneseq
    %v6648 = vshrl.u32 %v6647, 7
    %v6649 = vsub.s32 0, %v6648
    %v6650 = vrot.slane %v6579, %v6649
    %v6651 = vadd.f32 %v6642, %v6650
    %v6652 = vadd.f32 %v6644, %v6650
    %v6653 = vadd.f32 %v6646, %v6650
    %6654 = vst.msk [vmem:[#allocation10] sm:$0xff] %vm109, %v6651
    %6655 = vst.msk [vmem:[#allocation10 + $0x8] sm:$0xff] %vm109, %v6652
    %6656 = vst.msk [vmem:[#allocation10 + $0x10] sm:$0xff] %vm109, %v6653
    // Predicated region
    $region34: #{tpu_custom_call.1} parent=1 // pred_check
      _
    $region35: #{tpu_custom_call.1} parent=1 // pred_check_branch
      %6658 = sbr.rel (0) target = $region37
    $region36: #{tpu_custom_call.1} parent=1 // pred_region
      %s6660 = ssub.s32 384, 384
      %6661 = vsyncadd [#allocation4], %s6660
      %s6662 = sshll.u32 [#allocation10], 4
      %s6663 = int_to_ptr.vmem [resolvable:$true] %s6662
      %6668 = dma.vmem_to_hbm [thread:$0]  %s6663, 384, %s4, [#allocation4], 128, 128, 8
    $region37: #{tpu_custom_call.1} parent=1 // pred_fallthru
      _
    // Predicated region
    $region38: #{tpu_custom_call.1} parent=1 // pred_check
      _
    $region39: #{tpu_custom_call.1} parent=1 // pred_check_branch
      %6670 = sbr.rel (0) target = $region41
    $region40: #{tpu_custom_call.1} parent=1 // pred_region
      %6671 = dma.done [#allocation4], 384
    $region41: #{tpu_custom_call.1} parent=1 // pred_fallthru
      _
    %6672 = vsyncpa [#allocation3], 1
    %6673 = vsyncpa [#allocation6], 1
    %6674 = vsyncpa [#allocation9], 1
    %6675 = vsyncpa [#allocation4], 1

</llo_original>
